<compile_context>
chip_gen: v7x
topology: tpu7x:2x2x1
jax: 0.10.0
libtpu: 0.0.40
codegen_flags: <defaults>
</compile_context>

<pallas_src>
import functools
import math

import jax
import jax.numpy as jnp
from jax.experimental import pallas as pl
from jax.experimental.pallas import tpu as pltpu

# ----------------------------- small synthetic config ------------------------
BATCH = 2
IN_CHANS = 3
IMG = 16                       # square image (stands in for 560)
PATCH = 4                      # stands in for DINOv2 patch size 14
EMBED_DIM = 256                # lane-aligned stand-in for 768 (vitb14)
NUM_HEADS = 2                  # head_dim = 128 -> lane-aligned head slices
HEAD_DIM = EMBED_DIM // NUM_HEADS
MLP_DIM = 4 * EMBED_DIM
DEPTH = 6                      # early = blocks[:-4], late = blocks[-4:]
DEPTH_EARLY = DEPTH - 4
NUM_CLASSES = 3
N_PATCHES = (IMG // PATCH) ** 2
S_EARLY = 1 + N_PATCHES                      # cls + patch tokens
S_TOTAL = S_EARLY + NUM_CLASSES              # + injected class tokens
S_PAD = ((S_TOTAL + 15) // 16) * 16          # multiple of 16 (bf16 sublane pack)
CPP = IN_CHANS * PATCH * PATCH
CPP_PAD = ((CPP + 127) // 128) * 128         # lane-aligned K for patch matmul
LN_EPS = 1e-6                                # dinov2 LayerNorm eps

assert DEPTH > 4 and EMBED_DIM % NUM_HEADS == 0

BLOCK_PARAM_ORDER = (
    "ln1_w", "ln1_b", "qkv_w", "qkv_b", "proj_w", "proj_b", "ls1",
    "ln2_w", "ln2_b", "fc1_w", "fc1_b", "fc2_w", "fc2_b", "ls2")


# ----------------------------- kernel helpers --------------------------------
def _layernorm(x, w, b, eps=LN_EPS):
    mu = jnp.mean(x, axis=-1, keepdims=True)
    xc = x - mu
    var = jnp.mean(xc * xc, axis=-1, keepdims=True)
    return xc * jax.lax.rsqrt(var + eps) * w + b


def _gelu_exact(x):
    # matches torch.nn.GELU() (erf form).  TODO(synk): switch to the tanh
    # approximation (EUP slot) only if the VPU becomes the binding slot.
    return 0.5 * x * (1.0 + jax.lax.erf(x * (1.0 / math.sqrt(2.0))))


# ----------------------------- fused Pallas kernel ----------------------------
def fused_vit_kernel(depth_early, s_early, n_cls, num_heads, batch, s_pad,
                     patches_ref, pw_ref, pb_ref, cls_tok_ref, pos_ref,
                     clsemb_ref,
                     ln1w_ref, ln1b_ref, qkvw_ref, qkvb_ref, projw_ref,
                     projb_ref, ls1_ref, ln2w_ref, ln2b_ref, fc1w_ref,
                     fc1b_ref, fc2w_ref, fc2b_ref, ls2_ref,
                     normw_ref, normb_ref,
                     o_ref, x_scr):
    l = pl.program_id(0)
    rows, d = x_scr.shape                      # rows = batch * s_pad
    n_patches = s_early - 1
    hd = d // num_heads
    scale = hd ** -0.5

    # -- l == 0: patch-embed projection + cls token + pos-embed (fused) -------
    @pl.when(l == 0)
    def _():
        emb = jnp.dot(patches_ref[...], pw_ref[...],
                      preferred_element_type=jnp.float32) + pb_ref[...]
        for b in range(batch):                 # tiny static loop over batch rows
            base = b * s_pad
            x_scr[base:base + 1, :] = cls_tok_ref[...] + pos_ref[0:1, :]
            x_scr[base + 1:base + s_early, :] = (
                emb[b * n_patches:(b + 1) * n_patches] + pos_ref[1:s_early, :])
            # zero only padding / not-yet-injected rows (valid rows overwritten)
            x_scr[base + s_early:base + s_pad, :] = jnp.zeros(
                (s_pad - s_early, d), jnp.float32)

    # -- inject the learned class-token embeddings before the late blocks -----
    @pl.when(l == depth_early)
    def _():
        for b in range(batch):
            base = b * s_pad
            x_scr[base + s_early:base + s_early + n_cls, :] = clsemb_ref[...]

    # block-diagonal (same-batch) key mask; padded / not-yet-injected rows are
    # masked out of the attention keys so they never influence valid rows.
    n_valid = jnp.where(l < depth_early, s_early, s_early + n_cls)
    row_id = jax.lax.broadcasted_iota(jnp.int32, (rows, rows), 0)
    col_id = jax.lax.broadcasted_iota(jnp.int32, (rows, rows), 1)
    if s_pad & (s_pad - 1) == 0:               # pow-2 fast path (shift / and)
        shift = s_pad.bit_length() - 1
        same_batch = (row_id >> shift) == (col_id >> shift)
        key_ok = (col_id & (s_pad - 1)) < n_valid
    else:
        same_batch = (row_id // s_pad) == (col_id // s_pad)
        key_ok = (col_id % s_pad) < n_valid
    mask = jnp.logical_and(same_batch, key_ok)

    x = x_scr[...]

    # -- attention branch: x = x + ls1 * proj(attn(norm1(x))) ------------------
    h1 = _layernorm(x, ln1w_ref[0], ln1b_ref[0]).astype(jnp.bfloat16)
    qkv = jnp.dot(h1, qkvw_ref[0],
                  preferred_element_type=jnp.float32) + qkvb_ref[0]
    q = (qkv[:, 0:d] * scale).astype(jnp.bfloat16)
    k = qkv[:, d:2 * d].astype(jnp.bfloat16)
    v = qkv[:, 2 * d:3 * d].astype(jnp.bfloat16)

    attn = jnp.zeros((rows, d), jnp.float32)
    for h in range(num_heads):            # tiny static loop; 128-aligned slices
        sl = slice(h * hd, (h + 1) * hd)
        # q @ k^T without an explicit transpose (contract the head dim on MXU).
        logits = jax.lax.dot_general(
            q[:, sl], k[:, sl], (((1,), (1,)), ((), ())),
            preferred_element_type=jnp.float32)                    # (rows, rows)
        logits = jnp.where(mask, logits, -1e30)
        m = jnp.max(logits, axis=-1, keepdims=True)
        p = jnp.exp(logits - m)
        p = p * pl.reciprocal(jnp.sum(p, axis=-1, keepdims=True), approx=True)
        oh = jnp.dot(p.astype(jnp.bfloat16), v[:, sl],
                     preferred_element_type=jnp.float32)            # (rows, hd)
        # fold the output projection per head and accumulate (no concatenate).
        attn = attn + jnp.dot(oh.astype(jnp.bfloat16), projw_ref[0, h],
                              preferred_element_type=jnp.float32)
    x = x + ls1_ref[0] * (attn + projb_ref[0])

    # -- MLP branch: x = x + ls2 * fc2(gelu(fc1(norm2(x)))) --------------------
    h2 = _layernorm(x, ln2w_ref[0], ln2b_ref[0]).astype(jnp.bfloat16)
    hm = jnp.dot(h2, fc1w_ref[0],
                 preferred_element_type=jnp.float32) + fc1b_ref[0]
    hm = _gelu_exact(hm).astype(jnp.bfloat16)
    mlp = jnp.dot(hm, fc2w_ref[0],
                  preferred_element_type=jnp.float32) + fc2b_ref[0]
    x = x + ls2_ref[0] * mlp

    x_scr[...] = x                                 # stays resident across depth

    # -- fused final LayerNorm, written only on the last block -----------------
    @pl.when(l == pl.num_programs(0) - 1)
    def _():
        o_ref[...] = _layernorm(x, normw_ref[...], normb_ref[...])


# ----------------------------- JAX glue ---------------------------------------
def patchify(x, patch):
    # x: (B, C, H, W) NCHW, same layout as the PyTorch Conv2d(kernel=stride=patch)
    B, C, H, W = x.shape
    gh, gw = H // patch, W // patch
    x = x.reshape(B, C, gh, patch, gw, patch)
    x = x.transpose(0, 2, 4, 1, 3, 5)              # (B, gh, gw, C, p, p)
    return x.reshape(B, gh * gw, C * patch * patch)


def init_params(key):
    D, M, H, HD = EMBED_DIM, MLP_DIM, NUM_HEADS, HEAD_DIM
    keys = iter(jax.random.split(key, 16))

    def nrm(shape, std=0.02, dtype=jnp.float32):
        return (std * jax.random.normal(next(keys), shape)).astype(dtype)

    f32, bf16 = jnp.float32, jnp.bfloat16
    return dict(
        # patch embed (Conv2d weight reshaped/transposed to (C*P*P, D))
        patch_w=nrm((CPP, D), dtype=bf16),
        patch_b=jnp.zeros((1, D), f32),
        cls_token=nrm((1, 1, D)),
        pos_embed=nrm((1, S_EARLY, D)),
        cls_emb=nrm((1, NUM_CLASSES, D), std=1.0),   # nn.Parameter(torch.randn)
        # per-block params stacked along a leading depth axis (bf16 weights)
        ln1_w=jnp.ones((DEPTH, 1, D), f32), ln1_b=jnp.zeros((DEPTH, 1, D), f32),
        qkv_w=nrm((DEPTH, D, 3 * D), dtype=bf16),    # fused q/k/v weight
        qkv_b=jnp.zeros((DEPTH, 1, 3 * D), f32),
        proj_w=nrm((DEPTH, H, HD, D), dtype=bf16),   # per-head output projection
        proj_b=jnp.zeros((DEPTH, 1, D), f32),
        ls1=jnp.full((DEPTH, 1, D), 1e-5, f32),      # LayerScale
        ln2_w=jnp.ones((DEPTH, 1, D), f32), ln2_b=jnp.zeros((DEPTH, 1, D), f32),
        fc1_w=nrm((DEPTH, D, M), dtype=bf16), fc1_b=jnp.zeros((DEPTH, 1, M), f32),
        fc2_w=nrm((DEPTH, M, D), dtype=bf16), fc2_b=jnp.zeros((DEPTH, 1, D), f32),
        ls2=jnp.full((DEPTH, 1, D), 1e-5, f32),
        # final norm
        norm_w=jnp.ones((1, D), f32), norm_b=jnp.zeros((1, D), f32),
    )


def forward(x_img, params):
    B = x_img.shape[0]
    D = EMBED_DIM
    rows = B * S_PAD

    # patch extraction + zero-pad the contraction dim to 128 lanes (unmasked K)
    patches = patchify(x_img, PATCH).astype(jnp.bfloat16)          # (B, N, CPP)
    patches = jnp.pad(patches, ((0, 0), (0, 0), (0, CPP_PAD - CPP)))
    patches = patches.reshape(B * N_PATCHES, CPP_PAD)
    patch_w = jnp.pad(params["patch_w"], ((0, CPP_PAD - CPP), (0, 0)))

    pos = params["pos_embed"][0]            # (S_EARLY, D)
    cls_tok = params["cls_token"][0]        # (1, D)
    cls_emb = params["cls_emb"][0]          # (NUM_CLASSES, D)
    block_params = [params[name] for name in BLOCK_PARAM_ORDER]

    def full_spec(a):
        return pl.BlockSpec(a.shape, lambda l, nd=a.ndim: (0,) * nd)

    def depth_spec(a):
        return pl.BlockSpec((1,) + a.shape[1:],
                            lambda l, nd=a.ndim: (l,) + (0,) * (nd - 1))

    in_specs = (
        [full_spec(patches), full_spec(patch_w), full_spec(params["patch_b"]),
         full_spec(cls_tok), full_spec(pos), full_spec(cls_emb)]
        + [depth_spec(p) for p in block_params]
        + [full_spec(params["norm_w"]), full_spec(params["norm_b"])])

    args = [patches, patch_w, params["patch_b"], cls_tok, pos, cls_emb,
            *block_params, params["norm_w"], params["norm_b"]]

    # advisory cost estimate so XLA schedules surrounding ops around the call
    mm_flops = DEPTH * rows * 2 * (D * 3 * D + D * D + 2 * D * MLP_DIM)
    attn_flops = DEPTH * NUM_HEADS * 4 * rows * rows * HEAD_DIM
    pe_flops = 2 * B * N_PATCHES * CPP_PAD * D
    transc = DEPTH * (NUM_HEADS * rows * rows + rows * MLP_DIM + 2 * rows)
    bytes_accessed = (sum(int(a.size) * a.dtype.itemsize for a in args)
                      + rows * D * 4)

    kernel = functools.partial(fused_vit_kernel, DEPTH_EARLY, S_EARLY,
                               NUM_CLASSES, NUM_HEADS, B, S_PAD)

    # grid over depth only (batch folded into the block): each layer's weights
    # are streamed from HBM exactly once, prefetched under the previous layer.
    # TODO(synk): on v7x, keep batch as an extra "parallel" grid axis (2 TCs).
    out = pl.pallas_call(
        kernel,
        out_shape=jax.ShapeDtypeStruct((rows, D), jnp.float32),
        grid=(DEPTH,),
        in_specs=in_specs,
        out_specs=pl.BlockSpec((rows, D), lambda l: (0, 0)),
        scratch_shapes=[pltpu.VMEM((rows, D), jnp.float32)],
        compiler_params=pltpu.CompilerParams(
            dimension_semantics=("arbitrary",)),
        cost_estimate=pl.CostEstimate(flops=int(mm_flops + attn_flops + pe_flops),
                                      transcendentals=int(transc),
                                      bytes_accessed=int(bytes_accessed)),
    )(*args)

    # interpolate_pos_encoding: token grid matches pos_embed grid here, so the
    # interpolation reduces to the identity add done in-kernel.
    # TODO(synk): bicubic pos-embed resize for mismatched grids not implemented.
    return out.reshape(B, S_PAD, D)[:, :S_TOTAL, :]   # drop padding rows


if __name__ == "__main__":
    key = jax.random.PRNGKey(0)
    k_x, k_p = jax.random.split(key)
    x_img = jax.random.normal(k_x, (BATCH, IN_CHANS, IMG, IMG), dtype=jnp.float32)
    params = init_params(k_p)

    out = jax.jit(forward)(x_img, params)
    out = jax.block_until_ready(out)

    expected = (BATCH, S_TOTAL, EMBED_DIM)
    assert out.shape == expected, (out.shape, expected)
    assert bool(jnp.all(jnp.isfinite(out)))
    print("KERNEL_OK")
</pallas_src>

<mosaic_0001>
module attributes {stable_mosaic.version = 11 : i64} {
  func.func @fused_vit_kernel(%arg0: i32, %arg1: memref<32x128xbf16, #tpu.memory_space<vmem>>, %arg2: memref<128x256xbf16, #tpu.memory_space<vmem>>, %arg3: memref<1x256xf32, #tpu.memory_space<vmem>>, %arg4: memref<1x256xf32, #tpu.memory_space<vmem>>, %arg5: memref<17x256xf32, #tpu.memory_space<vmem>>, %arg6: memref<3x256xf32, #tpu.memory_space<vmem>>, %arg7: memref<1x1x256xf32, #tpu.memory_space<vmem>>, %arg8: memref<1x1x256xf32, #tpu.memory_space<vmem>>, %arg9: memref<1x256x768xbf16, #tpu.memory_space<vmem>>, %arg10: memref<1x1x768xf32, #tpu.memory_space<vmem>>, %arg11: memref<1x2x128x256xbf16, #tpu.memory_space<vmem>>, %arg12: memref<1x1x256xf32, #tpu.memory_space<vmem>>, %arg13: memref<1x1x256xf32, #tpu.memory_space<vmem>>, %arg14: memref<1x1x256xf32, #tpu.memory_space<vmem>>, %arg15: memref<1x1x256xf32, #tpu.memory_space<vmem>>, %arg16: memref<1x256x1024xbf16, #tpu.memory_space<vmem>>, %arg17: memref<1x1x1024xf32, #tpu.memory_space<vmem>>, %arg18: memref<1x1024x256xbf16, #tpu.memory_space<vmem>>, %arg19: memref<1x1x256xf32, #tpu.memory_space<vmem>>, %arg20: memref<1x1x256xf32, #tpu.memory_space<vmem>>, %arg21: memref<1x256xf32, #tpu.memory_space<vmem>>, %arg22: memref<1x256xf32, #tpu.memory_space<vmem>>, %arg23: memref<64x256xf32, #tpu.memory_space<vmem>>, %arg24: memref<64x256xf32, #tpu.memory_space<vmem>>) attributes {dimension_semantics = [#tpu.dimension_semantics<arbitrary>], iteration_bounds = array<i64: 6>, scalar_prefetch = 0 : i64, scratch_operands = 1 : i64, tpu.core_type = #tpu.core_type<tc>, window_params = [{pipeline_mode = #tpu.pipeline_mode<synchronous>, transform_indices = @transform_0, window_bounds = array<i64: 32, 128>}, {pipeline_mode = #tpu.pipeline_mode<synchronous>, transform_indices = @transform_1, window_bounds = array<i64: 128, 256>}, {pipeline_mode = #tpu.pipeline_mode<synchronous>, transform_indices = @transform_2, window_bounds = array<i64: 1, 256>}, {pipeline_mode = #tpu.pipeline_mode<synchronous>, transform_indices = @transform_3, window_bounds = array<i64: 1, 256>}, {pipeline_mode = #tpu.pipeline_mode<synchronous>, transform_indices = @transform_4, window_bounds = array<i64: 17, 256>}, {pipeline_mode = #tpu.pipeline_mode<synchronous>, transform_indices = @transform_5, window_bounds = array<i64: 3, 256>}, {transform_indices = @transform_6, window_bounds = array<i64: 1, 1, 256>}, {transform_indices = @transform_7, window_bounds = array<i64: 1, 1, 256>}, {transform_indices = @transform_8, window_bounds = array<i64: 1, 256, 768>}, {transform_indices = @transform_9, window_bounds = array<i64: 1, 1, 768>}, {transform_indices = @transform_10, window_bounds = array<i64: 1, 2, 128, 256>}, {transform_indices = @transform_11, window_bounds = array<i64: 1, 1, 256>}, {transform_indices = @transform_12, window_bounds = array<i64: 1, 1, 256>}, {transform_indices = @transform_13, window_bounds = array<i64: 1, 1, 256>}, {transform_indices = @transform_14, window_bounds = array<i64: 1, 1, 256>}, {transform_indices = @transform_15, window_bounds = array<i64: 1, 256, 1024>}, {transform_indices = @transform_16, window_bounds = array<i64: 1, 1, 1024>}, {transform_indices = @transform_17, window_bounds = array<i64: 1, 1024, 256>}, {transform_indices = @transform_18, window_bounds = array<i64: 1, 1, 256>}, {transform_indices = @transform_19, window_bounds = array<i64: 1, 1, 256>}, {pipeline_mode = #tpu.pipeline_mode<synchronous>, transform_indices = @transform_20, window_bounds = array<i64: 1, 256>}, {pipeline_mode = #tpu.pipeline_mode<synchronous>, transform_indices = @transform_21, window_bounds = array<i64: 1, 256>}, {pipeline_mode = #tpu.pipeline_mode<synchronous>, transform_indices = @transform_22, window_bounds = array<i64: 64, 256>}]} {
    %c0_i32 = arith.constant 0 : i32
    %0 = arith.cmpi eq, %arg0, %c0_i32 : i32
    %1 = arith.extui %0 : i1 to i32
    %c0_i32_0 = arith.constant 0 : i32
    %2 = arith.cmpi ne, %1, %c0_i32_0 : i32
    scf.if %2 {
      %c0_84 = arith.constant 0 : index
      %c0_85 = arith.constant 0 : index
      %174 = vector.load %arg1[%c0_84, %c0_85] : memref<32x128xbf16, #tpu.memory_space<vmem>>, vector<32x128xbf16>
      %c0_86 = arith.constant 0 : index
      %c0_87 = arith.constant 0 : index
      %175 = vector.load %arg2[%c0_86, %c0_87] : memref<128x256xbf16, #tpu.memory_space<vmem>>, vector<128x256xbf16>
      %cst_88 = arith.constant dense<0.000000e+00> : vector<32x256xf32>
      %176 = tpu.matmul %174, %175, %cst_88 {dimension_numbers = #tpu.dot_dimension_numbers<[1], [0], [0], [1], [0, 0, 1, 1], [], []>} : vector<32x128xbf16>, vector<128x256xbf16>, vector<32x256xf32> -> vector<32x256xf32>
      %c0_89 = arith.constant 0 : index
      %c0_90 = arith.constant 0 : index
      %177 = vector.load %arg3[%c0_89, %c0_90] : memref<1x256xf32, #tpu.memory_space<vmem>>, vector<1x256xf32>
      %178 = vector.broadcast %177 : vector<1x256xf32> to vector<32x256xf32>
      %179 = arith.addf %176, %178 : vector<32x256xf32>
      %c0_91 = arith.constant 0 : index
      %c0_92 = arith.constant 0 : index
      %180 = vector.load %arg4[%c0_91, %c0_92] : memref<1x256xf32, #tpu.memory_space<vmem>>, vector<1x256xf32>
      %c0_93 = arith.constant 0 : index
      %c0_94 = arith.constant 0 : index
      %181 = vector.load %arg5[%c0_93, %c0_94] : memref<17x256xf32, #tpu.memory_space<vmem>>, vector<1x256xf32>
      %182 = arith.addf %180, %181 : vector<1x256xf32>
      %c0_95 = arith.constant 0 : index
      %c0_96 = arith.constant 0 : index
      %183 = vector.load %arg24[%c0_95, %c0_96] : memref<64x256xf32, #tpu.memory_space<vmem>>, vector<1x256xf32>
      tpu.vector_store %arg24[%c0_95, %c0_96], %182 {strides = array<i32>} : memref<64x256xf32, #tpu.memory_space<vmem>>, vector<1x256xf32>,
      %184 = vector.extract_strided_slice %179 {offsets = [0, 0], sizes = [16, 256], strides = [1, 1]} : vector<32x256xf32> to vector<16x256xf32>
      %c1_97 = arith.constant 1 : index
      %c0_98 = arith.constant 0 : index
      %185 = vector.load %arg5[%c1_97, %c0_98] : memref<17x256xf32, #tpu.memory_space<vmem>>, vector<16x256xf32>
      %186 = arith.addf %184, %185 : vector<16x256xf32>
      %c1_99 = arith.constant 1 : index
      %c0_100 = arith.constant 0 : index
      %187 = vector.load %arg24[%c1_99, %c0_100] : memref<64x256xf32, #tpu.memory_space<vmem>>, vector<16x256xf32>
      tpu.vector_store %arg24[%c1_99, %c0_100], %186 {strides = array<i32>} : memref<64x256xf32, #tpu.memory_space<vmem>>, vector<16x256xf32>,
      %cst_101 = arith.constant 0.000000e+00 : f32
      %188 = vector.broadcast %cst_101 : f32 to vector<15x256xf32>
      %c17 = arith.constant 17 : index
      %c0_102 = arith.constant 0 : index
      %189 = vector.load %arg24[%c17, %c0_102] : memref<64x256xf32, #tpu.memory_space<vmem>>, vector<15x256xf32>
      tpu.vector_store %arg24[%c17, %c0_102], %188 {strides = array<i32>} : memref<64x256xf32, #tpu.memory_space<vmem>>, vector<15x256xf32>,
      %c0_103 = arith.constant 0 : index
      %c0_104 = arith.constant 0 : index
      %190 = vector.load %arg4[%c0_103, %c0_104] : memref<1x256xf32, #tpu.memory_space<vmem>>, vector<1x256xf32>
      %c0_105 = arith.constant 0 : index
      %c0_106 = arith.constant 0 : index
      %191 = vector.load %arg5[%c0_105, %c0_106] : memref<17x256xf32, #tpu.memory_space<vmem>>, vector<1x256xf32>
      %192 = arith.addf %190, %191 : vector<1x256xf32>
      %c32 = arith.constant 32 : index
      %c0_107 = arith.constant 0 : index
      %193 = vector.load %arg24[%c32, %c0_107] : memref<64x256xf32, #tpu.memory_space<vmem>>, vector<1x256xf32>
      tpu.vector_store %arg24[%c32, %c0_107], %192 {strides = array<i32>} : memref<64x256xf32, #tpu.memory_space<vmem>>, vector<1x256xf32>,
      %194 = vector.extract_strided_slice %179 {offsets = [16, 0], sizes = [16, 256], strides = [1, 1]} : vector<32x256xf32> to vector<16x256xf32>
      %c1_108 = arith.constant 1 : index
      %c0_109 = arith.constant 0 : index
      %195 = vector.load %arg5[%c1_108, %c0_109] : memref<17x256xf32, #tpu.memory_space<vmem>>, vector<16x256xf32>
      %196 = arith.addf %194, %195 : vector<16x256xf32>
      %c33 = arith.constant 33 : index
      %c0_110 = arith.constant 0 : index
      %197 = vector.load %arg24[%c33, %c0_110] : memref<64x256xf32, #tpu.memory_space<vmem>>, vector<16x256xf32>
      tpu.vector_store %arg24[%c33, %c0_110], %196 {strides = array<i32>} : memref<64x256xf32, #tpu.memory_space<vmem>>, vector<16x256xf32>,
      %cst_111 = arith.constant 0.000000e+00 : f32
      %198 = vector.broadcast %cst_111 : f32 to vector<15x256xf32>
      %c49 = arith.constant 49 : index
      %c0_112 = arith.constant 0 : index
      %199 = vector.load %arg24[%c49, %c0_112] : memref<64x256xf32, #tpu.memory_space<vmem>>, vector<15x256xf32>
      tpu.vector_store %arg24[%c49, %c0_112], %198 {strides = array<i32>} : memref<64x256xf32, #tpu.memory_space<vmem>>, vector<15x256xf32>,
    } else {
    }
    %c2_i32 = arith.constant 2 : i32
    %3 = arith.cmpi eq, %arg0, %c2_i32 : i32
    %4 = arith.extui %3 : i1 to i32
    %c0_i32_1 = arith.constant 0 : i32
    %5 = arith.cmpi ne, %4, %c0_i32_1 : i32
    scf.if %5 {
      %c0_84 = arith.constant 0 : index
      %c0_85 = arith.constant 0 : index
      %174 = vector.load %arg6[%c0_84, %c0_85] : memref<3x256xf32, #tpu.memory_space<vmem>>, vector<3x256xf32>
      %c17 = arith.constant 17 : index
      %c0_86 = arith.constant 0 : index
      %175 = vector.load %arg24[%c17, %c0_86] : memref<64x256xf32, #tpu.memory_space<vmem>>, vector<3x256xf32>
      tpu.vector_store %arg24[%c17, %c0_86], %174 {strides = array<i32>} : memref<64x256xf32, #tpu.memory_space<vmem>>, vector<3x256xf32>,
      %c0_87 = arith.constant 0 : index
      %c0_88 = arith.constant 0 : index
      %176 = vector.load %arg6[%c0_87, %c0_88] : memref<3x256xf32, #tpu.memory_space<vmem>>, vector<3x256xf32>
      %c49 = arith.constant 49 : index
      %c0_89 = arith.constant 0 : index
      %177 = vector.load %arg24[%c49, %c0_89] : memref<64x256xf32, #tpu.memory_space<vmem>>, vector<3x256xf32>
      tpu.vector_store %arg24[%c49, %c0_89], %176 {strides = array<i32>} : memref<64x256xf32, #tpu.memory_space<vmem>>, vector<3x256xf32>,
    } else {
    }
    %c2_i32_2 = arith.constant 2 : i32
    %6 = arith.cmpi slt, %arg0, %c2_i32_2 : i32
    %c17_i32 = arith.constant 17 : i32
    %c20_i32 = arith.constant 20 : i32
    %7 = arith.select %6, %c17_i32, %c20_i32 : i32
    %8 = tpu.iota {dimensions = array<i32: 0>} : vector<64x64xi32>
    %9 = tpu.iota {dimensions = array<i32: 1>} : vector<64x64xi32>
    %c5_i32 = arith.constant 5 : i32
    %10 = vector.broadcast %c5_i32 : i32 to vector<64x64xi32>
    %11 = arith.shrsi %8, %10 : vector<64x64xi32>
    %c5_i32_3 = arith.constant 5 : i32
    %12 = vector.broadcast %c5_i32_3 : i32 to vector<64x64xi32>
    %13 = arith.shrsi %9, %12 : vector<64x64xi32>
    %14 = arith.cmpi eq, %11, %13 : vector<64x64xi32>
    %c31_i32 = arith.constant 31 : i32
    %15 = vector.broadcast %c31_i32 : i32 to vector<64x64xi32>
    %16 = arith.andi %9, %15 : vector<64x64xi32>
    %17 = vector.broadcast %7 : i32 to vector<64x64xi32>
    %18 = arith.cmpi slt, %16, %17 : vector<64x64xi32>
    %19 = arith.andi %14, %18 : vector<64x64xi1>
    %c0 = arith.constant 0 : index
    %c0_4 = arith.constant 0 : index
    %20 = vector.load %arg24[%c0, %c0_4] : memref<64x256xf32, #tpu.memory_space<vmem>>, vector<64x256xf32>
    %c0_5 = arith.constant 0 : index
    %c0_6 = arith.constant 0 : index
    %c0_7 = arith.constant 0 : index
    %21 = vector.load %arg7[%c0_5, %c0_6, %c0_7] : memref<1x1x256xf32, #tpu.memory_space<vmem>>, vector<1x1x256xf32>
    %22 = vector.shape_cast %21 : vector<1x1x256xf32> to vector<1x256xf32>
    %c0_8 = arith.constant 0 : index
    %c0_9 = arith.constant 0 : index
    %c0_10 = arith.constant 0 : index
    %23 = vector.load %arg8[%c0_8, %c0_9, %c0_10] : memref<1x1x256xf32, #tpu.memory_space<vmem>>, vector<1x1x256xf32>
    %24 = vector.shape_cast %23 : vector<1x1x256xf32> to vector<1x256xf32>
    %cst = arith.constant dense<0.000000e+00> : vector<64xf32>
    %25 = vector.multi_reduction <add>, %20, %cst [1] : vector<64x256xf32> to vector<64xf32>
    %26 = vector.shape_cast %25 : vector<64xf32> to vector<64x1xf32>
    %cst_11 = arith.constant 2.560000e+02 : f32
    %27 = vector.broadcast %cst_11 : f32 to vector<64x1xf32>
    %28 = arith.divf %26, %27 : vector<64x1xf32>
    %29 = vector.broadcast %28 : vector<64x1xf32> to vector<64x256xf32>
    %30 = arith.subf %20, %29 : vector<64x256xf32>
    %31 = arith.mulf %30, %30 : vector<64x256xf32>
    %cst_12 = arith.constant dense<0.000000e+00> : vector<64xf32>
    %32 = vector.multi_reduction <add>, %31, %cst_12 [1] : vector<64x256xf32> to vector<64xf32>
    %33 = vector.shape_cast %32 : vector<64xf32> to vector<64x1xf32>
    %cst_13 = arith.constant 2.560000e+02 : f32
    %34 = vector.broadcast %cst_13 : f32 to vector<64x1xf32>
    %35 = arith.divf %33, %34 : vector<64x1xf32>
    %cst_14 = arith.constant 9.99999997E-7 : f32
    %36 = vector.broadcast %cst_14 : f32 to vector<64x1xf32>
    %37 = arith.addf %35, %36 : vector<64x1xf32>
    %38 = math.rsqrt %37 : vector<64x1xf32>
    %39 = vector.broadcast %38 : vector<64x1xf32> to vector<64x256xf32>
    %40 = arith.mulf %30, %39 : vector<64x256xf32>
    %41 = vector.broadcast %22 : vector<1x256xf32> to vector<64x256xf32>
    %42 = arith.mulf %40, %41 : vector<64x256xf32>
    %43 = vector.broadcast %24 : vector<1x256xf32> to vector<64x256xf32>
    %44 = arith.addf %42, %43 : vector<64x256xf32>
    %45 = arith.truncf %44 : vector<64x256xf32> to vector<64x256xbf16>
    %c0_15 = arith.constant 0 : index
    %c0_16 = arith.constant 0 : index
    %c0_17 = arith.constant 0 : index
    %46 = vector.load %arg9[%c0_15, %c0_16, %c0_17] : memref<1x256x768xbf16, #tpu.memory_space<vmem>>, vector<1x256x768xbf16>
    %47 = vector.shape_cast %46 : vector<1x256x768xbf16> to vector<256x768xbf16>
    %cst_18 = arith.constant dense<0.000000e+00> : vector<64x768xf32>
    %48 = tpu.matmul %45, %47, %cst_18 {dimension_numbers = #tpu.dot_dimension_numbers<[1], [0], [0], [1], [0, 0, 1, 1], [], []>} : vector<64x256xbf16>, vector<256x768xbf16>, vector<64x768xf32> -> vector<64x768xf32>
    %c0_19 = arith.constant 0 : index
    %c0_20 = arith.constant 0 : index
    %c0_21 = arith.constant 0 : index
    %49 = vector.load %arg10[%c0_19, %c0_20, %c0_21] : memref<1x1x768xf32, #tpu.memory_space<vmem>>, vector<1x1x768xf32>
    %50 = vector.shape_cast %49 : vector<1x1x768xf32> to vector<1x768xf32>
    %51 = vector.broadcast %50 : vector<1x768xf32> to vector<64x768xf32>
    %52 = arith.addf %48, %51 : vector<64x768xf32>
    %53 = vector.extract_strided_slice %52 {offsets = [0, 0], sizes = [64, 256], strides = [1, 1]} : vector<64x768xf32> to vector<64x256xf32>
    %cst_22 = arith.constant 0.0883883461 : f32
    %54 = vector.broadcast %cst_22 : f32 to vector<64x256xf32>
    %55 = arith.mulf %53, %54 : vector<64x256xf32>
    %56 = arith.truncf %55 : vector<64x256xf32> to vector<64x256xbf16>
    %57 = vector.extract_strided_slice %52 {offsets = [0, 256], sizes = [64, 256], strides = [1, 1]} : vector<64x768xf32> to vector<64x256xf32>
    %58 = arith.truncf %57 : vector<64x256xf32> to vector<64x256xbf16>
    %59 = vector.extract_strided_slice %52 {offsets = [0, 512], sizes = [64, 256], strides = [1, 1]} : vector<64x768xf32> to vector<64x256xf32>
    %60 = arith.truncf %59 : vector<64x256xf32> to vector<64x256xbf16>
    %cst_23 = arith.constant 0.000000e+00 : f32
    %61 = vector.broadcast %cst_23 : f32 to vector<64x256xf32>
    %62 = vector.extract_strided_slice %56 {offsets = [0, 0], sizes = [64, 128], strides = [1, 1]} : vector<64x256xbf16> to vector<64x128xbf16>
    %63 = vector.extract_strided_slice %58 {offsets = [0, 0], sizes = [64, 128], strides = [1, 1]} : vector<64x256xbf16> to vector<64x128xbf16>
    %cst_24 = arith.constant dense<0.000000e+00> : vector<64x64xf32>
    %64 = tpu.matmul %62, %63, %cst_24 {dimension_numbers = #tpu.dot_dimension_numbers<[1], [1], [0], [0], [0, 0, 1, 0], [], []>} : vector<64x128xbf16>, vector<64x128xbf16>, vector<64x64xf32> -> vector<64x64xf32>
    %cst_25 = arith.constant -1.000000e+30 : f32
    %65 = vector.broadcast %cst_25 : f32 to vector<64x64xf32>
    %66 = arith.select %19, %64, %65 : vector<64x64xi1>, vector<64x64xf32>
    %cst_26 = arith.constant dense<0xFF800000> : vector<64xf32>
    %67 = vector.multi_reduction <maximumf>, %66, %cst_26 [1] : vector<64x64xf32> to vector<64xf32>
    %68 = vector.shape_cast %67 : vector<64xf32> to vector<64x1xf32>
    %69 = vector.broadcast %68 : vector<64x1xf32> to vector<64x64xf32>
    %70 = arith.subf %66, %69 : vector<64x64xf32>
    %71 = math.exp %70 : vector<64x64xf32>
    %cst_27 = arith.constant dense<0.000000e+00> : vector<64xf32>
    %72 = vector.multi_reduction <add>, %71, %cst_27 [1] : vector<64x64xf32> to vector<64xf32>
    %73 = vector.shape_cast %72 : vector<64xf32> to vector<64x1xf32>
    %74 = tpu.reciprocal %73 {approx = true} : vector<64x1xf32> -> vector<64x1xf32>
    %75 = vector.broadcast %74 : vector<64x1xf32> to vector<64x64xf32>
    %76 = arith.mulf %71, %75 : vector<64x64xf32>
    %77 = arith.truncf %76 : vector<64x64xf32> to vector<64x64xbf16>
    %78 = vector.extract_strided_slice %60 {offsets = [0, 0], sizes = [64, 128], strides = [1, 1]} : vector<64x256xbf16> to vector<64x128xbf16>
    %cst_28 = arith.constant dense<0.000000e+00> : vector<64x128xf32>
    %79 = tpu.matmul %77, %78, %cst_28 {dimension_numbers = #tpu.dot_dimension_numbers<[1], [0], [0], [1], [0, 0, 1, 1], [], []>} : vector<64x64xbf16>, vector<64x128xbf16>, vector<64x128xf32> -> vector<64x128xf32>
    %80 = arith.truncf %79 : vector<64x128xf32> to vector<64x128xbf16>
    %c0_29 = arith.constant 0 : index
    %c0_30 = arith.constant 0 : index
    %c0_31 = arith.constant 0 : index
    %c0_32 = arith.constant 0 : index
    %81 = vector.load %arg11[%c0_29, %c0_30, %c0_31, %c0_32] : memref<1x2x128x256xbf16, #tpu.memory_space<vmem>>, vector<1x1x128x256xbf16>
    %82 = vector.shape_cast %81 : vector<1x1x128x256xbf16> to vector<128x256xbf16>
    %cst_33 = arith.constant dense<0.000000e+00> : vector<64x256xf32>
    %83 = tpu.matmul %80, %82, %cst_33 {dimension_numbers = #tpu.dot_dimension_numbers<[1], [0], [0], [1], [0, 0, 1, 1], [], []>} : vector<64x128xbf16>, vector<128x256xbf16>, vector<64x256xf32> -> vector<64x256xf32>
    %84 = arith.addf %61, %83 : vector<64x256xf32>
    %85 = vector.extract_strided_slice %56 {offsets = [0, 128], sizes = [64, 128], strides = [1, 1]} : vector<64x256xbf16> to vector<64x128xbf16>
    %86 = vector.extract_strided_slice %58 {offsets = [0, 128], sizes = [64, 128], strides = [1, 1]} : vector<64x256xbf16> to vector<64x128xbf16>
    %cst_34 = arith.constant dense<0.000000e+00> : vector<64x64xf32>
    %87 = tpu.matmul %85, %86, %cst_34 {dimension_numbers = #tpu.dot_dimension_numbers<[1], [1], [0], [0], [0, 0, 1, 0], [], []>} : vector<64x128xbf16>, vector<64x128xbf16>, vector<64x64xf32> -> vector<64x64xf32>
    %cst_35 = arith.constant -1.000000e+30 : f32
    %88 = vector.broadcast %cst_35 : f32 to vector<64x64xf32>
    %89 = arith.select %19, %87, %88 : vector<64x64xi1>, vector<64x64xf32>
    %cst_36 = arith.constant dense<0xFF800000> : vector<64xf32>
    %90 = vector.multi_reduction <maximumf>, %89, %cst_36 [1] : vector<64x64xf32> to vector<64xf32>
    %91 = vector.shape_cast %90 : vector<64xf32> to vector<64x1xf32>
    %92 = vector.broadcast %91 : vector<64x1xf32> to vector<64x64xf32>
    %93 = arith.subf %89, %92 : vector<64x64xf32>
    %94 = math.exp %93 : vector<64x64xf32>
    %cst_37 = arith.constant dense<0.000000e+00> : vector<64xf32>
    %95 = vector.multi_reduction <add>, %94, %cst_37 [1] : vector<64x64xf32> to vector<64xf32>
    %96 = vector.shape_cast %95 : vector<64xf32> to vector<64x1xf32>
    %97 = tpu.reciprocal %96 {approx = true} : vector<64x1xf32> -> vector<64x1xf32>
    %98 = vector.broadcast %97 : vector<64x1xf32> to vector<64x64xf32>
    %99 = arith.mulf %94, %98 : vector<64x64xf32>
    %100 = arith.truncf %99 : vector<64x64xf32> to vector<64x64xbf16>
    %101 = vector.extract_strided_slice %60 {offsets = [0, 128], sizes = [64, 128], strides = [1, 1]} : vector<64x256xbf16> to vector<64x128xbf16>
    %cst_38 = arith.constant dense<0.000000e+00> : vector<64x128xf32>
    %102 = tpu.matmul %100, %101, %cst_38 {dimension_numbers = #tpu.dot_dimension_numbers<[1], [0], [0], [1], [0, 0, 1, 1], [], []>} : vector<64x64xbf16>, vector<64x128xbf16>, vector<64x128xf32> -> vector<64x128xf32>
    %103 = arith.truncf %102 : vector<64x128xf32> to vector<64x128xbf16>
    %c0_39 = arith.constant 0 : index
    %c1 = arith.constant 1 : index
    %c0_40 = arith.constant 0 : index
    %c0_41 = arith.constant 0 : index
    %104 = vector.load %arg11[%c0_39, %c1, %c0_40, %c0_41] : memref<1x2x128x256xbf16, #tpu.memory_space<vmem>>, vector<1x1x128x256xbf16>
    %105 = vector.shape_cast %104 : vector<1x1x128x256xbf16> to vector<128x256xbf16>
    %cst_42 = arith.constant dense<0.000000e+00> : vector<64x256xf32>
    %106 = tpu.matmul %103, %105, %cst_42 {dimension_numbers = #tpu.dot_dimension_numbers<[1], [0], [0], [1], [0, 0, 1, 1], [], []>} : vector<64x128xbf16>, vector<128x256xbf16>, vector<64x256xf32> -> vector<64x256xf32>
    %107 = arith.addf %84, %106 : vector<64x256xf32>
    %c0_43 = arith.constant 0 : index
    %c0_44 = arith.constant 0 : index
    %c0_45 = arith.constant 0 : index
    %108 = vector.load %arg13[%c0_43, %c0_44, %c0_45] : memref<1x1x256xf32, #tpu.memory_space<vmem>>, vector<1x1x256xf32>
    %109 = vector.shape_cast %108 : vector<1x1x256xf32> to vector<1x256xf32>
    %c0_46 = arith.constant 0 : index
    %c0_47 = arith.constant 0 : index
    %c0_48 = arith.constant 0 : index
    %110 = vector.load %arg12[%c0_46, %c0_47, %c0_48] : memref<1x1x256xf32, #tpu.memory_space<vmem>>, vector<1x1x256xf32>
    %111 = vector.shape_cast %110 : vector<1x1x256xf32> to vector<1x256xf32>
    %112 = vector.broadcast %111 : vector<1x256xf32> to vector<64x256xf32>
    %113 = arith.addf %107, %112 : vector<64x256xf32>
    %114 = vector.broadcast %109 : vector<1x256xf32> to vector<64x256xf32>
    %115 = arith.mulf %114, %113 : vector<64x256xf32>
    %116 = arith.addf %20, %115 : vector<64x256xf32>
    %c0_49 = arith.constant 0 : index
    %c0_50 = arith.constant 0 : index
    %c0_51 = arith.constant 0 : index
    %117 = vector.load %arg14[%c0_49, %c0_50, %c0_51] : memref<1x1x256xf32, #tpu.memory_space<vmem>>, vector<1x1x256xf32>
    %118 = vector.shape_cast %117 : vector<1x1x256xf32> to vector<1x256xf32>
    %c0_52 = arith.constant 0 : index
    %c0_53 = arith.constant 0 : index
    %c0_54 = arith.constant 0 : index
    %119 = vector.load %arg15[%c0_52, %c0_53, %c0_54] : memref<1x1x256xf32, #tpu.memory_space<vmem>>, vector<1x1x256xf32>
    %120 = vector.shape_cast %119 : vector<1x1x256xf32> to vector<1x256xf32>
    %cst_55 = arith.constant dense<0.000000e+00> : vector<64xf32>
    %121 = vector.multi_reduction <add>, %116, %cst_55 [1] : vector<64x256xf32> to vector<64xf32>
    %122 = vector.shape_cast %121 : vector<64xf32> to vector<64x1xf32>
    %cst_56 = arith.constant 2.560000e+02 : f32
    %123 = vector.broadcast %cst_56 : f32 to vector<64x1xf32>
    %124 = arith.divf %122, %123 : vector<64x1xf32>
    %125 = vector.broadcast %124 : vector<64x1xf32> to vector<64x256xf32>
    %126 = arith.subf %116, %125 : vector<64x256xf32>
    %127 = arith.mulf %126, %126 : vector<64x256xf32>
    %cst_57 = arith.constant dense<0.000000e+00> : vector<64xf32>
    %128 = vector.multi_reduction <add>, %127, %cst_57 [1] : vector<64x256xf32> to vector<64xf32>
    %129 = vector.shape_cast %128 : vector<64xf32> to vector<64x1xf32>
    %cst_58 = arith.constant 2.560000e+02 : f32
    %130 = vector.broadcast %cst_58 : f32 to vector<64x1xf32>
    %131 = arith.divf %129, %130 : vector<64x1xf32>
    %cst_59 = arith.constant 9.99999997E-7 : f32
    %132 = vector.broadcast %cst_59 : f32 to vector<64x1xf32>
    %133 = arith.addf %131, %132 : vector<64x1xf32>
    %134 = math.rsqrt %133 : vector<64x1xf32>
    %135 = vector.broadcast %134 : vector<64x1xf32> to vector<64x256xf32>
    %136 = arith.mulf %126, %135 : vector<64x256xf32>
    %137 = vector.broadcast %118 : vector<1x256xf32> to vector<64x256xf32>
    %138 = arith.mulf %136, %137 : vector<64x256xf32>
    %139 = vector.broadcast %120 : vector<1x256xf32> to vector<64x256xf32>
    %140 = arith.addf %138, %139 : vector<64x256xf32>
    %141 = arith.truncf %140 : vector<64x256xf32> to vector<64x256xbf16>
    %c0_60 = arith.constant 0 : index
    %c0_61 = arith.constant 0 : index
    %c0_62 = arith.constant 0 : index
    %142 = vector.load %arg16[%c0_60, %c0_61, %c0_62] : memref<1x256x1024xbf16, #tpu.memory_space<vmem>>, vector<1x256x1024xbf16>
    %143 = vector.shape_cast %142 : vector<1x256x1024xbf16> to vector<256x1024xbf16>
    %cst_63 = arith.constant dense<0.000000e+00> : vector<64x1024xf32>
    %144 = tpu.matmul %141, %143, %cst_63 {dimension_numbers = #tpu.dot_dimension_numbers<[1], [0], [0], [1], [0, 0, 1, 1], [], []>} : vector<64x256xbf16>, vector<256x1024xbf16>, vector<64x1024xf32> -> vector<64x1024xf32>
    %c0_64 = arith.constant 0 : index
    %c0_65 = arith.constant 0 : index
    %c0_66 = arith.constant 0 : index
    %145 = vector.load %arg17[%c0_64, %c0_65, %c0_66] : memref<1x1x1024xf32, #tpu.memory_space<vmem>>, vector<1x1x1024xf32>
    %146 = vector.shape_cast %145 : vector<1x1x1024xf32> to vector<1x1024xf32>
    %147 = vector.broadcast %146 : vector<1x1024xf32> to vector<64x1024xf32>
    %148 = arith.addf %144, %147 : vector<64x1024xf32>
    %cst_67 = arith.constant 5.000000e-01 : f32
    %149 = vector.broadcast %cst_67 : f32 to vector<64x1024xf32>
    %150 = arith.mulf %149, %148 : vector<64x1024xf32>
    %cst_68 = arith.constant 0.707106769 : f32
    %151 = vector.broadcast %cst_68 : f32 to vector<64x1024xf32>
    %152 = arith.mulf %148, %151 : vector<64x1024xf32>
    %153 = math.erf %152 : vector<64x1024xf32>
    %cst_69 = arith.constant 1.000000e+00 : f32
    %154 = vector.broadcast %cst_69 : f32 to vector<64x1024xf32>
    %155 = arith.addf %154, %153 : vector<64x1024xf32>
    %156 = arith.mulf %150, %155 : vector<64x1024xf32>
    %157 = arith.truncf %156 : vector<64x1024xf32> to vector<64x1024xbf16>
    %c0_70 = arith.constant 0 : index
    %c0_71 = arith.constant 0 : index
    %c0_72 = arith.constant 0 : index
    %158 = vector.load %arg18[%c0_70, %c0_71, %c0_72] : memref<1x1024x256xbf16, #tpu.memory_space<vmem>>, vector<1x1024x256xbf16>
    %159 = vector.shape_cast %158 : vector<1x1024x256xbf16> to vector<1024x256xbf16>
    %cst_73 = arith.constant dense<0.000000e+00> : vector<64x256xf32>
    %160 = tpu.matmul %157, %159, %cst_73 {dimension_numbers = #tpu.dot_dimension_numbers<[1], [0], [0], [1], [0, 0, 1, 1], [], []>} : vector<64x1024xbf16>, vector<1024x256xbf16>, vector<64x256xf32> -> vector<64x256xf32>
    %c0_74 = arith.constant 0 : index
    %c0_75 = arith.constant 0 : index
    %c0_76 = arith.constant 0 : index
    %161 = vector.load %arg19[%c0_74, %c0_75, %c0_76] : memref<1x1x256xf32, #tpu.memory_space<vmem>>, vector<1x1x256xf32>
    %162 = vector.shape_cast %161 : vector<1x1x256xf32> to vector<1x256xf32>
    %163 = vector.broadcast %162 : vector<1x256xf32> to vector<64x256xf32>
    %164 = arith.addf %160, %163 : vector<64x256xf32>
    %c0_77 = arith.constant 0 : index
    %c0_78 = arith.constant 0 : index
    %c0_79 = arith.constant 0 : index
    %165 = vector.load %arg20[%c0_77, %c0_78, %c0_79] : memref<1x1x256xf32, #tpu.memory_space<vmem>>, vector<1x1x256xf32>
    %166 = vector.shape_cast %165 : vector<1x1x256xf32> to vector<1x256xf32>
    %167 = vector.broadcast %166 : vector<1x256xf32> to vector<64x256xf32>
    %168 = arith.mulf %167, %164 : vector<64x256xf32>
    %169 = arith.addf %116, %168 : vector<64x256xf32>
    %c0_80 = arith.constant 0 : index
    %c0_81 = arith.constant 0 : index
    %170 = vector.load %arg24[%c0_80, %c0_81] : memref<64x256xf32, #tpu.memory_space<vmem>>, vector<64x256xf32>
    tpu.vector_store %arg24[%c0_80, %c0_81], %169 {strides = array<i32>} : memref<64x256xf32, #tpu.memory_space<vmem>>, vector<64x256xf32>,
    %c5_i32_82 = arith.constant 5 : i32
    %171 = arith.cmpi eq, %arg0, %c5_i32_82 : i32
    %172 = arith.extui %171 : i1 to i32
    %c0_i32_83 = arith.constant 0 : i32
    %173 = arith.cmpi ne, %172, %c0_i32_83 : i32
    scf.if %173 {
      %c0_84 = arith.constant 0 : index
      %c0_85 = arith.constant 0 : index
      %174 = vector.load %arg21[%c0_84, %c0_85] : memref<1x256xf32, #tpu.memory_space<vmem>>, vector<1x256xf32>
      %c0_86 = arith.constant 0 : index
      %c0_87 = arith.constant 0 : index
      %175 = vector.load %arg22[%c0_86, %c0_87] : memref<1x256xf32, #tpu.memory_space<vmem>>, vector<1x256xf32>
      %cst_88 = arith.constant dense<0.000000e+00> : vector<64xf32>
      %176 = vector.multi_reduction <add>, %169, %cst_88 [1] : vector<64x256xf32> to vector<64xf32>
      %177 = vector.shape_cast %176 : vector<64xf32> to vector<64x1xf32>
      %cst_89 = arith.constant 2.560000e+02 : f32
      %178 = vector.broadcast %cst_89 : f32 to vector<64x1xf32>
      %179 = arith.divf %177, %178 : vector<64x1xf32>
      %180 = vector.broadcast %179 : vector<64x1xf32> to vector<64x256xf32>
      %181 = arith.subf %169, %180 : vector<64x256xf32>
      %182 = arith.mulf %181, %181 : vector<64x256xf32>
      %cst_90 = arith.constant dense<0.000000e+00> : vector<64xf32>
      %183 = vector.multi_reduction <add>, %182, %cst_90 [1] : vector<64x256xf32> to vector<64xf32>
      %184 = vector.shape_cast %183 : vector<64xf32> to vector<64x1xf32>
      %cst_91 = arith.constant 2.560000e+02 : f32
      %185 = vector.broadcast %cst_91 : f32 to vector<64x1xf32>
      %186 = arith.divf %184, %185 : vector<64x1xf32>
      %cst_92 = arith.constant 9.99999997E-7 : f32
      %187 = vector.broadcast %cst_92 : f32 to vector<64x1xf32>
      %188 = arith.addf %186, %187 : vector<64x1xf32>
      %189 = math.rsqrt %188 : vector<64x1xf32>
      %190 = vector.broadcast %189 : vector<64x1xf32> to vector<64x256xf32>
      %191 = arith.mulf %181, %190 : vector<64x256xf32>
      %192 = vector.broadcast %174 : vector<1x256xf32> to vector<64x256xf32>
      %193 = arith.mulf %191, %192 : vector<64x256xf32>
      %194 = vector.broadcast %175 : vector<1x256xf32> to vector<64x256xf32>
      %195 = arith.addf %193, %194 : vector<64x256xf32>
      %c0_93 = arith.constant 0 : index
      %c0_94 = arith.constant 0 : index
      %196 = vector.load %arg23[%c0_93, %c0_94] : memref<64x256xf32, #tpu.memory_space<vmem>>, vector<64x256xf32>
      tpu.vector_store %arg23[%c0_93, %c0_94], %195 {strides = array<i32>} : memref<64x256xf32, #tpu.memory_space<vmem>>, vector<64x256xf32>,
    } else {
    }
    return
  }
  func.func @transform_0(%arg0: i32) -> (i32, i32) {
    %c0_i32 = arith.constant 0 : i32
    %c0_i32_0 = arith.constant 0 : i32
    %c0_i32_1 = arith.constant 0 : i32
    return %c0_i32, %c0_i32_0 : i32, i32
  }
  func.func @transform_1(%arg0: i32) -> (i32, i32) {
    %c0_i32 = arith.constant 0 : i32
    %c0_i32_0 = arith.constant 0 : i32
    %c0_i32_1 = arith.constant 0 : i32
    return %c0_i32, %c0_i32_0 : i32, i32
  }
  func.func @transform_2(%arg0: i32) -> (i32, i32) {
    %c0_i32 = arith.constant 0 : i32
    %c0_i32_0 = arith.constant 0 : i32
    %c0_i32_1 = arith.constant 0 : i32
    return %c0_i32, %c0_i32_0 : i32, i32
  }
  func.func @transform_3(%arg0: i32) -> (i32, i32) {
    %c0_i32 = arith.constant 0 : i32
    %c0_i32_0 = arith.constant 0 : i32
    %c0_i32_1 = arith.constant 0 : i32
    return %c0_i32, %c0_i32_0 : i32, i32
  }
  func.func @transform_4(%arg0: i32) -> (i32, i32) {
    %c0_i32 = arith.constant 0 : i32
    %c0_i32_0 = arith.constant 0 : i32
    %c0_i32_1 = arith.constant 0 : i32
    return %c0_i32, %c0_i32_0 : i32, i32
  }
  func.func @transform_5(%arg0: i32) -> (i32, i32) {
    %c0_i32 = arith.constant 0 : i32
    %c0_i32_0 = arith.constant 0 : i32
    %c0_i32_1 = arith.constant 0 : i32
    return %c0_i32, %c0_i32_0 : i32, i32
  }
  func.func @transform_6(%arg0: i32) -> (i32, i32, i32) {
    %c0_i32 = arith.constant 0 : i32
    %c0_i32_0 = arith.constant 0 : i32
    %c0_i32_1 = arith.constant 0 : i32
    return %arg0, %c0_i32, %c0_i32_0 : i32, i32, i32
  }
  func.func @transform_7(%arg0: i32) -> (i32, i32, i32) {
    %c0_i32 = arith.constant 0 : i32
    %c0_i32_0 = arith.constant 0 : i32
    %c0_i32_1 = arith.constant 0 : i32
    return %arg0, %c0_i32, %c0_i32_0 : i32, i32, i32
  }
  func.func @transform_8(%arg0: i32) -> (i32, i32, i32) {
    %c0_i32 = arith.constant 0 : i32
    %c0_i32_0 = arith.constant 0 : i32
    %c0_i32_1 = arith.constant 0 : i32
    return %arg0, %c0_i32, %c0_i32_0 : i32, i32, i32
  }
  func.func @transform_9(%arg0: i32) -> (i32, i32, i32) {
    %c0_i32 = arith.constant 0 : i32
    %c0_i32_0 = arith.constant 0 : i32
    %c0_i32_1 = arith.constant 0 : i32
    return %arg0, %c0_i32, %c0_i32_0 : i32, i32, i32
  }
  func.func @transform_10(%arg0: i32) -> (i32, i32, i32, i32) {
    %c0_i32 = arith.constant 0 : i32
    %c0_i32_0 = arith.constant 0 : i32
    %c0_i32_1 = arith.constant 0 : i32
    %c0_i32_2 = arith.constant 0 : i32
    return %arg0, %c0_i32, %c0_i32_0, %c0_i32_1 : i32, i32, i32, i32
  }
  func.func @transform_11(%arg0: i32) -> (i32, i32, i32) {
    %c0_i32 = arith.constant 0 : i32
    %c0_i32_0 = arith.constant 0 : i32
    %c0_i32_1 = arith.constant 0 : i32
    return %arg0, %c0_i32, %c0_i32_0 : i32, i32, i32
  }
  func.func @transform_12(%arg0: i32) -> (i32, i32, i32) {
    %c0_i32 = arith.constant 0 : i32
    %c0_i32_0 = arith.constant 0 : i32
    %c0_i32_1 = arith.constant 0 : i32
    return %arg0, %c0_i32, %c0_i32_0 : i32, i32, i32
  }
  func.func @transform_13(%arg0: i32) -> (i32, i32, i32) {
    %c0_i32 = arith.constant 0 : i32
    %c0_i32_0 = arith.constant 0 : i32
    %c0_i32_1 = arith.constant 0 : i32
    return %arg0, %c0_i32, %c0_i32_0 : i32, i32, i32
  }
  func.func @transform_14(%arg0: i32) -> (i32, i32, i32) {
    %c0_i32 = arith.constant 0 : i32
    %c0_i32_0 = arith.constant 0 : i32
    %c0_i32_1 = arith.constant 0 : i32
    return %arg0, %c0_i32, %c0_i32_0 : i32, i32, i32
  }
  func.func @transform_15(%arg0: i32) -> (i32, i32, i32) {
    %c0_i32 = arith.constant 0 : i32
    %c0_i32_0 = arith.constant 0 : i32
    %c0_i32_1 = arith.constant 0 : i32
    return %arg0, %c0_i32, %c0_i32_0 : i32, i32, i32
  }
  func.func @transform_16(%arg0: i32) -> (i32, i32, i32) {
    %c0_i32 = arith.constant 0 : i32
    %c0_i32_0 = arith.constant 0 : i32
    %c0_i32_1 = arith.constant 0 : i32
    return %arg0, %c0_i32, %c0_i32_0 : i32, i32, i32
  }
  func.func @transform_17(%arg0: i32) -> (i32, i32, i32) {
    %c0_i32 = arith.constant 0 : i32
    %c0_i32_0 = arith.constant 0 : i32
    %c0_i32_1 = arith.constant 0 : i32
    return %arg0, %c0_i32, %c0_i32_0 : i32, i32, i32
  }
  func.func @transform_18(%arg0: i32) -> (i32, i32, i32) {
    %c0_i32 = arith.constant 0 : i32
    %c0_i32_0 = arith.constant 0 : i32
    %c0_i32_1 = arith.constant 0 : i32
    return %arg0, %c0_i32, %c0_i32_0 : i32, i32, i32
  }
  func.func @transform_19(%arg0: i32) -> (i32, i32, i32) {
    %c0_i32 = arith.constant 0 : i32
    %c0_i32_0 = arith.constant 0 : i32
    %c0_i32_1 = arith.constant 0 : i32
    return %arg0, %c0_i32, %c0_i32_0 : i32, i32, i32
  }
  func.func @transform_20(%arg0: i32) -> (i32, i32) {
    %c0_i32 = arith.constant 0 : i32
    %c0_i32_0 = arith.constant 0 : i32
    %c0_i32_1 = arith.constant 0 : i32
    return %c0_i32, %c0_i32_0 : i32, i32
  }
  func.func @transform_21(%arg0: i32) -> (i32, i32) {
    %c0_i32 = arith.constant 0 : i32
    %c0_i32_0 = arith.constant 0 : i32
    %c0_i32_1 = arith.constant 0 : i32
    return %c0_i32, %c0_i32_0 : i32, i32
  }
  func.func @transform_22(%arg0: i32) -> (i32, i32) {
    %c0_i32 = arith.constant 0 : i32
    %c0_i32_0 = arith.constant 0 : i32
    %c0_i32_1 = arith.constant 0 : i32
    return %c0_i32, %c0_i32_0 : i32, i32
  }
}

</mosaic_0001>

<llo_original>
// kernel: forward.1
$region0: #{forward.1}
  #allocation0 [shape = 'u32[]', space=smem, size = 0x4, offset = 0x4, fixed_abs, tag = 'smem constant byte address 0x4 - core index']
  #allocation1 [shape = 'u32[144,128]{1,0:T(1,128)}', space=vmem, size = 0x12000, scoped, tag = 'internal scratch']
  #allocation2 [shape = 'f32[64,256]{1,0:T(8,128)}', space=vmem, size = 0x10000, scoped, tag = 'scratch operand']
  %s0 = inlined_call_operand.vmem [shape: bf16[32,128], index: 0, kind: input, shape index: {}]
  %s1 = inlined_call_operand.vmem [shape: bf16[128,256], index: 1, kind: input, shape index: {}]
  %s2 = inlined_call_operand.hbm [shape: f32[1,256], index: 2, kind: input, shape index: {}]
  %s3 = inlined_call_operand.hbm [shape: f32[1,256], index: 3, kind: input, shape index: {}]
  %s4 = inlined_call_operand.vmem [shape: f32[17,256], index: 4, kind: input, shape index: {}]
  %s5 = inlined_call_operand.vmem [shape: f32[3,256], index: 5, kind: input, shape index: {}]
  %s6 = inlined_call_operand.hbm [shape: f32[6,1,256], index: 6, kind: input, shape index: {}]
  %s7 = inlined_call_operand.hbm [shape: f32[6,1,256], index: 7, kind: input, shape index: {}]
  %s8 = inlined_call_operand.hbm [shape: bf16[6,256,768], index: 8, kind: input, shape index: {}]
  %s9 = inlined_call_operand.hbm [shape: f32[6,1,768], index: 9, kind: input, shape index: {}]
  %s10 = inlined_call_operand.hbm [shape: bf16[6,2,128,256], index: 10, kind: input, shape index: {}]
  %s11 = inlined_call_operand.hbm [shape: f32[6,1,256], index: 11, kind: input, shape index: {}]
  %s12 = inlined_call_operand.hbm [shape: f32[6,1,256], index: 12, kind: input, shape index: {}]
  %s13 = inlined_call_operand.hbm [shape: f32[6,1,256], index: 13, kind: input, shape index: {}]
  %s14 = inlined_call_operand.hbm [shape: f32[6,1,256], index: 14, kind: input, shape index: {}]
  %s15 = inlined_call_operand.hbm [shape: bf16[6,256,1024], index: 15, kind: input, shape index: {}]
  %s16 = inlined_call_operand.hbm [shape: f32[6,1,1024], index: 16, kind: input, shape index: {}]
  %s17 = inlined_call_operand.hbm [shape: bf16[6,1024,256], index: 17, kind: input, shape index: {}]
  %s18 = inlined_call_operand.hbm [shape: f32[6,1,256], index: 18, kind: input, shape index: {}]
  %s19 = inlined_call_operand.hbm [shape: f32[6,1,256], index: 19, kind: input, shape index: {}]
  %s20 = inlined_call_operand.hbm [shape: f32[1,256], index: 20, kind: input, shape index: {}]
  %s21 = inlined_call_operand.hbm [shape: f32[1,256], index: 21, kind: input, shape index: {}]
  %s22 = inlined_call_operand.vmem [shape: f32[64,256], index: 22, kind: output, shape index: {}]
  %s23 = sld [smem:[#allocation0]]
  $region205: #{forward.1} parent=0
    _
  %s25 = ssub.s32 1, %s23
  %s26 = scalar_select 0, %s25, %s23
  $region1: #{forward.1} parent=0
    #allocation3 [shape = 'u8[1024]{0}', space=vmem, size = 0x400, scoped, tag = 'input window, operand 2, single buffered']
    #allocation4 [shape = 's32[2]{0}', space=sflag, size = 0x8, scoped, tag = 'scoped memory for forward.1']
    #allocation5 [shape = 'u8[1024]{0}', space=vmem, size = 0x400, scoped, tag = 'input window, operand 3, single buffered']
    #allocation6 [shape = 's32[1]{0}', space=sflag, size = 0x4, scoped, tag = 'scoped memory for forward.1']
    #allocation7 [shape = 'u8[2048]{0}', space=vmem, size = 0x800, scoped, tag = 'input window, operand 6']
    #allocation8 [shape = 'u8[2048]{0}', space=vmem, size = 0x800, scoped, tag = 'input window, operand 7']
    #allocation9 [shape = 'u8[786432]{0}', space=vmem, size = 0xc0000, scoped, tag = 'input window, operand 8']
    #allocation10 [shape = 'u8[6144]{0}', space=vmem, size = 0x1800, scoped, tag = 'input window, operand 9']
    #allocation11 [shape = 'u8[262144]{0}', space=vmem, size = 0x40000, scoped, tag = 'input window, operand 10']
    #allocation12 [shape = 'u8[2048]{0}', space=vmem, size = 0x800, scoped, tag = 'input window, operand 11']
    #allocation13 [shape = 'u8[2048]{0}', space=vmem, size = 0x800, scoped, tag = 'input window, operand 12']
    #allocation14 [shape = 'u8[2048]{0}', space=vmem, size = 0x800, scoped, tag = 'input window, operand 13']
    #allocation15 [shape = 'u8[2048]{0}', space=vmem, size = 0x800, scoped, tag = 'input window, operand 14']
    #allocation16 [shape = 'u8[1048576]{0}', space=vmem, size = 0x100000, scoped, tag = 'input window, operand 15']
    #allocation17 [shape = 'u8[8192]{0}', space=vmem, size = 0x2000, scoped, tag = 'input window, operand 16']
    #allocation18 [shape = 'u8[1048576]{0}', space=vmem, size = 0x100000, scoped, tag = 'input window, operand 17']
    #allocation19 [shape = 'u8[2048]{0}', space=vmem, size = 0x800, scoped, tag = 'input window, operand 18']
    #allocation20 [shape = 'u8[2048]{0}', space=vmem, size = 0x800, scoped, tag = 'input window, operand 19']
    #allocation21 [shape = 'u8[1024]{0}', space=vmem, size = 0x400, scoped, tag = 'input window, operand 20, single buffered']
    #allocation22 [shape = 'u8[1024]{0}', space=vmem, size = 0x400, scoped, tag = 'input window, operand 21, single buffered']
    #allocation23 [shape = 's32[1]{0}', space=sflag, size = 0x4, scoped, tag = 'scoped memory for forward.1']
    %27 = vsyncpa [#allocation4], 0
    %28 = vsyncpa [#allocation6], 0
    %29 = vsyncpa [#allocation23], 0
    loop: start=0, step=1, limit=8
    $region2: #{forward.1} parent=1 // loop_pre_header
      _
    $region3: #{forward.1} parent=1 // loop_header
      %s31 = sphi 0, %s35
      %p32 = scmp.ge.s32.totalorder %s31, 8
      %s39 = sphi 0, %s39
      %s41 = sphi 0, %s39
      %s42 = sphi 0, %s41
      %s56 = sphi 0, %s42
      %s60 = sphi 0, %s60
      %s62 = sphi 0, %s60
      %s63 = sphi 0, %s62
      %s77 = sphi 0, %s63
      %s81 = sphi 0, %s81
      %s83 = sphi 0, %s81
      %s84 = sphi 0, %s83
      %s98 = sphi 0, %s84
      %s102 = sphi 0, %s102
      %s104 = sphi 0, %s102
      %s105 = sphi 0, %s104
      %s119 = sphi 0, %s105
      %s123 = sphi 0, %s123
      %s125 = sphi 0, %s123
      %s126 = sphi 0, %s125
      %s140 = sphi 0, %s126
      %s144 = sphi 0, %s144
      %s146 = sphi 0, %s144
      %s147 = sphi 0, %s146
      %s161 = sphi 0, %s147
      %s167 = sphi 0, %s169
      %s170 = sphi 0, %s167
      %s171 = sphi 0, %s170
      %s187 = sphi 0, %s171
      %s193 = sphi 0, %s195
      %s196 = sphi 0, %s193
      %s197 = sphi 0, %s196
      %s213 = sphi 0, %s197
      %s219 = sphi 0, %s221
      %s222 = sphi 0, %s219
      %s223 = sphi 0, %s222
      %s239 = sphi 0, %s223
      %s245 = sphi 0, %s247
      %s248 = sphi 0, %s245
      %s249 = sphi 0, %s248
      %s265 = sphi 0, %s249
      %s271 = sphi 0, %s273
      %s274 = sphi 0, %s271
      %s275 = sphi 0, %s274
      %s291 = sphi 0, %s275
      %s297 = sphi 0, %s299
      %s300 = sphi 0, %s297
      %s301 = sphi 0, %s300
      %s317 = sphi 0, %s301
      %s323 = sphi 0, %s325
      %s326 = sphi 0, %s323
      %s327 = sphi 0, %s326
      %s343 = sphi 0, %s327
      %s349 = sphi 0, %s351
      %s352 = sphi 0, %s349
      %s353 = sphi 0, %s352
      %s369 = sphi 0, %s353
      %s375 = sphi 0, %s377
      %s378 = sphi 0, %s375
      %s379 = sphi 0, %s378
      %s395 = sphi 0, %s379
      %s401 = sphi 0, %s403
      %s404 = sphi 0, %s401
      %s405 = sphi 0, %s404
      %s421 = sphi 0, %s405
      %s427 = sphi 0, %s429
      %s430 = sphi 0, %s427
      %s431 = sphi 0, %s430
      %s447 = sphi 0, %s431
      %s453 = sphi 0, %s455
      %s456 = sphi 0, %s453
      %s457 = sphi 0, %s456
      %s473 = sphi 0, %s457
      %s479 = sphi 0, %s481
      %s482 = sphi 0, %s479
      %s483 = sphi 0, %s482
      %s499 = sphi 0, %s483
      %s505 = sphi 0, %s507
      %s508 = sphi 0, %s505
      %s509 = sphi 0, %s508
      %s525 = sphi 0, %s509
      %s529 = sphi 0, %s529
      %s531 = sphi 0, %s529
      %s532 = sphi 0, %s531
      %s546 = sphi 0, %s532
      %s550 = sphi 0, %s550
      %s552 = sphi 0, %s550
      %s553 = sphi 0, %s552
      %s567 = sphi 0, %s553
      %s571 = sphi 0, %s571
      %s573 = sphi 0, %s571
      %s574 = sphi 0, %s573
      %s588 = sphi 0, %s574
    $region4: #{forward.1} parent=1 // loop_header_branch
      %34 = sbr.rel (%p32) target = $region8
    $region5: #{forward.1} parent=1 // loop_body
      %s36 = ssub.s32 %s31, 1
      %s37 = ssub.s32 %s31, 2
      %s38 = sadd.s32 %s31, 1
      %s40 = sadd.s32 %s39, 1
      %p43 = scmp.eq.s32.totalorder %s31, 5
      %p44 = scmp.ne.s32.totalorder %s39, %s41
      %p45 = scmp.eq.s32.totalorder %s31, 0
      %p46 = por %p44, %p45
      %p47 = scmp.ne.s32.totalorder %s39, %s41
      %p48 = scmp.eq.s32.totalorder %s36, 5
      %p49 = por %p47, %p48
      %p50 = scmp.ne.s32.totalorder %s41, %s42
      %p51 = scmp.eq.s32.totalorder %s36, 0
      %p52 = por %p50, %p51
      %p53 = scmp.ne.s32.totalorder %s41, %s42
      %p54 = scmp.eq.s32.totalorder %s37, 5
      %p55 = por %p53, %p54
      %p57 = scmp.ne.s32.totalorder %s42, %s56
      %p58 = scmp.eq.s32.totalorder %s37, 0
      %p59 = por %p57, %p58
      %s61 = sadd.s32 %s60, 1
      %p64 = scmp.eq.s32.totalorder %s31, 5
      %p65 = scmp.ne.s32.totalorder %s60, %s62
      %p66 = scmp.eq.s32.totalorder %s31, 0
      %p67 = por %p65, %p66
      %p68 = scmp.ne.s32.totalorder %s60, %s62
      %p69 = scmp.eq.s32.totalorder %s36, 5
      %p70 = por %p68, %p69
      %p71 = scmp.ne.s32.totalorder %s62, %s63
      %p72 = scmp.eq.s32.totalorder %s36, 0
      %p73 = por %p71, %p72
      %p74 = scmp.ne.s32.totalorder %s62, %s63
      %p75 = scmp.eq.s32.totalorder %s37, 5
      %p76 = por %p74, %p75
      %p78 = scmp.ne.s32.totalorder %s63, %s77
      %p79 = scmp.eq.s32.totalorder %s37, 0
      %p80 = por %p78, %p79
      %s82 = sadd.s32 %s81, 1
      %p85 = scmp.eq.s32.totalorder %s31, 5
      %p86 = scmp.ne.s32.totalorder %s81, %s83
      %p87 = scmp.eq.s32.totalorder %s31, 0
      %p88 = por %p86, %p87
      %p89 = scmp.ne.s32.totalorder %s81, %s83
      %p90 = scmp.eq.s32.totalorder %s36, 5
      %p91 = por %p89, %p90
      %p92 = scmp.ne.s32.totalorder %s83, %s84
      %p93 = scmp.eq.s32.totalorder %s36, 0
      %p94 = por %p92, %p93
      %p95 = scmp.ne.s32.totalorder %s83, %s84
      %p96 = scmp.eq.s32.totalorder %s37, 5
      %p97 = por %p95, %p96
      %p99 = scmp.ne.s32.totalorder %s84, %s98
      %p100 = scmp.eq.s32.totalorder %s37, 0
      %p101 = por %p99, %p100
      %s103 = sadd.s32 %s102, 1
      %p106 = scmp.eq.s32.totalorder %s31, 5
      %p107 = scmp.ne.s32.totalorder %s102, %s104
      %p108 = scmp.eq.s32.totalorder %s31, 0
      %p109 = por %p107, %p108
      %p110 = scmp.ne.s32.totalorder %s102, %s104
      %p111 = scmp.eq.s32.totalorder %s36, 5
      %p112 = por %p110, %p111
      %p113 = scmp.ne.s32.totalorder %s104, %s105
      %p114 = scmp.eq.s32.totalorder %s36, 0
      %p115 = por %p113, %p114
      %p116 = scmp.ne.s32.totalorder %s104, %s105
      %p117 = scmp.eq.s32.totalorder %s37, 5
      %p118 = por %p116, %p117
      %p120 = scmp.ne.s32.totalorder %s105, %s119
      %p121 = scmp.eq.s32.totalorder %s37, 0
      %p122 = por %p120, %p121
      %s124 = sadd.s32 %s123, 1
      %p127 = scmp.eq.s32.totalorder %s31, 5
      %p128 = scmp.ne.s32.totalorder %s123, %s125
      %p129 = scmp.eq.s32.totalorder %s31, 0
      %p130 = por %p128, %p129
      %p131 = scmp.ne.s32.totalorder %s123, %s125
      %p132 = scmp.eq.s32.totalorder %s36, 5
      %p133 = por %p131, %p132
      %p134 = scmp.ne.s32.totalorder %s125, %s126
      %p135 = scmp.eq.s32.totalorder %s36, 0
      %p136 = por %p134, %p135
      %p137 = scmp.ne.s32.totalorder %s125, %s126
      %p138 = scmp.eq.s32.totalorder %s37, 5
      %p139 = por %p137, %p138
      %p141 = scmp.ne.s32.totalorder %s126, %s140
      %p142 = scmp.eq.s32.totalorder %s37, 0
      %p143 = por %p141, %p142
      %s145 = sadd.s32 %s144, 1
      %p148 = scmp.eq.s32.totalorder %s31, 5
      %p149 = scmp.ne.s32.totalorder %s144, %s146
      %p150 = scmp.eq.s32.totalorder %s31, 0
      %p151 = por %p149, %p150
      %p152 = scmp.ne.s32.totalorder %s144, %s146
      %p153 = scmp.eq.s32.totalorder %s36, 5
      %p154 = por %p152, %p153
      %p155 = scmp.ne.s32.totalorder %s146, %s147
      %p156 = scmp.eq.s32.totalorder %s36, 0
      %p157 = por %p155, %p156
      %p158 = scmp.ne.s32.totalorder %s146, %s147
      %p159 = scmp.eq.s32.totalorder %s37, 5
      %p160 = por %p158, %p159
      %p162 = scmp.ne.s32.totalorder %s147, %s161
      %p163 = scmp.eq.s32.totalorder %s37, 0
      %p164 = por %p162, %p163
      %s165 = ssub.s32 %s31, %s38
      %p166 = scmp.eq.s32.totalorder %s165, 0
      %s168 = sadd.s32 %s167, 1
      %s169 = scalar_select %p166, %s167, %s168
      %p172 = pneg %p166
      %p173 = scmp.eq.s32.totalorder %s31, 5
      %p174 = por %p172, %p173
      %p175 = scmp.ne.s32.totalorder %s167, %s170
      %p176 = scmp.eq.s32.totalorder %s31, 0
      %p177 = por %p175, %p176
      %p178 = scmp.ne.s32.totalorder %s167, %s170
      %p179 = scmp.eq.s32.totalorder %s36, 5
      %p180 = por %p178, %p179
      %p181 = scmp.ne.s32.totalorder %s170, %s171
      %p182 = scmp.eq.s32.totalorder %s36, 0
      %p183 = por %p181, %p182
      %p184 = scmp.ne.s32.totalorder %s170, %s171
      %p185 = scmp.eq.s32.totalorder %s37, 5
      %p186 = por %p184, %p185
      %p188 = scmp.ne.s32.totalorder %s171, %s187
      %p189 = scmp.eq.s32.totalorder %s37, 0
      %p190 = por %p188, %p189
      %s191 = ssub.s32 %s31, %s38
      %p192 = scmp.eq.s32.totalorder %s191, 0
      %s194 = sadd.s32 %s193, 1
      %s195 = scalar_select %p192, %s193, %s194
      %p198 = pneg %p192
      %p199 = scmp.eq.s32.totalorder %s31, 5
      %p200 = por %p198, %p199
      %p201 = scmp.ne.s32.totalorder %s193, %s196
      %p202 = scmp.eq.s32.totalorder %s31, 0
      %p203 = por %p201, %p202
      %p204 = scmp.ne.s32.totalorder %s193, %s196
      %p205 = scmp.eq.s32.totalorder %s36, 5
      %p206 = por %p204, %p205
      %p207 = scmp.ne.s32.totalorder %s196, %s197
      %p208 = scmp.eq.s32.totalorder %s36, 0
      %p209 = por %p207, %p208
      %p210 = scmp.ne.s32.totalorder %s196, %s197
      %p211 = scmp.eq.s32.totalorder %s37, 5
      %p212 = por %p210, %p211
      %p214 = scmp.ne.s32.totalorder %s197, %s213
      %p215 = scmp.eq.s32.totalorder %s37, 0
      %p216 = por %p214, %p215
      %s217 = ssub.s32 %s31, %s38
      %p218 = scmp.eq.s32.totalorder %s217, 0
      %s220 = sadd.s32 %s219, 1
      %s221 = scalar_select %p218, %s219, %s220
      %p224 = pneg %p218
      %p225 = scmp.eq.s32.totalorder %s31, 5
      %p226 = por %p224, %p225
      %p227 = scmp.ne.s32.totalorder %s219, %s222
      %p228 = scmp.eq.s32.totalorder %s31, 0
      %p229 = por %p227, %p228
      %p230 = scmp.ne.s32.totalorder %s219, %s222
      %p231 = scmp.eq.s32.totalorder %s36, 5
      %p232 = por %p230, %p231
      %p233 = scmp.ne.s32.totalorder %s222, %s223
      %p234 = scmp.eq.s32.totalorder %s36, 0
      %p235 = por %p233, %p234
      %p236 = scmp.ne.s32.totalorder %s222, %s223
      %p237 = scmp.eq.s32.totalorder %s37, 5
      %p238 = por %p236, %p237
      %p240 = scmp.ne.s32.totalorder %s223, %s239
      %p241 = scmp.eq.s32.totalorder %s37, 0
      %p242 = por %p240, %p241
      %s243 = ssub.s32 %s31, %s38
      %p244 = scmp.eq.s32.totalorder %s243, 0
      %s246 = sadd.s32 %s245, 1
      %s247 = scalar_select %p244, %s245, %s246
      %p250 = pneg %p244
      %p251 = scmp.eq.s32.totalorder %s31, 5
      %p252 = por %p250, %p251
      %p253 = scmp.ne.s32.totalorder %s245, %s248
      %p254 = scmp.eq.s32.totalorder %s31, 0
      %p255 = por %p253, %p254
      %p256 = scmp.ne.s32.totalorder %s245, %s248
      %p257 = scmp.eq.s32.totalorder %s36, 5
      %p258 = por %p256, %p257
      %p259 = scmp.ne.s32.totalorder %s248, %s249
      %p260 = scmp.eq.s32.totalorder %s36, 0
      %p261 = por %p259, %p260
      %p262 = scmp.ne.s32.totalorder %s248, %s249
      %p263 = scmp.eq.s32.totalorder %s37, 5
      %p264 = por %p262, %p263
      %p266 = scmp.ne.s32.totalorder %s249, %s265
      %p267 = scmp.eq.s32.totalorder %s37, 0
      %p268 = por %p266, %p267
      %s269 = ssub.s32 %s31, %s38
      %p270 = scmp.eq.s32.totalorder %s269, 0
      %s272 = sadd.s32 %s271, 1
      %s273 = scalar_select %p270, %s271, %s272
      %p276 = pneg %p270
      %p277 = scmp.eq.s32.totalorder %s31, 5
      %p278 = por %p276, %p277
      %p279 = scmp.ne.s32.totalorder %s271, %s274
      %p280 = scmp.eq.s32.totalorder %s31, 0
      %p281 = por %p279, %p280
      %p282 = scmp.ne.s32.totalorder %s271, %s274
      %p283 = scmp.eq.s32.totalorder %s36, 5
      %p284 = por %p282, %p283
      %p285 = scmp.ne.s32.totalorder %s274, %s275
      %p286 = scmp.eq.s32.totalorder %s36, 0
      %p287 = por %p285, %p286
      %p288 = scmp.ne.s32.totalorder %s274, %s275
      %p289 = scmp.eq.s32.totalorder %s37, 5
      %p290 = por %p288, %p289
      %p292 = scmp.ne.s32.totalorder %s275, %s291
      %p293 = scmp.eq.s32.totalorder %s37, 0
      %p294 = por %p292, %p293
      %s295 = ssub.s32 %s31, %s38
      %p296 = scmp.eq.s32.totalorder %s295, 0
      %s298 = sadd.s32 %s297, 1
      %s299 = scalar_select %p296, %s297, %s298
      %p302 = pneg %p296
      %p303 = scmp.eq.s32.totalorder %s31, 5
      %p304 = por %p302, %p303
      %p305 = scmp.ne.s32.totalorder %s297, %s300
      %p306 = scmp.eq.s32.totalorder %s31, 0
      %p307 = por %p305, %p306
      %p308 = scmp.ne.s32.totalorder %s297, %s300
      %p309 = scmp.eq.s32.totalorder %s36, 5
      %p310 = por %p308, %p309
      %p311 = scmp.ne.s32.totalorder %s300, %s301
      %p312 = scmp.eq.s32.totalorder %s36, 0
      %p313 = por %p311, %p312
      %p314 = scmp.ne.s32.totalorder %s300, %s301
      %p315 = scmp.eq.s32.totalorder %s37, 5
      %p316 = por %p314, %p315
      %p318 = scmp.ne.s32.totalorder %s301, %s317
      %p319 = scmp.eq.s32.totalorder %s37, 0
      %p320 = por %p318, %p319
      %s321 = ssub.s32 %s31, %s38
      %p322 = scmp.eq.s32.totalorder %s321, 0
      %s324 = sadd.s32 %s323, 1
      %s325 = scalar_select %p322, %s323, %s324
      %p328 = pneg %p322
      %p329 = scmp.eq.s32.totalorder %s31, 5
      %p330 = por %p328, %p329
      %p331 = scmp.ne.s32.totalorder %s323, %s326
      %p332 = scmp.eq.s32.totalorder %s31, 0
      %p333 = por %p331, %p332
      %p334 = scmp.ne.s32.totalorder %s323, %s326
      %p335 = scmp.eq.s32.totalorder %s36, 5
      %p336 = por %p334, %p335
      %p337 = scmp.ne.s32.totalorder %s326, %s327
      %p338 = scmp.eq.s32.totalorder %s36, 0
      %p339 = por %p337, %p338
      %p340 = scmp.ne.s32.totalorder %s326, %s327
      %p341 = scmp.eq.s32.totalorder %s37, 5
      %p342 = por %p340, %p341
      %p344 = scmp.ne.s32.totalorder %s327, %s343
      %p345 = scmp.eq.s32.totalorder %s37, 0
      %p346 = por %p344, %p345
      %s347 = ssub.s32 %s31, %s38
      %p348 = scmp.eq.s32.totalorder %s347, 0
      %s350 = sadd.s32 %s349, 1
      %s351 = scalar_select %p348, %s349, %s350
      %p354 = pneg %p348
      %p355 = scmp.eq.s32.totalorder %s31, 5
      %p356 = por %p354, %p355
      %p357 = scmp.ne.s32.totalorder %s349, %s352
      %p358 = scmp.eq.s32.totalorder %s31, 0
      %p359 = por %p357, %p358
      %p360 = scmp.ne.s32.totalorder %s349, %s352
      %p361 = scmp.eq.s32.totalorder %s36, 5
      %p362 = por %p360, %p361
      %p363 = scmp.ne.s32.totalorder %s352, %s353
      %p364 = scmp.eq.s32.totalorder %s36, 0
      %p365 = por %p363, %p364
      %p366 = scmp.ne.s32.totalorder %s352, %s353
      %p367 = scmp.eq.s32.totalorder %s37, 5
      %p368 = por %p366, %p367
      %p370 = scmp.ne.s32.totalorder %s353, %s369
      %p371 = scmp.eq.s32.totalorder %s37, 0
      %p372 = por %p370, %p371
      %s373 = ssub.s32 %s31, %s38
      %p374 = scmp.eq.s32.totalorder %s373, 0
      %s376 = sadd.s32 %s375, 1
      %s377 = scalar_select %p374, %s375, %s376
      %p380 = pneg %p374
      %p381 = scmp.eq.s32.totalorder %s31, 5
      %p382 = por %p380, %p381
      %p383 = scmp.ne.s32.totalorder %s375, %s378
      %p384 = scmp.eq.s32.totalorder %s31, 0
      %p385 = por %p383, %p384
      %p386 = scmp.ne.s32.totalorder %s375, %s378
      %p387 = scmp.eq.s32.totalorder %s36, 5
      %p388 = por %p386, %p387
      %p389 = scmp.ne.s32.totalorder %s378, %s379
      %p390 = scmp.eq.s32.totalorder %s36, 0
      %p391 = por %p389, %p390
      %p392 = scmp.ne.s32.totalorder %s378, %s379
      %p393 = scmp.eq.s32.totalorder %s37, 5
      %p394 = por %p392, %p393
      %p396 = scmp.ne.s32.totalorder %s379, %s395
      %p397 = scmp.eq.s32.totalorder %s37, 0
      %p398 = por %p396, %p397
      %s399 = ssub.s32 %s31, %s38
      %p400 = scmp.eq.s32.totalorder %s399, 0
      %s402 = sadd.s32 %s401, 1
      %s403 = scalar_select %p400, %s401, %s402
      %p406 = pneg %p400
      %p407 = scmp.eq.s32.totalorder %s31, 5
      %p408 = por %p406, %p407
      %p409 = scmp.ne.s32.totalorder %s401, %s404
      %p410 = scmp.eq.s32.totalorder %s31, 0
      %p411 = por %p409, %p410
      %p412 = scmp.ne.s32.totalorder %s401, %s404
      %p413 = scmp.eq.s32.totalorder %s36, 5
      %p414 = por %p412, %p413
      %p415 = scmp.ne.s32.totalorder %s404, %s405
      %p416 = scmp.eq.s32.totalorder %s36, 0
      %p417 = por %p415, %p416
      %p418 = scmp.ne.s32.totalorder %s404, %s405
      %p419 = scmp.eq.s32.totalorder %s37, 5
      %p420 = por %p418, %p419
      %p422 = scmp.ne.s32.totalorder %s405, %s421
      %p423 = scmp.eq.s32.totalorder %s37, 0
      %p424 = por %p422, %p423
      %s425 = ssub.s32 %s31, %s38
      %p426 = scmp.eq.s32.totalorder %s425, 0
      %s428 = sadd.s32 %s427, 1
      %s429 = scalar_select %p426, %s427, %s428
      %p432 = pneg %p426
      %p433 = scmp.eq.s32.totalorder %s31, 5
      %p434 = por %p432, %p433
      %p435 = scmp.ne.s32.totalorder %s427, %s430
      %p436 = scmp.eq.s32.totalorder %s31, 0
      %p437 = por %p435, %p436
      %p438 = scmp.ne.s32.totalorder %s427, %s430
      %p439 = scmp.eq.s32.totalorder %s36, 5
      %p440 = por %p438, %p439
      %p441 = scmp.ne.s32.totalorder %s430, %s431
      %p442 = scmp.eq.s32.totalorder %s36, 0
      %p443 = por %p441, %p442
      %p444 = scmp.ne.s32.totalorder %s430, %s431
      %p445 = scmp.eq.s32.totalorder %s37, 5
      %p446 = por %p444, %p445
      %p448 = scmp.ne.s32.totalorder %s431, %s447
      %p449 = scmp.eq.s32.totalorder %s37, 0
      %p450 = por %p448, %p449
      %s451 = ssub.s32 %s31, %s38
      %p452 = scmp.eq.s32.totalorder %s451, 0
      %s454 = sadd.s32 %s453, 1
      %s455 = scalar_select %p452, %s453, %s454
      %p458 = pneg %p452
      %p459 = scmp.eq.s32.totalorder %s31, 5
      %p460 = por %p458, %p459
      %p461 = scmp.ne.s32.totalorder %s453, %s456
      %p462 = scmp.eq.s32.totalorder %s31, 0
      %p463 = por %p461, %p462
      %p464 = scmp.ne.s32.totalorder %s453, %s456
      %p465 = scmp.eq.s32.totalorder %s36, 5
      %p466 = por %p464, %p465
      %p467 = scmp.ne.s32.totalorder %s456, %s457
      %p468 = scmp.eq.s32.totalorder %s36, 0
      %p469 = por %p467, %p468
      %p470 = scmp.ne.s32.totalorder %s456, %s457
      %p471 = scmp.eq.s32.totalorder %s37, 5
      %p472 = por %p470, %p471
      %p474 = scmp.ne.s32.totalorder %s457, %s473
      %p475 = scmp.eq.s32.totalorder %s37, 0
      %p476 = por %p474, %p475
      %s477 = ssub.s32 %s31, %s38
      %p478 = scmp.eq.s32.totalorder %s477, 0
      %s480 = sadd.s32 %s479, 1
      %s481 = scalar_select %p478, %s479, %s480
      %p484 = pneg %p478
      %p485 = scmp.eq.s32.totalorder %s31, 5
      %p486 = por %p484, %p485
      %p487 = scmp.ne.s32.totalorder %s479, %s482
      %p488 = scmp.eq.s32.totalorder %s31, 0
      %p489 = por %p487, %p488
      %p490 = scmp.ne.s32.totalorder %s479, %s482
      %p491 = scmp.eq.s32.totalorder %s36, 5
      %p492 = por %p490, %p491
      %p493 = scmp.ne.s32.totalorder %s482, %s483
      %p494 = scmp.eq.s32.totalorder %s36, 0
      %p495 = por %p493, %p494
      %p496 = scmp.ne.s32.totalorder %s482, %s483
      %p497 = scmp.eq.s32.totalorder %s37, 5
      %p498 = por %p496, %p497
      %p500 = scmp.ne.s32.totalorder %s483, %s499
      %p501 = scmp.eq.s32.totalorder %s37, 0
      %p502 = por %p500, %p501
      %s503 = ssub.s32 %s31, %s38
      %p504 = scmp.eq.s32.totalorder %s503, 0
      %s506 = sadd.s32 %s505, 1
      %s507 = scalar_select %p504, %s505, %s506
      %p510 = pneg %p504
      %p511 = scmp.eq.s32.totalorder %s31, 5
      %p512 = por %p510, %p511
      %p513 = scmp.ne.s32.totalorder %s505, %s508
      %p514 = scmp.eq.s32.totalorder %s31, 0
      %p515 = por %p513, %p514
      %p516 = scmp.ne.s32.totalorder %s505, %s508
      %p517 = scmp.eq.s32.totalorder %s36, 5
      %p518 = por %p516, %p517
      %p519 = scmp.ne.s32.totalorder %s508, %s509
      %p520 = scmp.eq.s32.totalorder %s36, 0
      %p521 = por %p519, %p520
      %p522 = scmp.ne.s32.totalorder %s508, %s509
      %p523 = scmp.eq.s32.totalorder %s37, 5
      %p524 = por %p522, %p523
      %p526 = scmp.ne.s32.totalorder %s509, %s525
      %p527 = scmp.eq.s32.totalorder %s37, 0
      %p528 = por %p526, %p527
      %s530 = sadd.s32 %s529, 1
      %p533 = scmp.eq.s32.totalorder %s31, 5
      %p534 = scmp.ne.s32.totalorder %s529, %s531
      %p535 = scmp.eq.s32.totalorder %s31, 0
      %p536 = por %p534, %p535
      %p537 = scmp.ne.s32.totalorder %s529, %s531
      %p538 = scmp.eq.s32.totalorder %s36, 5
      %p539 = por %p537, %p538
      %p540 = scmp.ne.s32.totalorder %s531, %s532
      %p541 = scmp.eq.s32.totalorder %s36, 0
      %p542 = por %p540, %p541
      %p543 = scmp.ne.s32.totalorder %s531, %s532
      %p544 = scmp.eq.s32.totalorder %s37, 5
      %p545 = por %p543, %p544
      %p547 = scmp.ne.s32.totalorder %s532, %s546
      %p548 = scmp.eq.s32.totalorder %s37, 0
      %p549 = por %p547, %p548
      %s551 = sadd.s32 %s550, 1
      %p554 = scmp.eq.s32.totalorder %s31, 5
      %p555 = scmp.ne.s32.totalorder %s550, %s552
      %p556 = scmp.eq.s32.totalorder %s31, 0
      %p557 = por %p555, %p556
      %p558 = scmp.ne.s32.totalorder %s550, %s552
      %p559 = scmp.eq.s32.totalorder %s36, 5
      %p560 = por %p558, %p559
      %p561 = scmp.ne.s32.totalorder %s552, %s553
      %p562 = scmp.eq.s32.totalorder %s36, 0
      %p563 = por %p561, %p562
      %p564 = scmp.ne.s32.totalorder %s552, %s553
      %p565 = scmp.eq.s32.totalorder %s37, 5
      %p566 = por %p564, %p565
      %p568 = scmp.ne.s32.totalorder %s553, %s567
      %p569 = scmp.eq.s32.totalorder %s37, 0
      %p570 = por %p568, %p569
      %s572 = sadd.s32 %s571, 1
      %p575 = scmp.eq.s32.totalorder %s31, 5
      %p576 = scmp.ne.s32.totalorder %s571, %s573
      %p577 = scmp.eq.s32.totalorder %s31, 0
      %p578 = por %p576, %p577
      %p579 = scmp.ne.s32.totalorder %s571, %s573
      %p580 = scmp.eq.s32.totalorder %s36, 5
      %p581 = por %p579, %p580
      %p582 = scmp.ne.s32.totalorder %s573, %s574
      %p583 = scmp.eq.s32.totalorder %s36, 0
      %p584 = por %p582, %p583
      %p585 = scmp.ne.s32.totalorder %s573, %s574
      %p586 = scmp.eq.s32.totalorder %s37, 5
      %p587 = por %p585, %p586
      %p589 = scmp.ne.s32.totalorder %s574, %s588
      %p590 = scmp.eq.s32.totalorder %s37, 0
      %p591 = por %p589, %p590
      %p592 = scmp.le.s32.totalorder 1, %s31
      %p593 = scmp.lt.s32.totalorder %s31, 7
      %p594 = pnand %p592, %p593
      %p595 = pneg %p594
      // Predicated region
      $region9: #{forward.1} parent=5 // pred_check
        _
      $region10: #{forward.1} parent=5 // pred_check_branch
        %597 = sbr.rel (%p594) target = $region12
      $region11: #{forward.1} parent=5 // pred_region
        %s598 = ssub.s32 %s31, 1
        // Predicated region
        $region13: #{forward.1} parent=11 // pred_check
          %p599 = pneg %p52
        $region14: #{forward.1} parent=11 // pred_check_branch
          %601 = sbr.rel (%p599) target = $region16
        $region15: #{forward.1} parent=11 // pred_region
          _
        $region16: #{forward.1} parent=11 // pred_fallthru
          _
        // Predicated region
        $region17: #{forward.1} parent=11 // pred_check
          %p602 = pneg %p73
        $region18: #{forward.1} parent=11 // pred_check_branch
          %604 = sbr.rel (%p602) target = $region20
        $region19: #{forward.1} parent=11 // pred_region
          _
        $region20: #{forward.1} parent=11 // pred_fallthru
          _
        // Predicated region
        $region21: #{forward.1} parent=11 // pred_check
          %p605 = pneg %p94
        $region22: #{forward.1} parent=11 // pred_check_branch
          %607 = sbr.rel (%p605) target = $region24
        $region23: #{forward.1} parent=11 // pred_region
          %s609 = ssub.s32 32, 32
          %610 = vsyncadd [#allocation4], %s609
          %s612 = sshll.u32 [#allocation3], 4
          %s613 = int_to_ptr.vmem [resolvable:$true] %s612
          %615 = dma.hbm_to_vmem [thread:$0]  %s2, 32, %s613, [#allocation4]
        $region24: #{forward.1} parent=11 // pred_fallthru
          _
        // Predicated region
        $region25: #{forward.1} parent=11 // pred_check
          %p616 = pneg %p115
        $region26: #{forward.1} parent=11 // pred_check_branch
          %618 = sbr.rel (%p616) target = $region28
        $region27: #{forward.1} parent=11 // pred_region
          %s620 = ssub.s32 32, 32
          %621 = vsyncadd [#allocation6], %s620
          %s623 = sshll.u32 [#allocation5], 4
          %s624 = int_to_ptr.vmem [resolvable:$true] %s623
          %626 = dma.hbm_to_vmem [thread:$0]  %s3, 32, %s624, [#allocation6]
        $region28: #{forward.1} parent=11 // pred_fallthru
          _
        // Predicated region
        $region29: #{forward.1} parent=11 // pred_check
          %p627 = pneg %p136
        $region30: #{forward.1} parent=11 // pred_check_branch
          %629 = sbr.rel (%p627) target = $region32
        $region31: #{forward.1} parent=11 // pred_region
          _
        $region32: #{forward.1} parent=11 // pred_fallthru
          _
        // Predicated region
        $region33: #{forward.1} parent=11 // pred_check
          %p630 = pneg %p157
        $region34: #{forward.1} parent=11 // pred_check_branch
          %632 = sbr.rel (%p630) target = $region36
        $region35: #{forward.1} parent=11 // pred_region
          _
        $region36: #{forward.1} parent=11 // pred_fallthru
          _
        // Predicated region
        $region37: #{forward.1} parent=11 // pred_check
          %p633 = pneg %p542
        $region38: #{forward.1} parent=11 // pred_check_branch
          %635 = sbr.rel (%p633) target = $region40
        $region39: #{forward.1} parent=11 // pred_region
          %s637 = ssub.s32 32, 32
          %638 = vsyncadd [#allocation6], %s637
          %s640 = sshll.u32 [#allocation21], 4
          %s641 = int_to_ptr.vmem [resolvable:$true] %s640
          %643 = dma.hbm_to_vmem [thread:$0]  %s20, 32, %s641, [#allocation6]
        $region40: #{forward.1} parent=11 // pred_fallthru
          _
        // Predicated region
        $region41: #{forward.1} parent=11 // pred_check
          %p644 = pneg %p563
        $region42: #{forward.1} parent=11 // pred_check_branch
          %646 = sbr.rel (%p644) target = $region44
        $region43: #{forward.1} parent=11 // pred_region
          %s648 = ssub.s32 32, 32
          %649 = vsyncadd [#allocation23], %s648
          %s651 = sshll.u32 [#allocation22], 4
          %s652 = int_to_ptr.vmem [resolvable:$true] %s651
          %654 = dma.hbm_to_vmem [thread:$0]  %s21, 32, %s652, [#allocation23]
        $region44: #{forward.1} parent=11 // pred_fallthru
          _
      $region12: #{forward.1} parent=5 // pred_fallthru
        _
      %p655 = scmp.lt.s32.totalorder %s31, 6
      // Predicated region
      $region45: #{forward.1} parent=5 // pred_check
        %p656 = pneg %p655
      $region46: #{forward.1} parent=5 // pred_check_branch
        %658 = sbr.rel (%p656) target = $region48
      $region47: #{forward.1} parent=5 // pred_region
        // Predicated region
        $region49: #{forward.1} parent=47 // pred_check
          %p659 = pneg %p177
        $region50: #{forward.1} parent=47 // pred_check_branch
          %661 = sbr.rel (%p659) target = $region52
        $region51: #{forward.1} parent=47 // pred_region
          %s662 = sand.u32 %s31, 1
          %s663 = scalar_lea.sflag [#allocation4], %s662
          %s664 = sand.u32 %s167, 1
          %s665 = smul.addr %s664, 2
          %s666 = scalar_lea.vmem [#allocation7], %s665
          %s668 = ssub.s32 32, 32
          %669 = vsyncadd %s663, %s668
          %s670 = smul.addr %s31, 2
          %s671 = smul.addr %s670, 16
          %s672 = scalar_lea.hbm %s6, %s671
          %s674 = sshll.u32 %s666, 4
          %s675 = int_to_ptr.vmem [resolvable:$true] %s674
          %677 = dma.hbm_to_vmem [thread:$0]  %s672, 32, %s675, %s663
        $region52: #{forward.1} parent=47 // pred_fallthru
          _
        // Predicated region
        $region53: #{forward.1} parent=47 // pred_check
          %p678 = pneg %p203
        $region54: #{forward.1} parent=47 // pred_check_branch
          %680 = sbr.rel (%p678) target = $region56
        $region55: #{forward.1} parent=47 // pred_region
          %s681 = sand.u32 %s31, 1
          %s682 = scalar_lea.sflag [#allocation4], %s681
          %s683 = sand.u32 %s193, 1
          %s684 = smul.addr %s683, 2
          %s685 = scalar_lea.vmem [#allocation8], %s684
          %s687 = ssub.s32 32, 32
          %688 = vsyncadd %s682, %s687
          %s689 = smul.addr %s31, 2
          %s690 = smul.addr %s689, 16
          %s691 = scalar_lea.hbm %s7, %s690
          %s693 = sshll.u32 %s685, 4
          %s694 = int_to_ptr.vmem [resolvable:$true] %s693
          %696 = dma.hbm_to_vmem [thread:$0]  %s691, 32, %s694, %s682
        $region56: #{forward.1} parent=47 // pred_fallthru
          _
        // Predicated region
        $region57: #{forward.1} parent=47 // pred_check
          %p697 = pneg %p229
        $region58: #{forward.1} parent=47 // pred_check_branch
          %699 = sbr.rel (%p697) target = $region60
        $region59: #{forward.1} parent=47 // pred_region
          %s700 = sand.u32 %s31, 1
          %s701 = scalar_lea.sflag [#allocation4], %s700
          %s702 = sand.u32 %s219, 1
          %s703 = smul.addr %s702, 768
          %s704 = scalar_lea.vmem [#allocation9], %s703
          %s706 = ssub.s32 12288, 12288
          %707 = vsyncadd %s701, %s706
          %s708 = smul.addr %s31, 192
          %s709 = smul.addr %s708, 64
          %s710 = scalar_lea.hbm %s8, %s709
          %s711 = sshll.u32 %s704, 4
          %s712 = int_to_ptr.vmem [resolvable:$true] %s711
          %717 = dma.hbm_to_vmem [thread:$0]  %s710, 12288, %s712, %s701, 384, 384, 24
        $region60: #{forward.1} parent=47 // pred_fallthru
          _
        // Predicated region
        $region61: #{forward.1} parent=47 // pred_check
          %p718 = pneg %p255
        $region62: #{forward.1} parent=47 // pred_check_branch
          %720 = sbr.rel (%p718) target = $region64
        $region63: #{forward.1} parent=47 // pred_region
          %s721 = sand.u32 %s31, 1
          %s722 = scalar_lea.sflag [#allocation4], %s721
          %s723 = sand.u32 %s245, 1
          %s724 = smul.addr %s723, 6
          %s725 = scalar_lea.vmem [#allocation10], %s724
          %s727 = ssub.s32 96, 96
          %728 = vsyncadd %s722, %s727
          %s729 = smul.addr %s31, 6
          %s730 = smul.addr %s729, 16
          %s731 = scalar_lea.hbm %s9, %s730
          %s733 = sshll.u32 %s725, 4
          %s734 = int_to_ptr.vmem [resolvable:$true] %s733
          %736 = dma.hbm_to_vmem [thread:$0]  %s731, 96, %s734, %s722
        $region64: #{forward.1} parent=47 // pred_fallthru
          _
        // Predicated region
        $region65: #{forward.1} parent=47 // pred_check
          %p737 = pneg %p281
        $region66: #{forward.1} parent=47 // pred_check_branch
          %739 = sbr.rel (%p737) target = $region68
        $region67: #{forward.1} parent=47 // pred_region
          %s740 = sand.u32 %s31, 1
          %s741 = scalar_lea.sflag [#allocation4], %s740
          %s742 = sand.u32 %s271, 1
          %s743 = smul.addr %s742, 256
          %s744 = scalar_lea.vmem [#allocation11], %s743
          %s746 = ssub.s32 4096, 4096
          %747 = vsyncadd %s741, %s746
          %s748 = smul.addr %s31, 64
          %s749 = smul.addr %s748, 64
          %s750 = scalar_lea.hbm %s10, %s749
          %s751 = sshll.u32 %s744, 4
          %s752 = int_to_ptr.vmem [resolvable:$true] %s751
          %757 = dma.hbm_to_vmem [thread:$0]  %s750, 4096, %s752, %s741, 128, 128, 8
        $region68: #{forward.1} parent=47 // pred_fallthru
          _
        // Predicated region
        $region69: #{forward.1} parent=47 // pred_check
          %p758 = pneg %p307
        $region70: #{forward.1} parent=47 // pred_check_branch
          %760 = sbr.rel (%p758) target = $region72
        $region71: #{forward.1} parent=47 // pred_region
          %s761 = sand.u32 %s31, 1
          %s762 = scalar_lea.sflag [#allocation4], %s761
          %s763 = sand.u32 %s297, 1
          %s764 = smul.addr %s763, 2
          %s765 = scalar_lea.vmem [#allocation12], %s764
          %s767 = ssub.s32 32, 32
          %768 = vsyncadd %s762, %s767
          %s769 = smul.addr %s31, 2
          %s770 = smul.addr %s769, 16
          %s771 = scalar_lea.hbm %s11, %s770
          %s773 = sshll.u32 %s765, 4
          %s774 = int_to_ptr.vmem [resolvable:$true] %s773
          %776 = dma.hbm_to_vmem [thread:$0]  %s771, 32, %s774, %s762
        $region72: #{forward.1} parent=47 // pred_fallthru
          _
        // Predicated region
        $region73: #{forward.1} parent=47 // pred_check
          %p777 = pneg %p333
        $region74: #{forward.1} parent=47 // pred_check_branch
          %779 = sbr.rel (%p777) target = $region76
        $region75: #{forward.1} parent=47 // pred_region
          %s780 = sand.u32 %s31, 1
          %s781 = scalar_lea.sflag [#allocation4], %s780
          %s782 = sand.u32 %s323, 1
          %s783 = smul.addr %s782, 2
          %s784 = scalar_lea.vmem [#allocation13], %s783
          %s786 = ssub.s32 32, 32
          %787 = vsyncadd %s781, %s786
          %s788 = smul.addr %s31, 2
          %s789 = smul.addr %s788, 16
          %s790 = scalar_lea.hbm %s12, %s789
          %s792 = sshll.u32 %s784, 4
          %s793 = int_to_ptr.vmem [resolvable:$true] %s792
          %795 = dma.hbm_to_vmem [thread:$0]  %s790, 32, %s793, %s781
        $region76: #{forward.1} parent=47 // pred_fallthru
          _
        // Predicated region
        $region77: #{forward.1} parent=47 // pred_check
          %p796 = pneg %p359
        $region78: #{forward.1} parent=47 // pred_check_branch
          %798 = sbr.rel (%p796) target = $region80
        $region79: #{forward.1} parent=47 // pred_region
          %s799 = sand.u32 %s31, 1
          %s800 = scalar_lea.sflag [#allocation4], %s799
          %s801 = sand.u32 %s349, 1
          %s802 = smul.addr %s801, 2
          %s803 = scalar_lea.vmem [#allocation14], %s802
          %s805 = ssub.s32 32, 32
          %806 = vsyncadd %s800, %s805
          %s807 = smul.addr %s31, 2
          %s808 = smul.addr %s807, 16
          %s809 = scalar_lea.hbm %s13, %s808
          %s811 = sshll.u32 %s803, 4
          %s812 = int_to_ptr.vmem [resolvable:$true] %s811
          %814 = dma.hbm_to_vmem [thread:$0]  %s809, 32, %s812, %s800
        $region80: #{forward.1} parent=47 // pred_fallthru
          _
        // Predicated region
        $region81: #{forward.1} parent=47 // pred_check
          %p815 = pneg %p385
        $region82: #{forward.1} parent=47 // pred_check_branch
          %817 = sbr.rel (%p815) target = $region84
        $region83: #{forward.1} parent=47 // pred_region
          %s818 = sand.u32 %s31, 1
          %s819 = scalar_lea.sflag [#allocation4], %s818
          %s820 = sand.u32 %s375, 1
          %s821 = smul.addr %s820, 2
          %s822 = scalar_lea.vmem [#allocation15], %s821
          %s824 = ssub.s32 32, 32
          %825 = vsyncadd %s819, %s824
          %s826 = smul.addr %s31, 2
          %s827 = smul.addr %s826, 16
          %s828 = scalar_lea.hbm %s14, %s827
          %s830 = sshll.u32 %s822, 4
          %s831 = int_to_ptr.vmem [resolvable:$true] %s830
          %833 = dma.hbm_to_vmem [thread:$0]  %s828, 32, %s831, %s819
        $region84: #{forward.1} parent=47 // pred_fallthru
          _
        // Predicated region
        $region85: #{forward.1} parent=47 // pred_check
          %p834 = pneg %p411
        $region86: #{forward.1} parent=47 // pred_check_branch
          %836 = sbr.rel (%p834) target = $region88
        $region87: #{forward.1} parent=47 // pred_region
          %s837 = sand.u32 %s31, 1
          %s838 = scalar_lea.sflag [#allocation4], %s837
          %s839 = sand.u32 %s401, 1
          %s840 = smul.addr %s839, 1024
          %s841 = scalar_lea.vmem [#allocation16], %s840
          %s843 = ssub.s32 16384, 16384
          %844 = vsyncadd %s838, %s843
          %s845 = smul.addr %s31, 256
          %s846 = smul.addr %s845, 64
          %s847 = scalar_lea.hbm %s15, %s846
          %s848 = sshll.u32 %s841, 4
          %s849 = int_to_ptr.vmem [resolvable:$true] %s848
          %854 = dma.hbm_to_vmem [thread:$0]  %s847, 16384, %s849, %s838, 512, 512, 32
        $region88: #{forward.1} parent=47 // pred_fallthru
          _
        // Predicated region
        $region89: #{forward.1} parent=47 // pred_check
          %p855 = pneg %p437
        $region90: #{forward.1} parent=47 // pred_check_branch
          %857 = sbr.rel (%p855) target = $region92
        $region91: #{forward.1} parent=47 // pred_region
          %s858 = sand.u32 %s31, 1
          %s859 = scalar_lea.sflag [#allocation4], %s858
          %s860 = sand.u32 %s427, 1
          %s861 = smul.addr %s860, 8
          %s862 = scalar_lea.vmem [#allocation17], %s861
          %s864 = ssub.s32 128, 128
          %865 = vsyncadd %s859, %s864
          %s866 = smul.addr %s31, 8
          %s867 = smul.addr %s866, 16
          %s868 = scalar_lea.hbm %s16, %s867
          %s870 = sshll.u32 %s862, 4
          %s871 = int_to_ptr.vmem [resolvable:$true] %s870
          %873 = dma.hbm_to_vmem [thread:$0]  %s868, 128, %s871, %s859
        $region92: #{forward.1} parent=47 // pred_fallthru
          _
        // Predicated region
        $region93: #{forward.1} parent=47 // pred_check
          %p874 = pneg %p463
        $region94: #{forward.1} parent=47 // pred_check_branch
          %876 = sbr.rel (%p874) target = $region96
        $region95: #{forward.1} parent=47 // pred_region
          %s877 = sand.u32 %s31, 1
          %s878 = scalar_lea.sflag [#allocation4], %s877
          %s879 = sand.u32 %s453, 1
          %s880 = smul.addr %s879, 1024
          %s881 = scalar_lea.vmem [#allocation18], %s880
          %s883 = ssub.s32 16384, 16384
          %884 = vsyncadd %s878, %s883
          %s885 = smul.addr %s31, 256
          %s886 = smul.addr %s885, 64
          %s887 = scalar_lea.hbm %s17, %s886
          %s888 = sshll.u32 %s881, 4
          %s889 = int_to_ptr.vmem [resolvable:$true] %s888
          %894 = dma.hbm_to_vmem [thread:$0]  %s887, 16384, %s889, %s878, 128, 128, 8
        $region96: #{forward.1} parent=47 // pred_fallthru
          _
        // Predicated region
        $region97: #{forward.1} parent=47 // pred_check
          %p895 = pneg %p489
        $region98: #{forward.1} parent=47 // pred_check_branch
          %897 = sbr.rel (%p895) target = $region100
        $region99: #{forward.1} parent=47 // pred_region
          %s898 = sand.u32 %s31, 1
          %s899 = scalar_lea.sflag [#allocation4], %s898
          %s900 = sand.u32 %s479, 1
          %s901 = smul.addr %s900, 2
          %s902 = scalar_lea.vmem [#allocation19], %s901
          %s904 = ssub.s32 32, 32
          %905 = vsyncadd %s899, %s904
          %s906 = smul.addr %s31, 2
          %s907 = smul.addr %s906, 16
          %s908 = scalar_lea.hbm %s18, %s907
          %s910 = sshll.u32 %s902, 4
          %s911 = int_to_ptr.vmem [resolvable:$true] %s910
          %913 = dma.hbm_to_vmem [thread:$0]  %s908, 32, %s911, %s899
        $region100: #{forward.1} parent=47 // pred_fallthru
          _
        // Predicated region
        $region101: #{forward.1} parent=47 // pred_check
          %p914 = pneg %p515
        $region102: #{forward.1} parent=47 // pred_check_branch
          %916 = sbr.rel (%p914) target = $region104
        $region103: #{forward.1} parent=47 // pred_region
          %s917 = sand.u32 %s31, 1
          %s918 = scalar_lea.sflag [#allocation4], %s917
          %s919 = sand.u32 %s505, 1
          %s920 = smul.addr %s919, 2
          %s921 = scalar_lea.vmem [#allocation20], %s920
          %s923 = ssub.s32 32, 32
          %924 = vsyncadd %s918, %s923
          %s925 = smul.addr %s31, 2
          %s926 = smul.addr %s925, 16
          %s927 = scalar_lea.hbm %s19, %s926
          %s929 = sshll.u32 %s921, 4
          %s930 = int_to_ptr.vmem [resolvable:$true] %s929
          %932 = dma.hbm_to_vmem [thread:$0]  %s927, 32, %s930, %s918
        $region104: #{forward.1} parent=47 // pred_fallthru
          _
      $region48: #{forward.1} parent=5 // pred_fallthru
        _
      %p933 = scmp.le.s32.totalorder 1, %s31
      %p934 = scmp.lt.s32.totalorder %s31, 7
      %p935 = pnand %p933, %p934
      %p936 = pneg %p935
      // Predicated region
      $region105: #{forward.1} parent=5 // pred_check
        _
      $region106: #{forward.1} parent=5 // pred_check_branch
        %938 = sbr.rel (%p935) target = $region108
      $region107: #{forward.1} parent=5 // pred_region
        %s939 = ssub.s32 %s31, 1
        // Predicated region
        $region109: #{forward.1} parent=107 // pred_check
          %p940 = pneg %p94
        $region110: #{forward.1} parent=107 // pred_check_branch
          %942 = sbr.rel (%p940) target = $region112
        $region111: #{forward.1} parent=107 // pred_region
          %943 = dma.done [#allocation4], 32
        $region112: #{forward.1} parent=107 // pred_fallthru
          _
        // Predicated region
        $region113: #{forward.1} parent=107 // pred_check
          %p944 = pneg %p115
        $region114: #{forward.1} parent=107 // pred_check_branch
          %946 = sbr.rel (%p944) target = $region116
        $region115: #{forward.1} parent=107 // pred_region
          %947 = dma.done [#allocation6], 32
        $region116: #{forward.1} parent=107 // pred_fallthru
          _
        %s948 = sand.u32 %s36, 1
        %s949 = scalar_lea.sflag [#allocation4], %s948
        %s950 = sand.u32 %s170, 1
        %s951 = smul.addr %s950, 2
        %s952 = scalar_lea.vmem [#allocation7], %s951
        // Predicated region
        $region117: #{forward.1} parent=107 // pred_check
          %p953 = pneg %p183
        $region118: #{forward.1} parent=107 // pred_check_branch
          %955 = sbr.rel (%p953) target = $region120
        $region119: #{forward.1} parent=107 // pred_region
          %956 = dma.done %s949, 32
        $region120: #{forward.1} parent=107 // pred_fallthru
          _
        %s957 = sand.u32 %s36, 1
        %s958 = scalar_lea.sflag [#allocation4], %s957
        %s959 = sand.u32 %s196, 1
        %s960 = smul.addr %s959, 2
        %s961 = scalar_lea.vmem [#allocation8], %s960
        // Predicated region
        $region121: #{forward.1} parent=107 // pred_check
          %p962 = pneg %p209
        $region122: #{forward.1} parent=107 // pred_check_branch
          %964 = sbr.rel (%p962) target = $region124
        $region123: #{forward.1} parent=107 // pred_region
          %965 = dma.done %s958, 32
        $region124: #{forward.1} parent=107 // pred_fallthru
          _
        %s966 = sand.u32 %s36, 1
        %s967 = scalar_lea.sflag [#allocation4], %s966
        %s968 = sand.u32 %s222, 1
        %s969 = smul.addr %s968, 768
        %s970 = scalar_lea.vmem [#allocation9], %s969
        // Predicated region
        $region125: #{forward.1} parent=107 // pred_check
          %p971 = pneg %p235
        $region126: #{forward.1} parent=107 // pred_check_branch
          %973 = sbr.rel (%p971) target = $region128
        $region127: #{forward.1} parent=107 // pred_region
          %974 = dma.done %s967, 12288
        $region128: #{forward.1} parent=107 // pred_fallthru
          _
        %s975 = sand.u32 %s36, 1
        %s976 = scalar_lea.sflag [#allocation4], %s975
        %s977 = sand.u32 %s248, 1
        %s978 = smul.addr %s977, 6
        %s979 = scalar_lea.vmem [#allocation10], %s978
        // Predicated region
        $region129: #{forward.1} parent=107 // pred_check
          %p980 = pneg %p261
        $region130: #{forward.1} parent=107 // pred_check_branch
          %982 = sbr.rel (%p980) target = $region132
        $region131: #{forward.1} parent=107 // pred_region
          %983 = dma.done %s976, 96
        $region132: #{forward.1} parent=107 // pred_fallthru
          _
        %s984 = sand.u32 %s36, 1
        %s985 = scalar_lea.sflag [#allocation4], %s984
        %s986 = sand.u32 %s274, 1
        %s987 = smul.addr %s986, 256
        %s988 = scalar_lea.vmem [#allocation11], %s987
        // Predicated region
        $region133: #{forward.1} parent=107 // pred_check
          %p989 = pneg %p287
        $region134: #{forward.1} parent=107 // pred_check_branch
          %991 = sbr.rel (%p989) target = $region136
        $region135: #{forward.1} parent=107 // pred_region
          %992 = dma.done %s985, 4096
        $region136: #{forward.1} parent=107 // pred_fallthru
          _
        %s993 = sand.u32 %s36, 1
        %s994 = scalar_lea.sflag [#allocation4], %s993
        %s995 = sand.u32 %s300, 1
        %s996 = smul.addr %s995, 2
        %s997 = scalar_lea.vmem [#allocation12], %s996
        // Predicated region
        $region137: #{forward.1} parent=107 // pred_check
          %p998 = pneg %p313
        $region138: #{forward.1} parent=107 // pred_check_branch
          %1000 = sbr.rel (%p998) target = $region140
        $region139: #{forward.1} parent=107 // pred_region
          %1001 = dma.done %s994, 32
        $region140: #{forward.1} parent=107 // pred_fallthru
          _
        %s1002 = sand.u32 %s36, 1
        %s1003 = scalar_lea.sflag [#allocation4], %s1002
        %s1004 = sand.u32 %s326, 1
        %s1005 = smul.addr %s1004, 2
        %s1006 = scalar_lea.vmem [#allocation13], %s1005
        // Predicated region
        $region141: #{forward.1} parent=107 // pred_check
          %p1007 = pneg %p339
        $region142: #{forward.1} parent=107 // pred_check_branch
          %1009 = sbr.rel (%p1007) target = $region144
        $region143: #{forward.1} parent=107 // pred_region
          %1010 = dma.done %s1003, 32
        $region144: #{forward.1} parent=107 // pred_fallthru
          _
        %s1011 = sand.u32 %s36, 1
        %s1012 = scalar_lea.sflag [#allocation4], %s1011
        %s1013 = sand.u32 %s352, 1
        %s1014 = smul.addr %s1013, 2
        %s1015 = scalar_lea.vmem [#allocation14], %s1014
        // Predicated region
        $region145: #{forward.1} parent=107 // pred_check
          %p1016 = pneg %p365
        $region146: #{forward.1} parent=107 // pred_check_branch
          %1018 = sbr.rel (%p1016) target = $region148
        $region147: #{forward.1} parent=107 // pred_region
          %1019 = dma.done %s1012, 32
        $region148: #{forward.1} parent=107 // pred_fallthru
          _
        %s1020 = sand.u32 %s36, 1
        %s1021 = scalar_lea.sflag [#allocation4], %s1020
        %s1022 = sand.u32 %s378, 1
        %s1023 = smul.addr %s1022, 2
        %s1024 = scalar_lea.vmem [#allocation15], %s1023
        // Predicated region
        $region149: #{forward.1} parent=107 // pred_check
          %p1025 = pneg %p391
        $region150: #{forward.1} parent=107 // pred_check_branch
          %1027 = sbr.rel (%p1025) target = $region152
        $region151: #{forward.1} parent=107 // pred_region
          %1028 = dma.done %s1021, 32
        $region152: #{forward.1} parent=107 // pred_fallthru
          _
        %s1029 = sand.u32 %s36, 1
        %s1030 = scalar_lea.sflag [#allocation4], %s1029
        %s1031 = sand.u32 %s404, 1
        %s1032 = smul.addr %s1031, 1024
        %s1033 = scalar_lea.vmem [#allocation16], %s1032
        // Predicated region
        $region153: #{forward.1} parent=107 // pred_check
          %p1034 = pneg %p417
        $region154: #{forward.1} parent=107 // pred_check_branch
          %1036 = sbr.rel (%p1034) target = $region156
        $region155: #{forward.1} parent=107 // pred_region
          %1037 = dma.done %s1030, 16384
        $region156: #{forward.1} parent=107 // pred_fallthru
          _
        %s1038 = sand.u32 %s36, 1
        %s1039 = scalar_lea.sflag [#allocation4], %s1038
        %s1040 = sand.u32 %s430, 1
        %s1041 = smul.addr %s1040, 8
        %s1042 = scalar_lea.vmem [#allocation17], %s1041
        // Predicated region
        $region157: #{forward.1} parent=107 // pred_check
          %p1043 = pneg %p443
        $region158: #{forward.1} parent=107 // pred_check_branch
          %1045 = sbr.rel (%p1043) target = $region160
        $region159: #{forward.1} parent=107 // pred_region
          %1046 = dma.done %s1039, 128
        $region160: #{forward.1} parent=107 // pred_fallthru
          _
        %s1047 = sand.u32 %s36, 1
        %s1048 = scalar_lea.sflag [#allocation4], %s1047
        %s1049 = sand.u32 %s456, 1
        %s1050 = smul.addr %s1049, 1024
        %s1051 = scalar_lea.vmem [#allocation18], %s1050
        // Predicated region
        $region161: #{forward.1} parent=107 // pred_check
          %p1052 = pneg %p469
        $region162: #{forward.1} parent=107 // pred_check_branch
          %1054 = sbr.rel (%p1052) target = $region164
        $region163: #{forward.1} parent=107 // pred_region
          %1055 = dma.done %s1048, 16384
        $region164: #{forward.1} parent=107 // pred_fallthru
          _
        %s1056 = sand.u32 %s36, 1
        %s1057 = scalar_lea.sflag [#allocation4], %s1056
        %s1058 = sand.u32 %s482, 1
        %s1059 = smul.addr %s1058, 2
        %s1060 = scalar_lea.vmem [#allocation19], %s1059
        // Predicated region
        $region165: #{forward.1} parent=107 // pred_check
          %p1061 = pneg %p495
        $region166: #{forward.1} parent=107 // pred_check_branch
          %1063 = sbr.rel (%p1061) target = $region168
        $region167: #{forward.1} parent=107 // pred_region
          %1064 = dma.done %s1057, 32
        $region168: #{forward.1} parent=107 // pred_fallthru
          _
        %s1065 = sand.u32 %s36, 1
        %s1066 = scalar_lea.sflag [#allocation4], %s1065
        %s1067 = sand.u32 %s508, 1
        %s1068 = smul.addr %s1067, 2
        %s1069 = scalar_lea.vmem [#allocation20], %s1068
        // Predicated region
        $region169: #{forward.1} parent=107 // pred_check
          %p1070 = pneg %p521
        $region170: #{forward.1} parent=107 // pred_check_branch
          %1072 = sbr.rel (%p1070) target = $region172
        $region171: #{forward.1} parent=107 // pred_region
          %1073 = dma.done %s1066, 32
        $region172: #{forward.1} parent=107 // pred_fallthru
          _
        // Predicated region
        $region173: #{forward.1} parent=107 // pred_check
          %p1074 = pneg %p542
        $region174: #{forward.1} parent=107 // pred_check_branch
          %1076 = sbr.rel (%p1074) target = $region176
        $region175: #{forward.1} parent=107 // pred_region
          %1077 = dma.done [#allocation6], 32
        $region176: #{forward.1} parent=107 // pred_fallthru
          _
        // Predicated region
        $region177: #{forward.1} parent=107 // pred_check
          %p1078 = pneg %p563
        $region178: #{forward.1} parent=107 // pred_check_branch
          %1080 = sbr.rel (%p1078) target = $region180
        $region179: #{forward.1} parent=107 // pred_region
          %1081 = dma.done [#allocation23], 32
        $region180: #{forward.1} parent=107 // pred_fallthru
          _
        %p1082 = pneg %p52
        %p1083 = pneg %p49
        %p1084 = pneg %p73
        %p1085 = pneg %p70
        %p1086 = pneg %p94
        %p1087 = pneg %p91
        %p1088 = pneg %p115
        %p1089 = pneg %p112
        %p1090 = pneg %p136
        %p1091 = pneg %p133
        %p1092 = pneg %p157
        %p1093 = pneg %p154
        %s1094 = sand.u32 %s36, 1
        %s1095 = scalar_lea.sflag [#allocation4], %s1094
        %s1096 = sand.u32 %s170, 1
        %s1097 = smul.addr %s1096, 2
        %s1098 = scalar_lea.vmem [#allocation7], %s1097
        %p1099 = pneg %p183
        %p1100 = pneg %p180
        %s1101 = sand.u32 %s36, 1
        %s1102 = scalar_lea.sflag [#allocation4], %s1101
        %s1103 = sand.u32 %s196, 1
        %s1104 = smul.addr %s1103, 2
        %s1105 = scalar_lea.vmem [#allocation8], %s1104
        %p1106 = pneg %p209
        %p1107 = pneg %p206
        %s1108 = sand.u32 %s36, 1
        %s1109 = scalar_lea.sflag [#allocation4], %s1108
        %s1110 = sand.u32 %s222, 1
        %s1111 = smul.addr %s1110, 768
        %s1112 = scalar_lea.vmem [#allocation9], %s1111
        %p1113 = pneg %p235
        %p1114 = pneg %p232
        %s1115 = sand.u32 %s36, 1
        %s1116 = scalar_lea.sflag [#allocation4], %s1115
        %s1117 = sand.u32 %s248, 1
        %s1118 = smul.addr %s1117, 6
        %s1119 = scalar_lea.vmem [#allocation10], %s1118
        %p1120 = pneg %p261
        %p1121 = pneg %p258
        %s1122 = sand.u32 %s36, 1
        %s1123 = scalar_lea.sflag [#allocation4], %s1122
        %s1124 = sand.u32 %s274, 1
        %s1125 = smul.addr %s1124, 256
        %s1126 = scalar_lea.vmem [#allocation11], %s1125
        %p1127 = pneg %p287
        %p1128 = pneg %p284
        %s1129 = sand.u32 %s36, 1
        %s1130 = scalar_lea.sflag [#allocation4], %s1129
        %s1131 = sand.u32 %s300, 1
        %s1132 = smul.addr %s1131, 2
        %s1133 = scalar_lea.vmem [#allocation12], %s1132
        %p1134 = pneg %p313
        %p1135 = pneg %p310
        %s1136 = sand.u32 %s36, 1
        %s1137 = scalar_lea.sflag [#allocation4], %s1136
        %s1138 = sand.u32 %s326, 1
        %s1139 = smul.addr %s1138, 2
        %s1140 = scalar_lea.vmem [#allocation13], %s1139
        %p1141 = pneg %p339
        %p1142 = pneg %p336
        %s1143 = sand.u32 %s36, 1
        %s1144 = scalar_lea.sflag [#allocation4], %s1143
        %s1145 = sand.u32 %s352, 1
        %s1146 = smul.addr %s1145, 2
        %s1147 = scalar_lea.vmem [#allocation14], %s1146
        %p1148 = pneg %p365
        %p1149 = pneg %p362
        %s1150 = sand.u32 %s36, 1
        %s1151 = scalar_lea.sflag [#allocation4], %s1150
        %s1152 = sand.u32 %s378, 1
        %s1153 = smul.addr %s1152, 2
        %s1154 = scalar_lea.vmem [#allocation15], %s1153
        %p1155 = pneg %p391
        %p1156 = pneg %p388
        %s1157 = sand.u32 %s36, 1
        %s1158 = scalar_lea.sflag [#allocation4], %s1157
        %s1159 = sand.u32 %s404, 1
        %s1160 = smul.addr %s1159, 1024
        %s1161 = scalar_lea.vmem [#allocation16], %s1160
        %p1162 = pneg %p417
        %p1163 = pneg %p414
        %s1164 = sand.u32 %s36, 1
        %s1165 = scalar_lea.sflag [#allocation4], %s1164
        %s1166 = sand.u32 %s430, 1
        %s1167 = smul.addr %s1166, 8
        %s1168 = scalar_lea.vmem [#allocation17], %s1167
        %p1169 = pneg %p443
        %p1170 = pneg %p440
        %s1171 = sand.u32 %s36, 1
        %s1172 = scalar_lea.sflag [#allocation4], %s1171
        %s1173 = sand.u32 %s456, 1
        %s1174 = smul.addr %s1173, 1024
        %s1175 = scalar_lea.vmem [#allocation18], %s1174
        %p1176 = pneg %p469
        %p1177 = pneg %p466
        %s1178 = sand.u32 %s36, 1
        %s1179 = scalar_lea.sflag [#allocation4], %s1178
        %s1180 = sand.u32 %s482, 1
        %s1181 = smul.addr %s1180, 2
        %s1182 = scalar_lea.vmem [#allocation19], %s1181
        %p1183 = pneg %p495
        %p1184 = pneg %p492
        %s1185 = sand.u32 %s36, 1
        %s1186 = scalar_lea.sflag [#allocation4], %s1185
        %s1187 = sand.u32 %s508, 1
        %s1188 = smul.addr %s1187, 2
        %s1189 = scalar_lea.vmem [#allocation20], %s1188
        %p1190 = pneg %p521
        %p1191 = pneg %p518
        %p1192 = pneg %p542
        %p1193 = pneg %p539
        %p1194 = pneg %p563
        %p1195 = pneg %p560
        %p1196 = pneg %p584
        %p1197 = pneg %p581
        %p1199 = scmp.eq.s32.totalorder %s36, 0
        // Predicated region
        $region181: #{forward.1} parent=107 // pred_check
          %p1200 = pneg %p1199
        $region182: #{forward.1} parent=107 // pred_check_branch
          %1202 = sbr.rel (%p1200) target = $region184
        $region183: #{forward.1} parent=107 // pred_region
          %v1203 = vld [vmem:[%s0] sm:$0xf]
          %v1204 = vld [vmem:[%s0 + $0x4] sm:$0xf]
          %v1205 = vld [vmem:[%s0 + $0x8] sm:$0xf]
          %v1206 = vld [vmem:[%s0 + $0xc] sm:$0xf]
          %v1207 = vld [vmem:[%s1] sm:$0xff]
          %v1208 = vld [vmem:[%s1 + $0x8] sm:$0xff]
          %v1209 = vld [vmem:[%s1 + $0x10] sm:$0xff]
          %v1210 = vld [vmem:[%s1 + $0x18] sm:$0xff]
          %v1211 = vld [vmem:[%s1 + $0x20] sm:$0xff]
          %v1212 = vld [vmem:[%s1 + $0x28] sm:$0xff]
          %v1213 = vld [vmem:[%s1 + $0x30] sm:$0xff]
          %v1214 = vld [vmem:[%s1 + $0x38] sm:$0xff]
          %v1215 = vld [vmem:[%s1 + $0x40] sm:$0xff]
          %v1216 = vld [vmem:[%s1 + $0x48] sm:$0xff]
          %v1217 = vld [vmem:[%s1 + $0x50] sm:$0xff]
          %v1218 = vld [vmem:[%s1 + $0x58] sm:$0xff]
          %v1219 = vld [vmem:[%s1 + $0x60] sm:$0xff]
          %v1220 = vld [vmem:[%s1 + $0x68] sm:$0xff]
          %v1221 = vld [vmem:[%s1 + $0x70] sm:$0xff]
          %v1222 = vld [vmem:[%s1 + $0x78] sm:$0xff]
          %v1223 = vld [vmem:[#allocation3] sm:$0x3]
          %v1225 = vlaneseq
          %v1226 = vshrl.u32 %v1225, 7
          %v1227 = vsub.s32 0, %v1226
          %v1228 = vrot.slane %v1223, %v1227
          %v1229 = vlaneseq
          %v1230 = vshrl.u32 %v1229, 7
          %v1231 = vsub.s32 1, %v1230
          %v1232 = vrot.slane %v1223, %v1231
          %v1239 = vunpack.c.l.b16 %v1203
          %v1240 = vunpack.c.l.b16 %v1204
          %v1241 = vunpack.c.l.b16 %v1205
          %v1242 = vunpack.c.l.b16 %v1206
          %v1243 = vpack.c.b16 %v1240, %v1239
          %v1244 = vpack.c.b16 %v1242, %v1241
          %v1263 = vunpack.c.l.b16 %v1207
          %v1264 = vunpack.c.h.b16 %v1207
          %v1265 = vunpack.c.l.b16 %v1208
          %v1266 = vunpack.c.h.b16 %v1208
          %v1267 = vunpack.c.l.b16 %v1209
          %v1268 = vunpack.c.h.b16 %v1209
          %v1269 = vunpack.c.l.b16 %v1210
          %v1270 = vunpack.c.h.b16 %v1210
          %v1271 = vunpack.c.l.b16 %v1211
          %v1272 = vunpack.c.h.b16 %v1211
          %v1273 = vunpack.c.l.b16 %v1212
          %v1274 = vunpack.c.h.b16 %v1212
          %v1275 = vunpack.c.l.b16 %v1213
          %v1276 = vunpack.c.h.b16 %v1213
          %v1277 = vunpack.c.l.b16 %v1214
          %v1278 = vunpack.c.h.b16 %v1214
          %v1279 = vunpack.c.l.b16 %v1215
          %v1280 = vunpack.c.h.b16 %v1215
          %v1281 = vunpack.c.l.b16 %v1216
          %v1282 = vunpack.c.h.b16 %v1216
          %v1283 = vunpack.c.l.b16 %v1217
          %v1284 = vunpack.c.h.b16 %v1217
          %v1285 = vunpack.c.l.b16 %v1218
          %v1286 = vunpack.c.h.b16 %v1218
          %v1287 = vunpack.c.l.b16 %v1219
          %v1288 = vunpack.c.h.b16 %v1219
          %v1289 = vunpack.c.l.b16 %v1220
          %v1290 = vunpack.c.h.b16 %v1220
          %v1291 = vunpack.c.l.b16 %v1221
          %v1292 = vunpack.c.h.b16 %v1221
          %v1293 = vunpack.c.l.b16 %v1222
          %v1294 = vunpack.c.h.b16 %v1222
          %v1295 = vpack.c.b16 %v1265, %v1263
          %v1296 = vpack.c.b16 %v1266, %v1264
          %v1297 = vpack.c.b16 %v1269, %v1267
          %v1298 = vpack.c.b16 %v1270, %v1268
          %v1299 = vpack.c.b16 %v1273, %v1271
          %v1300 = vpack.c.b16 %v1274, %v1272
          %v1301 = vpack.c.b16 %v1277, %v1275
          %v1302 = vpack.c.b16 %v1278, %v1276
          %v1303 = vpack.c.b16 %v1281, %v1279
          %v1304 = vpack.c.b16 %v1282, %v1280
          %v1305 = vpack.c.b16 %v1285, %v1283
          %v1306 = vpack.c.b16 %v1286, %v1284
          %v1307 = vpack.c.b16 %v1289, %v1287
          %v1308 = vpack.c.b16 %v1290, %v1288
          %v1309 = vpack.c.b16 %v1293, %v1291
          %v1310 = vpack.c.b16 %v1294, %v1292
          %1327 = vmatprep.subr.bf16.mxu0 %v1296
          %1328 = vmatpush1.bf16.msra.mxu0 %v1295
          %1329 = vmatprep.subr.bf16.mxu0 %v1298
          %1330 = vmatpush1.bf16.msra.mxu0 %v1297
          %1331 = vmatprep.subr.bf16.mxu0 %v1300
          %1332 = vmatpush1.bf16.msra.mxu0 %v1299
          %1333 = vmatprep.subr.bf16.mxu0 %v1302
          %1334 = vmatpush1.bf16.msra.mxu0 %v1301
          %1335 = vmatprep.subr.bf16.mxu0 %v1304
          %1336 = vmatpush1.bf16.msra.mxu0 %v1303
          %1337 = vmatprep.subr.bf16.mxu0 %v1306
          %1338 = vmatpush1.bf16.msra.mxu0 %v1305
          %1339 = vmatprep.subr.bf16.mxu0 %v1308
          %1340 = vmatpush1.bf16.msra.mxu0 %v1307
          %1341 = vmatprep.subr.bf16.mxu0 %v1310
          %1342 = vmatpush1.bf16.msra.mxu0 %v1309
          %1343 = vmatprep.subr.bf16.mxu0 0
          %1344 = vmatpush1.bf16.msra.mxu0 0
          %1345 = vmatprep.subr.bf16.mxu0 0
          %1346 = vmatpush1.bf16.msra.mxu0 0
          %1347 = vmatprep.subr.bf16.mxu0 0
          %1348 = vmatpush1.bf16.msra.mxu0 0
          %1349 = vmatprep.subr.bf16.mxu0 0
          %1350 = vmatpush1.bf16.msra.mxu0 0
          %1351 = vmatprep.subr.bf16.mxu0 0
          %1352 = vmatpush1.bf16.msra.mxu0 0
          %1353 = vmatprep.subr.bf16.mxu0 0
          %1354 = vmatpush1.bf16.msra.mxu0 0
          %1355 = vmatprep.subr.bf16.mxu0 0
          %1356 = vmatpush1.bf16.msra.mxu0 0
          %1357 = vmatprep.subr.bf16.mxu0 0
          %1358 = vmatpush1.bf16.msra.mxu0 0
          %1359 = vmatprep.mubr.bf16.mxu0 0
          %1360 = vmatmul.mubr.bf16.gmra.mrb[0].mxu0 %v1243
          %v1361 = vpop.f32.mrb[0].mxu0
          %v1362 = vadd.f32 %v1228, %v1361
          %v1363 = vpop.f32.mrb[0].mxu0
          %v1364 = vadd.f32 %v1232, %v1363
          %v1365 = vpop.f32.mrb[0].mxu0
          %v1366 = vadd.f32 %v1228, %v1365
          %v1367 = vpop.f32.mrb[0].mxu0
          %v1368 = vadd.f32 %v1232, %v1367
          %1369 = vmatprep.mubr.bf16.mxu0 0
          %1370 = vmatmul.mubr.bf16.gmra.mrb[0].mxu0 %v1244
          %v1371 = vpop.f32.mrb[0].mxu0
          %v1372 = vadd.f32 %v1228, %v1371
          %v1373 = vpop.f32.mrb[0].mxu0
          %v1374 = vadd.f32 %v1232, %v1373
          %v1375 = vpop.f32.mrb[0].mxu0
          %v1376 = vadd.f32 %v1228, %v1375
          %v1377 = vpop.f32.mrb[0].mxu0
          %v1378 = vadd.f32 %v1232, %v1377
          %1379 = vdwg.mxu0
          %v1380 = vld [vmem:[#allocation5] sm:$0x3]
          %v1381 = vld [vmem:[%s4] ss:$8 sm:$0x3]
          %v1382 = vadd.f32 %v1380, %v1381
          %v1383 = vlaneseq
          %vm1384 = vcmp.ge.s32.totalorder %v1383, 0
          %vm1385 = vcmp.lt.s32.totalorder %v1383, 256
          %vm1386 = vmand %vm1384, %vm1385
          %1387 = vst.msk [vmem:[#allocation2] ss:$8 sm:$0x3] %vm1386, %v1382
          %1388 = vst.msk [vmem:[#allocation2] ss:$8 sm:$0x0] %vm1386, %v1382
          %v1389 = vld [vmem:[%s4] sm:$0xfe]
          %v1390 = vld [vmem:[%s4 + $0x8] sm:$0xfe]
          %v1391 = vld [vmem:[%s4 + $0x10] sm:$0xff]
          %v1392 = vld [vmem:[%s4 + $0x18] sm:$0xff]
          %v1393 = vld [vmem:[%s4 + $0x20] sm:$0x1]
          %v1394 = vld [vmem:[%s4 + $0x28] sm:$0x1]
          %vm1401 = vcmask 1046528
          %v1402 = vrot.slane %v1389, 1
          %v1403 = vrot.slane %v1391, 1
          %v1404 = vsel %vm1401, %v1402, %v1403
          %v1405 = vrot.slane %v1390, 1
          %v1406 = vrot.slane %v1392, 1
          %v1407 = vsel %vm1401, %v1405, %v1406
          %v1408 = vrot.slane %v1393, 1
          %v1409 = vsel %vm1401, %v1403, %v1408
          %v1410 = vrot.slane %v1394, 1
          %v1411 = vsel %vm1401, %v1406, %v1410
          %v1416 = vadd.f32 %v1362, %v1404
          %v1417 = vadd.f32 %v1364, %v1407
          %v1418 = vadd.f32 %v1366, %v1409
          %v1419 = vadd.f32 %v1368, %v1411
          %vm1424 = vcmask 1040384
          %v1425 = vrot.slane %v1416, 7
          %v1426 = vrot.slane %v1417, 7
          %v1427 = vrot.slane %v1418, 7
          %v1428 = vsel %vm1424, %v1425, %v1427
          %v1429 = vrot.slane %v1419, 7
          %v1430 = vsel %vm1424, %v1426, %v1429
          %1437 = vst [vmem:[#allocation2] sm:$0xfe] %v1425
          %1438 = vst [vmem:[#allocation2 + $0x8] sm:$0xfe] %v1426
          %1439 = vst [vmem:[#allocation2 + $0x10] sm:$0xff] %v1428
          %1440 = vst [vmem:[#allocation2 + $0x18] sm:$0xff] %v1430
          %1441 = vst [vmem:[#allocation2 + $0x20] sm:$0x1] %v1427
          %1442 = vst [vmem:[#allocation2 + $0x28] sm:$0x1] %v1429
          %1443 = vst [vmem:[#allocation2 + $0x20] sm:$0xfe] 0.0
          %1444 = vst [vmem:[#allocation2 + $0x28] sm:$0xfe] 0.0
          %1445 = vst [vmem:[#allocation2 + $0x30] sm:$0xff] 0.0
          %1446 = vst [vmem:[#allocation2 + $0x38] sm:$0xff] 0.0
          %v1447 = vld [vmem:[#allocation5] sm:$0x3]
          %v1448 = vld [vmem:[%s4] ss:$8 sm:$0x3]
          %v1449 = vadd.f32 %v1447, %v1448
          %s1450 = scalar_lea.vmem [#allocation2], 64
          %1451 = vst.msk [vmem:[%s1450] ss:$8 sm:$0x3] %vm1386, %v1449
          %1452 = vst.msk [vmem:[%s1450] ss:$8 sm:$0x0] %vm1386, %v1449
          %v1453 = vld [vmem:[%s4] sm:$0xfe]
          %v1454 = vld [vmem:[%s4 + $0x8] sm:$0xfe]
          %v1455 = vld [vmem:[%s4 + $0x10] sm:$0xff]
          %v1456 = vld [vmem:[%s4 + $0x18] sm:$0xff]
          %v1457 = vld [vmem:[%s4 + $0x20] sm:$0x1]
          %v1458 = vld [vmem:[%s4 + $0x28] sm:$0x1]
          %v1465 = vrot.slane %v1453, 1
          %v1466 = vrot.slane %v1455, 1
          %v1467 = vsel %vm1401, %v1465, %v1466
          %v1468 = vrot.slane %v1454, 1
          %v1469 = vrot.slane %v1456, 1
          %v1470 = vsel %vm1401, %v1468, %v1469
          %v1471 = vrot.slane %v1457, 1
          %v1472 = vsel %vm1401, %v1466, %v1471
          %v1473 = vrot.slane %v1458, 1
          %v1474 = vsel %vm1401, %v1469, %v1473
          %v1479 = vadd.f32 %v1372, %v1467
          %v1480 = vadd.f32 %v1374, %v1470
          %v1481 = vadd.f32 %v1376, %v1472
          %v1482 = vadd.f32 %v1378, %v1474
          %v1487 = vrot.slane %v1479, 7
          %v1488 = vrot.slane %v1480, 7
          %v1489 = vrot.slane %v1481, 7
          %v1490 = vsel %vm1424, %v1487, %v1489
          %v1491 = vrot.slane %v1482, 7
          %v1492 = vsel %vm1424, %v1488, %v1491
          %1499 = vst [vmem:[#allocation2 + $0x40] sm:$0xfe] %v1487
          %1500 = vst [vmem:[#allocation2 + $0x48] sm:$0xfe] %v1488
          %1501 = vst [vmem:[#allocation2 + $0x50] sm:$0xff] %v1490
          %1502 = vst [vmem:[#allocation2 + $0x58] sm:$0xff] %v1492
          %1503 = vst [vmem:[#allocation2 + $0x60] sm:$0x1] %v1489
          %1504 = vst [vmem:[#allocation2 + $0x68] sm:$0x1] %v1491
          %1505 = vst [vmem:[#allocation2 + $0x60] sm:$0xfe] 0.0
          %1506 = vst [vmem:[#allocation2 + $0x68] sm:$0xfe] 0.0
          %1507 = vst [vmem:[#allocation2 + $0x70] sm:$0xff] 0.0
          %1508 = vst [vmem:[#allocation2 + $0x78] sm:$0xff] 0.0
        $region184: #{forward.1} parent=107 // pred_fallthru
          _
        %p1509 = scmp.eq.s32.totalorder %s36, 2
        // Predicated region
        $region185: #{forward.1} parent=107 // pred_check
          %p1510 = pneg %p1509
        $region186: #{forward.1} parent=107 // pred_check_branch
          %1512 = sbr.rel (%p1510) target = $region188
        $region187: #{forward.1} parent=107 // pred_region
          %v1513 = vld [vmem:[%s5] sm:$0x77]
          %v1515 = vcombine.high %v1513, %v1513
          %v1516 = vrot.slane %v1513, 7
          %v1517 = vrot.slane %v1515, 7
          %1520 = vst [vmem:[#allocation2 + $0x20] sm:$0xe] %v1516
          %1521 = vst [vmem:[#allocation2 + $0x28] sm:$0xe] %v1517
          %v1522 = vld [vmem:[%s5] sm:$0x77]
          %v1524 = vcombine.high %v1522, %v1522
          %v1525 = vrot.slane %v1522, 7
          %v1526 = vrot.slane %v1524, 7
          %1529 = vst [vmem:[#allocation2 + $0x60] sm:$0xe] %v1525
          %1530 = vst [vmem:[#allocation2 + $0x68] sm:$0xe] %v1526
        $region188: #{forward.1} parent=107 // pred_fallthru
          _
        %p1531 = scmp.lt.s32.totalorder %s36, 2
        %s1532 = scalar_select %p1531, 17, 20
        %v1533 = vlaneseq
        %v1534 = vshrl.u32 %v1533, 7
        %v1535 = vadd.s32 %v1534, 8
        %v1536 = vadd.s32 %v1534, 16
        %v1537 = vadd.s32 %v1534, 24
        %v1538 = vadd.s32 %v1534, 32
        %v1539 = vadd.s32 %v1534, 40
        %v1540 = vadd.s32 %v1534, 48
        %v1541 = vadd.s32 %v1534, 56
        %v1542 = vlaneseq
        %v1543 = vand.u32 %v1542, 127
        %v1544 = vshra.s32 %v1534, 5
        %v1545 = vshra.s32 %v1535, 5
        %v1546 = vshra.s32 %v1536, 5
        %v1547 = vshra.s32 %v1537, 5
        %v1548 = vshra.s32 %v1538, 5
        %v1549 = vshra.s32 %v1539, 5
        %v1550 = vshra.s32 %v1540, 5
        %v1551 = vshra.s32 %v1541, 5
        %v1552 = vshra.s32 %v1543, 5
        %vm1553 = vcmp.eq.s32.totalorder %v1544, %v1552
        %vm1554 = vcmp.eq.s32.totalorder %v1545, %v1552
        %vm1555 = vcmp.eq.s32.totalorder %v1546, %v1552
        %vm1556 = vcmp.eq.s32.totalorder %v1547, %v1552
        %vm1557 = vcmp.eq.s32.totalorder %v1548, %v1552
        %vm1558 = vcmp.eq.s32.totalorder %v1549, %v1552
        %vm1559 = vcmp.eq.s32.totalorder %v1550, %v1552
        %vm1560 = vcmp.eq.s32.totalorder %v1551, %v1552
        %v1561 = vand.u32 %v1543, 31
        %v1562 = vstv %s1532
        %vm1563 = vcmp.lt.s32.totalorder %v1561, %v1562
        %vm1564 = vmand %vm1553, %vm1563
        %vm1565 = vmand %vm1554, %vm1563
        %vm1566 = vmand %vm1555, %vm1563
        %vm1567 = vmand %vm1556, %vm1563
        %vm1568 = vmand %vm1557, %vm1563
        %vm1569 = vmand %vm1558, %vm1563
        %vm1570 = vmand %vm1559, %vm1563
        %vm1571 = vmand %vm1560, %vm1563
        %v1572 = vld [vmem:[#allocation2] sm:$0xff]
        %v1573 = vld [vmem:[#allocation2 + $0x8] sm:$0xff]
        %v1574 = vld [vmem:[#allocation2 + $0x10] sm:$0xff]
        %v1575 = vld [vmem:[#allocation2 + $0x18] sm:$0xff]
        %v1576 = vld [vmem:[#allocation2 + $0x20] sm:$0xff]
        %v1577 = vld [vmem:[#allocation2 + $0x28] sm:$0xff]
        %v1578 = vld [vmem:[#allocation2 + $0x30] sm:$0xff]
        %v1579 = vld [vmem:[#allocation2 + $0x38] sm:$0xff]
        %v1580 = vld [vmem:[#allocation2 + $0x40] sm:$0xff]
        %v1581 = vld [vmem:[#allocation2 + $0x48] sm:$0xff]
        %v1582 = vld [vmem:[#allocation2 + $0x50] sm:$0xff]
        %v1583 = vld [vmem:[#allocation2 + $0x58] sm:$0xff]
        %v1584 = vld [vmem:[#allocation2 + $0x60] sm:$0xff]
        %v1585 = vld [vmem:[#allocation2 + $0x68] sm:$0xff]
        %v1586 = vld [vmem:[#allocation2 + $0x70] sm:$0xff]
        %v1587 = vld [vmem:[#allocation2 + $0x78] sm:$0xff]
        %v1588 = vld [vmem:[%s952] sm:$0x3]
        %v1589 = vld [vmem:[%s961] sm:$0x3]
        %v1590 = vadd.f32 %v1572, %v1573
        %1591 = vadd.xlane.f32.xlu0 %v1590
        %v1592 = vpop.xlane.xlu0 %1591
        %v1593 = vadd.f32 %v1574, %v1575
        %1594 = vadd.xlane.f32.xlu0 %v1593
        %v1595 = vpop.xlane.xlu0 %1594
        %v1596 = vadd.f32 %v1576, %v1577
        %1597 = vadd.xlane.f32.xlu0 %v1596
        %v1598 = vpop.xlane.xlu0 %1597
        %v1599 = vadd.f32 %v1578, %v1579
        %1600 = vadd.xlane.f32.xlu0 %v1599
        %v1601 = vpop.xlane.xlu0 %1600
        %v1602 = vadd.f32 %v1580, %v1581
        %1603 = vadd.xlane.f32.xlu0 %v1602
        %v1604 = vpop.xlane.xlu0 %1603
        %v1605 = vadd.f32 %v1582, %v1583
        %1606 = vadd.xlane.f32.xlu0 %v1605
        %v1607 = vpop.xlane.xlu0 %1606
        %v1608 = vadd.f32 %v1584, %v1585
        %1609 = vadd.xlane.f32.xlu0 %v1608
        %v1610 = vpop.xlane.xlu0 %1609
        %v1611 = vadd.f32 %v1586, %v1587
        %1612 = vadd.xlane.f32.xlu0 %v1611
        %v1613 = vpop.xlane.xlu0 %1612
        %v1614 = vrcp.pop 256.0
        %v1615 = vmul.f32 %v1592, %v1614
        %v1616 = vmul.f32 %v1595, %v1614
        %v1617 = vmul.f32 %v1598, %v1614
        %v1618 = vmul.f32 %v1601, %v1614
        %v1619 = vmul.f32 %v1604, %v1614
        %v1620 = vmul.f32 %v1607, %v1614
        %v1621 = vmul.f32 %v1610, %v1614
        %v1622 = vmul.f32 %v1613, %v1614
        %v1623 = vsub.f32 %v1572, %v1615
        %v1624 = vsub.f32 %v1573, %v1615
        %v1625 = vsub.f32 %v1574, %v1616
        %v1626 = vsub.f32 %v1575, %v1616
        %v1627 = vsub.f32 %v1576, %v1617
        %v1628 = vsub.f32 %v1577, %v1617
        %v1629 = vsub.f32 %v1578, %v1618
        %v1630 = vsub.f32 %v1579, %v1618
        %v1631 = vsub.f32 %v1580, %v1619
        %v1632 = vsub.f32 %v1581, %v1619
        %v1633 = vsub.f32 %v1582, %v1620
        %v1634 = vsub.f32 %v1583, %v1620
        %v1635 = vsub.f32 %v1584, %v1621
        %v1636 = vsub.f32 %v1585, %v1621
        %v1637 = vsub.f32 %v1586, %v1622
        %v1638 = vsub.f32 %v1587, %v1622
        %v1639 = vmul.f32 %v1623, %v1623
        %v1640 = vmul.f32 %v1624, %v1624
        %v1641 = vmul.f32 %v1625, %v1625
        %v1642 = vmul.f32 %v1626, %v1626
        %v1643 = vmul.f32 %v1627, %v1627
        %v1644 = vmul.f32 %v1628, %v1628
        %v1645 = vmul.f32 %v1629, %v1629
        %v1646 = vmul.f32 %v1630, %v1630
        %v1647 = vmul.f32 %v1631, %v1631
        %v1648 = vmul.f32 %v1632, %v1632
        %v1649 = vmul.f32 %v1633, %v1633
        %v1650 = vmul.f32 %v1634, %v1634
        %v1651 = vmul.f32 %v1635, %v1635
        %v1652 = vmul.f32 %v1636, %v1636
        %v1653 = vmul.f32 %v1637, %v1637
        %v1654 = vmul.f32 %v1638, %v1638
        %v1655 = vadd.f32 %v1639, %v1640
        %1656 = vadd.xlane.f32.xlu0 %v1655
        %v1657 = vpop.xlane.xlu0 %1656
        %v1658 = vadd.f32 %v1641, %v1642
        %1659 = vadd.xlane.f32.xlu0 %v1658
        %v1660 = vpop.xlane.xlu0 %1659
        %v1661 = vadd.f32 %v1643, %v1644
        %1662 = vadd.xlane.f32.xlu0 %v1661
        %v1663 = vpop.xlane.xlu0 %1662
        %v1664 = vadd.f32 %v1645, %v1646
        %1665 = vadd.xlane.f32.xlu0 %v1664
        %v1666 = vpop.xlane.xlu0 %1665
        %v1667 = vadd.f32 %v1647, %v1648
        %1668 = vadd.xlane.f32.xlu0 %v1667
        %v1669 = vpop.xlane.xlu0 %1668
        %v1670 = vadd.f32 %v1649, %v1650
        %1671 = vadd.xlane.f32.xlu0 %v1670
        %v1672 = vpop.xlane.xlu0 %1671
        %v1673 = vadd.f32 %v1651, %v1652
        %1674 = vadd.xlane.f32.xlu0 %v1673
        %v1675 = vpop.xlane.xlu0 %1674
        %v1676 = vadd.f32 %v1653, %v1654
        %1677 = vadd.xlane.f32.xlu0 %v1676
        %v1678 = vpop.xlane.xlu0 %1677
        %v1679 = vmul.f32 %v1657, %v1614
        %v1680 = vmul.f32 %v1660, %v1614
        %v1681 = vmul.f32 %v1663, %v1614
        %v1682 = vmul.f32 %v1666, %v1614
        %v1683 = vmul.f32 %v1669, %v1614
        %v1684 = vmul.f32 %v1672, %v1614
        %v1685 = vmul.f32 %v1675, %v1614
        %v1686 = vmul.f32 %v1678, %v1614
        %v1687 = vadd.f32 %v1679, 1e-06
        %v1688 = vadd.f32 %v1680, 1e-06
        %v1689 = vadd.f32 %v1681, 1e-06
        %v1690 = vadd.f32 %v1682, 1e-06
        %v1691 = vadd.f32 %v1683, 1e-06
        %v1692 = vadd.f32 %v1684, 1e-06
        %v1693 = vadd.f32 %v1685, 1e-06
        %v1694 = vadd.f32 %v1686, 1e-06
        %v1695 = vrsqrt.pop %v1687
        %v1696 = vrsqrt.pop %v1688
        %v1697 = vrsqrt.pop %v1689
        %v1698 = vrsqrt.pop %v1690
        %v1699 = vrsqrt.pop %v1691
        %v1700 = vrsqrt.pop %v1692
        %v1701 = vrsqrt.pop %v1693
        %v1702 = vrsqrt.pop %v1694
        %v1703 = vmul.f32 %v1623, %v1695
        %v1704 = vmul.f32 %v1624, %v1695
        %v1705 = vmul.f32 %v1625, %v1696
        %v1706 = vmul.f32 %v1626, %v1696
        %v1707 = vmul.f32 %v1627, %v1697
        %v1708 = vmul.f32 %v1628, %v1697
        %v1709 = vmul.f32 %v1629, %v1698
        %v1710 = vmul.f32 %v1630, %v1698
        %v1711 = vmul.f32 %v1631, %v1699
        %v1712 = vmul.f32 %v1632, %v1699
        %v1713 = vmul.f32 %v1633, %v1700
        %v1714 = vmul.f32 %v1634, %v1700
        %v1715 = vmul.f32 %v1635, %v1701
        %v1716 = vmul.f32 %v1636, %v1701
        %v1717 = vmul.f32 %v1637, %v1702
        %v1718 = vmul.f32 %v1638, %v1702
        %v1720 = vlaneseq
        %v1721 = vshrl.u32 %v1720, 7
        %v1722 = vsub.s32 0, %v1721
        %v1723 = vrot.slane %v1588, %v1722
        %v1724 = vlaneseq
        %v1725 = vshrl.u32 %v1724, 7
        %v1726 = vsub.s32 1, %v1725
        %v1727 = vrot.slane %v1588, %v1726
        %v1730 = vmul.f32 %v1703, %v1723
        %v1731 = vmul.f32 %v1704, %v1727
        %v1732 = vmul.f32 %v1705, %v1723
        %v1733 = vmul.f32 %v1706, %v1727
        %v1734 = vmul.f32 %v1707, %v1723
        %v1735 = vmul.f32 %v1708, %v1727
        %v1736 = vmul.f32 %v1709, %v1723
        %v1737 = vmul.f32 %v1710, %v1727
        %v1738 = vmul.f32 %v1711, %v1723
        %v1739 = vmul.f32 %v1712, %v1727
        %v1740 = vmul.f32 %v1713, %v1723
        %v1741 = vmul.f32 %v1714, %v1727
        %v1742 = vmul.f32 %v1715, %v1723
        %v1743 = vmul.f32 %v1716, %v1727
        %v1744 = vmul.f32 %v1717, %v1723
        %v1745 = vmul.f32 %v1718, %v1727
        %v1747 = vlaneseq
        %v1748 = vshrl.u32 %v1747, 7
        %v1749 = vsub.s32 0, %v1748
        %v1750 = vrot.slane %v1589, %v1749
        %v1751 = vlaneseq
        %v1752 = vshrl.u32 %v1751, 7
        %v1753 = vsub.s32 1, %v1752
        %v1754 = vrot.slane %v1589, %v1753
        %v1757 = vadd.f32 %v1730, %v1750
        %v1758 = vadd.f32 %v1731, %v1754
        %v1759 = vadd.f32 %v1732, %v1750
        %v1760 = vadd.f32 %v1733, %v1754
        %v1761 = vadd.f32 %v1734, %v1750
        %v1762 = vadd.f32 %v1735, %v1754
        %v1763 = vadd.f32 %v1736, %v1750
        %v1764 = vadd.f32 %v1737, %v1754
        %v1765 = vadd.f32 %v1738, %v1750
        %v1766 = vadd.f32 %v1739, %v1754
        %v1767 = vadd.f32 %v1740, %v1750
        %v1768 = vadd.f32 %v1741, %v1754
        %v1769 = vadd.f32 %v1742, %v1750
        %v1770 = vadd.f32 %v1743, %v1754
        %v1771 = vadd.f32 %v1744, %v1750
        %v1772 = vadd.f32 %v1745, %v1754
        %v1773 = vpack.c.bf16 %v1759, %v1757
        %v1774 = vpack.c.bf16 %v1760, %v1758
        %v1775 = vpack.c.bf16 %v1763, %v1761
        %v1776 = vpack.c.bf16 %v1764, %v1762
        %v1777 = vpack.c.bf16 %v1767, %v1765
        %v1778 = vpack.c.bf16 %v1768, %v1766
        %v1779 = vpack.c.bf16 %v1771, %v1769
        %v1780 = vpack.c.bf16 %v1772, %v1770
        %v1781 = vld [vmem:[%s970] sm:$0xff]
        %v1782 = vld [vmem:[%s970 + $0x8] sm:$0xff]
        %v1783 = vld [vmem:[%s970 + $0x10] sm:$0xff]
        %v1784 = vld [vmem:[%s970 + $0x18] sm:$0xff]
        %v1785 = vld [vmem:[%s970 + $0x20] sm:$0xff]
        %v1786 = vld [vmem:[%s970 + $0x28] sm:$0xff]
        %v1787 = vld [vmem:[%s970 + $0x30] sm:$0xff]
        %v1788 = vld [vmem:[%s970 + $0x38] sm:$0xff]
        %v1789 = vld [vmem:[%s970 + $0x40] sm:$0xff]
        %v1790 = vld [vmem:[%s970 + $0x48] sm:$0xff]
        %v1791 = vld [vmem:[%s970 + $0x50] sm:$0xff]
        %v1792 = vld [vmem:[%s970 + $0x58] sm:$0xff]
        %v1793 = vld [vmem:[%s970 + $0x60] sm:$0xff]
        %v1794 = vld [vmem:[%s970 + $0x68] sm:$0xff]
        %v1795 = vld [vmem:[%s970 + $0x70] sm:$0xff]
        %v1796 = vld [vmem:[%s970 + $0x78] sm:$0xff]
        %v1797 = vld [vmem:[%s970 + $0x80] sm:$0xff]
        %v1798 = vld [vmem:[%s970 + $0x88] sm:$0xff]
        %v1799 = vld [vmem:[%s970 + $0x90] sm:$0xff]
        %v1800 = vld [vmem:[%s970 + $0x98] sm:$0xff]
        %v1801 = vld [vmem:[%s970 + $0xa0] sm:$0xff]
        %v1802 = vld [vmem:[%s970 + $0xa8] sm:$0xff]
        %v1803 = vld [vmem:[%s970 + $0xb0] sm:$0xff]
        %v1804 = vld [vmem:[%s970 + $0xb8] sm:$0xff]
        %v1805 = vld [vmem:[%s970 + $0xc0] sm:$0xff]
        %v1806 = vld [vmem:[%s970 + $0xc8] sm:$0xff]
        %v1807 = vld [vmem:[%s970 + $0xd0] sm:$0xff]
        %v1808 = vld [vmem:[%s970 + $0xd8] sm:$0xff]
        %v1809 = vld [vmem:[%s970 + $0xe0] sm:$0xff]
        %v1810 = vld [vmem:[%s970 + $0xe8] sm:$0xff]
        %v1811 = vld [vmem:[%s970 + $0xf0] sm:$0xff]
        %v1812 = vld [vmem:[%s970 + $0xf8] sm:$0xff]
        %v1813 = vld [vmem:[%s970 + $0x100] sm:$0xff]
        %v1814 = vld [vmem:[%s970 + $0x108] sm:$0xff]
        %v1815 = vld [vmem:[%s970 + $0x110] sm:$0xff]
        %v1816 = vld [vmem:[%s970 + $0x118] sm:$0xff]
        %v1817 = vld [vmem:[%s970 + $0x120] sm:$0xff]
        %v1818 = vld [vmem:[%s970 + $0x128] sm:$0xff]
        %v1819 = vld [vmem:[%s970 + $0x130] sm:$0xff]
        %v1820 = vld [vmem:[%s970 + $0x138] sm:$0xff]
        %v1821 = vld [vmem:[%s970 + $0x140] sm:$0xff]
        %v1822 = vld [vmem:[%s970 + $0x148] sm:$0xff]
        %v1823 = vld [vmem:[%s970 + $0x150] sm:$0xff]
        %v1824 = vld [vmem:[%s970 + $0x158] sm:$0xff]
        %v1825 = vld [vmem:[%s970 + $0x160] sm:$0xff]
        %v1826 = vld [vmem:[%s970 + $0x168] sm:$0xff]
        %v1827 = vld [vmem:[%s970 + $0x170] sm:$0xff]
        %v1828 = vld [vmem:[%s970 + $0x178] sm:$0xff]
        %v1829 = vld [vmem:[%s970 + $0x180] sm:$0xff]
        %v1830 = vld [vmem:[%s970 + $0x188] sm:$0xff]
        %v1831 = vld [vmem:[%s970 + $0x190] sm:$0xff]
        %v1832 = vld [vmem:[%s970 + $0x198] sm:$0xff]
        %v1833 = vld [vmem:[%s970 + $0x1a0] sm:$0xff]
        %v1834 = vld [vmem:[%s970 + $0x1a8] sm:$0xff]
        %v1835 = vld [vmem:[%s970 + $0x1b0] sm:$0xff]
        %v1836 = vld [vmem:[%s970 + $0x1b8] sm:$0xff]
        %v1837 = vld [vmem:[%s970 + $0x1c0] sm:$0xff]
        %v1838 = vld [vmem:[%s970 + $0x1c8] sm:$0xff]
        %v1839 = vld [vmem:[%s970 + $0x1d0] sm:$0xff]
        %v1840 = vld [vmem:[%s970 + $0x1d8] sm:$0xff]
        %v1841 = vld [vmem:[%s970 + $0x1e0] sm:$0xff]
        %v1842 = vld [vmem:[%s970 + $0x1e8] sm:$0xff]
        %v1843 = vld [vmem:[%s970 + $0x1f0] sm:$0xff]
        %v1844 = vld [vmem:[%s970 + $0x1f8] sm:$0xff]
        %v1845 = vld [vmem:[%s970 + $0x200] sm:$0xff]
        %v1846 = vld [vmem:[%s970 + $0x208] sm:$0xff]
        %v1847 = vld [vmem:[%s970 + $0x210] sm:$0xff]
        %v1848 = vld [vmem:[%s970 + $0x218] sm:$0xff]
        %v1849 = vld [vmem:[%s970 + $0x220] sm:$0xff]
        %v1850 = vld [vmem:[%s970 + $0x228] sm:$0xff]
        %v1851 = vld [vmem:[%s970 + $0x230] sm:$0xff]
        %v1852 = vld [vmem:[%s970 + $0x238] sm:$0xff]
        %v1853 = vld [vmem:[%s970 + $0x240] sm:$0xff]
        %v1854 = vld [vmem:[%s970 + $0x248] sm:$0xff]
        %v1855 = vld [vmem:[%s970 + $0x250] sm:$0xff]
        %v1856 = vld [vmem:[%s970 + $0x258] sm:$0xff]
        %v1857 = vld [vmem:[%s970 + $0x260] sm:$0xff]
        %v1858 = vld [vmem:[%s970 + $0x268] sm:$0xff]
        %v1859 = vld [vmem:[%s970 + $0x270] sm:$0xff]
        %v1860 = vld [vmem:[%s970 + $0x278] sm:$0xff]
        %v1861 = vld [vmem:[%s970 + $0x280] sm:$0xff]
        %v1862 = vld [vmem:[%s970 + $0x288] sm:$0xff]
        %v1863 = vld [vmem:[%s970 + $0x290] sm:$0xff]
        %v1864 = vld [vmem:[%s970 + $0x298] sm:$0xff]
        %v1865 = vld [vmem:[%s970 + $0x2a0] sm:$0xff]
        %v1866 = vld [vmem:[%s970 + $0x2a8] sm:$0xff]
        %v1867 = vld [vmem:[%s970 + $0x2b0] sm:$0xff]
        %v1868 = vld [vmem:[%s970 + $0x2b8] sm:$0xff]
        %v1869 = vld [vmem:[%s970 + $0x2c0] sm:$0xff]
        %v1870 = vld [vmem:[%s970 + $0x2c8] sm:$0xff]
        %v1871 = vld [vmem:[%s970 + $0x2d0] sm:$0xff]
        %v1872 = vld [vmem:[%s970 + $0x2d8] sm:$0xff]
        %v1873 = vld [vmem:[%s970 + $0x2e0] sm:$0xff]
        %v1874 = vld [vmem:[%s970 + $0x2e8] sm:$0xff]
        %v1875 = vld [vmem:[%s970 + $0x2f0] sm:$0xff]
        %v1876 = vld [vmem:[%s970 + $0x2f8] sm:$0xff]
        %v1877 = vld [vmem:[%s979] sm:$0x3f]
        %v1879 = vlaneseq
        %v1880 = vshrl.u32 %v1879, 7
        %v1881 = vsub.s32 0, %v1880
        %v1882 = vrot.slane %v1877, %v1881
        %v1883 = vlaneseq
        %v1884 = vshrl.u32 %v1883, 7
        %v1885 = vsub.s32 1, %v1884
        %v1886 = vrot.slane %v1877, %v1885
        %v1887 = vlaneseq
        %v1888 = vshrl.u32 %v1887, 7
        %v1889 = vsub.s32 2, %v1888
        %v1890 = vrot.slane %v1877, %v1889
        %v1891 = vlaneseq
        %v1892 = vshrl.u32 %v1891, 7
        %v1893 = vsub.s32 3, %v1892
        %v1894 = vrot.slane %v1877, %v1893
        %v1895 = vlaneseq
        %v1896 = vshrl.u32 %v1895, 7
        %v1897 = vsub.s32 4, %v1896
        %v1898 = vrot.slane %v1877, %v1897
        %v1899 = vlaneseq
        %v1900 = vshrl.u32 %v1899, 7
        %v1901 = vsub.s32 5, %v1900
        %v1902 = vrot.slane %v1877, %v1901
        %v2005 = vunpack.c.l.b16 %v1781
        %v2006 = vunpack.c.h.b16 %v1781
        %v2007 = vunpack.c.l.b16 %v1782
        %v2008 = vunpack.c.h.b16 %v1782
        %v2009 = vunpack.c.l.b16 %v1783
        %v2010 = vunpack.c.h.b16 %v1783
        %v2011 = vunpack.c.l.b16 %v1784
        %v2012 = vunpack.c.h.b16 %v1784
        %v2013 = vunpack.c.l.b16 %v1785
        %v2014 = vunpack.c.h.b16 %v1785
        %v2015 = vunpack.c.l.b16 %v1786
        %v2016 = vunpack.c.h.b16 %v1786
        %v2017 = vunpack.c.l.b16 %v1787
        %v2018 = vunpack.c.h.b16 %v1787
        %v2019 = vunpack.c.l.b16 %v1788
        %v2020 = vunpack.c.h.b16 %v1788
        %v2021 = vunpack.c.l.b16 %v1789
        %v2022 = vunpack.c.h.b16 %v1789
        %v2023 = vunpack.c.l.b16 %v1790
        %v2024 = vunpack.c.h.b16 %v1790
        %v2025 = vunpack.c.l.b16 %v1791
        %v2026 = vunpack.c.h.b16 %v1791
        %v2027 = vunpack.c.l.b16 %v1792
        %v2028 = vunpack.c.h.b16 %v1792
        %v2029 = vunpack.c.l.b16 %v1793
        %v2030 = vunpack.c.h.b16 %v1793
        %v2031 = vunpack.c.l.b16 %v1794
        %v2032 = vunpack.c.h.b16 %v1794
        %v2033 = vunpack.c.l.b16 %v1795
        %v2034 = vunpack.c.h.b16 %v1795
        %v2035 = vunpack.c.l.b16 %v1796
        %v2036 = vunpack.c.h.b16 %v1796
        %v2037 = vunpack.c.l.b16 %v1797
        %v2038 = vunpack.c.h.b16 %v1797
        %v2039 = vunpack.c.l.b16 %v1798
        %v2040 = vunpack.c.h.b16 %v1798
        %v2041 = vunpack.c.l.b16 %v1799
        %v2042 = vunpack.c.h.b16 %v1799
        %v2043 = vunpack.c.l.b16 %v1800
        %v2044 = vunpack.c.h.b16 %v1800
        %v2045 = vunpack.c.l.b16 %v1801
        %v2046 = vunpack.c.h.b16 %v1801
        %v2047 = vunpack.c.l.b16 %v1802
        %v2048 = vunpack.c.h.b16 %v1802
        %v2049 = vunpack.c.l.b16 %v1803
        %v2050 = vunpack.c.h.b16 %v1803
        %v2051 = vunpack.c.l.b16 %v1804
        %v2052 = vunpack.c.h.b16 %v1804
        %v2053 = vunpack.c.l.b16 %v1805
        %v2054 = vunpack.c.h.b16 %v1805
        %v2055 = vunpack.c.l.b16 %v1806
        %v2056 = vunpack.c.h.b16 %v1806
        %v2057 = vunpack.c.l.b16 %v1807
        %v2058 = vunpack.c.h.b16 %v1807
        %v2059 = vunpack.c.l.b16 %v1808
        %v2060 = vunpack.c.h.b16 %v1808
        %v2061 = vunpack.c.l.b16 %v1809
        %v2062 = vunpack.c.h.b16 %v1809
        %v2063 = vunpack.c.l.b16 %v1810
        %v2064 = vunpack.c.h.b16 %v1810
        %v2065 = vunpack.c.l.b16 %v1811
        %v2066 = vunpack.c.h.b16 %v1811
        %v2067 = vunpack.c.l.b16 %v1812
        %v2068 = vunpack.c.h.b16 %v1812
        %v2069 = vunpack.c.l.b16 %v1813
        %v2070 = vunpack.c.h.b16 %v1813
        %v2071 = vunpack.c.l.b16 %v1814
        %v2072 = vunpack.c.h.b16 %v1814
        %v2073 = vunpack.c.l.b16 %v1815
        %v2074 = vunpack.c.h.b16 %v1815
        %v2075 = vunpack.c.l.b16 %v1816
        %v2076 = vunpack.c.h.b16 %v1816
        %v2077 = vunpack.c.l.b16 %v1817
        %v2078 = vunpack.c.h.b16 %v1817
        %v2079 = vunpack.c.l.b16 %v1818
        %v2080 = vunpack.c.h.b16 %v1818
        %v2081 = vunpack.c.l.b16 %v1819
        %v2082 = vunpack.c.h.b16 %v1819
        %v2083 = vunpack.c.l.b16 %v1820
        %v2084 = vunpack.c.h.b16 %v1820
        %v2085 = vunpack.c.l.b16 %v1821
        %v2086 = vunpack.c.h.b16 %v1821
        %v2087 = vunpack.c.l.b16 %v1822
        %v2088 = vunpack.c.h.b16 %v1822
        %v2089 = vunpack.c.l.b16 %v1823
        %v2090 = vunpack.c.h.b16 %v1823
        %v2091 = vunpack.c.l.b16 %v1824
        %v2092 = vunpack.c.h.b16 %v1824
        %v2093 = vunpack.c.l.b16 %v1825
        %v2094 = vunpack.c.h.b16 %v1825
        %v2095 = vunpack.c.l.b16 %v1826
        %v2096 = vunpack.c.h.b16 %v1826
        %v2097 = vunpack.c.l.b16 %v1827
        %v2098 = vunpack.c.h.b16 %v1827
        %v2099 = vunpack.c.l.b16 %v1828
        %v2100 = vunpack.c.h.b16 %v1828
        %v2101 = vunpack.c.l.b16 %v1829
        %v2102 = vunpack.c.h.b16 %v1829
        %v2103 = vunpack.c.l.b16 %v1830
        %v2104 = vunpack.c.h.b16 %v1830
        %v2105 = vunpack.c.l.b16 %v1831
        %v2106 = vunpack.c.h.b16 %v1831
        %v2107 = vunpack.c.l.b16 %v1832
        %v2108 = vunpack.c.h.b16 %v1832
        %v2109 = vunpack.c.l.b16 %v1833
        %v2110 = vunpack.c.h.b16 %v1833
        %v2111 = vunpack.c.l.b16 %v1834
        %v2112 = vunpack.c.h.b16 %v1834
        %v2113 = vunpack.c.l.b16 %v1835
        %v2114 = vunpack.c.h.b16 %v1835
        %v2115 = vunpack.c.l.b16 %v1836
        %v2116 = vunpack.c.h.b16 %v1836
        %v2117 = vunpack.c.l.b16 %v1837
        %v2118 = vunpack.c.h.b16 %v1837
        %v2119 = vunpack.c.l.b16 %v1838
        %v2120 = vunpack.c.h.b16 %v1838
        %v2121 = vunpack.c.l.b16 %v1839
        %v2122 = vunpack.c.h.b16 %v1839
        %v2123 = vunpack.c.l.b16 %v1840
        %v2124 = vunpack.c.h.b16 %v1840
        %v2125 = vunpack.c.l.b16 %v1841
        %v2126 = vunpack.c.h.b16 %v1841
        %v2127 = vunpack.c.l.b16 %v1842
        %v2128 = vunpack.c.h.b16 %v1842
        %v2129 = vunpack.c.l.b16 %v1843
        %v2130 = vunpack.c.h.b16 %v1843
        %v2131 = vunpack.c.l.b16 %v1844
        %v2132 = vunpack.c.h.b16 %v1844
        %v2133 = vunpack.c.l.b16 %v1845
        %v2134 = vunpack.c.h.b16 %v1845
        %v2135 = vunpack.c.l.b16 %v1846
        %v2136 = vunpack.c.h.b16 %v1846
        %v2137 = vunpack.c.l.b16 %v1847
        %v2138 = vunpack.c.h.b16 %v1847
        %v2139 = vunpack.c.l.b16 %v1848
        %v2140 = vunpack.c.h.b16 %v1848
        %v2141 = vunpack.c.l.b16 %v1849
        %v2142 = vunpack.c.h.b16 %v1849
        %v2143 = vunpack.c.l.b16 %v1850
        %v2144 = vunpack.c.h.b16 %v1850
        %v2145 = vunpack.c.l.b16 %v1851
        %v2146 = vunpack.c.h.b16 %v1851
        %v2147 = vunpack.c.l.b16 %v1852
        %v2148 = vunpack.c.h.b16 %v1852
        %v2149 = vunpack.c.l.b16 %v1853
        %v2150 = vunpack.c.h.b16 %v1853
        %v2151 = vunpack.c.l.b16 %v1854
        %v2152 = vunpack.c.h.b16 %v1854
        %v2153 = vunpack.c.l.b16 %v1855
        %v2154 = vunpack.c.h.b16 %v1855
        %v2155 = vunpack.c.l.b16 %v1856
        %v2156 = vunpack.c.h.b16 %v1856
        %v2157 = vunpack.c.l.b16 %v1857
        %v2158 = vunpack.c.h.b16 %v1857
        %v2159 = vunpack.c.l.b16 %v1858
        %v2160 = vunpack.c.h.b16 %v1858
        %v2161 = vunpack.c.l.b16 %v1859
        %v2162 = vunpack.c.h.b16 %v1859
        %v2163 = vunpack.c.l.b16 %v1860
        %v2164 = vunpack.c.h.b16 %v1860
        %v2165 = vunpack.c.l.b16 %v1861
        %v2166 = vunpack.c.h.b16 %v1861
        %v2167 = vunpack.c.l.b16 %v1862
        %v2168 = vunpack.c.h.b16 %v1862
        %v2169 = vunpack.c.l.b16 %v1863
        %v2170 = vunpack.c.h.b16 %v1863
        %v2171 = vunpack.c.l.b16 %v1864
        %v2172 = vunpack.c.h.b16 %v1864
        %v2173 = vunpack.c.l.b16 %v1865
        %v2174 = vunpack.c.h.b16 %v1865
        %v2175 = vunpack.c.l.b16 %v1866
        %v2176 = vunpack.c.h.b16 %v1866
        %v2177 = vunpack.c.l.b16 %v1867
        %v2178 = vunpack.c.h.b16 %v1867
        %v2179 = vunpack.c.l.b16 %v1868
        %v2180 = vunpack.c.h.b16 %v1868
        %v2181 = vunpack.c.l.b16 %v1869
        %v2182 = vunpack.c.h.b16 %v1869
        %v2183 = vunpack.c.l.b16 %v1870
        %v2184 = vunpack.c.h.b16 %v1870
        %v2185 = vunpack.c.l.b16 %v1871
        %v2186 = vunpack.c.h.b16 %v1871
        %v2187 = vunpack.c.l.b16 %v1872
        %v2188 = vunpack.c.h.b16 %v1872
        %v2189 = vunpack.c.l.b16 %v1873
        %v2190 = vunpack.c.h.b16 %v1873
        %v2191 = vunpack.c.l.b16 %v1874
        %v2192 = vunpack.c.h.b16 %v1874
        %v2193 = vunpack.c.l.b16 %v1875
        %v2194 = vunpack.c.h.b16 %v1875
        %v2195 = vunpack.c.l.b16 %v1876
        %v2196 = vunpack.c.h.b16 %v1876
        %v2197 = vpack.c.b16 %v2011, %v2005
        %v2198 = vpack.c.b16 %v2012, %v2006
        %v2199 = vpack.c.b16 %v2013, %v2007
        %v2200 = vpack.c.b16 %v2014, %v2008
        %v2201 = vpack.c.b16 %v2015, %v2009
        %v2202 = vpack.c.b16 %v2016, %v2010
        %v2203 = vpack.c.b16 %v2023, %v2017
        %v2204 = vpack.c.b16 %v2024, %v2018
        %v2205 = vpack.c.b16 %v2025, %v2019
        %v2206 = vpack.c.b16 %v2026, %v2020
        %v2207 = vpack.c.b16 %v2027, %v2021
        %v2208 = vpack.c.b16 %v2028, %v2022
        %v2209 = vpack.c.b16 %v2035, %v2029
        %v2210 = vpack.c.b16 %v2036, %v2030
        %v2211 = vpack.c.b16 %v2037, %v2031
        %v2212 = vpack.c.b16 %v2038, %v2032
        %v2213 = vpack.c.b16 %v2039, %v2033
        %v2214 = vpack.c.b16 %v2040, %v2034
        %v2215 = vpack.c.b16 %v2047, %v2041
        %v2216 = vpack.c.b16 %v2048, %v2042
        %v2217 = vpack.c.b16 %v2049, %v2043
        %v2218 = vpack.c.b16 %v2050, %v2044
        %v2219 = vpack.c.b16 %v2051, %v2045
        %v2220 = vpack.c.b16 %v2052, %v2046
        %v2221 = vpack.c.b16 %v2059, %v2053
        %v2222 = vpack.c.b16 %v2060, %v2054
        %v2223 = vpack.c.b16 %v2061, %v2055
        %v2224 = vpack.c.b16 %v2062, %v2056
        %v2225 = vpack.c.b16 %v2063, %v2057
        %v2226 = vpack.c.b16 %v2064, %v2058
        %v2227 = vpack.c.b16 %v2071, %v2065
        %v2228 = vpack.c.b16 %v2072, %v2066
        %v2229 = vpack.c.b16 %v2073, %v2067
        %v2230 = vpack.c.b16 %v2074, %v2068
        %v2231 = vpack.c.b16 %v2075, %v2069
        %v2232 = vpack.c.b16 %v2076, %v2070
        %v2233 = vpack.c.b16 %v2083, %v2077
        %v2234 = vpack.c.b16 %v2084, %v2078
        %v2235 = vpack.c.b16 %v2085, %v2079
        %v2236 = vpack.c.b16 %v2086, %v2080
        %v2237 = vpack.c.b16 %v2087, %v2081
        %v2238 = vpack.c.b16 %v2088, %v2082
        %v2239 = vpack.c.b16 %v2095, %v2089
        %v2240 = vpack.c.b16 %v2096, %v2090
        %v2241 = vpack.c.b16 %v2097, %v2091
        %v2242 = vpack.c.b16 %v2098, %v2092
        %v2243 = vpack.c.b16 %v2099, %v2093
        %v2244 = vpack.c.b16 %v2100, %v2094
        %v2245 = vpack.c.b16 %v2107, %v2101
        %v2246 = vpack.c.b16 %v2108, %v2102
        %v2247 = vpack.c.b16 %v2109, %v2103
        %v2248 = vpack.c.b16 %v2110, %v2104
        %v2249 = vpack.c.b16 %v2111, %v2105
        %v2250 = vpack.c.b16 %v2112, %v2106
        %v2251 = vpack.c.b16 %v2119, %v2113
        %v2252 = vpack.c.b16 %v2120, %v2114
        %v2253 = vpack.c.b16 %v2121, %v2115
        %v2254 = vpack.c.b16 %v2122, %v2116
        %v2255 = vpack.c.b16 %v2123, %v2117
        %v2256 = vpack.c.b16 %v2124, %v2118
        %v2257 = vpack.c.b16 %v2131, %v2125
        %v2258 = vpack.c.b16 %v2132, %v2126
        %v2259 = vpack.c.b16 %v2133, %v2127
        %v2260 = vpack.c.b16 %v2134, %v2128
        %v2261 = vpack.c.b16 %v2135, %v2129
        %v2262 = vpack.c.b16 %v2136, %v2130
        %v2263 = vpack.c.b16 %v2143, %v2137
        %v2264 = vpack.c.b16 %v2144, %v2138
        %v2265 = vpack.c.b16 %v2145, %v2139
        %v2266 = vpack.c.b16 %v2146, %v2140
        %v2267 = vpack.c.b16 %v2147, %v2141
        %v2268 = vpack.c.b16 %v2148, %v2142
        %v2269 = vpack.c.b16 %v2155, %v2149
        %v2270 = vpack.c.b16 %v2156, %v2150
        %v2271 = vpack.c.b16 %v2157, %v2151
        %v2272 = vpack.c.b16 %v2158, %v2152
        %v2273 = vpack.c.b16 %v2159, %v2153
        %v2274 = vpack.c.b16 %v2160, %v2154
        %v2275 = vpack.c.b16 %v2167, %v2161
        %v2276 = vpack.c.b16 %v2168, %v2162
        %v2277 = vpack.c.b16 %v2169, %v2163
        %v2278 = vpack.c.b16 %v2170, %v2164
        %v2279 = vpack.c.b16 %v2171, %v2165
        %v2280 = vpack.c.b16 %v2172, %v2166
        %v2281 = vpack.c.b16 %v2179, %v2173
        %v2282 = vpack.c.b16 %v2180, %v2174
        %v2283 = vpack.c.b16 %v2181, %v2175
        %v2284 = vpack.c.b16 %v2182, %v2176
        %v2285 = vpack.c.b16 %v2183, %v2177
        %v2286 = vpack.c.b16 %v2184, %v2178
        %v2287 = vpack.c.b16 %v2191, %v2185
        %v2288 = vpack.c.b16 %v2192, %v2186
        %v2289 = vpack.c.b16 %v2193, %v2187
        %v2290 = vpack.c.b16 %v2194, %v2188
        %v2291 = vpack.c.b16 %v2195, %v2189
        %v2292 = vpack.c.b16 %v2196, %v2190
        %2389 = vmatprep.subr.bf16.mxu0 %v2198
        %2390 = vmatpush1.bf16.msra.mxu0 %v2197
        %2391 = vmatprep.subr.bf16.mxu0 %v2204
        %2392 = vmatpush1.bf16.msra.mxu0 %v2203
        %2393 = vmatprep.subr.bf16.mxu0 %v2210
        %2394 = vmatpush1.bf16.msra.mxu0 %v2209
        %2395 = vmatprep.subr.bf16.mxu0 %v2216
        %2396 = vmatpush1.bf16.msra.mxu0 %v2215
        %2397 = vmatprep.subr.bf16.mxu0 %v2222
        %2398 = vmatpush1.bf16.msra.mxu0 %v2221
        %2399 = vmatprep.subr.bf16.mxu0 %v2228
        %2400 = vmatpush1.bf16.msra.mxu0 %v2227
        %2401 = vmatprep.subr.bf16.mxu0 %v2234
        %2402 = vmatpush1.bf16.msra.mxu0 %v2233
        %2403 = vmatprep.subr.bf16.mxu0 %v2240
        %2404 = vmatpush1.bf16.msra.mxu0 %v2239
        %2405 = vmatprep.subr.bf16.mxu0 %v2246
        %2406 = vmatpush1.bf16.msra.mxu0 %v2245
        %2407 = vmatprep.subr.bf16.mxu0 %v2252
        %2408 = vmatpush1.bf16.msra.mxu0 %v2251
        %2409 = vmatprep.subr.bf16.mxu0 %v2258
        %2410 = vmatpush1.bf16.msra.mxu0 %v2257
        %2411 = vmatprep.subr.bf16.mxu0 %v2264
        %2412 = vmatpush1.bf16.msra.mxu0 %v2263
        %2413 = vmatprep.subr.bf16.mxu0 %v2270
        %2414 = vmatpush1.bf16.msra.mxu0 %v2269
        %2415 = vmatprep.subr.bf16.mxu0 %v2276
        %2416 = vmatpush1.bf16.msra.mxu0 %v2275
        %2417 = vmatprep.subr.bf16.mxu0 %v2282
        %2418 = vmatpush1.bf16.msra.mxu0 %v2281
        %2419 = vmatprep.subr.bf16.mxu0 %v2288
        %2420 = vmatpush1.bf16.msra.mxu0 %v2287
        %2421 = vmatprep.mubr.bf16.mxu0 %v1774
        %2422 = vmatmul.mubr.bf16.gmra.mrb[0].mxu0 %v1773
        %v2423 = vpop.f32.mrb[0].mxu0
        %v2424 = vadd.f32 %v1882, %v2423
        %v2425 = vpop.f32.mrb[0].mxu0
        %v2426 = vadd.f32 %v1886, %v2425
        %v2427 = vpop.f32.mrb[0].mxu0
        %v2428 = vadd.f32 %v1882, %v2427
        %v2429 = vpop.f32.mrb[0].mxu0
        %v2430 = vadd.f32 %v1886, %v2429
        %2431 = vmatprep.mubr.bf16.mxu0 %v1776
        %2432 = vmatmul.mubr.bf16.gmra.mrb[0].mxu0 %v1775
        %v2433 = vpop.f32.mrb[0].mxu0
        %v2434 = vadd.f32 %v1882, %v2433
        %v2435 = vpop.f32.mrb[0].mxu0
        %v2436 = vadd.f32 %v1886, %v2435
        %v2437 = vpop.f32.mrb[0].mxu0
        %v2438 = vadd.f32 %v1882, %v2437
        %v2439 = vpop.f32.mrb[0].mxu0
        %v2440 = vadd.f32 %v1886, %v2439
        %2441 = vmatprep.mubr.bf16.mxu0 %v1778
        %2442 = vmatmul.mubr.bf16.gmra.mrb[0].mxu0 %v1777
        %v2443 = vpop.f32.mrb[0].mxu0
        %v2444 = vadd.f32 %v1882, %v2443
        %v2445 = vpop.f32.mrb[0].mxu0
        %v2446 = vadd.f32 %v1886, %v2445
        %v2447 = vpop.f32.mrb[0].mxu0
        %v2448 = vadd.f32 %v1882, %v2447
        %v2449 = vpop.f32.mrb[0].mxu0
        %v2450 = vadd.f32 %v1886, %v2449
        %2451 = vmatprep.mubr.bf16.mxu0 %v1780
        %2452 = vmatmul.mubr.bf16.gmra.mrb[0].mxu0 %v1779
        %v2453 = vpop.f32.mrb[0].mxu0
        %v2454 = vadd.f32 %v1882, %v2453
        %v2455 = vpop.f32.mrb[0].mxu0
        %v2456 = vadd.f32 %v1886, %v2455
        %v2457 = vpop.f32.mrb[0].mxu0
        %v2458 = vadd.f32 %v1882, %v2457
        %v2459 = vpop.f32.mrb[0].mxu0
        %v2460 = vadd.f32 %v1886, %v2459
        %2461 = vdwg.mxu0
        %2462 = vmatprep.subr.bf16.mxu0 %v2200
        %2463 = vmatpush1.bf16.msra.mxu0 %v2199
        %2464 = vmatprep.subr.bf16.mxu0 %v2206
        %2465 = vmatpush1.bf16.msra.mxu0 %v2205
        %2466 = vmatprep.subr.bf16.mxu0 %v2212
        %2467 = vmatpush1.bf16.msra.mxu0 %v2211
        %2468 = vmatprep.subr.bf16.mxu0 %v2218
        %2469 = vmatpush1.bf16.msra.mxu0 %v2217
        %2470 = vmatprep.subr.bf16.mxu0 %v2224
        %2471 = vmatpush1.bf16.msra.mxu0 %v2223
        %2472 = vmatprep.subr.bf16.mxu0 %v2230
        %2473 = vmatpush1.bf16.msra.mxu0 %v2229
        %2474 = vmatprep.subr.bf16.mxu0 %v2236
        %2475 = vmatpush1.bf16.msra.mxu0 %v2235
        %2476 = vmatprep.subr.bf16.mxu0 %v2242
        %2477 = vmatpush1.bf16.msra.mxu0 %v2241
        %2478 = vmatprep.subr.bf16.mxu0 %v2248
        %2479 = vmatpush1.bf16.msra.mxu0 %v2247
        %2480 = vmatprep.subr.bf16.mxu0 %v2254
        %2481 = vmatpush1.bf16.msra.mxu0 %v2253
        %2482 = vmatprep.subr.bf16.mxu0 %v2260
        %2483 = vmatpush1.bf16.msra.mxu0 %v2259
        %2484 = vmatprep.subr.bf16.mxu0 %v2266
        %2485 = vmatpush1.bf16.msra.mxu0 %v2265
        %2486 = vmatprep.subr.bf16.mxu0 %v2272
        %2487 = vmatpush1.bf16.msra.mxu0 %v2271
        %2488 = vmatprep.subr.bf16.mxu0 %v2278
        %2489 = vmatpush1.bf16.msra.mxu0 %v2277
        %2490 = vmatprep.subr.bf16.mxu0 %v2284
        %2491 = vmatpush1.bf16.msra.mxu0 %v2283
        %2492 = vmatprep.subr.bf16.mxu0 %v2290
        %2493 = vmatpush1.bf16.msra.mxu0 %v2289
        %2494 = vmatprep.mubr.bf16.mxu0 %v1774
        %2495 = vmatmul.mubr.bf16.gmra.mrb[0].mxu0 %v1773
        %v2496 = vpop.f32.mrb[0].mxu0
        %v2497 = vadd.f32 %v1890, %v2496
        %v2498 = vpop.f32.mrb[0].mxu0
        %v2499 = vadd.f32 %v1894, %v2498
        %v2500 = vpop.f32.mrb[0].mxu0
        %v2501 = vadd.f32 %v1890, %v2500
        %v2502 = vpop.f32.mrb[0].mxu0
        %v2503 = vadd.f32 %v1894, %v2502
        %2504 = vmatprep.mubr.bf16.mxu0 %v1776
        %2505 = vmatmul.mubr.bf16.gmra.mrb[0].mxu0 %v1775
        %v2506 = vpop.f32.mrb[0].mxu0
        %v2507 = vadd.f32 %v1890, %v2506
        %v2508 = vpop.f32.mrb[0].mxu0
        %v2509 = vadd.f32 %v1894, %v2508
        %v2510 = vpop.f32.mrb[0].mxu0
        %v2511 = vadd.f32 %v1890, %v2510
        %v2512 = vpop.f32.mrb[0].mxu0
        %v2513 = vadd.f32 %v1894, %v2512
        %2514 = vmatprep.mubr.bf16.mxu0 %v1778
        %2515 = vmatmul.mubr.bf16.gmra.mrb[0].mxu0 %v1777
        %v2516 = vpop.f32.mrb[0].mxu0
        %v2517 = vadd.f32 %v1890, %v2516
        %v2518 = vpop.f32.mrb[0].mxu0
        %v2519 = vadd.f32 %v1894, %v2518
        %v2520 = vpop.f32.mrb[0].mxu0
        %v2521 = vadd.f32 %v1890, %v2520
        %v2522 = vpop.f32.mrb[0].mxu0
        %v2523 = vadd.f32 %v1894, %v2522
        %2524 = vmatprep.mubr.bf16.mxu0 %v1780
        %2525 = vmatmul.mubr.bf16.gmra.mrb[0].mxu0 %v1779
        %v2526 = vpop.f32.mrb[0].mxu0
        %v2527 = vadd.f32 %v1890, %v2526
        %v2528 = vpop.f32.mrb[0].mxu0
        %v2529 = vadd.f32 %v1894, %v2528
        %v2530 = vpop.f32.mrb[0].mxu0
        %v2531 = vadd.f32 %v1890, %v2530
        %v2532 = vpop.f32.mrb[0].mxu0
        %v2533 = vadd.f32 %v1894, %v2532
        %2534 = vdwg.mxu0
        %2535 = vmatprep.subr.bf16.mxu0 %v2202
        %2536 = vmatpush1.bf16.msra.mxu0 %v2201
        %2537 = vmatprep.subr.bf16.mxu0 %v2208
        %2538 = vmatpush1.bf16.msra.mxu0 %v2207
        %2539 = vmatprep.subr.bf16.mxu0 %v2214
        %2540 = vmatpush1.bf16.msra.mxu0 %v2213
        %2541 = vmatprep.subr.bf16.mxu0 %v2220
        %2542 = vmatpush1.bf16.msra.mxu0 %v2219
        %2543 = vmatprep.subr.bf16.mxu0 %v2226
        %2544 = vmatpush1.bf16.msra.mxu0 %v2225
        %2545 = vmatprep.subr.bf16.mxu0 %v2232
        %2546 = vmatpush1.bf16.msra.mxu0 %v2231
        %2547 = vmatprep.subr.bf16.mxu0 %v2238
        %2548 = vmatpush1.bf16.msra.mxu0 %v2237
        %2549 = vmatprep.subr.bf16.mxu0 %v2244
        %2550 = vmatpush1.bf16.msra.mxu0 %v2243
        %2551 = vmatprep.subr.bf16.mxu0 %v2250
        %2552 = vmatpush1.bf16.msra.mxu0 %v2249
        %2553 = vmatprep.subr.bf16.mxu0 %v2256
        %2554 = vmatpush1.bf16.msra.mxu0 %v2255
        %2555 = vmatprep.subr.bf16.mxu0 %v2262
        %2556 = vmatpush1.bf16.msra.mxu0 %v2261
        %2557 = vmatprep.subr.bf16.mxu0 %v2268
        %2558 = vmatpush1.bf16.msra.mxu0 %v2267
        %2559 = vmatprep.subr.bf16.mxu0 %v2274
        %2560 = vmatpush1.bf16.msra.mxu0 %v2273
        %2561 = vmatprep.subr.bf16.mxu0 %v2280
        %2562 = vmatpush1.bf16.msra.mxu0 %v2279
        %2563 = vmatprep.subr.bf16.mxu0 %v2286
        %2564 = vmatpush1.bf16.msra.mxu0 %v2285
        %2565 = vmatprep.subr.bf16.mxu0 %v2292
        %2566 = vmatpush1.bf16.msra.mxu0 %v2291
        %2567 = vmatprep.mubr.bf16.mxu0 %v1774
        %2568 = vmatmul.mubr.bf16.gmra.mrb[0].mxu0 %v1773
        %v2569 = vpop.f32.mrb[0].mxu0
        %v2570 = vadd.f32 %v1898, %v2569
        %v2571 = vpop.f32.mrb[0].mxu0
        %v2572 = vadd.f32 %v1902, %v2571
        %v2573 = vpop.f32.mrb[0].mxu0
        %v2574 = vadd.f32 %v1898, %v2573
        %v2575 = vpop.f32.mrb[0].mxu0
        %v2576 = vadd.f32 %v1902, %v2575
        %2577 = vmatprep.mubr.bf16.mxu0 %v1776
        %2578 = vmatmul.mubr.bf16.gmra.mrb[0].mxu0 %v1775
        %v2579 = vpop.f32.mrb[0].mxu0
        %v2580 = vadd.f32 %v1898, %v2579
        %v2581 = vpop.f32.mrb[0].mxu0
        %v2582 = vadd.f32 %v1902, %v2581
        %v2583 = vpop.f32.mrb[0].mxu0
        %v2584 = vadd.f32 %v1898, %v2583
        %v2585 = vpop.f32.mrb[0].mxu0
        %v2586 = vadd.f32 %v1902, %v2585
        %2587 = vmatprep.mubr.bf16.mxu0 %v1778
        %2588 = vmatmul.mubr.bf16.gmra.mrb[0].mxu0 %v1777
        %v2589 = vpop.f32.mrb[0].mxu0
        %v2590 = vadd.f32 %v1898, %v2589
        %v2591 = vpop.f32.mrb[0].mxu0
        %v2592 = vadd.f32 %v1902, %v2591
        %v2593 = vpop.f32.mrb[0].mxu0
        %v2594 = vadd.f32 %v1898, %v2593
        %v2595 = vpop.f32.mrb[0].mxu0
        %v2596 = vadd.f32 %v1902, %v2595
        %2597 = vmatprep.mubr.bf16.mxu0 %v1780
        %2598 = vmatmul.mubr.bf16.gmra.mrb[0].mxu0 %v1779
        %v2599 = vpop.f32.mrb[0].mxu0
        %v2600 = vadd.f32 %v1898, %v2599
        %v2601 = vpop.f32.mrb[0].mxu0
        %v2602 = vadd.f32 %v1902, %v2601
        %v2603 = vpop.f32.mrb[0].mxu0
        %v2604 = vadd.f32 %v1898, %v2603
        %v2605 = vpop.f32.mrb[0].mxu0
        %v2606 = vadd.f32 %v1902, %v2605
        %2607 = vdwg.mxu0
        %v2608 = vmul.f32 %v2424, 0.088388346
        %v2609 = vmul.f32 %v2426, 0.088388346
        %v2610 = vmul.f32 %v2428, 0.088388346
        %v2611 = vmul.f32 %v2430, 0.088388346
        %v2612 = vmul.f32 %v2434, 0.088388346
        %v2613 = vmul.f32 %v2436, 0.088388346
        %v2614 = vmul.f32 %v2438, 0.088388346
        %v2615 = vmul.f32 %v2440, 0.088388346
        %v2616 = vmul.f32 %v2444, 0.088388346
        %v2617 = vmul.f32 %v2446, 0.088388346
        %v2618 = vmul.f32 %v2448, 0.088388346
        %v2619 = vmul.f32 %v2450, 0.088388346
        %v2620 = vmul.f32 %v2454, 0.088388346
        %v2621 = vmul.f32 %v2456, 0.088388346
        %v2622 = vmul.f32 %v2458, 0.088388346
        %v2623 = vmul.f32 %v2460, 0.088388346
        %v2624 = vpack.c.bf16 %v2610, %v2608
        %v2625 = vpack.c.bf16 %v2611, %v2609
        %v2626 = vpack.c.bf16 %v2614, %v2612
        %v2627 = vpack.c.bf16 %v2615, %v2613
        %v2628 = vpack.c.bf16 %v2618, %v2616
        %v2629 = vpack.c.bf16 %v2619, %v2617
        %v2630 = vpack.c.bf16 %v2622, %v2620
        %v2631 = vpack.c.bf16 %v2623, %v2621
        %v2632 = vpack.c.bf16 %v2501, %v2497
        %v2633 = vpack.c.bf16 %v2503, %v2499
        %v2634 = vpack.c.bf16 %v2511, %v2507
        %v2635 = vpack.c.bf16 %v2513, %v2509
        %v2636 = vpack.c.bf16 %v2521, %v2517
        %v2637 = vpack.c.bf16 %v2523, %v2519
        %v2638 = vpack.c.bf16 %v2531, %v2527
        %v2639 = vpack.c.bf16 %v2533, %v2529
        %v2640 = vpack.c.bf16 %v2574, %v2570
        %v2641 = vpack.c.bf16 %v2576, %v2572
        %v2642 = vpack.c.bf16 %v2584, %v2580
        %v2643 = vpack.c.bf16 %v2586, %v2582
        %v2644 = vpack.c.bf16 %v2594, %v2590
        %v2645 = vpack.c.bf16 %v2596, %v2592
        %v2646 = vpack.c.bf16 %v2604, %v2600
        %v2647 = vpack.c.bf16 %v2606, %v2602
        %2648 = vmatprep.subr.bf16.mxu0 0
        %2649 = vmatpush1.bf16.xpose.msra.mxu0 %v2632
        %2650 = vmatprep.subr.bf16.mxu0 0
        %2651 = vmatpush1.bf16.xpose.msra.mxu0 %v2634
        %2652 = vmatprep.subr.bf16.mxu0 0
        %2653 = vmatpush1.bf16.xpose.msra.mxu0 %v2636
        %2654 = vmatprep.subr.bf16.mxu0 0
        %2655 = vmatpush1.bf16.xpose.msra.mxu0 %v2638
        %2656 = vmatprep.subr.bf16.mxu0 0
        %2657 = vmatpush1.bf16.xpose.msra.mxu0 0
        %2658 = vmatprep.subr.bf16.mxu0 0
        %2659 = vmatpush1.bf16.xpose.msra.mxu0 0
        %2660 = vmatprep.subr.bf16.mxu0 0
        %2661 = vmatpush1.bf16.xpose.msra.mxu0 0
        %2662 = vmatprep.subr.bf16.mxu0 0
        %2663 = vmatpush1.bf16.xpose.msra.mxu0 0
        %2664 = vmatprep.subr.bf16.mxu0 0
        %2665 = vmatpush1.bf16.xpose.msra.mxu0 0
        %2666 = vmatprep.subr.bf16.mxu0 0
        %2667 = vmatpush1.bf16.xpose.msra.mxu0 0
        %2668 = vmatprep.subr.bf16.mxu0 0
        %2669 = vmatpush1.bf16.xpose.msra.mxu0 0
        %2670 = vmatprep.subr.bf16.mxu0 0
        %2671 = vmatpush1.bf16.xpose.msra.mxu0 0
        %2672 = vmatprep.subr.bf16.mxu0 0
        %2673 = vmatpush1.bf16.xpose.msra.mxu0 0
        %2674 = vmatprep.subr.bf16.mxu0 0
        %2675 = vmatpush1.bf16.xpose.msra.mxu0 0
        %2676 = vmatprep.subr.bf16.mxu0 0
        %2677 = vmatpush1.bf16.xpose.msra.mxu0 0
        %2678 = vmatprep.subr.bf16.mxu0 0
        %2679 = vmatpush1.bf16.xpose.msra.mxu0 0
        %2680 = vmatprep.mubr.bf16.mxu0 0
        %2681 = vmatmul.mubr.bf16.gmra.mrb[0].mxu0 %v2624
        %v2682 = vpop.f32.mrb[0].mxu0
        %v2683 = vadd.f32 0.0, %v2682
        %v2684 = vpop.f32.mrb[0].mxu0
        %v2685 = vpop.f32.mrb[0].mxu0
        %v2686 = vadd.f32 0.0, %v2685
        %v2687 = vpop.f32.mrb[0].mxu0
        %2688 = vmatprep.mubr.bf16.mxu0 0
        %2689 = vmatmul.mubr.bf16.gmra.mrb[0].mxu0 %v2626
        %v2690 = vpop.f32.mrb[0].mxu0
        %v2691 = vadd.f32 0.0, %v2690
        %v2692 = vpop.f32.mrb[0].mxu0
        %v2693 = vpop.f32.mrb[0].mxu0
        %v2694 = vadd.f32 0.0, %v2693
        %v2695 = vpop.f32.mrb[0].mxu0
        %2696 = vmatprep.mubr.bf16.mxu0 0
        %2697 = vmatmul.mubr.bf16.gmra.mrb[0].mxu0 %v2628
        %v2698 = vpop.f32.mrb[0].mxu0
        %v2699 = vadd.f32 0.0, %v2698
        %v2700 = vpop.f32.mrb[0].mxu0
        %v2701 = vpop.f32.mrb[0].mxu0
        %v2702 = vadd.f32 0.0, %v2701
        %v2703 = vpop.f32.mrb[0].mxu0
        %2704 = vmatprep.mubr.bf16.mxu0 0
        %2705 = vmatmul.mubr.bf16.gmra.mrb[0].mxu0 %v2630
        %v2706 = vpop.f32.mrb[0].mxu0
        %v2707 = vadd.f32 0.0, %v2706
        %v2708 = vpop.f32.mrb[0].mxu0
        %v2709 = vpop.f32.mrb[0].mxu0
        %v2710 = vadd.f32 0.0, %v2709
        %v2711 = vpop.f32.mrb[0].mxu0
        %2712 = vdwg.mxu0
        %v2713 = vsel %vm1564, %v2683, -1e+30
        %v2714 = vsel %vm1565, %v2686, -1e+30
        %v2715 = vsel %vm1566, %v2691, -1e+30
        %v2716 = vsel %vm1567, %v2694, -1e+30
        %v2717 = vsel %vm1568, %v2699, -1e+30
        %v2718 = vsel %vm1569, %v2702, -1e+30
        %v2719 = vsel %vm1570, %v2707, -1e+30
        %v2720 = vsel %vm1571, %v2710, -1e+30
        %vm2721 = vcmask 523264
        %v2722 = vsel %vm2721, %v2713, -inf
        %2723 = vmax.xlane.f32.xlu0 %v2722
        %v2724 = vpop.xlane.xlu0 %2723
        %v2725 = vsel %vm2721, %v2714, -inf
        %2726 = vmax.xlane.f32.xlu0 %v2725
        %v2727 = vpop.xlane.xlu0 %2726
        %v2728 = vsel %vm2721, %v2715, -inf
        %2729 = vmax.xlane.f32.xlu0 %v2728
        %v2730 = vpop.xlane.xlu0 %2729
        %v2731 = vsel %vm2721, %v2716, -inf
        %2732 = vmax.xlane.f32.xlu0 %v2731
        %v2733 = vpop.xlane.xlu0 %2732
        %v2734 = vsel %vm2721, %v2717, -inf
        %2735 = vmax.xlane.f32.xlu0 %v2734
        %v2736 = vpop.xlane.xlu0 %2735
        %v2737 = vsel %vm2721, %v2718, -inf
        %2738 = vmax.xlane.f32.xlu0 %v2737
        %v2739 = vpop.xlane.xlu0 %2738
        %v2740 = vsel %vm2721, %v2719, -inf
        %2741 = vmax.xlane.f32.xlu0 %v2740
        %v2742 = vpop.xlane.xlu0 %2741
        %v2743 = vsel %vm2721, %v2720, -inf
        %2744 = vmax.xlane.f32.xlu0 %v2743
        %v2745 = vpop.xlane.xlu0 %2744
        %v2746 = vsub.f32 %v2713, %v2724
        %v2747 = vsub.f32 %v2714, %v2727
        %v2748 = vsub.f32 %v2715, %v2730
        %v2749 = vsub.f32 %v2716, %v2733
        %v2750 = vsub.f32 %v2717, %v2736
        %v2751 = vsub.f32 %v2718, %v2739
        %v2752 = vsub.f32 %v2719, %v2742
        %v2753 = vsub.f32 %v2720, %v2745
        %v2754 = vmul.f32 %v2746, 1.442695
        %v2755 = vpow.pop %v2754
        %v2756 = vmul.f32 %v2747, 1.442695
        %v2757 = vpow.pop %v2756
        %v2758 = vmul.f32 %v2748, 1.442695
        %v2759 = vpow.pop %v2758
        %v2760 = vmul.f32 %v2749, 1.442695
        %v2761 = vpow.pop %v2760
        %v2762 = vmul.f32 %v2750, 1.442695
        %v2763 = vpow.pop %v2762
        %v2764 = vmul.f32 %v2751, 1.442695
        %v2765 = vpow.pop %v2764
        %v2766 = vmul.f32 %v2752, 1.442695
        %v2767 = vpow.pop %v2766
        %v2768 = vmul.f32 %v2753, 1.442695
        %v2769 = vpow.pop %v2768
        %v2770 = vsel %vm2721, %v2755, 0.0
        %2771 = vadd.xlane.f32.xlu0 %v2770
        %v2772 = vpop.xlane.xlu0 %2771
        %v2773 = vsel %vm2721, %v2757, 0.0
        %2774 = vadd.xlane.f32.xlu0 %v2773
        %v2775 = vpop.xlane.xlu0 %2774
        %v2776 = vsel %vm2721, %v2759, 0.0
        %2777 = vadd.xlane.f32.xlu0 %v2776
        %v2778 = vpop.xlane.xlu0 %2777
        %v2779 = vsel %vm2721, %v2761, 0.0
        %2780 = vadd.xlane.f32.xlu0 %v2779
        %v2781 = vpop.xlane.xlu0 %2780
        %v2782 = vsel %vm2721, %v2763, 0.0
        %2783 = vadd.xlane.f32.xlu0 %v2782
        %v2784 = vpop.xlane.xlu0 %2783
        %v2785 = vsel %vm2721, %v2765, 0.0
        %2786 = vadd.xlane.f32.xlu0 %v2785
        %v2787 = vpop.xlane.xlu0 %2786
        %v2788 = vsel %vm2721, %v2767, 0.0
        %2789 = vadd.xlane.f32.xlu0 %v2788
        %v2790 = vpop.xlane.xlu0 %2789
        %v2791 = vsel %vm2721, %v2769, 0.0
        %2792 = vadd.xlane.f32.xlu0 %v2791
        %v2793 = vpop.xlane.xlu0 %2792
        %v2794 = vrcp.pop %v2772
        %v2795 = vrcp.pop %v2775
        %v2796 = vrcp.pop %v2778
        %v2797 = vrcp.pop %v2781
        %v2798 = vrcp.pop %v2784
        %v2799 = vrcp.pop %v2787
        %v2800 = vrcp.pop %v2790
        %v2801 = vrcp.pop %v2793
        %v2802 = vmul.f32 %v2755, %v2794
        %v2803 = vmul.f32 %v2757, %v2795
        %v2804 = vmul.f32 %v2759, %v2796
        %v2805 = vmul.f32 %v2761, %v2797
        %v2806 = vmul.f32 %v2763, %v2798
        %v2807 = vmul.f32 %v2765, %v2799
        %v2808 = vmul.f32 %v2767, %v2800
        %v2809 = vmul.f32 %v2769, %v2801
        %v2810 = vpack.c.bf16 %v2803, %v2802
        %v2811 = vpack.c.bf16 %v2805, %v2804
        %v2812 = vpack.c.bf16 %v2807, %v2806
        %v2813 = vpack.c.bf16 %v2809, %v2808
        %v2815 = vsel %vm2721, %v2810, 0
        %v2818 = vsel %vm2721, %v2811, 0
        %v2821 = vsel %vm2721, %v2812, 0
        %v2824 = vsel %vm2721, %v2813, 0
        %2826 = vmatprep.subr.bf16.mxu0 0
        %2827 = vmatpush1.bf16.msra.mxu0 %v2640
        %2828 = vmatprep.subr.bf16.mxu0 0
        %2829 = vmatpush1.bf16.msra.mxu0 %v2642
        %2830 = vmatprep.subr.bf16.mxu0 0
        %2831 = vmatpush1.bf16.msra.mxu0 %v2644
        %2832 = vmatprep.subr.bf16.mxu0 0
        %2833 = vmatpush1.bf16.msra.mxu0 %v2646
        %2834 = vmatprep.subr.bf16.mxu0 0
        %2835 = vmatpush1.bf16.msra.mxu0 0
        %2836 = vmatprep.subr.bf16.mxu0 0
        %2837 = vmatpush1.bf16.msra.mxu0 0
        %2838 = vmatprep.subr.bf16.mxu0 0
        %2839 = vmatpush1.bf16.msra.mxu0 0
        %2840 = vmatprep.subr.bf16.mxu0 0
        %2841 = vmatpush1.bf16.msra.mxu0 0
        %2842 = vmatprep.subr.bf16.mxu0 0
        %2843 = vmatpush1.bf16.msra.mxu0 0
        %2844 = vmatprep.subr.bf16.mxu0 0
        %2845 = vmatpush1.bf16.msra.mxu0 0
        %2846 = vmatprep.subr.bf16.mxu0 0
        %2847 = vmatpush1.bf16.msra.mxu0 0
        %2848 = vmatprep.subr.bf16.mxu0 0
        %2849 = vmatpush1.bf16.msra.mxu0 0
        %2850 = vmatprep.subr.bf16.mxu0 0
        %2851 = vmatpush1.bf16.msra.mxu0 0
        %2852 = vmatprep.subr.bf16.mxu0 0
        %2853 = vmatpush1.bf16.msra.mxu0 0
        %2854 = vmatprep.subr.bf16.mxu0 0
        %2855 = vmatpush1.bf16.msra.mxu0 0
        %2856 = vmatprep.subr.bf16.mxu0 0
        %2857 = vmatpush1.bf16.msra.mxu0 0
        %2858 = vmatprep.mubr.bf16.mxu0 0
        %2859 = vmatmul.mubr.bf16.gmra.mrb[0].mxu0 %v2815
        %v2860 = vpop.f32.mrb[0].mxu0
        %v2861 = vadd.f32 0.0, %v2860
        %v2862 = vpop.f32.mrb[0].mxu0
        %v2863 = vpop.f32.mrb[0].mxu0
        %v2864 = vadd.f32 0.0, %v2863
        %v2865 = vpop.f32.mrb[0].mxu0
        %2866 = vmatprep.mubr.bf16.mxu0 0
        %2867 = vmatmul.mubr.bf16.gmra.mrb[0].mxu0 %v2818
        %v2868 = vpop.f32.mrb[0].mxu0
        %v2869 = vadd.f32 0.0, %v2868
        %v2870 = vpop.f32.mrb[0].mxu0
        %v2871 = vpop.f32.mrb[0].mxu0
        %v2872 = vadd.f32 0.0, %v2871
        %v2873 = vpop.f32.mrb[0].mxu0
        %2874 = vmatprep.mubr.bf16.mxu0 0
        %2875 = vmatmul.mubr.bf16.gmra.mrb[0].mxu0 %v2821
        %v2876 = vpop.f32.mrb[0].mxu0
        %v2877 = vadd.f32 0.0, %v2876
        %v2878 = vpop.f32.mrb[0].mxu0
        %v2879 = vpop.f32.mrb[0].mxu0
        %v2880 = vadd.f32 0.0, %v2879
        %v2881 = vpop.f32.mrb[0].mxu0
        %2882 = vmatprep.mubr.bf16.mxu0 0
        %2883 = vmatmul.mubr.bf16.gmra.mrb[0].mxu0 %v2824
        %v2884 = vpop.f32.mrb[0].mxu0
        %v2885 = vadd.f32 0.0, %v2884
        %v2886 = vpop.f32.mrb[0].mxu0
        %v2887 = vpop.f32.mrb[0].mxu0
        %v2888 = vadd.f32 0.0, %v2887
        %v2889 = vpop.f32.mrb[0].mxu0
        %2890 = vdwg.mxu0
        %v2891 = vpack.c.bf16 %v2864, %v2861
        %v2892 = vpack.c.bf16 %v2872, %v2869
        %v2893 = vpack.c.bf16 %v2880, %v2877
        %v2894 = vpack.c.bf16 %v2888, %v2885
        %v2895 = vld [vmem:[%s988] sm:$0xff]
        %v2896 = vld [vmem:[%s988 + $0x8] sm:$0xff]
        %v2897 = vld [vmem:[%s988 + $0x10] sm:$0xff]
        %v2898 = vld [vmem:[%s988 + $0x18] sm:$0xff]
        %v2899 = vld [vmem:[%s988 + $0x20] sm:$0xff]
        %v2900 = vld [vmem:[%s988 + $0x28] sm:$0xff]
        %v2901 = vld [vmem:[%s988 + $0x30] sm:$0xff]
        %v2902 = vld [vmem:[%s988 + $0x38] sm:$0xff]
        %v2903 = vld [vmem:[%s988 + $0x40] sm:$0xff]
        %v2904 = vld [vmem:[%s988 + $0x48] sm:$0xff]
        %v2905 = vld [vmem:[%s988 + $0x50] sm:$0xff]
        %v2906 = vld [vmem:[%s988 + $0x58] sm:$0xff]
        %v2907 = vld [vmem:[%s988 + $0x60] sm:$0xff]
        %v2908 = vld [vmem:[%s988 + $0x68] sm:$0xff]
        %v2909 = vld [vmem:[%s988 + $0x70] sm:$0xff]
        %v2910 = vld [vmem:[%s988 + $0x78] sm:$0xff]
        %2911 = vmatprep.subr.bf16.mxu0 0
        %2912 = vmatpush1.bf16.xpose.msra.mxu0 %v2633
        %2913 = vmatprep.subr.bf16.mxu0 0
        %2914 = vmatpush1.bf16.xpose.msra.mxu0 %v2635
        %2915 = vmatprep.subr.bf16.mxu0 0
        %2916 = vmatpush1.bf16.xpose.msra.mxu0 %v2637
        %2917 = vmatprep.subr.bf16.mxu0 0
        %2918 = vmatpush1.bf16.xpose.msra.mxu0 %v2639
        %2919 = vmatprep.subr.bf16.mxu0 0
        %2920 = vmatpush1.bf16.xpose.msra.mxu0 0
        %2921 = vmatprep.subr.bf16.mxu0 0
        %2922 = vmatpush1.bf16.xpose.msra.mxu0 0
        %2923 = vmatprep.subr.bf16.mxu0 0
        %2924 = vmatpush1.bf16.xpose.msra.mxu0 0
        %2925 = vmatprep.subr.bf16.mxu0 0
        %2926 = vmatpush1.bf16.xpose.msra.mxu0 0
        %2927 = vmatprep.subr.bf16.mxu0 0
        %2928 = vmatpush1.bf16.xpose.msra.mxu0 0
        %2929 = vmatprep.subr.bf16.mxu0 0
        %2930 = vmatpush1.bf16.xpose.msra.mxu0 0
        %2931 = vmatprep.subr.bf16.mxu0 0
        %2932 = vmatpush1.bf16.xpose.msra.mxu0 0
        %2933 = vmatprep.subr.bf16.mxu0 0
        %2934 = vmatpush1.bf16.xpose.msra.mxu0 0
        %2935 = vmatprep.subr.bf16.mxu0 0
        %2936 = vmatpush1.bf16.xpose.msra.mxu0 0
        %2937 = vmatprep.subr.bf16.mxu0 0
        %2938 = vmatpush1.bf16.xpose.msra.mxu0 0
        %2939 = vmatprep.subr.bf16.mxu0 0
        %2940 = vmatpush1.bf16.xpose.msra.mxu0 0
        %2941 = vmatprep.subr.bf16.mxu0 0
        %2942 = vmatpush1.bf16.xpose.msra.mxu0 0
        %2943 = vmatprep.mubr.bf16.mxu0 0
        %2944 = vmatmul.mubr.bf16.gmra.mrb[0].mxu0 %v2625
        %v2945 = vpop.f32.mrb[0].mxu0
        %v2946 = vadd.f32 0.0, %v2945
        %v2947 = vpop.f32.mrb[0].mxu0
        %v2948 = vpop.f32.mrb[0].mxu0
        %v2949 = vadd.f32 0.0, %v2948
        %v2950 = vpop.f32.mrb[0].mxu0
        %2951 = vmatprep.mubr.bf16.mxu0 0
        %2952 = vmatmul.mubr.bf16.gmra.mrb[0].mxu0 %v2627
        %v2953 = vpop.f32.mrb[0].mxu0
        %v2954 = vadd.f32 0.0, %v2953
        %v2955 = vpop.f32.mrb[0].mxu0
        %v2956 = vpop.f32.mrb[0].mxu0
        %v2957 = vadd.f32 0.0, %v2956
        %v2958 = vpop.f32.mrb[0].mxu0
        %2959 = vmatprep.mubr.bf16.mxu0 0
        %2960 = vmatmul.mubr.bf16.gmra.mrb[0].mxu0 %v2629
        %v2961 = vpop.f32.mrb[0].mxu0
        %v2962 = vadd.f32 0.0, %v2961
        %v2963 = vpop.f32.mrb[0].mxu0
        %v2964 = vpop.f32.mrb[0].mxu0
        %v2965 = vadd.f32 0.0, %v2964
        %v2966 = vpop.f32.mrb[0].mxu0
        %2967 = vmatprep.mubr.bf16.mxu0 0
        %2968 = vmatmul.mubr.bf16.gmra.mrb[0].mxu0 %v2631
        %v2969 = vpop.f32.mrb[0].mxu0
        %v2970 = vadd.f32 0.0, %v2969
        %v2971 = vpop.f32.mrb[0].mxu0
        %v2972 = vpop.f32.mrb[0].mxu0
        %v2973 = vadd.f32 0.0, %v2972
        %v2974 = vpop.f32.mrb[0].mxu0
        %2975 = vdwg.mxu0
        %v2976 = vsel %vm1564, %v2946, -1e+30
        %v2977 = vsel %vm1565, %v2949, -1e+30
        %v2978 = vsel %vm1566, %v2954, -1e+30
        %v2979 = vsel %vm1567, %v2957, -1e+30
        %v2980 = vsel %vm1568, %v2962, -1e+30
        %v2981 = vsel %vm1569, %v2965, -1e+30
        %v2982 = vsel %vm1570, %v2970, -1e+30
        %v2983 = vsel %vm1571, %v2973, -1e+30
        %v2984 = vsel %vm2721, %v2976, -inf
        %2985 = vmax.xlane.f32.xlu0 %v2984
        %v2986 = vpop.xlane.xlu0 %2985
        %v2987 = vsel %vm2721, %v2977, -inf
        %2988 = vmax.xlane.f32.xlu0 %v2987
        %v2989 = vpop.xlane.xlu0 %2988
        %v2990 = vsel %vm2721, %v2978, -inf
        %2991 = vmax.xlane.f32.xlu0 %v2990
        %v2992 = vpop.xlane.xlu0 %2991
        %v2993 = vsel %vm2721, %v2979, -inf
        %2994 = vmax.xlane.f32.xlu0 %v2993
        %v2995 = vpop.xlane.xlu0 %2994
        %v2996 = vsel %vm2721, %v2980, -inf
        %2997 = vmax.xlane.f32.xlu0 %v2996
        %v2998 = vpop.xlane.xlu0 %2997
        %v2999 = vsel %vm2721, %v2981, -inf
        %3000 = vmax.xlane.f32.xlu0 %v2999
        %v3001 = vpop.xlane.xlu0 %3000
        %v3002 = vsel %vm2721, %v2982, -inf
        %3003 = vmax.xlane.f32.xlu0 %v3002
        %v3004 = vpop.xlane.xlu0 %3003
        %v3005 = vsel %vm2721, %v2983, -inf
        %3006 = vmax.xlane.f32.xlu0 %v3005
        %v3007 = vpop.xlane.xlu0 %3006
        %v3008 = vsub.f32 %v2976, %v2986
        %v3009 = vsub.f32 %v2977, %v2989
        %v3010 = vsub.f32 %v2978, %v2992
        %v3011 = vsub.f32 %v2979, %v2995
        %v3012 = vsub.f32 %v2980, %v2998
        %v3013 = vsub.f32 %v2981, %v3001
        %v3014 = vsub.f32 %v2982, %v3004
        %v3015 = vsub.f32 %v2983, %v3007
        %v3016 = vmul.f32 %v3008, 1.442695
        %v3017 = vpow.pop %v3016
        %v3018 = vmul.f32 %v3009, 1.442695
        %v3019 = vpow.pop %v3018
        %v3020 = vmul.f32 %v3010, 1.442695
        %v3021 = vpow.pop %v3020
        %v3022 = vmul.f32 %v3011, 1.442695
        %v3023 = vpow.pop %v3022
        %v3024 = vmul.f32 %v3012, 1.442695
        %v3025 = vpow.pop %v3024
        %v3026 = vmul.f32 %v3013, 1.442695
        %v3027 = vpow.pop %v3026
        %v3028 = vmul.f32 %v3014, 1.442695
        %v3029 = vpow.pop %v3028
        %v3030 = vmul.f32 %v3015, 1.442695
        %v3031 = vpow.pop %v3030
        %v3032 = vsel %vm2721, %v3017, 0.0
        %3033 = vadd.xlane.f32.xlu0 %v3032
        %v3034 = vpop.xlane.xlu0 %3033
        %v3035 = vsel %vm2721, %v3019, 0.0
        %3036 = vadd.xlane.f32.xlu0 %v3035
        %v3037 = vpop.xlane.xlu0 %3036
        %v3038 = vsel %vm2721, %v3021, 0.0
        %3039 = vadd.xlane.f32.xlu0 %v3038
        %v3040 = vpop.xlane.xlu0 %3039
        %v3041 = vsel %vm2721, %v3023, 0.0
        %3042 = vadd.xlane.f32.xlu0 %v3041
        %v3043 = vpop.xlane.xlu0 %3042
        %v3044 = vsel %vm2721, %v3025, 0.0
        %3045 = vadd.xlane.f32.xlu0 %v3044
        %v3046 = vpop.xlane.xlu0 %3045
        %v3047 = vsel %vm2721, %v3027, 0.0
        %3048 = vadd.xlane.f32.xlu0 %v3047
        %v3049 = vpop.xlane.xlu0 %3048
        %v3050 = vsel %vm2721, %v3029, 0.0
        %3051 = vadd.xlane.f32.xlu0 %v3050
        %v3052 = vpop.xlane.xlu0 %3051
        %v3053 = vsel %vm2721, %v3031, 0.0
        %3054 = vadd.xlane.f32.xlu0 %v3053
        %v3055 = vpop.xlane.xlu0 %3054
        %v3056 = vrcp.pop %v3034
        %v3057 = vrcp.pop %v3037
        %v3058 = vrcp.pop %v3040
        %v3059 = vrcp.pop %v3043
        %v3060 = vrcp.pop %v3046
        %v3061 = vrcp.pop %v3049
        %v3062 = vrcp.pop %v3052
        %v3063 = vrcp.pop %v3055
        %v3064 = vmul.f32 %v3017, %v3056
        %v3065 = vmul.f32 %v3019, %v3057
        %v3066 = vmul.f32 %v3021, %v3058
        %v3067 = vmul.f32 %v3023, %v3059
        %v3068 = vmul.f32 %v3025, %v3060
        %v3069 = vmul.f32 %v3027, %v3061
        %v3070 = vmul.f32 %v3029, %v3062
        %v3071 = vmul.f32 %v3031, %v3063
        %v3072 = vpack.c.bf16 %v3065, %v3064
        %v3073 = vpack.c.bf16 %v3067, %v3066
        %v3074 = vpack.c.bf16 %v3069, %v3068
        %v3075 = vpack.c.bf16 %v3071, %v3070
        %v3077 = vsel %vm2721, %v3072, 0
        %v3080 = vsel %vm2721, %v3073, 0
        %v3083 = vsel %vm2721, %v3074, 0
        %v3086 = vsel %vm2721, %v3075, 0
        %3088 = vmatprep.subr.bf16.mxu0 0
        %3089 = vmatpush1.bf16.msra.mxu0 %v2641
        %3090 = vmatprep.subr.bf16.mxu0 0
        %3091 = vmatpush1.bf16.msra.mxu0 %v2643
        %3092 = vmatprep.subr.bf16.mxu0 0
        %3093 = vmatpush1.bf16.msra.mxu0 %v2645
        %3094 = vmatprep.subr.bf16.mxu0 0
        %3095 = vmatpush1.bf16.msra.mxu0 %v2647
        %3096 = vmatprep.subr.bf16.mxu0 0
        %3097 = vmatpush1.bf16.msra.mxu0 0
        %3098 = vmatprep.subr.bf16.mxu0 0
        %3099 = vmatpush1.bf16.msra.mxu0 0
        %3100 = vmatprep.subr.bf16.mxu0 0
        %3101 = vmatpush1.bf16.msra.mxu0 0
        %3102 = vmatprep.subr.bf16.mxu0 0
        %3103 = vmatpush1.bf16.msra.mxu0 0
        %3104 = vmatprep.subr.bf16.mxu0 0
        %3105 = vmatpush1.bf16.msra.mxu0 0
        %3106 = vmatprep.subr.bf16.mxu0 0
        %3107 = vmatpush1.bf16.msra.mxu0 0
        %3108 = vmatprep.subr.bf16.mxu0 0
        %3109 = vmatpush1.bf16.msra.mxu0 0
        %3110 = vmatprep.subr.bf16.mxu0 0
        %3111 = vmatpush1.bf16.msra.mxu0 0
        %3112 = vmatprep.subr.bf16.mxu0 0
        %3113 = vmatpush1.bf16.msra.mxu0 0
        %3114 = vmatprep.subr.bf16.mxu0 0
        %3115 = vmatpush1.bf16.msra.mxu0 0
        %3116 = vmatprep.subr.bf16.mxu0 0
        %3117 = vmatpush1.bf16.msra.mxu0 0
        %3118 = vmatprep.subr.bf16.mxu0 0
        %3119 = vmatpush1.bf16.msra.mxu0 0
        %3120 = vmatprep.mubr.bf16.mxu0 0
        %3121 = vmatmul.mubr.bf16.gmra.mrb[0].mxu0 %v3077
        %v3122 = vpop.f32.mrb[0].mxu0
        %v3123 = vadd.f32 0.0, %v3122
        %v3124 = vpop.f32.mrb[0].mxu0
        %v3125 = vpop.f32.mrb[0].mxu0
        %v3126 = vadd.f32 0.0, %v3125
        %v3127 = vpop.f32.mrb[0].mxu0
        %3128 = vmatprep.mubr.bf16.mxu0 0
        %3129 = vmatmul.mubr.bf16.gmra.mrb[0].mxu0 %v3080
        %v3130 = vpop.f32.mrb[0].mxu0
        %v3131 = vadd.f32 0.0, %v3130
        %v3132 = vpop.f32.mrb[0].mxu0
        %v3133 = vpop.f32.mrb[0].mxu0
        %v3134 = vadd.f32 0.0, %v3133
        %v3135 = vpop.f32.mrb[0].mxu0
        %3136 = vmatprep.mubr.bf16.mxu0 0
        %3137 = vmatmul.mubr.bf16.gmra.mrb[0].mxu0 %v3083
        %v3138 = vpop.f32.mrb[0].mxu0
        %v3139 = vadd.f32 0.0, %v3138
        %v3140 = vpop.f32.mrb[0].mxu0
        %v3141 = vpop.f32.mrb[0].mxu0
        %v3142 = vadd.f32 0.0, %v3141
        %v3143 = vpop.f32.mrb[0].mxu0
        %3144 = vmatprep.mubr.bf16.mxu0 0
        %3145 = vmatmul.mubr.bf16.gmra.mrb[0].mxu0 %v3086
        %v3146 = vpop.f32.mrb[0].mxu0
        %v3147 = vadd.f32 0.0, %v3146
        %v3148 = vpop.f32.mrb[0].mxu0
        %v3149 = vpop.f32.mrb[0].mxu0
        %v3150 = vadd.f32 0.0, %v3149
        %v3151 = vpop.f32.mrb[0].mxu0
        %3152 = vdwg.mxu0
        %v3153 = vpack.c.bf16 %v3126, %v3123
        %v3154 = vpack.c.bf16 %v3134, %v3131
        %v3155 = vpack.c.bf16 %v3142, %v3139
        %v3156 = vpack.c.bf16 %v3150, %v3147
        %s3157 = scalar_lea.vmem %s988, 128 [#allocation11]
        %v3158 = vld [vmem:[%s3157] sm:$0xff]
        %v3159 = vld [vmem:[%s3157 + $0x8] sm:$0xff]
        %v3160 = vld [vmem:[%s3157 + $0x10] sm:$0xff]
        %v3161 = vld [vmem:[%s3157 + $0x18] sm:$0xff]
        %v3162 = vld [vmem:[%s3157 + $0x20] sm:$0xff]
        %v3163 = vld [vmem:[%s3157 + $0x28] sm:$0xff]
        %v3164 = vld [vmem:[%s3157 + $0x30] sm:$0xff]
        %v3165 = vld [vmem:[%s3157 + $0x38] sm:$0xff]
        %v3166 = vld [vmem:[%s3157 + $0x40] sm:$0xff]
        %v3167 = vld [vmem:[%s3157 + $0x48] sm:$0xff]
        %v3168 = vld [vmem:[%s3157 + $0x50] sm:$0xff]
        %v3169 = vld [vmem:[%s3157 + $0x58] sm:$0xff]
        %v3170 = vld [vmem:[%s3157 + $0x60] sm:$0xff]
        %v3171 = vld [vmem:[%s3157 + $0x68] sm:$0xff]
        %v3172 = vld [vmem:[%s3157 + $0x70] sm:$0xff]
        %v3173 = vld [vmem:[%s3157 + $0x78] sm:$0xff]
        %v3190 = vunpack.c.l.b16 %v3158
        %v3191 = vunpack.c.h.b16 %v3158
        %v3192 = vunpack.c.l.b16 %v3159
        %v3193 = vunpack.c.h.b16 %v3159
        %v3194 = vunpack.c.l.b16 %v3160
        %v3195 = vunpack.c.h.b16 %v3160
        %v3196 = vunpack.c.l.b16 %v3161
        %v3197 = vunpack.c.h.b16 %v3161
        %v3198 = vunpack.c.l.b16 %v3162
        %v3199 = vunpack.c.h.b16 %v3162
        %v3200 = vunpack.c.l.b16 %v3163
        %v3201 = vunpack.c.h.b16 %v3163
        %v3202 = vunpack.c.l.b16 %v3164
        %v3203 = vunpack.c.h.b16 %v3164
        %v3204 = vunpack.c.l.b16 %v3165
        %v3205 = vunpack.c.h.b16 %v3165
        %v3206 = vunpack.c.l.b16 %v3166
        %v3207 = vunpack.c.h.b16 %v3166
        %v3208 = vunpack.c.l.b16 %v3167
        %v3209 = vunpack.c.h.b16 %v3167
        %v3210 = vunpack.c.l.b16 %v3168
        %v3211 = vunpack.c.h.b16 %v3168
        %v3212 = vunpack.c.l.b16 %v3169
        %v3213 = vunpack.c.h.b16 %v3169
        %v3214 = vunpack.c.l.b16 %v3170
        %v3215 = vunpack.c.h.b16 %v3170
        %v3216 = vunpack.c.l.b16 %v3171
        %v3217 = vunpack.c.h.b16 %v3171
        %v3218 = vunpack.c.l.b16 %v3172
        %v3219 = vunpack.c.h.b16 %v3172
        %v3220 = vunpack.c.l.b16 %v3173
        %v3221 = vunpack.c.h.b16 %v3173
        %v3222 = vpack.c.b16 %v3192, %v3190
        %v3223 = vpack.c.b16 %v3193, %v3191
        %v3224 = vpack.c.b16 %v3196, %v3194
        %v3225 = vpack.c.b16 %v3197, %v3195
        %v3226 = vpack.c.b16 %v3200, %v3198
        %v3227 = vpack.c.b16 %v3201, %v3199
        %v3228 = vpack.c.b16 %v3204, %v3202
        %v3229 = vpack.c.b16 %v3205, %v3203
        %v3230 = vpack.c.b16 %v3208, %v3206
        %v3231 = vpack.c.b16 %v3209, %v3207
        %v3232 = vpack.c.b16 %v3212, %v3210
        %v3233 = vpack.c.b16 %v3213, %v3211
        %v3234 = vpack.c.b16 %v3216, %v3214
        %v3235 = vpack.c.b16 %v3217, %v3215
        %v3236 = vpack.c.b16 %v3220, %v3218
        %v3237 = vpack.c.b16 %v3221, %v3219
        %3254 = vmatprep.subr.bf16.mxu0 %v3223
        %3255 = vmatpush1.bf16.msra.mxu0 %v3222
        %3256 = vmatprep.subr.bf16.mxu0 %v3225
        %3257 = vmatpush1.bf16.msra.mxu0 %v3224
        %3258 = vmatprep.subr.bf16.mxu0 %v3227
        %3259 = vmatpush1.bf16.msra.mxu0 %v3226
        %3260 = vmatprep.subr.bf16.mxu0 %v3229
        %3261 = vmatpush1.bf16.msra.mxu0 %v3228
        %3262 = vmatprep.subr.bf16.mxu0 %v3231
        %3263 = vmatpush1.bf16.msra.mxu0 %v3230
        %3264 = vmatprep.subr.bf16.mxu0 %v3233
        %3265 = vmatpush1.bf16.msra.mxu0 %v3232
        %3266 = vmatprep.subr.bf16.mxu0 %v3235
        %3267 = vmatpush1.bf16.msra.mxu0 %v3234
        %3268 = vmatprep.subr.bf16.mxu0 %v3237
        %3269 = vmatpush1.bf16.msra.mxu0 %v3236
        %3270 = vmatprep.subr.bf16.mxu0 0
        %3271 = vmatpush1.bf16.msra.mxu0 0
        %3272 = vmatprep.subr.bf16.mxu0 0
        %3273 = vmatpush1.bf16.msra.mxu0 0
        %3274 = vmatprep.subr.bf16.mxu0 0
        %3275 = vmatpush1.bf16.msra.mxu0 0
        %3276 = vmatprep.subr.bf16.mxu0 0
        %3277 = vmatpush1.bf16.msra.mxu0 0
        %3278 = vmatprep.subr.bf16.mxu0 0
        %3279 = vmatpush1.bf16.msra.mxu0 0
        %3280 = vmatprep.subr.bf16.mxu0 0
        %3281 = vmatpush1.bf16.msra.mxu0 0
        %3282 = vmatprep.subr.bf16.mxu0 0
        %3283 = vmatpush1.bf16.msra.mxu0 0
        %3284 = vmatprep.subr.bf16.mxu0 0
        %3285 = vmatpush1.bf16.msra.mxu0 0
        %3286 = vmatprep.mubr.bf16.mxu0 0
        %3287 = vmatmul.mubr.bf16.gmra.mrb[0].mxu0 %v3153
        %v3288 = vpop.f32.mrb[0].mxu0
        %v3289 = vadd.f32 0.0, %v3288
        %v3290 = vpop.f32.mrb[0].mxu0
        %v3291 = vadd.f32 0.0, %v3290
        %v3292 = vpop.f32.mrb[0].mxu0
        %v3293 = vadd.f32 0.0, %v3292
        %v3294 = vpop.f32.mrb[0].mxu0
        %v3295 = vadd.f32 0.0, %v3294
        %3296 = vmatprep.mubr.bf16.mxu0 0
        %3297 = vmatmul.mubr.bf16.gmra.mrb[0].mxu0 %v3154
        %v3298 = vpop.f32.mrb[0].mxu0
        %v3299 = vadd.f32 0.0, %v3298
        %v3300 = vpop.f32.mrb[0].mxu0
        %v3301 = vadd.f32 0.0, %v3300
        %v3302 = vpop.f32.mrb[0].mxu0
        %v3303 = vadd.f32 0.0, %v3302
        %v3304 = vpop.f32.mrb[0].mxu0
        %v3305 = vadd.f32 0.0, %v3304
        %3306 = vmatprep.mubr.bf16.mxu0 0
        %3307 = vmatmul.mubr.bf16.gmra.mrb[0].mxu0 %v3155
        %v3308 = vpop.f32.mrb[0].mxu0
        %v3309 = vadd.f32 0.0, %v3308
        %v3310 = vpop.f32.mrb[0].mxu0
        %v3311 = vadd.f32 0.0, %v3310
        %v3312 = vpop.f32.mrb[0].mxu0
        %v3313 = vadd.f32 0.0, %v3312
        %v3314 = vpop.f32.mrb[0].mxu0
        %v3315 = vadd.f32 0.0, %v3314
        %3316 = vmatprep.mubr.bf16.mxu0 0
        %3317 = vmatmul.mubr.bf16.gmra.mrb[0].mxu0 %v3156
        %v3318 = vpop.f32.mrb[0].mxu0
        %v3319 = vadd.f32 0.0, %v3318
        %v3320 = vpop.f32.mrb[0].mxu0
        %v3321 = vadd.f32 0.0, %v3320
        %v3322 = vpop.f32.mrb[0].mxu0
        %v3323 = vadd.f32 0.0, %v3322
        %v3324 = vpop.f32.mrb[0].mxu0
        %v3325 = vadd.f32 0.0, %v3324
        %3326 = vdwg.mxu0
        %v3343 = vunpack.c.l.b16 %v2895
        %v3344 = vunpack.c.h.b16 %v2895
        %v3345 = vunpack.c.l.b16 %v2896
        %v3346 = vunpack.c.h.b16 %v2896
        %v3347 = vunpack.c.l.b16 %v2897
        %v3348 = vunpack.c.h.b16 %v2897
        %v3349 = vunpack.c.l.b16 %v2898
        %v3350 = vunpack.c.h.b16 %v2898
        %v3351 = vunpack.c.l.b16 %v2899
        %v3352 = vunpack.c.h.b16 %v2899
        %v3353 = vunpack.c.l.b16 %v2900
        %v3354 = vunpack.c.h.b16 %v2900
        %v3355 = vunpack.c.l.b16 %v2901
        %v3356 = vunpack.c.h.b16 %v2901
        %v3357 = vunpack.c.l.b16 %v2902
        %v3358 = vunpack.c.h.b16 %v2902
        %v3359 = vunpack.c.l.b16 %v2903
        %v3360 = vunpack.c.h.b16 %v2903
        %v3361 = vunpack.c.l.b16 %v2904
        %v3362 = vunpack.c.h.b16 %v2904
        %v3363 = vunpack.c.l.b16 %v2905
        %v3364 = vunpack.c.h.b16 %v2905
        %v3365 = vunpack.c.l.b16 %v2906
        %v3366 = vunpack.c.h.b16 %v2906
        %v3367 = vunpack.c.l.b16 %v2907
        %v3368 = vunpack.c.h.b16 %v2907
        %v3369 = vunpack.c.l.b16 %v2908
        %v3370 = vunpack.c.h.b16 %v2908
        %v3371 = vunpack.c.l.b16 %v2909
        %v3372 = vunpack.c.h.b16 %v2909
        %v3373 = vunpack.c.l.b16 %v2910
        %v3374 = vunpack.c.h.b16 %v2910
        %v3375 = vpack.c.b16 %v3345, %v3343
        %v3376 = vpack.c.b16 %v3346, %v3344
        %v3377 = vpack.c.b16 %v3349, %v3347
        %v3378 = vpack.c.b16 %v3350, %v3348
        %v3379 = vpack.c.b16 %v3353, %v3351
        %v3380 = vpack.c.b16 %v3354, %v3352
        %v3381 = vpack.c.b16 %v3357, %v3355
        %v3382 = vpack.c.b16 %v3358, %v3356
        %v3383 = vpack.c.b16 %v3361, %v3359
        %v3384 = vpack.c.b16 %v3362, %v3360
        %v3385 = vpack.c.b16 %v3365, %v3363
        %v3386 = vpack.c.b16 %v3366, %v3364
        %v3387 = vpack.c.b16 %v3369, %v3367
        %v3388 = vpack.c.b16 %v3370, %v3368
        %v3389 = vpack.c.b16 %v3373, %v3371
        %v3390 = vpack.c.b16 %v3374, %v3372
        %3407 = vmatprep.subr.bf16.mxu0 %v3376
        %3408 = vmatpush1.bf16.msra.mxu0 %v3375
        %3409 = vmatprep.subr.bf16.mxu0 %v3378
        %3410 = vmatpush1.bf16.msra.mxu0 %v3377
        %3411 = vmatprep.subr.bf16.mxu0 %v3380
        %3412 = vmatpush1.bf16.msra.mxu0 %v3379
        %3413 = vmatprep.subr.bf16.mxu0 %v3382
        %3414 = vmatpush1.bf16.msra.mxu0 %v3381
        %3415 = vmatprep.subr.bf16.mxu0 %v3384
        %3416 = vmatpush1.bf16.msra.mxu0 %v3383
        %3417 = vmatprep.subr.bf16.mxu0 %v3386
        %3418 = vmatpush1.bf16.msra.mxu0 %v3385
        %3419 = vmatprep.subr.bf16.mxu0 %v3388
        %3420 = vmatpush1.bf16.msra.mxu0 %v3387
        %3421 = vmatprep.subr.bf16.mxu0 %v3390
        %3422 = vmatpush1.bf16.msra.mxu0 %v3389
        %3423 = vmatprep.subr.bf16.mxu0 0
        %3424 = vmatpush1.bf16.msra.mxu0 0
        %3425 = vmatprep.subr.bf16.mxu0 0
        %3426 = vmatpush1.bf16.msra.mxu0 0
        %3427 = vmatprep.subr.bf16.mxu0 0
        %3428 = vmatpush1.bf16.msra.mxu0 0
        %3429 = vmatprep.subr.bf16.mxu0 0
        %3430 = vmatpush1.bf16.msra.mxu0 0
        %3431 = vmatprep.subr.bf16.mxu0 0
        %3432 = vmatpush1.bf16.msra.mxu0 0
        %3433 = vmatprep.subr.bf16.mxu0 0
        %3434 = vmatpush1.bf16.msra.mxu0 0
        %3435 = vmatprep.subr.bf16.mxu0 0
        %3436 = vmatpush1.bf16.msra.mxu0 0
        %3437 = vmatprep.subr.bf16.mxu0 0
        %3438 = vmatpush1.bf16.msra.mxu0 0
        %3439 = vmatprep.mubr.bf16.mxu0 0
        %3440 = vmatmul.mubr.bf16.gmra.mrb[0].mxu0 %v2891
        %v3441 = vpop.f32.mrb[0].mxu0
        %v3442 = vadd.f32 %v3289, %v3441
        %v3443 = vpop.f32.mrb[0].mxu0
        %v3444 = vadd.f32 %v3291, %v3443
        %v3445 = vpop.f32.mrb[0].mxu0
        %v3446 = vadd.f32 %v3293, %v3445
        %v3447 = vpop.f32.mrb[0].mxu0
        %v3448 = vadd.f32 %v3295, %v3447
        %3449 = vmatprep.mubr.bf16.mxu0 0
        %3450 = vmatmul.mubr.bf16.gmra.mrb[0].mxu0 %v2892
        %v3451 = vpop.f32.mrb[0].mxu0
        %v3452 = vadd.f32 %v3299, %v3451
        %v3453 = vpop.f32.mrb[0].mxu0
        %v3454 = vadd.f32 %v3301, %v3453
        %v3455 = vpop.f32.mrb[0].mxu0
        %v3456 = vadd.f32 %v3303, %v3455
        %v3457 = vpop.f32.mrb[0].mxu0
        %v3458 = vadd.f32 %v3305, %v3457
        %3459 = vmatprep.mubr.bf16.mxu0 0
        %3460 = vmatmul.mubr.bf16.gmra.mrb[0].mxu0 %v2893
        %v3461 = vpop.f32.mrb[0].mxu0
        %v3462 = vadd.f32 %v3309, %v3461
        %v3463 = vpop.f32.mrb[0].mxu0
        %v3464 = vadd.f32 %v3311, %v3463
        %v3465 = vpop.f32.mrb[0].mxu0
        %v3466 = vadd.f32 %v3313, %v3465
        %v3467 = vpop.f32.mrb[0].mxu0
        %v3468 = vadd.f32 %v3315, %v3467
        %3469 = vmatprep.mubr.bf16.mxu0 0
        %3470 = vmatmul.mubr.bf16.gmra.mrb[0].mxu0 %v2894
        %v3471 = vpop.f32.mrb[0].mxu0
        %v3472 = vadd.f32 %v3319, %v3471
        %v3473 = vpop.f32.mrb[0].mxu0
        %v3474 = vadd.f32 %v3321, %v3473
        %v3475 = vpop.f32.mrb[0].mxu0
        %v3476 = vadd.f32 %v3323, %v3475
        %v3477 = vpop.f32.mrb[0].mxu0
        %v3478 = vadd.f32 %v3325, %v3477
        %3479 = vdwg.mxu0
        %v3480 = vld [vmem:[%s1006] sm:$0x3]
        %v3481 = vld [vmem:[%s997] sm:$0x3]
        %v3483 = vlaneseq
        %v3484 = vshrl.u32 %v3483, 7
        %v3485 = vsub.s32 0, %v3484
        %v3486 = vrot.slane %v3481, %v3485
        %v3487 = vlaneseq
        %v3488 = vshrl.u32 %v3487, 7
        %v3489 = vsub.s32 1, %v3488
        %v3490 = vrot.slane %v3481, %v3489
        %v3493 = vadd.f32 %v3442, %v3486
        %v3494 = vadd.f32 %v3444, %v3490
        %v3495 = vadd.f32 %v3446, %v3486
        %v3496 = vadd.f32 %v3448, %v3490
        %v3497 = vadd.f32 %v3452, %v3486
        %v3498 = vadd.f32 %v3454, %v3490
        %v3499 = vadd.f32 %v3456, %v3486
        %v3500 = vadd.f32 %v3458, %v3490
        %v3501 = vadd.f32 %v3462, %v3486
        %v3502 = vadd.f32 %v3464, %v3490
        %v3503 = vadd.f32 %v3466, %v3486
        %v3504 = vadd.f32 %v3468, %v3490
        %v3505 = vadd.f32 %v3472, %v3486
        %v3506 = vadd.f32 %v3474, %v3490
        %v3507 = vadd.f32 %v3476, %v3486
        %v3508 = vadd.f32 %v3478, %v3490
        %v3510 = vlaneseq
        %v3511 = vshrl.u32 %v3510, 7
        %v3512 = vsub.s32 0, %v3511
        %v3513 = vrot.slane %v3480, %v3512
        %v3514 = vlaneseq
        %v3515 = vshrl.u32 %v3514, 7
        %v3516 = vsub.s32 1, %v3515
        %v3517 = vrot.slane %v3480, %v3516
        %v3520 = vmul.f32 %v3513, %v3493
        %v3521 = vmul.f32 %v3517, %v3494
        %v3522 = vmul.f32 %v3513, %v3495
        %v3523 = vmul.f32 %v3517, %v3496
        %v3524 = vmul.f32 %v3513, %v3497
        %v3525 = vmul.f32 %v3517, %v3498
        %v3526 = vmul.f32 %v3513, %v3499
        %v3527 = vmul.f32 %v3517, %v3500
        %v3528 = vmul.f32 %v3513, %v3501
        %v3529 = vmul.f32 %v3517, %v3502
        %v3530 = vmul.f32 %v3513, %v3503
        %v3531 = vmul.f32 %v3517, %v3504
        %v3532 = vmul.f32 %v3513, %v3505
        %v3533 = vmul.f32 %v3517, %v3506
        %v3534 = vmul.f32 %v3513, %v3507
        %v3535 = vmul.f32 %v3517, %v3508
        %v3536 = vadd.f32 %v1572, %v3520
        %v3537 = vadd.f32 %v1573, %v3521
        %v3538 = vadd.f32 %v1574, %v3522
        %v3539 = vadd.f32 %v1575, %v3523
        %v3540 = vadd.f32 %v1576, %v3524
        %v3541 = vadd.f32 %v1577, %v3525
        %v3542 = vadd.f32 %v1578, %v3526
        %v3543 = vadd.f32 %v1579, %v3527
        %v3544 = vadd.f32 %v1580, %v3528
        %v3545 = vadd.f32 %v1581, %v3529
        %v3546 = vadd.f32 %v1582, %v3530
        %v3547 = vadd.f32 %v1583, %v3531
        %v3548 = vadd.f32 %v1584, %v3532
        %v3549 = vadd.f32 %v1585, %v3533
        %v3550 = vadd.f32 %v1586, %v3534
        %v3551 = vadd.f32 %v1587, %v3535
        %v3552 = vld [vmem:[%s1015] sm:$0x3]
        %v3553 = vld [vmem:[%s1024] sm:$0x3]
        %v3554 = vadd.f32 %v3536, %v3537
        %3555 = vadd.xlane.f32.xlu0 %v3554
        %v3556 = vpop.xlane.xlu0 %3555
        %v3557 = vadd.f32 %v3538, %v3539
        %3558 = vadd.xlane.f32.xlu0 %v3557
        %v3559 = vpop.xlane.xlu0 %3558
        %v3560 = vadd.f32 %v3540, %v3541
        %3561 = vadd.xlane.f32.xlu0 %v3560
        %v3562 = vpop.xlane.xlu0 %3561
        %v3563 = vadd.f32 %v3542, %v3543
        %3564 = vadd.xlane.f32.xlu0 %v3563
        %v3565 = vpop.xlane.xlu0 %3564
        %v3566 = vadd.f32 %v3544, %v3545
        %3567 = vadd.xlane.f32.xlu0 %v3566
        %v3568 = vpop.xlane.xlu0 %3567
        %v3569 = vadd.f32 %v3546, %v3547
        %3570 = vadd.xlane.f32.xlu0 %v3569
        %v3571 = vpop.xlane.xlu0 %3570
        %v3572 = vadd.f32 %v3548, %v3549
        %3573 = vadd.xlane.f32.xlu0 %v3572
        %v3574 = vpop.xlane.xlu0 %3573
        %v3575 = vadd.f32 %v3550, %v3551
        %3576 = vadd.xlane.f32.xlu0 %v3575
        %v3577 = vpop.xlane.xlu0 %3576
        %v3578 = vmul.f32 %v3556, %v1614
        %v3579 = vmul.f32 %v3559, %v1614
        %v3580 = vmul.f32 %v3562, %v1614
        %v3581 = vmul.f32 %v3565, %v1614
        %v3582 = vmul.f32 %v3568, %v1614
        %v3583 = vmul.f32 %v3571, %v1614
        %v3584 = vmul.f32 %v3574, %v1614
        %v3585 = vmul.f32 %v3577, %v1614
        %v3586 = vsub.f32 %v3536, %v3578
        %v3587 = vsub.f32 %v3537, %v3578
        %v3588 = vsub.f32 %v3538, %v3579
        %v3589 = vsub.f32 %v3539, %v3579
        %v3590 = vsub.f32 %v3540, %v3580
        %v3591 = vsub.f32 %v3541, %v3580
        %v3592 = vsub.f32 %v3542, %v3581
        %v3593 = vsub.f32 %v3543, %v3581
        %v3594 = vsub.f32 %v3544, %v3582
        %v3595 = vsub.f32 %v3545, %v3582
        %v3596 = vsub.f32 %v3546, %v3583
        %v3597 = vsub.f32 %v3547, %v3583
        %v3598 = vsub.f32 %v3548, %v3584
        %v3599 = vsub.f32 %v3549, %v3584
        %v3600 = vsub.f32 %v3550, %v3585
        %v3601 = vsub.f32 %v3551, %v3585
        %v3602 = vmul.f32 %v3586, %v3586
        %v3603 = vmul.f32 %v3587, %v3587
        %v3604 = vmul.f32 %v3588, %v3588
        %v3605 = vmul.f32 %v3589, %v3589
        %v3606 = vmul.f32 %v3590, %v3590
        %v3607 = vmul.f32 %v3591, %v3591
        %v3608 = vmul.f32 %v3592, %v3592
        %v3609 = vmul.f32 %v3593, %v3593
        %v3610 = vmul.f32 %v3594, %v3594
        %v3611 = vmul.f32 %v3595, %v3595
        %v3612 = vmul.f32 %v3596, %v3596
        %v3613 = vmul.f32 %v3597, %v3597
        %v3614 = vmul.f32 %v3598, %v3598
        %v3615 = vmul.f32 %v3599, %v3599
        %v3616 = vmul.f32 %v3600, %v3600
        %v3617 = vmul.f32 %v3601, %v3601
        %v3618 = vadd.f32 %v3602, %v3603
        %3619 = vadd.xlane.f32.xlu0 %v3618
        %v3620 = vpop.xlane.xlu0 %3619
        %v3621 = vadd.f32 %v3604, %v3605
        %3622 = vadd.xlane.f32.xlu0 %v3621
        %v3623 = vpop.xlane.xlu0 %3622
        %v3624 = vadd.f32 %v3606, %v3607
        %3625 = vadd.xlane.f32.xlu0 %v3624
        %v3626 = vpop.xlane.xlu0 %3625
        %v3627 = vadd.f32 %v3608, %v3609
        %3628 = vadd.xlane.f32.xlu0 %v3627
        %v3629 = vpop.xlane.xlu0 %3628
        %v3630 = vadd.f32 %v3610, %v3611
        %3631 = vadd.xlane.f32.xlu0 %v3630
        %v3632 = vpop.xlane.xlu0 %3631
        %v3633 = vadd.f32 %v3612, %v3613
        %3634 = vadd.xlane.f32.xlu0 %v3633
        %v3635 = vpop.xlane.xlu0 %3634
        %v3636 = vadd.f32 %v3614, %v3615
        %3637 = vadd.xlane.f32.xlu0 %v3636
        %v3638 = vpop.xlane.xlu0 %3637
        %v3639 = vadd.f32 %v3616, %v3617
        %3640 = vadd.xlane.f32.xlu0 %v3639
        %v3641 = vpop.xlane.xlu0 %3640
        %v3642 = vmul.f32 %v3620, %v1614
        %v3643 = vmul.f32 %v3623, %v1614
        %v3644 = vmul.f32 %v3626, %v1614
        %v3645 = vmul.f32 %v3629, %v1614
        %v3646 = vmul.f32 %v3632, %v1614
        %v3647 = vmul.f32 %v3635, %v1614
        %v3648 = vmul.f32 %v3638, %v1614
        %v3649 = vmul.f32 %v3641, %v1614
        %v3650 = vadd.f32 %v3642, 1e-06
        %v3651 = vadd.f32 %v3643, 1e-06
        %v3652 = vadd.f32 %v3644, 1e-06
        %v3653 = vadd.f32 %v3645, 1e-06
        %v3654 = vadd.f32 %v3646, 1e-06
        %v3655 = vadd.f32 %v3647, 1e-06
        %v3656 = vadd.f32 %v3648, 1e-06
        %v3657 = vadd.f32 %v3649, 1e-06
        %v3658 = vrsqrt.pop %v3650
        %v3659 = vrsqrt.pop %v3651
        %v3660 = vrsqrt.pop %v3652
        %v3661 = vrsqrt.pop %v3653
        %v3662 = vrsqrt.pop %v3654
        %v3663 = vrsqrt.pop %v3655
        %v3664 = vrsqrt.pop %v3656
        %v3665 = vrsqrt.pop %v3657
        %v3666 = vmul.f32 %v3586, %v3658
        %v3667 = vmul.f32 %v3587, %v3658
        %v3668 = vmul.f32 %v3588, %v3659
        %v3669 = vmul.f32 %v3589, %v3659
        %v3670 = vmul.f32 %v3590, %v3660
        %v3671 = vmul.f32 %v3591, %v3660
        %v3672 = vmul.f32 %v3592, %v3661
        %v3673 = vmul.f32 %v3593, %v3661
        %v3674 = vmul.f32 %v3594, %v3662
        %v3675 = vmul.f32 %v3595, %v3662
        %v3676 = vmul.f32 %v3596, %v3663
        %v3677 = vmul.f32 %v3597, %v3663
        %v3678 = vmul.f32 %v3598, %v3664
        %v3679 = vmul.f32 %v3599, %v3664
        %v3680 = vmul.f32 %v3600, %v3665
        %v3681 = vmul.f32 %v3601, %v3665
        %v3683 = vlaneseq
        %v3684 = vshrl.u32 %v3683, 7
        %v3685 = vsub.s32 0, %v3684
        %v3686 = vrot.slane %v3552, %v3685
        %v3687 = vlaneseq
        %v3688 = vshrl.u32 %v3687, 7
        %v3689 = vsub.s32 1, %v3688
        %v3690 = vrot.slane %v3552, %v3689
        %v3693 = vmul.f32 %v3666, %v3686
        %v3694 = vmul.f32 %v3667, %v3690
        %v3695 = vmul.f32 %v3668, %v3686
        %v3696 = vmul.f32 %v3669, %v3690
        %v3697 = vmul.f32 %v3670, %v3686
        %v3698 = vmul.f32 %v3671, %v3690
        %v3699 = vmul.f32 %v3672, %v3686
        %v3700 = vmul.f32 %v3673, %v3690
        %v3701 = vmul.f32 %v3674, %v3686
        %v3702 = vmul.f32 %v3675, %v3690
        %v3703 = vmul.f32 %v3676, %v3686
        %v3704 = vmul.f32 %v3677, %v3690
        %v3705 = vmul.f32 %v3678, %v3686
        %v3706 = vmul.f32 %v3679, %v3690
        %v3707 = vmul.f32 %v3680, %v3686
        %v3708 = vmul.f32 %v3681, %v3690
        %v3710 = vlaneseq
        %v3711 = vshrl.u32 %v3710, 7
        %v3712 = vsub.s32 0, %v3711
        %v3713 = vrot.slane %v3553, %v3712
        %v3714 = vlaneseq
        %v3715 = vshrl.u32 %v3714, 7
        %v3716 = vsub.s32 1, %v3715
        %v3717 = vrot.slane %v3553, %v3716
        %v3720 = vadd.f32 %v3693, %v3713
        %v3721 = vadd.f32 %v3694, %v3717
        %v3722 = vadd.f32 %v3695, %v3713
        %v3723 = vadd.f32 %v3696, %v3717
        %v3724 = vadd.f32 %v3697, %v3713
        %v3725 = vadd.f32 %v3698, %v3717
        %v3726 = vadd.f32 %v3699, %v3713
        %v3727 = vadd.f32 %v3700, %v3717
        %v3728 = vadd.f32 %v3701, %v3713
        %v3729 = vadd.f32 %v3702, %v3717
        %v3730 = vadd.f32 %v3703, %v3713
        %v3731 = vadd.f32 %v3704, %v3717
        %v3732 = vadd.f32 %v3705, %v3713
        %v3733 = vadd.f32 %v3706, %v3717
        %v3734 = vadd.f32 %v3707, %v3713
        %v3735 = vadd.f32 %v3708, %v3717
        %v3736 = vpack.c.bf16 %v3722, %v3720
        %v3737 = vpack.c.bf16 %v3723, %v3721
        %v3738 = vpack.c.bf16 %v3726, %v3724
        %v3739 = vpack.c.bf16 %v3727, %v3725
        %v3740 = vpack.c.bf16 %v3730, %v3728
        %v3741 = vpack.c.bf16 %v3731, %v3729
        %v3742 = vpack.c.bf16 %v3734, %v3732
        %v3743 = vpack.c.bf16 %v3735, %v3733
        %v3744 = vld [vmem:[%s1033] sm:$0xff]
        %v3745 = vld [vmem:[%s1033 + $0x8] sm:$0xff]
        %v3746 = vld [vmem:[%s1033 + $0x10] sm:$0xff]
        %v3747 = vld [vmem:[%s1033 + $0x18] sm:$0xff]
        %v3748 = vld [vmem:[%s1033 + $0x20] sm:$0xff]
        %v3749 = vld [vmem:[%s1033 + $0x28] sm:$0xff]
        %v3750 = vld [vmem:[%s1033 + $0x30] sm:$0xff]
        %v3751 = vld [vmem:[%s1033 + $0x38] sm:$0xff]
        %v3752 = vld [vmem:[%s1033 + $0x40] sm:$0xff]
        %v3753 = vld [vmem:[%s1033 + $0x48] sm:$0xff]
        %v3754 = vld [vmem:[%s1033 + $0x50] sm:$0xff]
        %v3755 = vld [vmem:[%s1033 + $0x58] sm:$0xff]
        %v3756 = vld [vmem:[%s1033 + $0x60] sm:$0xff]
        %v3757 = vld [vmem:[%s1033 + $0x68] sm:$0xff]
        %v3758 = vld [vmem:[%s1033 + $0x70] sm:$0xff]
        %v3759 = vld [vmem:[%s1033 + $0x78] sm:$0xff]
        %v3760 = vld [vmem:[%s1033 + $0x80] sm:$0xff]
        %v3761 = vld [vmem:[%s1033 + $0x88] sm:$0xff]
        %v3762 = vld [vmem:[%s1033 + $0x90] sm:$0xff]
        %v3763 = vld [vmem:[%s1033 + $0x98] sm:$0xff]
        %v3764 = vld [vmem:[%s1033 + $0xa0] sm:$0xff]
        %v3765 = vld [vmem:[%s1033 + $0xa8] sm:$0xff]
        %v3766 = vld [vmem:[%s1033 + $0xb0] sm:$0xff]
        %v3767 = vld [vmem:[%s1033 + $0xb8] sm:$0xff]
        %v3768 = vld [vmem:[%s1033 + $0xc0] sm:$0xff]
        %v3769 = vld [vmem:[%s1033 + $0xc8] sm:$0xff]
        %v3770 = vld [vmem:[%s1033 + $0xd0] sm:$0xff]
        %v3771 = vld [vmem:[%s1033 + $0xd8] sm:$0xff]
        %v3772 = vld [vmem:[%s1033 + $0xe0] sm:$0xff]
        %v3773 = vld [vmem:[%s1033 + $0xe8] sm:$0xff]
        %v3774 = vld [vmem:[%s1033 + $0xf0] sm:$0xff]
        %v3775 = vld [vmem:[%s1033 + $0xf8] sm:$0xff]
        %v3776 = vld [vmem:[%s1033 + $0x100] sm:$0xff]
        %v3777 = vld [vmem:[%s1033 + $0x108] sm:$0xff]
        %v3778 = vld [vmem:[%s1033 + $0x110] sm:$0xff]
        %v3779 = vld [vmem:[%s1033 + $0x118] sm:$0xff]
        %v3780 = vld [vmem:[%s1033 + $0x120] sm:$0xff]
        %v3781 = vld [vmem:[%s1033 + $0x128] sm:$0xff]
        %v3782 = vld [vmem:[%s1033 + $0x130] sm:$0xff]
        %v3783 = vld [vmem:[%s1033 + $0x138] sm:$0xff]
        %v3784 = vld [vmem:[%s1033 + $0x140] sm:$0xff]
        %v3785 = vld [vmem:[%s1033 + $0x148] sm:$0xff]
        %v3786 = vld [vmem:[%s1033 + $0x150] sm:$0xff]
        %v3787 = vld [vmem:[%s1033 + $0x158] sm:$0xff]
        %v3788 = vld [vmem:[%s1033 + $0x160] sm:$0xff]
        %v3789 = vld [vmem:[%s1033 + $0x168] sm:$0xff]
        %v3790 = vld [vmem:[%s1033 + $0x170] sm:$0xff]
        %v3791 = vld [vmem:[%s1033 + $0x178] sm:$0xff]
        %v3792 = vld [vmem:[%s1033 + $0x180] sm:$0xff]
        %v3793 = vld [vmem:[%s1033 + $0x188] sm:$0xff]
        %v3794 = vld [vmem:[%s1033 + $0x190] sm:$0xff]
        %v3795 = vld [vmem:[%s1033 + $0x198] sm:$0xff]
        %v3796 = vld [vmem:[%s1033 + $0x1a0] sm:$0xff]
        %v3797 = vld [vmem:[%s1033 + $0x1a8] sm:$0xff]
        %v3798 = vld [vmem:[%s1033 + $0x1b0] sm:$0xff]
        %v3799 = vld [vmem:[%s1033 + $0x1b8] sm:$0xff]
        %v3800 = vld [vmem:[%s1033 + $0x1c0] sm:$0xff]
        %v3801 = vld [vmem:[%s1033 + $0x1c8] sm:$0xff]
        %v3802 = vld [vmem:[%s1033 + $0x1d0] sm:$0xff]
        %v3803 = vld [vmem:[%s1033 + $0x1d8] sm:$0xff]
        %v3804 = vld [vmem:[%s1033 + $0x1e0] sm:$0xff]
        %v3805 = vld [vmem:[%s1033 + $0x1e8] sm:$0xff]
        %v3806 = vld [vmem:[%s1033 + $0x1f0] sm:$0xff]
        %v3807 = vld [vmem:[%s1033 + $0x1f8] sm:$0xff]
        %v3808 = vld [vmem:[%s1033 + $0x200] sm:$0xff]
        %v3809 = vld [vmem:[%s1033 + $0x208] sm:$0xff]
        %v3810 = vld [vmem:[%s1033 + $0x210] sm:$0xff]
        %v3811 = vld [vmem:[%s1033 + $0x218] sm:$0xff]
        %v3812 = vld [vmem:[%s1033 + $0x220] sm:$0xff]
        %v3813 = vld [vmem:[%s1033 + $0x228] sm:$0xff]
        %v3814 = vld [vmem:[%s1033 + $0x230] sm:$0xff]
        %v3815 = vld [vmem:[%s1033 + $0x238] sm:$0xff]
        %v3816 = vld [vmem:[%s1033 + $0x240] sm:$0xff]
        %v3817 = vld [vmem:[%s1033 + $0x248] sm:$0xff]
        %v3818 = vld [vmem:[%s1033 + $0x250] sm:$0xff]
        %v3819 = vld [vmem:[%s1033 + $0x258] sm:$0xff]
        %v3820 = vld [vmem:[%s1033 + $0x260] sm:$0xff]
        %v3821 = vld [vmem:[%s1033 + $0x268] sm:$0xff]
        %v3822 = vld [vmem:[%s1033 + $0x270] sm:$0xff]
        %v3823 = vld [vmem:[%s1033 + $0x278] sm:$0xff]
        %v3824 = vld [vmem:[%s1033 + $0x280] sm:$0xff]
        %v3825 = vld [vmem:[%s1033 + $0x288] sm:$0xff]
        %v3826 = vld [vmem:[%s1033 + $0x290] sm:$0xff]
        %v3827 = vld [vmem:[%s1033 + $0x298] sm:$0xff]
        %v3828 = vld [vmem:[%s1033 + $0x2a0] sm:$0xff]
        %v3829 = vld [vmem:[%s1033 + $0x2a8] sm:$0xff]
        %v3830 = vld [vmem:[%s1033 + $0x2b0] sm:$0xff]
        %v3831 = vld [vmem:[%s1033 + $0x2b8] sm:$0xff]
        %v3832 = vld [vmem:[%s1033 + $0x2c0] sm:$0xff]
        %v3833 = vld [vmem:[%s1033 + $0x2c8] sm:$0xff]
        %v3834 = vld [vmem:[%s1033 + $0x2d0] sm:$0xff]
        %v3835 = vld [vmem:[%s1033 + $0x2d8] sm:$0xff]
        %v3836 = vld [vmem:[%s1033 + $0x2e0] sm:$0xff]
        %v3837 = vld [vmem:[%s1033 + $0x2e8] sm:$0xff]
        %v3838 = vld [vmem:[%s1033 + $0x2f0] sm:$0xff]
        %v3839 = vld [vmem:[%s1033 + $0x2f8] sm:$0xff]
        %v3840 = vld [vmem:[%s1033 + $0x300] sm:$0xff]
        %v3841 = vld [vmem:[%s1033 + $0x308] sm:$0xff]
        %v3842 = vld [vmem:[%s1033 + $0x310] sm:$0xff]
        %v3843 = vld [vmem:[%s1033 + $0x318] sm:$0xff]
        %v3844 = vld [vmem:[%s1033 + $0x320] sm:$0xff]
        %v3845 = vld [vmem:[%s1033 + $0x328] sm:$0xff]
        %v3846 = vld [vmem:[%s1033 + $0x330] sm:$0xff]
        %v3847 = vld [vmem:[%s1033 + $0x338] sm:$0xff]
        %v3848 = vld [vmem:[%s1033 + $0x340] sm:$0xff]
        %v3849 = vld [vmem:[%s1033 + $0x348] sm:$0xff]
        %v3850 = vld [vmem:[%s1033 + $0x350] sm:$0xff]
        %v3851 = vld [vmem:[%s1033 + $0x358] sm:$0xff]
        %v3852 = vld [vmem:[%s1033 + $0x360] sm:$0xff]
        %v3853 = vld [vmem:[%s1033 + $0x368] sm:$0xff]
        %v3854 = vld [vmem:[%s1033 + $0x370] sm:$0xff]
        %v3855 = vld [vmem:[%s1033 + $0x378] sm:$0xff]
        %v3856 = vld [vmem:[%s1033 + $0x380] sm:$0xff]
        %v3857 = vld [vmem:[%s1033 + $0x388] sm:$0xff]
        %v3858 = vld [vmem:[%s1033 + $0x390] sm:$0xff]
        %v3859 = vld [vmem:[%s1033 + $0x398] sm:$0xff]
        %v3860 = vld [vmem:[%s1033 + $0x3a0] sm:$0xff]
        %v3861 = vld [vmem:[%s1033 + $0x3a8] sm:$0xff]
        %v3862 = vld [vmem:[%s1033 + $0x3b0] sm:$0xff]
        %v3863 = vld [vmem:[%s1033 + $0x3b8] sm:$0xff]
        %v3864 = vld [vmem:[%s1033 + $0x3c0] sm:$0xff]
        %v3865 = vld [vmem:[%s1033 + $0x3c8] sm:$0xff]
        %v3866 = vld [vmem:[%s1033 + $0x3d0] sm:$0xff]
        %v3867 = vld [vmem:[%s1033 + $0x3d8] sm:$0xff]
        %v3868 = vld [vmem:[%s1033 + $0x3e0] sm:$0xff]
        %v3869 = vld [vmem:[%s1033 + $0x3e8] sm:$0xff]
        %v3870 = vld [vmem:[%s1033 + $0x3f0] sm:$0xff]
        %v3871 = vld [vmem:[%s1033 + $0x3f8] sm:$0xff]
        %v3872 = vld [vmem:[%s1042] sm:$0xff]
        %v3874 = vlaneseq
        %v3875 = vshrl.u32 %v3874, 7
        %v3876 = vsub.s32 0, %v3875
        %v3877 = vrot.slane %v3872, %v3876
        %v3878 = vlaneseq
        %v3879 = vshrl.u32 %v3878, 7
        %v3880 = vsub.s32 1, %v3879
        %v3881 = vrot.slane %v3872, %v3880
        %v3882 = vlaneseq
        %v3883 = vshrl.u32 %v3882, 7
        %v3884 = vsub.s32 2, %v3883
        %v3885 = vrot.slane %v3872, %v3884
        %v3886 = vlaneseq
        %v3887 = vshrl.u32 %v3886, 7
        %v3888 = vsub.s32 3, %v3887
        %v3889 = vrot.slane %v3872, %v3888
        %v3890 = vlaneseq
        %v3891 = vshrl.u32 %v3890, 7
        %v3892 = vsub.s32 4, %v3891
        %v3893 = vrot.slane %v3872, %v3892
        %v3894 = vlaneseq
        %v3895 = vshrl.u32 %v3894, 7
        %v3896 = vsub.s32 5, %v3895
        %v3897 = vrot.slane %v3872, %v3896
        %v3898 = vlaneseq
        %v3899 = vshrl.u32 %v3898, 7
        %v3900 = vsub.s32 6, %v3899
        %v3901 = vrot.slane %v3872, %v3900
        %v3902 = vlaneseq
        %v3903 = vshrl.u32 %v3902, 7
        %v3904 = vsub.s32 7, %v3903
        %v3905 = vrot.slane %v3872, %v3904
        %v4042 = vunpack.c.l.b16 %v3744
        %v4043 = vunpack.c.h.b16 %v3744
        %v4044 = vunpack.c.l.b16 %v3745
        %v4045 = vunpack.c.h.b16 %v3745
        %v4046 = vunpack.c.l.b16 %v3746
        %v4047 = vunpack.c.h.b16 %v3746
        %v4048 = vunpack.c.l.b16 %v3747
        %v4049 = vunpack.c.h.b16 %v3747
        %v4050 = vunpack.c.l.b16 %v3748
        %v4051 = vunpack.c.h.b16 %v3748
        %v4052 = vunpack.c.l.b16 %v3749
        %v4053 = vunpack.c.h.b16 %v3749
        %v4054 = vunpack.c.l.b16 %v3750
        %v4055 = vunpack.c.h.b16 %v3750
        %v4056 = vunpack.c.l.b16 %v3751
        %v4057 = vunpack.c.h.b16 %v3751
        %v4058 = vunpack.c.l.b16 %v3752
        %v4059 = vunpack.c.h.b16 %v3752
        %v4060 = vunpack.c.l.b16 %v3753
        %v4061 = vunpack.c.h.b16 %v3753
        %v4062 = vunpack.c.l.b16 %v3754
        %v4063 = vunpack.c.h.b16 %v3754
        %v4064 = vunpack.c.l.b16 %v3755
        %v4065 = vunpack.c.h.b16 %v3755
        %v4066 = vunpack.c.l.b16 %v3756
        %v4067 = vunpack.c.h.b16 %v3756
        %v4068 = vunpack.c.l.b16 %v3757
        %v4069 = vunpack.c.h.b16 %v3757
        %v4070 = vunpack.c.l.b16 %v3758
        %v4071 = vunpack.c.h.b16 %v3758
        %v4072 = vunpack.c.l.b16 %v3759
        %v4073 = vunpack.c.h.b16 %v3759
        %v4074 = vunpack.c.l.b16 %v3760
        %v4075 = vunpack.c.h.b16 %v3760
        %v4076 = vunpack.c.l.b16 %v3761
        %v4077 = vunpack.c.h.b16 %v3761
        %v4078 = vunpack.c.l.b16 %v3762
        %v4079 = vunpack.c.h.b16 %v3762
        %v4080 = vunpack.c.l.b16 %v3763
        %v4081 = vunpack.c.h.b16 %v3763
        %v4082 = vunpack.c.l.b16 %v3764
        %v4083 = vunpack.c.h.b16 %v3764
        %v4084 = vunpack.c.l.b16 %v3765
        %v4085 = vunpack.c.h.b16 %v3765
        %v4086 = vunpack.c.l.b16 %v3766
        %v4087 = vunpack.c.h.b16 %v3766
        %v4088 = vunpack.c.l.b16 %v3767
        %v4089 = vunpack.c.h.b16 %v3767
        %v4090 = vunpack.c.l.b16 %v3768
        %v4091 = vunpack.c.h.b16 %v3768
        %v4092 = vunpack.c.l.b16 %v3769
        %v4093 = vunpack.c.h.b16 %v3769
        %v4094 = vunpack.c.l.b16 %v3770
        %v4095 = vunpack.c.h.b16 %v3770
        %v4096 = vunpack.c.l.b16 %v3771
        %v4097 = vunpack.c.h.b16 %v3771
        %v4098 = vunpack.c.l.b16 %v3772
        %v4099 = vunpack.c.h.b16 %v3772
        %v4100 = vunpack.c.l.b16 %v3773
        %v4101 = vunpack.c.h.b16 %v3773
        %v4102 = vunpack.c.l.b16 %v3774
        %v4103 = vunpack.c.h.b16 %v3774
        %v4104 = vunpack.c.l.b16 %v3775
        %v4105 = vunpack.c.h.b16 %v3775
        %v4106 = vunpack.c.l.b16 %v3776
        %v4107 = vunpack.c.h.b16 %v3776
        %v4108 = vunpack.c.l.b16 %v3777
        %v4109 = vunpack.c.h.b16 %v3777
        %v4110 = vunpack.c.l.b16 %v3778
        %v4111 = vunpack.c.h.b16 %v3778
        %v4112 = vunpack.c.l.b16 %v3779
        %v4113 = vunpack.c.h.b16 %v3779
        %v4114 = vunpack.c.l.b16 %v3780
        %v4115 = vunpack.c.h.b16 %v3780
        %v4116 = vunpack.c.l.b16 %v3781
        %v4117 = vunpack.c.h.b16 %v3781
        %v4118 = vunpack.c.l.b16 %v3782
        %v4119 = vunpack.c.h.b16 %v3782
        %v4120 = vunpack.c.l.b16 %v3783
        %v4121 = vunpack.c.h.b16 %v3783
        %v4122 = vunpack.c.l.b16 %v3784
        %v4123 = vunpack.c.h.b16 %v3784
        %v4124 = vunpack.c.l.b16 %v3785
        %v4125 = vunpack.c.h.b16 %v3785
        %v4126 = vunpack.c.l.b16 %v3786
        %v4127 = vunpack.c.h.b16 %v3786
        %v4128 = vunpack.c.l.b16 %v3787
        %v4129 = vunpack.c.h.b16 %v3787
        %v4130 = vunpack.c.l.b16 %v3788
        %v4131 = vunpack.c.h.b16 %v3788
        %v4132 = vunpack.c.l.b16 %v3789
        %v4133 = vunpack.c.h.b16 %v3789
        %v4134 = vunpack.c.l.b16 %v3790
        %v4135 = vunpack.c.h.b16 %v3790
        %v4136 = vunpack.c.l.b16 %v3791
        %v4137 = vunpack.c.h.b16 %v3791
        %v4138 = vunpack.c.l.b16 %v3792
        %v4139 = vunpack.c.h.b16 %v3792
        %v4140 = vunpack.c.l.b16 %v3793
        %v4141 = vunpack.c.h.b16 %v3793
        %v4142 = vunpack.c.l.b16 %v3794
        %v4143 = vunpack.c.h.b16 %v3794
        %v4144 = vunpack.c.l.b16 %v3795
        %v4145 = vunpack.c.h.b16 %v3795
        %v4146 = vunpack.c.l.b16 %v3796
        %v4147 = vunpack.c.h.b16 %v3796
        %v4148 = vunpack.c.l.b16 %v3797
        %v4149 = vunpack.c.h.b16 %v3797
        %v4150 = vunpack.c.l.b16 %v3798
        %v4151 = vunpack.c.h.b16 %v3798
        %v4152 = vunpack.c.l.b16 %v3799
        %v4153 = vunpack.c.h.b16 %v3799
        %v4154 = vunpack.c.l.b16 %v3800
        %v4155 = vunpack.c.h.b16 %v3800
        %v4156 = vunpack.c.l.b16 %v3801
        %v4157 = vunpack.c.h.b16 %v3801
        %v4158 = vunpack.c.l.b16 %v3802
        %v4159 = vunpack.c.h.b16 %v3802
        %v4160 = vunpack.c.l.b16 %v3803
        %v4161 = vunpack.c.h.b16 %v3803
        %v4162 = vunpack.c.l.b16 %v3804
        %v4163 = vunpack.c.h.b16 %v3804
        %v4164 = vunpack.c.l.b16 %v3805
        %v4165 = vunpack.c.h.b16 %v3805
        %v4166 = vunpack.c.l.b16 %v3806
        %v4167 = vunpack.c.h.b16 %v3806
        %v4168 = vunpack.c.l.b16 %v3807
        %v4169 = vunpack.c.h.b16 %v3807
        %v4170 = vunpack.c.l.b16 %v3808
        %v4171 = vunpack.c.h.b16 %v3808
        %v4172 = vunpack.c.l.b16 %v3809
        %v4173 = vunpack.c.h.b16 %v3809
        %v4174 = vunpack.c.l.b16 %v3810
        %v4175 = vunpack.c.h.b16 %v3810
        %v4176 = vunpack.c.l.b16 %v3811
        %v4177 = vunpack.c.h.b16 %v3811
        %v4178 = vunpack.c.l.b16 %v3812
        %v4179 = vunpack.c.h.b16 %v3812
        %v4180 = vunpack.c.l.b16 %v3813
        %v4181 = vunpack.c.h.b16 %v3813
        %v4182 = vunpack.c.l.b16 %v3814
        %v4183 = vunpack.c.h.b16 %v3814
        %v4184 = vunpack.c.l.b16 %v3815
        %v4185 = vunpack.c.h.b16 %v3815
        %v4186 = vunpack.c.l.b16 %v3816
        %v4187 = vunpack.c.h.b16 %v3816
        %v4188 = vunpack.c.l.b16 %v3817
        %v4189 = vunpack.c.h.b16 %v3817
        %v4190 = vunpack.c.l.b16 %v3818
        %v4191 = vunpack.c.h.b16 %v3818
        %v4192 = vunpack.c.l.b16 %v3819
        %v4193 = vunpack.c.h.b16 %v3819
        %v4194 = vunpack.c.l.b16 %v3820
        %v4195 = vunpack.c.h.b16 %v3820
        %v4196 = vunpack.c.l.b16 %v3821
        %v4197 = vunpack.c.h.b16 %v3821
        %v4198 = vunpack.c.l.b16 %v3822
        %v4199 = vunpack.c.h.b16 %v3822
        %v4200 = vunpack.c.l.b16 %v3823
        %v4201 = vunpack.c.h.b16 %v3823
        %v4202 = vunpack.c.l.b16 %v3824
        %v4203 = vunpack.c.h.b16 %v3824
        %v4204 = vunpack.c.l.b16 %v3825
        %v4205 = vunpack.c.h.b16 %v3825
        %v4206 = vunpack.c.l.b16 %v3826
        %v4207 = vunpack.c.h.b16 %v3826
        %v4208 = vunpack.c.l.b16 %v3827
        %v4209 = vunpack.c.h.b16 %v3827
        %v4210 = vunpack.c.l.b16 %v3828
        %v4211 = vunpack.c.h.b16 %v3828
        %v4212 = vunpack.c.l.b16 %v3829
        %v4213 = vunpack.c.h.b16 %v3829
        %v4214 = vunpack.c.l.b16 %v3830
        %v4215 = vunpack.c.h.b16 %v3830
        %v4216 = vunpack.c.l.b16 %v3831
        %v4217 = vunpack.c.h.b16 %v3831
        %v4218 = vunpack.c.l.b16 %v3832
        %v4219 = vunpack.c.h.b16 %v3832
        %v4220 = vunpack.c.l.b16 %v3833
        %v4221 = vunpack.c.h.b16 %v3833
        %v4222 = vunpack.c.l.b16 %v3834
        %v4223 = vunpack.c.h.b16 %v3834
        %v4224 = vunpack.c.l.b16 %v3835
        %v4225 = vunpack.c.h.b16 %v3835
        %v4226 = vunpack.c.l.b16 %v3836
        %v4227 = vunpack.c.h.b16 %v3836
        %v4228 = vunpack.c.l.b16 %v3837
        %v4229 = vunpack.c.h.b16 %v3837
        %v4230 = vunpack.c.l.b16 %v3838
        %v4231 = vunpack.c.h.b16 %v3838
        %v4232 = vunpack.c.l.b16 %v3839
        %v4233 = vunpack.c.h.b16 %v3839
        %v4234 = vunpack.c.l.b16 %v3840
        %v4235 = vunpack.c.h.b16 %v3840
        %v4236 = vunpack.c.l.b16 %v3841
        %v4237 = vunpack.c.h.b16 %v3841
        %v4238 = vunpack.c.l.b16 %v3842
        %v4239 = vunpack.c.h.b16 %v3842
        %v4240 = vunpack.c.l.b16 %v3843
        %v4241 = vunpack.c.h.b16 %v3843
        %v4242 = vunpack.c.l.b16 %v3844
        %v4243 = vunpack.c.h.b16 %v3844
        %v4244 = vunpack.c.l.b16 %v3845
        %v4245 = vunpack.c.h.b16 %v3845
        %v4246 = vunpack.c.l.b16 %v3846
        %v4247 = vunpack.c.h.b16 %v3846
        %v4248 = vunpack.c.l.b16 %v3847
        %v4249 = vunpack.c.h.b16 %v3847
        %v4250 = vunpack.c.l.b16 %v3848
        %v4251 = vunpack.c.h.b16 %v3848
        %v4252 = vunpack.c.l.b16 %v3849
        %v4253 = vunpack.c.h.b16 %v3849
        %v4254 = vunpack.c.l.b16 %v3850
        %v4255 = vunpack.c.h.b16 %v3850
        %v4256 = vunpack.c.l.b16 %v3851
        %v4257 = vunpack.c.h.b16 %v3851
        %v4258 = vunpack.c.l.b16 %v3852
        %v4259 = vunpack.c.h.b16 %v3852
        %v4260 = vunpack.c.l.b16 %v3853
        %v4261 = vunpack.c.h.b16 %v3853
        %v4262 = vunpack.c.l.b16 %v3854
        %v4263 = vunpack.c.h.b16 %v3854
        %v4264 = vunpack.c.l.b16 %v3855
        %v4265 = vunpack.c.h.b16 %v3855
        %v4266 = vunpack.c.l.b16 %v3856
        %v4267 = vunpack.c.h.b16 %v3856
        %v4268 = vunpack.c.l.b16 %v3857
        %v4269 = vunpack.c.h.b16 %v3857
        %v4270 = vunpack.c.l.b16 %v3858
        %v4271 = vunpack.c.h.b16 %v3858
        %v4272 = vunpack.c.l.b16 %v3859
        %v4273 = vunpack.c.h.b16 %v3859
        %v4274 = vunpack.c.l.b16 %v3860
        %v4275 = vunpack.c.h.b16 %v3860
        %v4276 = vunpack.c.l.b16 %v3861
        %v4277 = vunpack.c.h.b16 %v3861
        %v4278 = vunpack.c.l.b16 %v3862
        %v4279 = vunpack.c.h.b16 %v3862
        %v4280 = vunpack.c.l.b16 %v3863
        %v4281 = vunpack.c.h.b16 %v3863
        %v4282 = vunpack.c.l.b16 %v3864
        %v4283 = vunpack.c.h.b16 %v3864
        %v4284 = vunpack.c.l.b16 %v3865
        %v4285 = vunpack.c.h.b16 %v3865
        %v4286 = vunpack.c.l.b16 %v3866
        %v4287 = vunpack.c.h.b16 %v3866
        %v4288 = vunpack.c.l.b16 %v3867
        %v4289 = vunpack.c.h.b16 %v3867
        %v4290 = vunpack.c.l.b16 %v3868
        %v4291 = vunpack.c.h.b16 %v3868
        %v4292 = vunpack.c.l.b16 %v3869
        %v4293 = vunpack.c.h.b16 %v3869
        %v4294 = vunpack.c.l.b16 %v3870
        %v4295 = vunpack.c.h.b16 %v3870
        %v4296 = vunpack.c.l.b16 %v3871
        %v4297 = vunpack.c.h.b16 %v3871
        %v4298 = vpack.c.b16 %v4050, %v4042
        %v4299 = vpack.c.b16 %v4051, %v4043
        %v4300 = vpack.c.b16 %v4052, %v4044
        %v4301 = vpack.c.b16 %v4053, %v4045
        %v4302 = vpack.c.b16 %v4054, %v4046
        %v4303 = vpack.c.b16 %v4055, %v4047
        %v4304 = vpack.c.b16 %v4056, %v4048
        %v4305 = vpack.c.b16 %v4057, %v4049
        %v4306 = vpack.c.b16 %v4066, %v4058
        %v4307 = vpack.c.b16 %v4067, %v4059
        %v4308 = vpack.c.b16 %v4068, %v4060
        %v4309 = vpack.c.b16 %v4069, %v4061
        %v4310 = vpack.c.b16 %v4070, %v4062
        %v4311 = vpack.c.b16 %v4071, %v4063
        %v4312 = vpack.c.b16 %v4072, %v4064
        %v4313 = vpack.c.b16 %v4073, %v4065
        %v4314 = vpack.c.b16 %v4082, %v4074
        %v4315 = vpack.c.b16 %v4083, %v4075
        %v4316 = vpack.c.b16 %v4084, %v4076
        %v4317 = vpack.c.b16 %v4085, %v4077
        %v4318 = vpack.c.b16 %v4086, %v4078
        %v4319 = vpack.c.b16 %v4087, %v4079
        %v4320 = vpack.c.b16 %v4088, %v4080
        %v4321 = vpack.c.b16 %v4089, %v4081
        %v4322 = vpack.c.b16 %v4098, %v4090
        %v4323 = vpack.c.b16 %v4099, %v4091
        %v4324 = vpack.c.b16 %v4100, %v4092
        %v4325 = vpack.c.b16 %v4101, %v4093
        %v4326 = vpack.c.b16 %v4102, %v4094
        %v4327 = vpack.c.b16 %v4103, %v4095
        %v4328 = vpack.c.b16 %v4104, %v4096
        %v4329 = vpack.c.b16 %v4105, %v4097
        %v4330 = vpack.c.b16 %v4114, %v4106
        %v4331 = vpack.c.b16 %v4115, %v4107
        %v4332 = vpack.c.b16 %v4116, %v4108
        %v4333 = vpack.c.b16 %v4117, %v4109
        %v4334 = vpack.c.b16 %v4118, %v4110
        %v4335 = vpack.c.b16 %v4119, %v4111
        %v4336 = vpack.c.b16 %v4120, %v4112
        %v4337 = vpack.c.b16 %v4121, %v4113
        %v4338 = vpack.c.b16 %v4130, %v4122
        %v4339 = vpack.c.b16 %v4131, %v4123
        %v4340 = vpack.c.b16 %v4132, %v4124
        %v4341 = vpack.c.b16 %v4133, %v4125
        %v4342 = vpack.c.b16 %v4134, %v4126
        %v4343 = vpack.c.b16 %v4135, %v4127
        %v4344 = vpack.c.b16 %v4136, %v4128
        %v4345 = vpack.c.b16 %v4137, %v4129
        %v4346 = vpack.c.b16 %v4146, %v4138
        %v4347 = vpack.c.b16 %v4147, %v4139
        %v4348 = vpack.c.b16 %v4148, %v4140
        %v4349 = vpack.c.b16 %v4149, %v4141
        %v4350 = vpack.c.b16 %v4150, %v4142
        %v4351 = vpack.c.b16 %v4151, %v4143
        %v4352 = vpack.c.b16 %v4152, %v4144
        %v4353 = vpack.c.b16 %v4153, %v4145
        %v4354 = vpack.c.b16 %v4162, %v4154
        %v4355 = vpack.c.b16 %v4163, %v4155
        %v4356 = vpack.c.b16 %v4164, %v4156
        %v4357 = vpack.c.b16 %v4165, %v4157
        %v4358 = vpack.c.b16 %v4166, %v4158
        %v4359 = vpack.c.b16 %v4167, %v4159
        %v4360 = vpack.c.b16 %v4168, %v4160
        %v4361 = vpack.c.b16 %v4169, %v4161
        %v4362 = vpack.c.b16 %v4178, %v4170
        %v4363 = vpack.c.b16 %v4179, %v4171
        %v4364 = vpack.c.b16 %v4180, %v4172
        %v4365 = vpack.c.b16 %v4181, %v4173
        %v4366 = vpack.c.b16 %v4182, %v4174
        %v4367 = vpack.c.b16 %v4183, %v4175
        %v4368 = vpack.c.b16 %v4184, %v4176
        %v4369 = vpack.c.b16 %v4185, %v4177
        %v4370 = vpack.c.b16 %v4194, %v4186
        %v4371 = vpack.c.b16 %v4195, %v4187
        %v4372 = vpack.c.b16 %v4196, %v4188
        %v4373 = vpack.c.b16 %v4197, %v4189
        %v4374 = vpack.c.b16 %v4198, %v4190
        %v4375 = vpack.c.b16 %v4199, %v4191
        %v4376 = vpack.c.b16 %v4200, %v4192
        %v4377 = vpack.c.b16 %v4201, %v4193
        %v4378 = vpack.c.b16 %v4210, %v4202
        %v4379 = vpack.c.b16 %v4211, %v4203
        %v4380 = vpack.c.b16 %v4212, %v4204
        %v4381 = vpack.c.b16 %v4213, %v4205
        %v4382 = vpack.c.b16 %v4214, %v4206
        %v4383 = vpack.c.b16 %v4215, %v4207
        %v4384 = vpack.c.b16 %v4216, %v4208
        %v4385 = vpack.c.b16 %v4217, %v4209
        %v4386 = vpack.c.b16 %v4226, %v4218
        %v4387 = vpack.c.b16 %v4227, %v4219
        %v4388 = vpack.c.b16 %v4228, %v4220
        %v4389 = vpack.c.b16 %v4229, %v4221
        %v4390 = vpack.c.b16 %v4230, %v4222
        %v4391 = vpack.c.b16 %v4231, %v4223
        %v4392 = vpack.c.b16 %v4232, %v4224
        %v4393 = vpack.c.b16 %v4233, %v4225
        %v4394 = vpack.c.b16 %v4242, %v4234
        %v4395 = vpack.c.b16 %v4243, %v4235
        %v4396 = vpack.c.b16 %v4244, %v4236
        %v4397 = vpack.c.b16 %v4245, %v4237
        %v4398 = vpack.c.b16 %v4246, %v4238
        %v4399 = vpack.c.b16 %v4247, %v4239
        %v4400 = vpack.c.b16 %v4248, %v4240
        %v4401 = vpack.c.b16 %v4249, %v4241
        %v4402 = vpack.c.b16 %v4258, %v4250
        %v4403 = vpack.c.b16 %v4259, %v4251
        %v4404 = vpack.c.b16 %v4260, %v4252
        %v4405 = vpack.c.b16 %v4261, %v4253
        %v4406 = vpack.c.b16 %v4262, %v4254
        %v4407 = vpack.c.b16 %v4263, %v4255
        %v4408 = vpack.c.b16 %v4264, %v4256
        %v4409 = vpack.c.b16 %v4265, %v4257
        %v4410 = vpack.c.b16 %v4274, %v4266
        %v4411 = vpack.c.b16 %v4275, %v4267
        %v4412 = vpack.c.b16 %v4276, %v4268
        %v4413 = vpack.c.b16 %v4277, %v4269
        %v4414 = vpack.c.b16 %v4278, %v4270
        %v4415 = vpack.c.b16 %v4279, %v4271
        %v4416 = vpack.c.b16 %v4280, %v4272
        %v4417 = vpack.c.b16 %v4281, %v4273
        %v4418 = vpack.c.b16 %v4290, %v4282
        %v4419 = vpack.c.b16 %v4291, %v4283
        %v4420 = vpack.c.b16 %v4292, %v4284
        %v4421 = vpack.c.b16 %v4293, %v4285
        %v4422 = vpack.c.b16 %v4294, %v4286
        %v4423 = vpack.c.b16 %v4295, %v4287
        %v4424 = vpack.c.b16 %v4296, %v4288
        %v4425 = vpack.c.b16 %v4297, %v4289
        %4554 = vmatprep.subr.bf16.mxu0 %v4299
        %4555 = vmatpush1.bf16.msra.mxu0 %v4298
        %4556 = vmatprep.subr.bf16.mxu0 %v4307
        %4557 = vmatpush1.bf16.msra.mxu0 %v4306
        %4558 = vmatprep.subr.bf16.mxu0 %v4315
        %4559 = vmatpush1.bf16.msra.mxu0 %v4314
        %4560 = vmatprep.subr.bf16.mxu0 %v4323
        %4561 = vmatpush1.bf16.msra.mxu0 %v4322
        %4562 = vmatprep.subr.bf16.mxu0 %v4331
        %4563 = vmatpush1.bf16.msra.mxu0 %v4330
        %4564 = vmatprep.subr.bf16.mxu0 %v4339
        %4565 = vmatpush1.bf16.msra.mxu0 %v4338
        %4566 = vmatprep.subr.bf16.mxu0 %v4347
        %4567 = vmatpush1.bf16.msra.mxu0 %v4346
        %4568 = vmatprep.subr.bf16.mxu0 %v4355
        %4569 = vmatpush1.bf16.msra.mxu0 %v4354
        %4570 = vmatprep.subr.bf16.mxu0 %v4363
        %4571 = vmatpush1.bf16.msra.mxu0 %v4362
        %4572 = vmatprep.subr.bf16.mxu0 %v4371
        %4573 = vmatpush1.bf16.msra.mxu0 %v4370
        %4574 = vmatprep.subr.bf16.mxu0 %v4379
        %4575 = vmatpush1.bf16.msra.mxu0 %v4378
        %4576 = vmatprep.subr.bf16.mxu0 %v4387
        %4577 = vmatpush1.bf16.msra.mxu0 %v4386
        %4578 = vmatprep.subr.bf16.mxu0 %v4395
        %4579 = vmatpush1.bf16.msra.mxu0 %v4394
        %4580 = vmatprep.subr.bf16.mxu0 %v4403
        %4581 = vmatpush1.bf16.msra.mxu0 %v4402
        %4582 = vmatprep.subr.bf16.mxu0 %v4411
        %4583 = vmatpush1.bf16.msra.mxu0 %v4410
        %4584 = vmatprep.subr.bf16.mxu0 %v4419
        %4585 = vmatpush1.bf16.msra.mxu0 %v4418
        %4586 = vmatprep.mubr.bf16.mxu0 %v3737
        %4587 = vmatmul.mubr.bf16.gmra.mrb[0].mxu0 %v3736
        %v4588 = vpop.f32.mrb[0].mxu0
        %v4589 = vadd.f32 %v3877, %v4588
        %v4590 = vpop.f32.mrb[0].mxu0
        %v4591 = vadd.f32 %v3881, %v4590
        %v4592 = vpop.f32.mrb[0].mxu0
        %v4593 = vadd.f32 %v3877, %v4592
        %v4594 = vpop.f32.mrb[0].mxu0
        %v4595 = vadd.f32 %v3881, %v4594
        %4596 = vmatprep.mubr.bf16.mxu0 %v3739
        %4597 = vmatmul.mubr.bf16.gmra.mrb[0].mxu0 %v3738
        %v4598 = vpop.f32.mrb[0].mxu0
        %v4599 = vadd.f32 %v3877, %v4598
        %v4600 = vpop.f32.mrb[0].mxu0
        %v4601 = vadd.f32 %v3881, %v4600
        %v4602 = vpop.f32.mrb[0].mxu0
        %v4603 = vadd.f32 %v3877, %v4602
        %v4604 = vpop.f32.mrb[0].mxu0
        %v4605 = vadd.f32 %v3881, %v4604
        %4606 = vmatprep.mubr.bf16.mxu0 %v3741
        %4607 = vmatmul.mubr.bf16.gmra.mrb[0].mxu0 %v3740
        %v4608 = vpop.f32.mrb[0].mxu0
        %v4609 = vadd.f32 %v3877, %v4608
        %v4610 = vpop.f32.mrb[0].mxu0
        %v4611 = vadd.f32 %v3881, %v4610
        %v4612 = vpop.f32.mrb[0].mxu0
        %v4613 = vadd.f32 %v3877, %v4612
        %v4614 = vpop.f32.mrb[0].mxu0
        %v4615 = vadd.f32 %v3881, %v4614
        %4616 = vmatprep.mubr.bf16.mxu0 %v3743
        %4617 = vmatmul.mubr.bf16.gmra.mrb[0].mxu0 %v3742
        %v4618 = vpop.f32.mrb[0].mxu0
        %v4619 = vadd.f32 %v3877, %v4618
        %v4620 = vpop.f32.mrb[0].mxu0
        %v4621 = vadd.f32 %v3881, %v4620
        %v4622 = vpop.f32.mrb[0].mxu0
        %v4623 = vadd.f32 %v3877, %v4622
        %v4624 = vpop.f32.mrb[0].mxu0
        %v4625 = vadd.f32 %v3881, %v4624
        %4626 = vdwg.mxu0
        %4627 = vmatprep.subr.bf16.mxu0 %v4301
        %4628 = vmatpush1.bf16.msra.mxu0 %v4300
        %4629 = vmatprep.subr.bf16.mxu0 %v4309
        %4630 = vmatpush1.bf16.msra.mxu0 %v4308
        %4631 = vmatprep.subr.bf16.mxu0 %v4317
        %4632 = vmatpush1.bf16.msra.mxu0 %v4316
        %4633 = vmatprep.subr.bf16.mxu0 %v4325
        %4634 = vmatpush1.bf16.msra.mxu0 %v4324
        %4635 = vmatprep.subr.bf16.mxu0 %v4333
        %4636 = vmatpush1.bf16.msra.mxu0 %v4332
        %4637 = vmatprep.subr.bf16.mxu0 %v4341
        %4638 = vmatpush1.bf16.msra.mxu0 %v4340
        %4639 = vmatprep.subr.bf16.mxu0 %v4349
        %4640 = vmatpush1.bf16.msra.mxu0 %v4348
        %4641 = vmatprep.subr.bf16.mxu0 %v4357
        %4642 = vmatpush1.bf16.msra.mxu0 %v4356
        %4643 = vmatprep.subr.bf16.mxu0 %v4365
        %4644 = vmatpush1.bf16.msra.mxu0 %v4364
        %4645 = vmatprep.subr.bf16.mxu0 %v4373
        %4646 = vmatpush1.bf16.msra.mxu0 %v4372
        %4647 = vmatprep.subr.bf16.mxu0 %v4381
        %4648 = vmatpush1.bf16.msra.mxu0 %v4380
        %4649 = vmatprep.subr.bf16.mxu0 %v4389
        %4650 = vmatpush1.bf16.msra.mxu0 %v4388
        %4651 = vmatprep.subr.bf16.mxu0 %v4397
        %4652 = vmatpush1.bf16.msra.mxu0 %v4396
        %4653 = vmatprep.subr.bf16.mxu0 %v4405
        %4654 = vmatpush1.bf16.msra.mxu0 %v4404
        %4655 = vmatprep.subr.bf16.mxu0 %v4413
        %4656 = vmatpush1.bf16.msra.mxu0 %v4412
        %4657 = vmatprep.subr.bf16.mxu0 %v4421
        %4658 = vmatpush1.bf16.msra.mxu0 %v4420
        %4659 = vmatprep.mubr.bf16.mxu0 %v3737
        %4660 = vmatmul.mubr.bf16.gmra.mrb[0].mxu0 %v3736
        %v4661 = vpop.f32.mrb[0].mxu0
        %v4662 = vadd.f32 %v3885, %v4661
        %v4663 = vpop.f32.mrb[0].mxu0
        %v4664 = vadd.f32 %v3889, %v4663
        %v4665 = vpop.f32.mrb[0].mxu0
        %v4666 = vadd.f32 %v3885, %v4665
        %v4667 = vpop.f32.mrb[0].mxu0
        %v4668 = vadd.f32 %v3889, %v4667
        %4669 = vmatprep.mubr.bf16.mxu0 %v3739
        %4670 = vmatmul.mubr.bf16.gmra.mrb[0].mxu0 %v3738
        %v4671 = vpop.f32.mrb[0].mxu0
        %v4672 = vadd.f32 %v3885, %v4671
        %v4673 = vpop.f32.mrb[0].mxu0
        %v4674 = vadd.f32 %v3889, %v4673
        %v4675 = vpop.f32.mrb[0].mxu0
        %v4676 = vadd.f32 %v3885, %v4675
        %v4677 = vpop.f32.mrb[0].mxu0
        %v4678 = vadd.f32 %v3889, %v4677
        %4679 = vmatprep.mubr.bf16.mxu0 %v3741
        %4680 = vmatmul.mubr.bf16.gmra.mrb[0].mxu0 %v3740
        %v4681 = vpop.f32.mrb[0].mxu0
        %v4682 = vadd.f32 %v3885, %v4681
        %v4683 = vpop.f32.mrb[0].mxu0
        %v4684 = vadd.f32 %v3889, %v4683
        %v4685 = vpop.f32.mrb[0].mxu0
        %v4686 = vadd.f32 %v3885, %v4685
        %v4687 = vpop.f32.mrb[0].mxu0
        %v4688 = vadd.f32 %v3889, %v4687
        %4689 = vmatprep.mubr.bf16.mxu0 %v3743
        %4690 = vmatmul.mubr.bf16.gmra.mrb[0].mxu0 %v3742
        %v4691 = vpop.f32.mrb[0].mxu0
        %v4692 = vadd.f32 %v3885, %v4691
        %v4693 = vpop.f32.mrb[0].mxu0
        %v4694 = vadd.f32 %v3889, %v4693
        %v4695 = vpop.f32.mrb[0].mxu0
        %v4696 = vadd.f32 %v3885, %v4695
        %v4697 = vpop.f32.mrb[0].mxu0
        %v4698 = vadd.f32 %v3889, %v4697
        %4699 = vdwg.mxu0
        %4700 = vmatprep.subr.bf16.mxu0 %v4303
        %4701 = vmatpush1.bf16.msra.mxu0 %v4302
        %4702 = vmatprep.subr.bf16.mxu0 %v4311
        %4703 = vmatpush1.bf16.msra.mxu0 %v4310
        %4704 = vmatprep.subr.bf16.mxu0 %v4319
        %4705 = vmatpush1.bf16.msra.mxu0 %v4318
        %4706 = vmatprep.subr.bf16.mxu0 %v4327
        %4707 = vmatpush1.bf16.msra.mxu0 %v4326
        %4708 = vmatprep.subr.bf16.mxu0 %v4335
        %4709 = vmatpush1.bf16.msra.mxu0 %v4334
        %4710 = vmatprep.subr.bf16.mxu0 %v4343
        %4711 = vmatpush1.bf16.msra.mxu0 %v4342
        %4712 = vmatprep.subr.bf16.mxu0 %v4351
        %4713 = vmatpush1.bf16.msra.mxu0 %v4350
        %4714 = vmatprep.subr.bf16.mxu0 %v4359
        %4715 = vmatpush1.bf16.msra.mxu0 %v4358
        %4716 = vmatprep.subr.bf16.mxu0 %v4367
        %4717 = vmatpush1.bf16.msra.mxu0 %v4366
        %4718 = vmatprep.subr.bf16.mxu0 %v4375
        %4719 = vmatpush1.bf16.msra.mxu0 %v4374
        %4720 = vmatprep.subr.bf16.mxu0 %v4383
        %4721 = vmatpush1.bf16.msra.mxu0 %v4382
        %4722 = vmatprep.subr.bf16.mxu0 %v4391
        %4723 = vmatpush1.bf16.msra.mxu0 %v4390
        %4724 = vmatprep.subr.bf16.mxu0 %v4399
        %4725 = vmatpush1.bf16.msra.mxu0 %v4398
        %4726 = vmatprep.subr.bf16.mxu0 %v4407
        %4727 = vmatpush1.bf16.msra.mxu0 %v4406
        %4728 = vmatprep.subr.bf16.mxu0 %v4415
        %4729 = vmatpush1.bf16.msra.mxu0 %v4414
        %4730 = vmatprep.subr.bf16.mxu0 %v4423
        %4731 = vmatpush1.bf16.msra.mxu0 %v4422
        %4732 = vmatprep.mubr.bf16.mxu0 %v3737
        %4733 = vmatmul.mubr.bf16.gmra.mrb[0].mxu0 %v3736
        %v4734 = vpop.f32.mrb[0].mxu0
        %v4735 = vadd.f32 %v3893, %v4734
        %v4736 = vpop.f32.mrb[0].mxu0
        %v4737 = vadd.f32 %v3897, %v4736
        %v4738 = vpop.f32.mrb[0].mxu0
        %v4739 = vadd.f32 %v3893, %v4738
        %v4740 = vpop.f32.mrb[0].mxu0
        %v4741 = vadd.f32 %v3897, %v4740
        %4742 = vmatprep.mubr.bf16.mxu0 %v3739
        %4743 = vmatmul.mubr.bf16.gmra.mrb[0].mxu0 %v3738
        %v4744 = vpop.f32.mrb[0].mxu0
        %v4745 = vadd.f32 %v3893, %v4744
        %v4746 = vpop.f32.mrb[0].mxu0
        %v4747 = vadd.f32 %v3897, %v4746
        %v4748 = vpop.f32.mrb[0].mxu0
        %v4749 = vadd.f32 %v3893, %v4748
        %v4750 = vpop.f32.mrb[0].mxu0
        %v4751 = vadd.f32 %v3897, %v4750
        %4752 = vmatprep.mubr.bf16.mxu0 %v3741
        %4753 = vmatmul.mubr.bf16.gmra.mrb[0].mxu0 %v3740
        %v4754 = vpop.f32.mrb[0].mxu0
        %v4755 = vadd.f32 %v3893, %v4754
        %v4756 = vpop.f32.mrb[0].mxu0
        %v4757 = vadd.f32 %v3897, %v4756
        %v4758 = vpop.f32.mrb[0].mxu0
        %v4759 = vadd.f32 %v3893, %v4758
        %v4760 = vpop.f32.mrb[0].mxu0
        %v4761 = vadd.f32 %v3897, %v4760
        %4762 = vmatprep.mubr.bf16.mxu0 %v3743
        %4763 = vmatmul.mubr.bf16.gmra.mrb[0].mxu0 %v3742
        %v4764 = vpop.f32.mrb[0].mxu0
        %v4765 = vadd.f32 %v3893, %v4764
        %v4766 = vpop.f32.mrb[0].mxu0
        %v4767 = vadd.f32 %v3897, %v4766
        %v4768 = vpop.f32.mrb[0].mxu0
        %v4769 = vadd.f32 %v3893, %v4768
        %v4770 = vpop.f32.mrb[0].mxu0
        %v4771 = vadd.f32 %v3897, %v4770
        %4772 = vdwg.mxu0
        %4773 = vmatprep.subr.bf16.mxu0 %v4305
        %4774 = vmatpush1.bf16.msra.mxu0 %v4304
        %4775 = vmatprep.subr.bf16.mxu0 %v4313
        %4776 = vmatpush1.bf16.msra.mxu0 %v4312
        %4777 = vmatprep.subr.bf16.mxu0 %v4321
        %4778 = vmatpush1.bf16.msra.mxu0 %v4320
        %4779 = vmatprep.subr.bf16.mxu0 %v4329
        %4780 = vmatpush1.bf16.msra.mxu0 %v4328
        %4781 = vmatprep.subr.bf16.mxu0 %v4337
        %4782 = vmatpush1.bf16.msra.mxu0 %v4336
        %4783 = vmatprep.subr.bf16.mxu0 %v4345
        %4784 = vmatpush1.bf16.msra.mxu0 %v4344
        %4785 = vmatprep.subr.bf16.mxu0 %v4353
        %4786 = vmatpush1.bf16.msra.mxu0 %v4352
        %4787 = vmatprep.subr.bf16.mxu0 %v4361
        %4788 = vmatpush1.bf16.msra.mxu0 %v4360
        %4789 = vmatprep.subr.bf16.mxu0 %v4369
        %4790 = vmatpush1.bf16.msra.mxu0 %v4368
        %4791 = vmatprep.subr.bf16.mxu0 %v4377
        %4792 = vmatpush1.bf16.msra.mxu0 %v4376
        %4793 = vmatprep.subr.bf16.mxu0 %v4385
        %4794 = vmatpush1.bf16.msra.mxu0 %v4384
        %4795 = vmatprep.subr.bf16.mxu0 %v4393
        %4796 = vmatpush1.bf16.msra.mxu0 %v4392
        %4797 = vmatprep.subr.bf16.mxu0 %v4401
        %4798 = vmatpush1.bf16.msra.mxu0 %v4400
        %4799 = vmatprep.subr.bf16.mxu0 %v4409
        %4800 = vmatpush1.bf16.msra.mxu0 %v4408
        %4801 = vmatprep.subr.bf16.mxu0 %v4417
        %4802 = vmatpush1.bf16.msra.mxu0 %v4416
        %4803 = vmatprep.subr.bf16.mxu0 %v4425
        %4804 = vmatpush1.bf16.msra.mxu0 %v4424
        %4805 = vmatprep.mubr.bf16.mxu0 %v3737
        %4806 = vmatmul.mubr.bf16.gmra.mrb[0].mxu0 %v3736
        %v4807 = vpop.f32.mrb[0].mxu0
        %v4808 = vadd.f32 %v3901, %v4807
        %v4809 = vpop.f32.mrb[0].mxu0
        %v4810 = vadd.f32 %v3905, %v4809
        %v4811 = vpop.f32.mrb[0].mxu0
        %v4812 = vadd.f32 %v3901, %v4811
        %v4813 = vpop.f32.mrb[0].mxu0
        %v4814 = vadd.f32 %v3905, %v4813
        %4815 = vmatprep.mubr.bf16.mxu0 %v3739
        %4816 = vmatmul.mubr.bf16.gmra.mrb[0].mxu0 %v3738
        %v4817 = vpop.f32.mrb[0].mxu0
        %v4818 = vadd.f32 %v3901, %v4817
        %v4819 = vpop.f32.mrb[0].mxu0
        %v4820 = vadd.f32 %v3905, %v4819
        %v4821 = vpop.f32.mrb[0].mxu0
        %v4822 = vadd.f32 %v3901, %v4821
        %v4823 = vpop.f32.mrb[0].mxu0
        %v4824 = vadd.f32 %v3905, %v4823
        %4825 = vmatprep.mubr.bf16.mxu0 %v3741
        %4826 = vmatmul.mubr.bf16.gmra.mrb[0].mxu0 %v3740
        %v4827 = vpop.f32.mrb[0].mxu0
        %v4828 = vadd.f32 %v3901, %v4827
        %v4829 = vpop.f32.mrb[0].mxu0
        %v4830 = vadd.f32 %v3905, %v4829
        %v4831 = vpop.f32.mrb[0].mxu0
        %v4832 = vadd.f32 %v3901, %v4831
        %v4833 = vpop.f32.mrb[0].mxu0
        %v4834 = vadd.f32 %v3905, %v4833
        %4835 = vmatprep.mubr.bf16.mxu0 %v3743
        %4836 = vmatmul.mubr.bf16.gmra.mrb[0].mxu0 %v3742
        %v4837 = vpop.f32.mrb[0].mxu0
        %v4838 = vadd.f32 %v3901, %v4837
        %v4839 = vpop.f32.mrb[0].mxu0
        %v4840 = vadd.f32 %v3905, %v4839
        %v4841 = vpop.f32.mrb[0].mxu0
        %v4842 = vadd.f32 %v3901, %v4841
        %v4843 = vpop.f32.mrb[0].mxu0
        %v4844 = vadd.f32 %v3905, %v4843
        %4845 = vdwg.mxu0
        %v4846 = vmul.f32 %v4589, 0.5
        %v4847 = vmul.f32 %v4591, 0.5
        %v4848 = vmul.f32 %v4662, 0.5
        %v4849 = vmul.f32 %v4664, 0.5
        %v4850 = vmul.f32 %v4735, 0.5
        %v4851 = vmul.f32 %v4737, 0.5
        %v4852 = vmul.f32 %v4808, 0.5
        %v4853 = vmul.f32 %v4810, 0.5
        %v4854 = vmul.f32 %v4593, 0.5
        %v4855 = vmul.f32 %v4595, 0.5
        %v4856 = vmul.f32 %v4666, 0.5
        %v4857 = vmul.f32 %v4668, 0.5
        %v4858 = vmul.f32 %v4739, 0.5
        %v4859 = vmul.f32 %v4741, 0.5
        %v4860 = vmul.f32 %v4812, 0.5
        %v4861 = vmul.f32 %v4814, 0.5
        %v4862 = vmul.f32 %v4599, 0.5
        %v4863 = vmul.f32 %v4601, 0.5
        %v4864 = vmul.f32 %v4672, 0.5
        %v4865 = vmul.f32 %v4674, 0.5
        %v4866 = vmul.f32 %v4745, 0.5
        %v4867 = vmul.f32 %v4747, 0.5
        %v4868 = vmul.f32 %v4818, 0.5
        %v4869 = vmul.f32 %v4820, 0.5
        %v4870 = vmul.f32 %v4603, 0.5
        %v4871 = vmul.f32 %v4605, 0.5
        %v4872 = vmul.f32 %v4676, 0.5
        %v4873 = vmul.f32 %v4678, 0.5
        %v4874 = vmul.f32 %v4749, 0.5
        %v4875 = vmul.f32 %v4751, 0.5
        %v4876 = vmul.f32 %v4822, 0.5
        %v4877 = vmul.f32 %v4824, 0.5
        %v4878 = vmul.f32 %v4609, 0.5
        %v4879 = vmul.f32 %v4611, 0.5
        %v4880 = vmul.f32 %v4682, 0.5
        %v4881 = vmul.f32 %v4684, 0.5
        %v4882 = vmul.f32 %v4755, 0.5
        %v4883 = vmul.f32 %v4757, 0.5
        %v4884 = vmul.f32 %v4828, 0.5
        %v4885 = vmul.f32 %v4830, 0.5
        %v4886 = vmul.f32 %v4613, 0.5
        %v4887 = vmul.f32 %v4615, 0.5
        %v4888 = vmul.f32 %v4686, 0.5
        %v4889 = vmul.f32 %v4688, 0.5
        %v4890 = vmul.f32 %v4759, 0.5
        %v4891 = vmul.f32 %v4761, 0.5
        %v4892 = vmul.f32 %v4832, 0.5
        %v4893 = vmul.f32 %v4834, 0.5
        %v4894 = vmul.f32 %v4619, 0.5
        %v4895 = vmul.f32 %v4621, 0.5
        %v4896 = vmul.f32 %v4692, 0.5
        %v4897 = vmul.f32 %v4694, 0.5
        %v4898 = vmul.f32 %v4765, 0.5
        %v4899 = vmul.f32 %v4767, 0.5
        %v4900 = vmul.f32 %v4838, 0.5
        %v4901 = vmul.f32 %v4840, 0.5
        %v4902 = vmul.f32 %v4623, 0.5
        %v4903 = vmul.f32 %v4625, 0.5
        %v4904 = vmul.f32 %v4696, 0.5
        %v4905 = vmul.f32 %v4698, 0.5
        %v4906 = vmul.f32 %v4769, 0.5
        %v4907 = vmul.f32 %v4771, 0.5
        %v4908 = vmul.f32 %v4842, 0.5
        %v4909 = vmul.f32 %v4844, 0.5
        %v4910 = vmul.f32 %v4589, 0.70710677
        %v4911 = vmul.f32 %v4591, 0.70710677
        %v4912 = vmul.f32 %v4662, 0.70710677
        %v4913 = vmul.f32 %v4664, 0.70710677
        %v4914 = vmul.f32 %v4735, 0.70710677
        %v4915 = vmul.f32 %v4737, 0.70710677
        %v4916 = vmul.f32 %v4808, 0.70710677
        %v4917 = vmul.f32 %v4810, 0.70710677
        %v4918 = vmul.f32 %v4593, 0.70710677
        %v4919 = vmul.f32 %v4595, 0.70710677
        %v4920 = vmul.f32 %v4666, 0.70710677
        %v4921 = vmul.f32 %v4668, 0.70710677
        %v4922 = vmul.f32 %v4739, 0.70710677
        %v4923 = vmul.f32 %v4741, 0.70710677
        %v4924 = vmul.f32 %v4812, 0.70710677
        %v4925 = vmul.f32 %v4814, 0.70710677
        %v4926 = vmul.f32 %v4599, 0.70710677
        %v4927 = vmul.f32 %v4601, 0.70710677
        %v4928 = vmul.f32 %v4672, 0.70710677
        %v4929 = vmul.f32 %v4674, 0.70710677
        %v4930 = vmul.f32 %v4745, 0.70710677
        %v4931 = vmul.f32 %v4747, 0.70710677
        %v4932 = vmul.f32 %v4818, 0.70710677
        %v4933 = vmul.f32 %v4820, 0.70710677
        %v4934 = vmul.f32 %v4603, 0.70710677
        %v4935 = vmul.f32 %v4605, 0.70710677
        %v4936 = vmul.f32 %v4676, 0.70710677
        %v4937 = vmul.f32 %v4678, 0.70710677
        %v4938 = vmul.f32 %v4749, 0.70710677
        %v4939 = vmul.f32 %v4751, 0.70710677
        %v4940 = vmul.f32 %v4822, 0.70710677
        %v4941 = vmul.f32 %v4824, 0.70710677
        %v4942 = vmul.f32 %v4609, 0.70710677
        %v4943 = vmul.f32 %v4611, 0.70710677
        %v4944 = vmul.f32 %v4682, 0.70710677
        %v4945 = vmul.f32 %v4684, 0.70710677
        %v4946 = vmul.f32 %v4755, 0.70710677
        %v4947 = vmul.f32 %v4757, 0.70710677
        %v4948 = vmul.f32 %v4828, 0.70710677
        %v4949 = vmul.f32 %v4830, 0.70710677
        %v4950 = vmul.f32 %v4613, 0.70710677
        %v4951 = vmul.f32 %v4615, 0.70710677
        %v4952 = vmul.f32 %v4686, 0.70710677
        %v4953 = vmul.f32 %v4688, 0.70710677
        %v4954 = vmul.f32 %v4759, 0.70710677
        %v4955 = vmul.f32 %v4761, 0.70710677
        %v4956 = vmul.f32 %v4832, 0.70710677
        %v4957 = vmul.f32 %v4834, 0.70710677
        %v4958 = vmul.f32 %v4619, 0.70710677
        %v4959 = vmul.f32 %v4621, 0.70710677
        %v4960 = vmul.f32 %v4692, 0.70710677
        %v4961 = vmul.f32 %v4694, 0.70710677
        %v4962 = vmul.f32 %v4765, 0.70710677
        %v4963 = vmul.f32 %v4767, 0.70710677
        %v4964 = vmul.f32 %v4838, 0.70710677
        %v4965 = vmul.f32 %v4840, 0.70710677
        %v4966 = vmul.f32 %v4623, 0.70710677
        %v4967 = vmul.f32 %v4625, 0.70710677
        %v4968 = vmul.f32 %v4696, 0.70710677
        %v4969 = vmul.f32 %v4698, 0.70710677
        %v4970 = vmul.f32 %v4769, 0.70710677
        %v4971 = vmul.f32 %v4771, 0.70710677
        %v4972 = vmul.f32 %v4842, 0.70710677
        %v4973 = vmul.f32 %v4844, 0.70710677
        %v4974 = verf.f32.pop %v4910
        %v4975 = verf.f32.pop %v4911
        %v4976 = verf.f32.pop %v4912
        %v4977 = verf.f32.pop %v4913
        %v4978 = verf.f32.pop %v4914
        %v4979 = verf.f32.pop %v4915
        %v4980 = verf.f32.pop %v4916
        %v4981 = verf.f32.pop %v4917
        %v4982 = verf.f32.pop %v4918
        %v4983 = verf.f32.pop %v4919
        %v4984 = verf.f32.pop %v4920
        %v4985 = verf.f32.pop %v4921
        %v4986 = verf.f32.pop %v4922
        %v4987 = verf.f32.pop %v4923
        %v4988 = verf.f32.pop %v4924
        %v4989 = verf.f32.pop %v4925
        %v4990 = verf.f32.pop %v4926
        %v4991 = verf.f32.pop %v4927
        %v4992 = verf.f32.pop %v4928
        %v4993 = verf.f32.pop %v4929
        %v4994 = verf.f32.pop %v4930
        %v4995 = verf.f32.pop %v4931
        %v4996 = verf.f32.pop %v4932
        %v4997 = verf.f32.pop %v4933
        %v4998 = verf.f32.pop %v4934
        %v4999 = verf.f32.pop %v4935
        %v5000 = verf.f32.pop %v4936
        %v5001 = verf.f32.pop %v4937
        %v5002 = verf.f32.pop %v4938
        %v5003 = verf.f32.pop %v4939
        %v5004 = verf.f32.pop %v4940
        %v5005 = verf.f32.pop %v4941
        %v5006 = verf.f32.pop %v4942
        %v5007 = verf.f32.pop %v4943
        %v5008 = verf.f32.pop %v4944
        %v5009 = verf.f32.pop %v4945
        %v5010 = verf.f32.pop %v4946
        %v5011 = verf.f32.pop %v4947
        %v5012 = verf.f32.pop %v4948
        %v5013 = verf.f32.pop %v4949
        %v5014 = verf.f32.pop %v4950
        %v5015 = verf.f32.pop %v4951
        %v5016 = verf.f32.pop %v4952
        %v5017 = verf.f32.pop %v4953
        %v5018 = verf.f32.pop %v4954
        %v5019 = verf.f32.pop %v4955
        %v5020 = verf.f32.pop %v4956
        %v5021 = verf.f32.pop %v4957
        %v5022 = verf.f32.pop %v4958
        %v5023 = verf.f32.pop %v4959
        %v5024 = verf.f32.pop %v4960
        %v5025 = verf.f32.pop %v4961
        %v5026 = verf.f32.pop %v4962
        %v5027 = verf.f32.pop %v4963
        %v5028 = verf.f32.pop %v4964
        %v5029 = verf.f32.pop %v4965
        %v5030 = verf.f32.pop %v4966
        %v5031 = verf.f32.pop %v4967
        %v5032 = verf.f32.pop %v4968
        %v5033 = verf.f32.pop %v4969
        %v5034 = verf.f32.pop %v4970
        %v5035 = verf.f32.pop %v4971
        %v5036 = verf.f32.pop %v4972
        %v5037 = verf.f32.pop %v4973
        %v5038 = vadd.f32 %v4974, 1.0
        %v5039 = vadd.f32 %v4975, 1.0
        %v5040 = vadd.f32 %v4976, 1.0
        %v5041 = vadd.f32 %v4977, 1.0
        %v5042 = vadd.f32 %v4978, 1.0
        %v5043 = vadd.f32 %v4979, 1.0
        %v5044 = vadd.f32 %v4980, 1.0
        %v5045 = vadd.f32 %v4981, 1.0
        %v5046 = vadd.f32 %v4982, 1.0
        %v5047 = vadd.f32 %v4983, 1.0
        %v5048 = vadd.f32 %v4984, 1.0
        %v5049 = vadd.f32 %v4985, 1.0
        %v5050 = vadd.f32 %v4986, 1.0
        %v5051 = vadd.f32 %v4987, 1.0
        %v5052 = vadd.f32 %v4988, 1.0
        %v5053 = vadd.f32 %v4989, 1.0
        %v5054 = vadd.f32 %v4990, 1.0
        %v5055 = vadd.f32 %v4991, 1.0
        %v5056 = vadd.f32 %v4992, 1.0
        %v5057 = vadd.f32 %v4993, 1.0
        %v5058 = vadd.f32 %v4994, 1.0
        %v5059 = vadd.f32 %v4995, 1.0
        %v5060 = vadd.f32 %v4996, 1.0
        %v5061 = vadd.f32 %v4997, 1.0
        %v5062 = vadd.f32 %v4998, 1.0
        %v5063 = vadd.f32 %v4999, 1.0
        %v5064 = vadd.f32 %v5000, 1.0
        %v5065 = vadd.f32 %v5001, 1.0
        %v5066 = vadd.f32 %v5002, 1.0
        %v5067 = vadd.f32 %v5003, 1.0
        %v5068 = vadd.f32 %v5004, 1.0
        %v5069 = vadd.f32 %v5005, 1.0
        %v5070 = vadd.f32 %v5006, 1.0
        %v5071 = vadd.f32 %v5007, 1.0
        %v5072 = vadd.f32 %v5008, 1.0
        %v5073 = vadd.f32 %v5009, 1.0
        %v5074 = vadd.f32 %v5010, 1.0
        %v5075 = vadd.f32 %v5011, 1.0
        %v5076 = vadd.f32 %v5012, 1.0
        %v5077 = vadd.f32 %v5013, 1.0
        %v5078 = vadd.f32 %v5014, 1.0
        %v5079 = vadd.f32 %v5015, 1.0
        %v5080 = vadd.f32 %v5016, 1.0
        %v5081 = vadd.f32 %v5017, 1.0
        %v5082 = vadd.f32 %v5018, 1.0
        %v5083 = vadd.f32 %v5019, 1.0
        %v5084 = vadd.f32 %v5020, 1.0
        %v5085 = vadd.f32 %v5021, 1.0
        %v5086 = vadd.f32 %v5022, 1.0
        %v5087 = vadd.f32 %v5023, 1.0
        %v5088 = vadd.f32 %v5024, 1.0
        %v5089 = vadd.f32 %v5025, 1.0
        %v5090 = vadd.f32 %v5026, 1.0
        %v5091 = vadd.f32 %v5027, 1.0
        %v5092 = vadd.f32 %v5028, 1.0
        %v5093 = vadd.f32 %v5029, 1.0
        %v5094 = vadd.f32 %v5030, 1.0
        %v5095 = vadd.f32 %v5031, 1.0
        %v5096 = vadd.f32 %v5032, 1.0
        %v5097 = vadd.f32 %v5033, 1.0
        %v5098 = vadd.f32 %v5034, 1.0
        %v5099 = vadd.f32 %v5035, 1.0
        %v5100 = vadd.f32 %v5036, 1.0
        %v5101 = vadd.f32 %v5037, 1.0
        %v5102 = vmul.f32 %v4846, %v5038
        %v5103 = vmul.f32 %v4847, %v5039
        %v5104 = vmul.f32 %v4848, %v5040
        %v5105 = vmul.f32 %v4849, %v5041
        %v5106 = vmul.f32 %v4850, %v5042
        %v5107 = vmul.f32 %v4851, %v5043
        %v5108 = vmul.f32 %v4852, %v5044
        %v5109 = vmul.f32 %v4853, %v5045
        %v5110 = vmul.f32 %v4854, %v5046
        %v5111 = vmul.f32 %v4855, %v5047
        %v5112 = vmul.f32 %v4856, %v5048
        %v5113 = vmul.f32 %v4857, %v5049
        %v5114 = vmul.f32 %v4858, %v5050
        %v5115 = vmul.f32 %v4859, %v5051
        %v5116 = vmul.f32 %v4860, %v5052
        %v5117 = vmul.f32 %v4861, %v5053
        %v5118 = vmul.f32 %v4862, %v5054
        %v5119 = vmul.f32 %v4863, %v5055
        %v5120 = vmul.f32 %v4864, %v5056
        %v5121 = vmul.f32 %v4865, %v5057
        %v5122 = vmul.f32 %v4866, %v5058
        %v5123 = vmul.f32 %v4867, %v5059
        %v5124 = vmul.f32 %v4868, %v5060
        %v5125 = vmul.f32 %v4869, %v5061
        %v5126 = vmul.f32 %v4870, %v5062
        %v5127 = vmul.f32 %v4871, %v5063
        %v5128 = vmul.f32 %v4872, %v5064
        %v5129 = vmul.f32 %v4873, %v5065
        %v5130 = vmul.f32 %v4874, %v5066
        %v5131 = vmul.f32 %v4875, %v5067
        %v5132 = vmul.f32 %v4876, %v5068
        %v5133 = vmul.f32 %v4877, %v5069
        %v5134 = vmul.f32 %v4878, %v5070
        %v5135 = vmul.f32 %v4879, %v5071
        %v5136 = vmul.f32 %v4880, %v5072
        %v5137 = vmul.f32 %v4881, %v5073
        %v5138 = vmul.f32 %v4882, %v5074
        %v5139 = vmul.f32 %v4883, %v5075
        %v5140 = vmul.f32 %v4884, %v5076
        %v5141 = vmul.f32 %v4885, %v5077
        %v5142 = vmul.f32 %v4886, %v5078
        %v5143 = vmul.f32 %v4887, %v5079
        %v5144 = vmul.f32 %v4888, %v5080
        %v5145 = vmul.f32 %v4889, %v5081
        %v5146 = vmul.f32 %v4890, %v5082
        %v5147 = vmul.f32 %v4891, %v5083
        %v5148 = vmul.f32 %v4892, %v5084
        %v5149 = vmul.f32 %v4893, %v5085
        %v5150 = vmul.f32 %v4894, %v5086
        %v5151 = vmul.f32 %v4895, %v5087
        %v5152 = vmul.f32 %v4896, %v5088
        %v5153 = vmul.f32 %v4897, %v5089
        %v5154 = vmul.f32 %v4898, %v5090
        %v5155 = vmul.f32 %v4899, %v5091
        %v5156 = vmul.f32 %v4900, %v5092
        %v5157 = vmul.f32 %v4901, %v5093
        %v5158 = vmul.f32 %v4902, %v5094
        %v5159 = vmul.f32 %v4903, %v5095
        %v5160 = vmul.f32 %v4904, %v5096
        %v5161 = vmul.f32 %v4905, %v5097
        %v5162 = vmul.f32 %v4906, %v5098
        %v5163 = vmul.f32 %v4907, %v5099
        %v5164 = vmul.f32 %v4908, %v5100
        %v5165 = vmul.f32 %v4909, %v5101
        %v5166 = vpack.c.bf16 %v5110, %v5102
        %v5167 = vpack.c.bf16 %v5111, %v5103
        %v5168 = vpack.c.bf16 %v5112, %v5104
        %v5169 = vpack.c.bf16 %v5113, %v5105
        %v5170 = vpack.c.bf16 %v5114, %v5106
        %v5171 = vpack.c.bf16 %v5115, %v5107
        %v5172 = vpack.c.bf16 %v5116, %v5108
        %v5173 = vpack.c.bf16 %v5117, %v5109
        %v5174 = vpack.c.bf16 %v5126, %v5118
        %v5175 = vpack.c.bf16 %v5127, %v5119
        %v5176 = vpack.c.bf16 %v5128, %v5120
        %v5177 = vpack.c.bf16 %v5129, %v5121
        %v5178 = vpack.c.bf16 %v5130, %v5122
        %v5179 = vpack.c.bf16 %v5131, %v5123
        %v5180 = vpack.c.bf16 %v5132, %v5124
        %v5181 = vpack.c.bf16 %v5133, %v5125
        %v5182 = vpack.c.bf16 %v5142, %v5134
        %v5183 = vpack.c.bf16 %v5143, %v5135
        %v5184 = vpack.c.bf16 %v5144, %v5136
        %v5185 = vpack.c.bf16 %v5145, %v5137
        %v5186 = vpack.c.bf16 %v5146, %v5138
        %v5187 = vpack.c.bf16 %v5147, %v5139
        %v5188 = vpack.c.bf16 %v5148, %v5140
        %v5189 = vpack.c.bf16 %v5149, %v5141
        %v5190 = vpack.c.bf16 %v5158, %v5150
        %v5191 = vpack.c.bf16 %v5159, %v5151
        %v5192 = vpack.c.bf16 %v5160, %v5152
        %v5193 = vpack.c.bf16 %v5161, %v5153
        %v5194 = vpack.c.bf16 %v5162, %v5154
        %v5195 = vpack.c.bf16 %v5163, %v5155
        %v5196 = vpack.c.bf16 %v5164, %v5156
        %v5197 = vpack.c.bf16 %v5165, %v5157
        %v5198 = vld [vmem:[%s1051] sm:$0xff]
        %v5199 = vld [vmem:[%s1051 + $0x8] sm:$0xff]
        %v5200 = vld [vmem:[%s1051 + $0x10] sm:$0xff]
        %v5201 = vld [vmem:[%s1051 + $0x18] sm:$0xff]
        %v5202 = vld [vmem:[%s1051 + $0x20] sm:$0xff]
        %v5203 = vld [vmem:[%s1051 + $0x28] sm:$0xff]
        %v5204 = vld [vmem:[%s1051 + $0x30] sm:$0xff]
        %v5205 = vld [vmem:[%s1051 + $0x38] sm:$0xff]
        %v5206 = vld [vmem:[%s1051 + $0x40] sm:$0xff]
        %v5207 = vld [vmem:[%s1051 + $0x48] sm:$0xff]
        %v5208 = vld [vmem:[%s1051 + $0x50] sm:$0xff]
        %v5209 = vld [vmem:[%s1051 + $0x58] sm:$0xff]
        %v5210 = vld [vmem:[%s1051 + $0x60] sm:$0xff]
        %v5211 = vld [vmem:[%s1051 + $0x68] sm:$0xff]
        %v5212 = vld [vmem:[%s1051 + $0x70] sm:$0xff]
        %v5213 = vld [vmem:[%s1051 + $0x78] sm:$0xff]
        %v5214 = vld [vmem:[%s1051 + $0x80] sm:$0xff]
        %v5215 = vld [vmem:[%s1051 + $0x88] sm:$0xff]
        %v5216 = vld [vmem:[%s1051 + $0x90] sm:$0xff]
        %v5217 = vld [vmem:[%s1051 + $0x98] sm:$0xff]
        %v5218 = vld [vmem:[%s1051 + $0xa0] sm:$0xff]
        %v5219 = vld [vmem:[%s1051 + $0xa8] sm:$0xff]
        %v5220 = vld [vmem:[%s1051 + $0xb0] sm:$0xff]
        %v5221 = vld [vmem:[%s1051 + $0xb8] sm:$0xff]
        %v5222 = vld [vmem:[%s1051 + $0xc0] sm:$0xff]
        %v5223 = vld [vmem:[%s1051 + $0xc8] sm:$0xff]
        %v5224 = vld [vmem:[%s1051 + $0xd0] sm:$0xff]
        %v5225 = vld [vmem:[%s1051 + $0xd8] sm:$0xff]
        %v5226 = vld [vmem:[%s1051 + $0xe0] sm:$0xff]
        %v5227 = vld [vmem:[%s1051 + $0xe8] sm:$0xff]
        %v5228 = vld [vmem:[%s1051 + $0xf0] sm:$0xff]
        %v5229 = vld [vmem:[%s1051 + $0xf8] sm:$0xff]
        %v5230 = vld [vmem:[%s1051 + $0x100] sm:$0xff]
        %v5231 = vld [vmem:[%s1051 + $0x108] sm:$0xff]
        %v5232 = vld [vmem:[%s1051 + $0x110] sm:$0xff]
        %v5233 = vld [vmem:[%s1051 + $0x118] sm:$0xff]
        %v5234 = vld [vmem:[%s1051 + $0x120] sm:$0xff]
        %v5235 = vld [vmem:[%s1051 + $0x128] sm:$0xff]
        %v5236 = vld [vmem:[%s1051 + $0x130] sm:$0xff]
        %v5237 = vld [vmem:[%s1051 + $0x138] sm:$0xff]
        %v5238 = vld [vmem:[%s1051 + $0x140] sm:$0xff]
        %v5239 = vld [vmem:[%s1051 + $0x148] sm:$0xff]
        %v5240 = vld [vmem:[%s1051 + $0x150] sm:$0xff]
        %v5241 = vld [vmem:[%s1051 + $0x158] sm:$0xff]
        %v5242 = vld [vmem:[%s1051 + $0x160] sm:$0xff]
        %v5243 = vld [vmem:[%s1051 + $0x168] sm:$0xff]
        %v5244 = vld [vmem:[%s1051 + $0x170] sm:$0xff]
        %v5245 = vld [vmem:[%s1051 + $0x178] sm:$0xff]
        %v5246 = vld [vmem:[%s1051 + $0x180] sm:$0xff]
        %v5247 = vld [vmem:[%s1051 + $0x188] sm:$0xff]
        %v5248 = vld [vmem:[%s1051 + $0x190] sm:$0xff]
        %v5249 = vld [vmem:[%s1051 + $0x198] sm:$0xff]
        %v5250 = vld [vmem:[%s1051 + $0x1a0] sm:$0xff]
        %v5251 = vld [vmem:[%s1051 + $0x1a8] sm:$0xff]
        %v5252 = vld [vmem:[%s1051 + $0x1b0] sm:$0xff]
        %v5253 = vld [vmem:[%s1051 + $0x1b8] sm:$0xff]
        %v5254 = vld [vmem:[%s1051 + $0x1c0] sm:$0xff]
        %v5255 = vld [vmem:[%s1051 + $0x1c8] sm:$0xff]
        %v5256 = vld [vmem:[%s1051 + $0x1d0] sm:$0xff]
        %v5257 = vld [vmem:[%s1051 + $0x1d8] sm:$0xff]
        %v5258 = vld [vmem:[%s1051 + $0x1e0] sm:$0xff]
        %v5259 = vld [vmem:[%s1051 + $0x1e8] sm:$0xff]
        %v5260 = vld [vmem:[%s1051 + $0x1f0] sm:$0xff]
        %v5261 = vld [vmem:[%s1051 + $0x1f8] sm:$0xff]
        %v5262 = vld [vmem:[%s1051 + $0x200] sm:$0xff]
        %v5263 = vld [vmem:[%s1051 + $0x208] sm:$0xff]
        %v5264 = vld [vmem:[%s1051 + $0x210] sm:$0xff]
        %v5265 = vld [vmem:[%s1051 + $0x218] sm:$0xff]
        %v5266 = vld [vmem:[%s1051 + $0x220] sm:$0xff]
        %v5267 = vld [vmem:[%s1051 + $0x228] sm:$0xff]
        %v5268 = vld [vmem:[%s1051 + $0x230] sm:$0xff]
        %v5269 = vld [vmem:[%s1051 + $0x238] sm:$0xff]
        %v5270 = vld [vmem:[%s1051 + $0x240] sm:$0xff]
        %v5271 = vld [vmem:[%s1051 + $0x248] sm:$0xff]
        %v5272 = vld [vmem:[%s1051 + $0x250] sm:$0xff]
        %v5273 = vld [vmem:[%s1051 + $0x258] sm:$0xff]
        %v5274 = vld [vmem:[%s1051 + $0x260] sm:$0xff]
        %v5275 = vld [vmem:[%s1051 + $0x268] sm:$0xff]
        %v5276 = vld [vmem:[%s1051 + $0x270] sm:$0xff]
        %v5277 = vld [vmem:[%s1051 + $0x278] sm:$0xff]
        %v5278 = vld [vmem:[%s1051 + $0x280] sm:$0xff]
        %v5279 = vld [vmem:[%s1051 + $0x288] sm:$0xff]
        %v5280 = vld [vmem:[%s1051 + $0x290] sm:$0xff]
        %v5281 = vld [vmem:[%s1051 + $0x298] sm:$0xff]
        %v5282 = vld [vmem:[%s1051 + $0x2a0] sm:$0xff]
        %v5283 = vld [vmem:[%s1051 + $0x2a8] sm:$0xff]
        %v5284 = vld [vmem:[%s1051 + $0x2b0] sm:$0xff]
        %v5285 = vld [vmem:[%s1051 + $0x2b8] sm:$0xff]
        %v5286 = vld [vmem:[%s1051 + $0x2c0] sm:$0xff]
        %v5287 = vld [vmem:[%s1051 + $0x2c8] sm:$0xff]
        %v5288 = vld [vmem:[%s1051 + $0x2d0] sm:$0xff]
        %v5289 = vld [vmem:[%s1051 + $0x2d8] sm:$0xff]
        %v5290 = vld [vmem:[%s1051 + $0x2e0] sm:$0xff]
        %v5291 = vld [vmem:[%s1051 + $0x2e8] sm:$0xff]
        %v5292 = vld [vmem:[%s1051 + $0x2f0] sm:$0xff]
        %v5293 = vld [vmem:[%s1051 + $0x2f8] sm:$0xff]
        %v5294 = vld [vmem:[%s1051 + $0x300] sm:$0xff]
        %v5295 = vld [vmem:[%s1051 + $0x308] sm:$0xff]
        %v5296 = vld [vmem:[%s1051 + $0x310] sm:$0xff]
        %v5297 = vld [vmem:[%s1051 + $0x318] sm:$0xff]
        %v5298 = vld [vmem:[%s1051 + $0x320] sm:$0xff]
        %v5299 = vld [vmem:[%s1051 + $0x328] sm:$0xff]
        %v5300 = vld [vmem:[%s1051 + $0x330] sm:$0xff]
        %v5301 = vld [vmem:[%s1051 + $0x338] sm:$0xff]
        %v5302 = vld [vmem:[%s1051 + $0x340] sm:$0xff]
        %v5303 = vld [vmem:[%s1051 + $0x348] sm:$0xff]
        %v5304 = vld [vmem:[%s1051 + $0x350] sm:$0xff]
        %v5305 = vld [vmem:[%s1051 + $0x358] sm:$0xff]
        %v5306 = vld [vmem:[%s1051 + $0x360] sm:$0xff]
        %v5307 = vld [vmem:[%s1051 + $0x368] sm:$0xff]
        %v5308 = vld [vmem:[%s1051 + $0x370] sm:$0xff]
        %v5309 = vld [vmem:[%s1051 + $0x378] sm:$0xff]
        %v5310 = vld [vmem:[%s1051 + $0x380] sm:$0xff]
        %v5311 = vld [vmem:[%s1051 + $0x388] sm:$0xff]
        %v5312 = vld [vmem:[%s1051 + $0x390] sm:$0xff]
        %v5313 = vld [vmem:[%s1051 + $0x398] sm:$0xff]
        %v5314 = vld [vmem:[%s1051 + $0x3a0] sm:$0xff]
        %v5315 = vld [vmem:[%s1051 + $0x3a8] sm:$0xff]
        %v5316 = vld [vmem:[%s1051 + $0x3b0] sm:$0xff]
        %v5317 = vld [vmem:[%s1051 + $0x3b8] sm:$0xff]
        %v5318 = vld [vmem:[%s1051 + $0x3c0] sm:$0xff]
        %v5319 = vld [vmem:[%s1051 + $0x3c8] sm:$0xff]
        %v5320 = vld [vmem:[%s1051 + $0x3d0] sm:$0xff]
        %v5321 = vld [vmem:[%s1051 + $0x3d8] sm:$0xff]
        %v5322 = vld [vmem:[%s1051 + $0x3e0] sm:$0xff]
        %v5323 = vld [vmem:[%s1051 + $0x3e8] sm:$0xff]
        %v5324 = vld [vmem:[%s1051 + $0x3f0] sm:$0xff]
        %v5325 = vld [vmem:[%s1051 + $0x3f8] sm:$0xff]
        %v5326 = vld [vmem:[%s1060] sm:$0x3]
        %v5328 = vlaneseq
        %v5329 = vshrl.u32 %v5328, 7
        %v5330 = vsub.s32 0, %v5329
        %v5331 = vrot.slane %v5326, %v5330
        %v5332 = vlaneseq
        %v5333 = vshrl.u32 %v5332, 7
        %v5334 = vsub.s32 1, %v5333
        %v5335 = vrot.slane %v5326, %v5334
        %v5466 = vunpack.c.l.b16 %v5198
        %v5467 = vunpack.c.h.b16 %v5198
        %v5468 = vunpack.c.l.b16 %v5199
        %v5469 = vunpack.c.h.b16 %v5199
        %v5470 = vunpack.c.l.b16 %v5200
        %v5471 = vunpack.c.h.b16 %v5200
        %v5472 = vunpack.c.l.b16 %v5201
        %v5473 = vunpack.c.h.b16 %v5201
        %v5474 = vunpack.c.l.b16 %v5202
        %v5475 = vunpack.c.h.b16 %v5202
        %v5476 = vunpack.c.l.b16 %v5203
        %v5477 = vunpack.c.h.b16 %v5203
        %v5478 = vunpack.c.l.b16 %v5204
        %v5479 = vunpack.c.h.b16 %v5204
        %v5480 = vunpack.c.l.b16 %v5205
        %v5481 = vunpack.c.h.b16 %v5205
        %v5482 = vunpack.c.l.b16 %v5206
        %v5483 = vunpack.c.h.b16 %v5206
        %v5484 = vunpack.c.l.b16 %v5207
        %v5485 = vunpack.c.h.b16 %v5207
        %v5486 = vunpack.c.l.b16 %v5208
        %v5487 = vunpack.c.h.b16 %v5208
        %v5488 = vunpack.c.l.b16 %v5209
        %v5489 = vunpack.c.h.b16 %v5209
        %v5490 = vunpack.c.l.b16 %v5210
        %v5491 = vunpack.c.h.b16 %v5210
        %v5492 = vunpack.c.l.b16 %v5211
        %v5493 = vunpack.c.h.b16 %v5211
        %v5494 = vunpack.c.l.b16 %v5212
        %v5495 = vunpack.c.h.b16 %v5212
        %v5496 = vunpack.c.l.b16 %v5213
        %v5497 = vunpack.c.h.b16 %v5213
        %v5498 = vunpack.c.l.b16 %v5214
        %v5499 = vunpack.c.h.b16 %v5214
        %v5500 = vunpack.c.l.b16 %v5215
        %v5501 = vunpack.c.h.b16 %v5215
        %v5502 = vunpack.c.l.b16 %v5216
        %v5503 = vunpack.c.h.b16 %v5216
        %v5504 = vunpack.c.l.b16 %v5217
        %v5505 = vunpack.c.h.b16 %v5217
        %v5506 = vunpack.c.l.b16 %v5218
        %v5507 = vunpack.c.h.b16 %v5218
        %v5508 = vunpack.c.l.b16 %v5219
        %v5509 = vunpack.c.h.b16 %v5219
        %v5510 = vunpack.c.l.b16 %v5220
        %v5511 = vunpack.c.h.b16 %v5220
        %v5512 = vunpack.c.l.b16 %v5221
        %v5513 = vunpack.c.h.b16 %v5221
        %v5514 = vunpack.c.l.b16 %v5222
        %v5515 = vunpack.c.h.b16 %v5222
        %v5516 = vunpack.c.l.b16 %v5223
        %v5517 = vunpack.c.h.b16 %v5223
        %v5518 = vunpack.c.l.b16 %v5224
        %v5519 = vunpack.c.h.b16 %v5224
        %v5520 = vunpack.c.l.b16 %v5225
        %v5521 = vunpack.c.h.b16 %v5225
        %v5522 = vunpack.c.l.b16 %v5226
        %v5523 = vunpack.c.h.b16 %v5226
        %v5524 = vunpack.c.l.b16 %v5227
        %v5525 = vunpack.c.h.b16 %v5227
        %v5526 = vunpack.c.l.b16 %v5228
        %v5527 = vunpack.c.h.b16 %v5228
        %v5528 = vunpack.c.l.b16 %v5229
        %v5529 = vunpack.c.h.b16 %v5229
        %v5530 = vunpack.c.l.b16 %v5230
        %v5531 = vunpack.c.h.b16 %v5230
        %v5532 = vunpack.c.l.b16 %v5231
        %v5533 = vunpack.c.h.b16 %v5231
        %v5534 = vunpack.c.l.b16 %v5232
        %v5535 = vunpack.c.h.b16 %v5232
        %v5536 = vunpack.c.l.b16 %v5233
        %v5537 = vunpack.c.h.b16 %v5233
        %v5538 = vunpack.c.l.b16 %v5234
        %v5539 = vunpack.c.h.b16 %v5234
        %v5540 = vunpack.c.l.b16 %v5235
        %v5541 = vunpack.c.h.b16 %v5235
        %v5542 = vunpack.c.l.b16 %v5236
        %v5543 = vunpack.c.h.b16 %v5236
        %v5544 = vunpack.c.l.b16 %v5237
        %v5545 = vunpack.c.h.b16 %v5237
        %v5546 = vunpack.c.l.b16 %v5238
        %v5547 = vunpack.c.h.b16 %v5238
        %v5548 = vunpack.c.l.b16 %v5239
        %v5549 = vunpack.c.h.b16 %v5239
        %v5550 = vunpack.c.l.b16 %v5240
        %v5551 = vunpack.c.h.b16 %v5240
        %v5552 = vunpack.c.l.b16 %v5241
        %v5553 = vunpack.c.h.b16 %v5241
        %v5554 = vunpack.c.l.b16 %v5242
        %v5555 = vunpack.c.h.b16 %v5242
        %v5556 = vunpack.c.l.b16 %v5243
        %v5557 = vunpack.c.h.b16 %v5243
        %v5558 = vunpack.c.l.b16 %v5244
        %v5559 = vunpack.c.h.b16 %v5244
        %v5560 = vunpack.c.l.b16 %v5245
        %v5561 = vunpack.c.h.b16 %v5245
        %v5562 = vunpack.c.l.b16 %v5246
        %v5563 = vunpack.c.h.b16 %v5246
        %v5564 = vunpack.c.l.b16 %v5247
        %v5565 = vunpack.c.h.b16 %v5247
        %v5566 = vunpack.c.l.b16 %v5248
        %v5567 = vunpack.c.h.b16 %v5248
        %v5568 = vunpack.c.l.b16 %v5249
        %v5569 = vunpack.c.h.b16 %v5249
        %v5570 = vunpack.c.l.b16 %v5250
        %v5571 = vunpack.c.h.b16 %v5250
        %v5572 = vunpack.c.l.b16 %v5251
        %v5573 = vunpack.c.h.b16 %v5251
        %v5574 = vunpack.c.l.b16 %v5252
        %v5575 = vunpack.c.h.b16 %v5252
        %v5576 = vunpack.c.l.b16 %v5253
        %v5577 = vunpack.c.h.b16 %v5253
        %v5578 = vunpack.c.l.b16 %v5254
        %v5579 = vunpack.c.h.b16 %v5254
        %v5580 = vunpack.c.l.b16 %v5255
        %v5581 = vunpack.c.h.b16 %v5255
        %v5582 = vunpack.c.l.b16 %v5256
        %v5583 = vunpack.c.h.b16 %v5256
        %v5584 = vunpack.c.l.b16 %v5257
        %v5585 = vunpack.c.h.b16 %v5257
        %v5586 = vunpack.c.l.b16 %v5258
        %v5587 = vunpack.c.h.b16 %v5258
        %v5588 = vunpack.c.l.b16 %v5259
        %v5589 = vunpack.c.h.b16 %v5259
        %v5590 = vunpack.c.l.b16 %v5260
        %v5591 = vunpack.c.h.b16 %v5260
        %v5592 = vunpack.c.l.b16 %v5261
        %v5593 = vunpack.c.h.b16 %v5261
        %v5594 = vunpack.c.l.b16 %v5262
        %v5595 = vunpack.c.h.b16 %v5262
        %v5596 = vunpack.c.l.b16 %v5263
        %v5597 = vunpack.c.h.b16 %v5263
        %v5598 = vunpack.c.l.b16 %v5264
        %v5599 = vunpack.c.h.b16 %v5264
        %v5600 = vunpack.c.l.b16 %v5265
        %v5601 = vunpack.c.h.b16 %v5265
        %v5602 = vunpack.c.l.b16 %v5266
        %v5603 = vunpack.c.h.b16 %v5266
        %v5604 = vunpack.c.l.b16 %v5267
        %v5605 = vunpack.c.h.b16 %v5267
        %v5606 = vunpack.c.l.b16 %v5268
        %v5607 = vunpack.c.h.b16 %v5268
        %v5608 = vunpack.c.l.b16 %v5269
        %v5609 = vunpack.c.h.b16 %v5269
        %v5610 = vunpack.c.l.b16 %v5270
        %v5611 = vunpack.c.h.b16 %v5270
        %v5612 = vunpack.c.l.b16 %v5271
        %v5613 = vunpack.c.h.b16 %v5271
        %v5614 = vunpack.c.l.b16 %v5272
        %v5615 = vunpack.c.h.b16 %v5272
        %v5616 = vunpack.c.l.b16 %v5273
        %v5617 = vunpack.c.h.b16 %v5273
        %v5618 = vunpack.c.l.b16 %v5274
        %v5619 = vunpack.c.h.b16 %v5274
        %v5620 = vunpack.c.l.b16 %v5275
        %v5621 = vunpack.c.h.b16 %v5275
        %v5622 = vunpack.c.l.b16 %v5276
        %v5623 = vunpack.c.h.b16 %v5276
        %v5624 = vunpack.c.l.b16 %v5277
        %v5625 = vunpack.c.h.b16 %v5277
        %v5626 = vunpack.c.l.b16 %v5278
        %v5627 = vunpack.c.h.b16 %v5278
        %v5628 = vunpack.c.l.b16 %v5279
        %v5629 = vunpack.c.h.b16 %v5279
        %v5630 = vunpack.c.l.b16 %v5280
        %v5631 = vunpack.c.h.b16 %v5280
        %v5632 = vunpack.c.l.b16 %v5281
        %v5633 = vunpack.c.h.b16 %v5281
        %v5634 = vunpack.c.l.b16 %v5282
        %v5635 = vunpack.c.h.b16 %v5282
        %v5636 = vunpack.c.l.b16 %v5283
        %v5637 = vunpack.c.h.b16 %v5283
        %v5638 = vunpack.c.l.b16 %v5284
        %v5639 = vunpack.c.h.b16 %v5284
        %v5640 = vunpack.c.l.b16 %v5285
        %v5641 = vunpack.c.h.b16 %v5285
        %v5642 = vunpack.c.l.b16 %v5286
        %v5643 = vunpack.c.h.b16 %v5286
        %v5644 = vunpack.c.l.b16 %v5287
        %v5645 = vunpack.c.h.b16 %v5287
        %v5646 = vunpack.c.l.b16 %v5288
        %v5647 = vunpack.c.h.b16 %v5288
        %v5648 = vunpack.c.l.b16 %v5289
        %v5649 = vunpack.c.h.b16 %v5289
        %v5650 = vunpack.c.l.b16 %v5290
        %v5651 = vunpack.c.h.b16 %v5290
        %v5652 = vunpack.c.l.b16 %v5291
        %v5653 = vunpack.c.h.b16 %v5291
        %v5654 = vunpack.c.l.b16 %v5292
        %v5655 = vunpack.c.h.b16 %v5292
        %v5656 = vunpack.c.l.b16 %v5293
        %v5657 = vunpack.c.h.b16 %v5293
        %v5658 = vunpack.c.l.b16 %v5294
        %v5659 = vunpack.c.h.b16 %v5294
        %v5660 = vunpack.c.l.b16 %v5295
        %v5661 = vunpack.c.h.b16 %v5295
        %v5662 = vunpack.c.l.b16 %v5296
        %v5663 = vunpack.c.h.b16 %v5296
        %v5664 = vunpack.c.l.b16 %v5297
        %v5665 = vunpack.c.h.b16 %v5297
        %v5666 = vunpack.c.l.b16 %v5298
        %v5667 = vunpack.c.h.b16 %v5298
        %v5668 = vunpack.c.l.b16 %v5299
        %v5669 = vunpack.c.h.b16 %v5299
        %v5670 = vunpack.c.l.b16 %v5300
        %v5671 = vunpack.c.h.b16 %v5300
        %v5672 = vunpack.c.l.b16 %v5301
        %v5673 = vunpack.c.h.b16 %v5301
        %v5674 = vunpack.c.l.b16 %v5302
        %v5675 = vunpack.c.h.b16 %v5302
        %v5676 = vunpack.c.l.b16 %v5303
        %v5677 = vunpack.c.h.b16 %v5303
        %v5678 = vunpack.c.l.b16 %v5304
        %v5679 = vunpack.c.h.b16 %v5304
        %v5680 = vunpack.c.l.b16 %v5305
        %v5681 = vunpack.c.h.b16 %v5305
        %v5682 = vunpack.c.l.b16 %v5306
        %v5683 = vunpack.c.h.b16 %v5306
        %v5684 = vunpack.c.l.b16 %v5307
        %v5685 = vunpack.c.h.b16 %v5307
        %v5686 = vunpack.c.l.b16 %v5308
        %v5687 = vunpack.c.h.b16 %v5308
        %v5688 = vunpack.c.l.b16 %v5309
        %v5689 = vunpack.c.h.b16 %v5309
        %v5690 = vunpack.c.l.b16 %v5310
        %v5691 = vunpack.c.h.b16 %v5310
        %v5692 = vunpack.c.l.b16 %v5311
        %v5693 = vunpack.c.h.b16 %v5311
        %v5694 = vunpack.c.l.b16 %v5312
        %v5695 = vunpack.c.h.b16 %v5312
        %v5696 = vunpack.c.l.b16 %v5313
        %v5697 = vunpack.c.h.b16 %v5313
        %v5698 = vunpack.c.l.b16 %v5314
        %v5699 = vunpack.c.h.b16 %v5314
        %v5700 = vunpack.c.l.b16 %v5315
        %v5701 = vunpack.c.h.b16 %v5315
        %v5702 = vunpack.c.l.b16 %v5316
        %v5703 = vunpack.c.h.b16 %v5316
        %v5704 = vunpack.c.l.b16 %v5317
        %v5705 = vunpack.c.h.b16 %v5317
        %v5706 = vunpack.c.l.b16 %v5318
        %v5707 = vunpack.c.h.b16 %v5318
        %v5708 = vunpack.c.l.b16 %v5319
        %v5709 = vunpack.c.h.b16 %v5319
        %v5710 = vunpack.c.l.b16 %v5320
        %v5711 = vunpack.c.h.b16 %v5320
        %v5712 = vunpack.c.l.b16 %v5321
        %v5713 = vunpack.c.h.b16 %v5321
        %v5714 = vunpack.c.l.b16 %v5322
        %v5715 = vunpack.c.h.b16 %v5322
        %v5716 = vunpack.c.l.b16 %v5323
        %v5717 = vunpack.c.h.b16 %v5323
        %v5718 = vunpack.c.l.b16 %v5324
        %v5719 = vunpack.c.h.b16 %v5324
        %v5720 = vunpack.c.l.b16 %v5325
        %v5721 = vunpack.c.h.b16 %v5325
        %v5722 = vpack.c.b16 %v5468, %v5466
        %v5723 = vpack.c.b16 %v5469, %v5467
        %v5724 = vpack.c.b16 %v5472, %v5470
        %v5725 = vpack.c.b16 %v5473, %v5471
        %v5726 = vpack.c.b16 %v5476, %v5474
        %v5727 = vpack.c.b16 %v5477, %v5475
        %v5728 = vpack.c.b16 %v5480, %v5478
        %v5729 = vpack.c.b16 %v5481, %v5479
        %v5730 = vpack.c.b16 %v5484, %v5482
        %v5731 = vpack.c.b16 %v5485, %v5483
        %v5732 = vpack.c.b16 %v5488, %v5486
        %v5733 = vpack.c.b16 %v5489, %v5487
        %v5734 = vpack.c.b16 %v5492, %v5490
        %v5735 = vpack.c.b16 %v5493, %v5491
        %v5736 = vpack.c.b16 %v5496, %v5494
        %v5737 = vpack.c.b16 %v5497, %v5495
        %v5738 = vpack.c.b16 %v5500, %v5498
        %v5739 = vpack.c.b16 %v5501, %v5499
        %v5740 = vpack.c.b16 %v5504, %v5502
        %v5741 = vpack.c.b16 %v5505, %v5503
        %v5742 = vpack.c.b16 %v5508, %v5506
        %v5743 = vpack.c.b16 %v5509, %v5507
        %v5744 = vpack.c.b16 %v5512, %v5510
        %v5745 = vpack.c.b16 %v5513, %v5511
        %v5746 = vpack.c.b16 %v5516, %v5514
        %v5747 = vpack.c.b16 %v5517, %v5515
        %v5748 = vpack.c.b16 %v5520, %v5518
        %v5749 = vpack.c.b16 %v5521, %v5519
        %v5750 = vpack.c.b16 %v5524, %v5522
        %v5751 = vpack.c.b16 %v5525, %v5523
        %v5752 = vpack.c.b16 %v5528, %v5526
        %v5753 = vpack.c.b16 %v5529, %v5527
        %v5754 = vpack.c.b16 %v5532, %v5530
        %v5755 = vpack.c.b16 %v5533, %v5531
        %v5756 = vpack.c.b16 %v5536, %v5534
        %v5757 = vpack.c.b16 %v5537, %v5535
        %v5758 = vpack.c.b16 %v5540, %v5538
        %v5759 = vpack.c.b16 %v5541, %v5539
        %v5760 = vpack.c.b16 %v5544, %v5542
        %v5761 = vpack.c.b16 %v5545, %v5543
        %v5762 = vpack.c.b16 %v5548, %v5546
        %v5763 = vpack.c.b16 %v5549, %v5547
        %v5764 = vpack.c.b16 %v5552, %v5550
        %v5765 = vpack.c.b16 %v5553, %v5551
        %v5766 = vpack.c.b16 %v5556, %v5554
        %v5767 = vpack.c.b16 %v5557, %v5555
        %v5768 = vpack.c.b16 %v5560, %v5558
        %v5769 = vpack.c.b16 %v5561, %v5559
        %v5770 = vpack.c.b16 %v5564, %v5562
        %v5771 = vpack.c.b16 %v5565, %v5563
        %v5772 = vpack.c.b16 %v5568, %v5566
        %v5773 = vpack.c.b16 %v5569, %v5567
        %v5774 = vpack.c.b16 %v5572, %v5570
        %v5775 = vpack.c.b16 %v5573, %v5571
        %v5776 = vpack.c.b16 %v5576, %v5574
        %v5777 = vpack.c.b16 %v5577, %v5575
        %v5778 = vpack.c.b16 %v5580, %v5578
        %v5779 = vpack.c.b16 %v5581, %v5579
        %v5780 = vpack.c.b16 %v5584, %v5582
        %v5781 = vpack.c.b16 %v5585, %v5583
        %v5782 = vpack.c.b16 %v5588, %v5586
        %v5783 = vpack.c.b16 %v5589, %v5587
        %v5784 = vpack.c.b16 %v5592, %v5590
        %v5785 = vpack.c.b16 %v5593, %v5591
        %v5786 = vpack.c.b16 %v5596, %v5594
        %v5787 = vpack.c.b16 %v5597, %v5595
        %v5788 = vpack.c.b16 %v5600, %v5598
        %v5789 = vpack.c.b16 %v5601, %v5599
        %v5790 = vpack.c.b16 %v5604, %v5602
        %v5791 = vpack.c.b16 %v5605, %v5603
        %v5792 = vpack.c.b16 %v5608, %v5606
        %v5793 = vpack.c.b16 %v5609, %v5607
        %v5794 = vpack.c.b16 %v5612, %v5610
        %v5795 = vpack.c.b16 %v5613, %v5611
        %v5796 = vpack.c.b16 %v5616, %v5614
        %v5797 = vpack.c.b16 %v5617, %v5615
        %v5798 = vpack.c.b16 %v5620, %v5618
        %v5799 = vpack.c.b16 %v5621, %v5619
        %v5800 = vpack.c.b16 %v5624, %v5622
        %v5801 = vpack.c.b16 %v5625, %v5623
        %v5802 = vpack.c.b16 %v5628, %v5626
        %v5803 = vpack.c.b16 %v5629, %v5627
        %v5804 = vpack.c.b16 %v5632, %v5630
        %v5805 = vpack.c.b16 %v5633, %v5631
        %v5806 = vpack.c.b16 %v5636, %v5634
        %v5807 = vpack.c.b16 %v5637, %v5635
        %v5808 = vpack.c.b16 %v5640, %v5638
        %v5809 = vpack.c.b16 %v5641, %v5639
        %v5810 = vpack.c.b16 %v5644, %v5642
        %v5811 = vpack.c.b16 %v5645, %v5643
        %v5812 = vpack.c.b16 %v5648, %v5646
        %v5813 = vpack.c.b16 %v5649, %v5647
        %v5814 = vpack.c.b16 %v5652, %v5650
        %v5815 = vpack.c.b16 %v5653, %v5651
        %v5816 = vpack.c.b16 %v5656, %v5654
        %v5817 = vpack.c.b16 %v5657, %v5655
        %v5818 = vpack.c.b16 %v5660, %v5658
        %v5819 = vpack.c.b16 %v5661, %v5659
        %v5820 = vpack.c.b16 %v5664, %v5662
        %v5821 = vpack.c.b16 %v5665, %v5663
        %v5822 = vpack.c.b16 %v5668, %v5666
        %v5823 = vpack.c.b16 %v5669, %v5667
        %v5824 = vpack.c.b16 %v5672, %v5670
        %v5825 = vpack.c.b16 %v5673, %v5671
        %v5826 = vpack.c.b16 %v5676, %v5674
        %v5827 = vpack.c.b16 %v5677, %v5675
        %v5828 = vpack.c.b16 %v5680, %v5678
        %v5829 = vpack.c.b16 %v5681, %v5679
        %v5830 = vpack.c.b16 %v5684, %v5682
        %v5831 = vpack.c.b16 %v5685, %v5683
        %v5832 = vpack.c.b16 %v5688, %v5686
        %v5833 = vpack.c.b16 %v5689, %v5687
        %v5834 = vpack.c.b16 %v5692, %v5690
        %v5835 = vpack.c.b16 %v5693, %v5691
        %v5836 = vpack.c.b16 %v5696, %v5694
        %v5837 = vpack.c.b16 %v5697, %v5695
        %v5838 = vpack.c.b16 %v5700, %v5698
        %v5839 = vpack.c.b16 %v5701, %v5699
        %v5840 = vpack.c.b16 %v5704, %v5702
        %v5841 = vpack.c.b16 %v5705, %v5703
        %v5842 = vpack.c.b16 %v5708, %v5706
        %v5843 = vpack.c.b16 %v5709, %v5707
        %v5844 = vpack.c.b16 %v5712, %v5710
        %v5845 = vpack.c.b16 %v5713, %v5711
        %v5846 = vpack.c.b16 %v5716, %v5714
        %v5847 = vpack.c.b16 %v5717, %v5715
        %v5848 = vpack.c.b16 %v5720, %v5718
        %v5849 = vpack.c.b16 %v5721, %v5719
        %5978 = vmatprep.subr.bf16.mxu0 %v5723
        %5979 = vmatpush1.bf16.msra.mxu0 %v5722
        %5980 = vmatprep.subr.bf16.mxu0 %v5725
        %5981 = vmatpush1.bf16.msra.mxu0 %v5724
        %5982 = vmatprep.subr.bf16.mxu0 %v5727
        %5983 = vmatpush1.bf16.msra.mxu0 %v5726
        %5984 = vmatprep.subr.bf16.mxu0 %v5729
        %5985 = vmatpush1.bf16.msra.mxu0 %v5728
        %5986 = vmatprep.subr.bf16.mxu0 %v5731
        %5987 = vmatpush1.bf16.msra.mxu0 %v5730
        %5988 = vmatprep.subr.bf16.mxu0 %v5733
        %5989 = vmatpush1.bf16.msra.mxu0 %v5732
        %5990 = vmatprep.subr.bf16.mxu0 %v5735
        %5991 = vmatpush1.bf16.msra.mxu0 %v5734
        %5992 = vmatprep.subr.bf16.mxu0 %v5737
        %5993 = vmatpush1.bf16.msra.mxu0 %v5736
        %5994 = vmatprep.subr.bf16.mxu0 %v5739
        %5995 = vmatpush1.bf16.msra.mxu0 %v5738
        %5996 = vmatprep.subr.bf16.mxu0 %v5741
        %5997 = vmatpush1.bf16.msra.mxu0 %v5740
        %5998 = vmatprep.subr.bf16.mxu0 %v5743
        %5999 = vmatpush1.bf16.msra.mxu0 %v5742
        %6000 = vmatprep.subr.bf16.mxu0 %v5745
        %6001 = vmatpush1.bf16.msra.mxu0 %v5744
        %6002 = vmatprep.subr.bf16.mxu0 %v5747
        %6003 = vmatpush1.bf16.msra.mxu0 %v5746
        %6004 = vmatprep.subr.bf16.mxu0 %v5749
        %6005 = vmatpush1.bf16.msra.mxu0 %v5748
        %6006 = vmatprep.subr.bf16.mxu0 %v5751
        %6007 = vmatpush1.bf16.msra.mxu0 %v5750
        %6008 = vmatprep.subr.bf16.mxu0 %v5753
        %6009 = vmatpush1.bf16.msra.mxu0 %v5752
        %6010 = vmatprep.mubr.bf16.mxu0 %v5167
        %6011 = vmatmul.mubr.bf16.gmra.mrb[0].mxu0 %v5166
        %v6012 = vpop.f32.mrb[0].mxu0
        %v6013 = vadd.f32 %v5331, %v6012
        %v6014 = vpop.f32.mrb[0].mxu0
        %v6015 = vadd.f32 %v5335, %v6014
        %v6016 = vpop.f32.mrb[0].mxu0
        %v6017 = vadd.f32 %v5331, %v6016
        %v6018 = vpop.f32.mrb[0].mxu0
        %v6019 = vadd.f32 %v5335, %v6018
        %6020 = vmatprep.mubr.bf16.mxu0 %v5175
        %6021 = vmatmul.mubr.bf16.gmra.mrb[0].mxu0 %v5174
        %v6022 = vpop.f32.mrb[0].mxu0
        %v6023 = vadd.f32 %v5331, %v6022
        %v6024 = vpop.f32.mrb[0].mxu0
        %v6025 = vadd.f32 %v5335, %v6024
        %v6026 = vpop.f32.mrb[0].mxu0
        %v6027 = vadd.f32 %v5331, %v6026
        %v6028 = vpop.f32.mrb[0].mxu0
        %v6029 = vadd.f32 %v5335, %v6028
        %6030 = vmatprep.mubr.bf16.mxu0 %v5183
        %6031 = vmatmul.mubr.bf16.gmra.mrb[0].mxu0 %v5182
        %v6032 = vpop.f32.mrb[0].mxu0
        %v6033 = vadd.f32 %v5331, %v6032
        %v6034 = vpop.f32.mrb[0].mxu0
        %v6035 = vadd.f32 %v5335, %v6034
        %v6036 = vpop.f32.mrb[0].mxu0
        %v6037 = vadd.f32 %v5331, %v6036
        %v6038 = vpop.f32.mrb[0].mxu0
        %v6039 = vadd.f32 %v5335, %v6038
        %6040 = vmatprep.mubr.bf16.mxu0 %v5191
        %6041 = vmatmul.mubr.bf16.gmra.mrb[0].mxu0 %v5190
        %v6042 = vpop.f32.mrb[0].mxu0
        %v6043 = vadd.f32 %v5331, %v6042
        %v6044 = vpop.f32.mrb[0].mxu0
        %v6045 = vadd.f32 %v5335, %v6044
        %v6046 = vpop.f32.mrb[0].mxu0
        %v6047 = vadd.f32 %v5331, %v6046
        %v6048 = vpop.f32.mrb[0].mxu0
        %v6049 = vadd.f32 %v5335, %v6048
        %6050 = vdwg.mxu0
        %6051 = vmatprep.subr.bf16.mxu0 %v5755
        %6052 = vmatpush1.bf16.msra.mxu0 %v5754
        %6053 = vmatprep.subr.bf16.mxu0 %v5757
        %6054 = vmatpush1.bf16.msra.mxu0 %v5756
        %6055 = vmatprep.subr.bf16.mxu0 %v5759
        %6056 = vmatpush1.bf16.msra.mxu0 %v5758
        %6057 = vmatprep.subr.bf16.mxu0 %v5761
        %6058 = vmatpush1.bf16.msra.mxu0 %v5760
        %6059 = vmatprep.subr.bf16.mxu0 %v5763
        %6060 = vmatpush1.bf16.msra.mxu0 %v5762
        %6061 = vmatprep.subr.bf16.mxu0 %v5765
        %6062 = vmatpush1.bf16.msra.mxu0 %v5764
        %6063 = vmatprep.subr.bf16.mxu0 %v5767
        %6064 = vmatpush1.bf16.msra.mxu0 %v5766
        %6065 = vmatprep.subr.bf16.mxu0 %v5769
        %6066 = vmatpush1.bf16.msra.mxu0 %v5768
        %6067 = vmatprep.subr.bf16.mxu0 %v5771
        %6068 = vmatpush1.bf16.msra.mxu0 %v5770
        %6069 = vmatprep.subr.bf16.mxu0 %v5773
        %6070 = vmatpush1.bf16.msra.mxu0 %v5772
        %6071 = vmatprep.subr.bf16.mxu0 %v5775
        %6072 = vmatpush1.bf16.msra.mxu0 %v5774
        %6073 = vmatprep.subr.bf16.mxu0 %v5777
        %6074 = vmatpush1.bf16.msra.mxu0 %v5776
        %6075 = vmatprep.subr.bf16.mxu0 %v5779
        %6076 = vmatpush1.bf16.msra.mxu0 %v5778
        %6077 = vmatprep.subr.bf16.mxu0 %v5781
        %6078 = vmatpush1.bf16.msra.mxu0 %v5780
        %6079 = vmatprep.subr.bf16.mxu0 %v5783
        %6080 = vmatpush1.bf16.msra.mxu0 %v5782
        %6081 = vmatprep.subr.bf16.mxu0 %v5785
        %6082 = vmatpush1.bf16.msra.mxu0 %v5784
        %6083 = vmatprep.mubr.bf16.mxu0 %v5169
        %6084 = vmatmul.mubr.bf16.gmra.mrb[0].mxu0 %v5168
        %v6085 = vpop.f32.mrb[0].mxu0
        %v6086 = vadd.f32 %v6013, %v6085
        %v6087 = vpop.f32.mrb[0].mxu0
        %v6088 = vadd.f32 %v6015, %v6087
        %v6089 = vpop.f32.mrb[0].mxu0
        %v6090 = vadd.f32 %v6017, %v6089
        %v6091 = vpop.f32.mrb[0].mxu0
        %v6092 = vadd.f32 %v6019, %v6091
        %6093 = vmatprep.mubr.bf16.mxu0 %v5177
        %6094 = vmatmul.mubr.bf16.gmra.mrb[0].mxu0 %v5176
        %v6095 = vpop.f32.mrb[0].mxu0
        %v6096 = vadd.f32 %v6023, %v6095
        %v6097 = vpop.f32.mrb[0].mxu0
        %v6098 = vadd.f32 %v6025, %v6097
        %v6099 = vpop.f32.mrb[0].mxu0
        %v6100 = vadd.f32 %v6027, %v6099
        %v6101 = vpop.f32.mrb[0].mxu0
        %v6102 = vadd.f32 %v6029, %v6101
        %6103 = vmatprep.mubr.bf16.mxu0 %v5185
        %6104 = vmatmul.mubr.bf16.gmra.mrb[0].mxu0 %v5184
        %v6105 = vpop.f32.mrb[0].mxu0
        %v6106 = vadd.f32 %v6033, %v6105
        %v6107 = vpop.f32.mrb[0].mxu0
        %v6108 = vadd.f32 %v6035, %v6107
        %v6109 = vpop.f32.mrb[0].mxu0
        %v6110 = vadd.f32 %v6037, %v6109
        %v6111 = vpop.f32.mrb[0].mxu0
        %v6112 = vadd.f32 %v6039, %v6111
        %6113 = vmatprep.mubr.bf16.mxu0 %v5193
        %6114 = vmatmul.mubr.bf16.gmra.mrb[0].mxu0 %v5192
        %v6115 = vpop.f32.mrb[0].mxu0
        %v6116 = vadd.f32 %v6043, %v6115
        %v6117 = vpop.f32.mrb[0].mxu0
        %v6118 = vadd.f32 %v6045, %v6117
        %v6119 = vpop.f32.mrb[0].mxu0
        %v6120 = vadd.f32 %v6047, %v6119
        %v6121 = vpop.f32.mrb[0].mxu0
        %v6122 = vadd.f32 %v6049, %v6121
        %6123 = vdwg.mxu0
        %6124 = vmatprep.subr.bf16.mxu0 %v5787
        %6125 = vmatpush1.bf16.msra.mxu0 %v5786
        %6126 = vmatprep.subr.bf16.mxu0 %v5789
        %6127 = vmatpush1.bf16.msra.mxu0 %v5788
        %6128 = vmatprep.subr.bf16.mxu0 %v5791
        %6129 = vmatpush1.bf16.msra.mxu0 %v5790
        %6130 = vmatprep.subr.bf16.mxu0 %v5793
        %6131 = vmatpush1.bf16.msra.mxu0 %v5792
        %6132 = vmatprep.subr.bf16.mxu0 %v5795
        %6133 = vmatpush1.bf16.msra.mxu0 %v5794
        %6134 = vmatprep.subr.bf16.mxu0 %v5797
        %6135 = vmatpush1.bf16.msra.mxu0 %v5796
        %6136 = vmatprep.subr.bf16.mxu0 %v5799
        %6137 = vmatpush1.bf16.msra.mxu0 %v5798
        %6138 = vmatprep.subr.bf16.mxu0 %v5801
        %6139 = vmatpush1.bf16.msra.mxu0 %v5800
        %6140 = vmatprep.subr.bf16.mxu0 %v5803
        %6141 = vmatpush1.bf16.msra.mxu0 %v5802
        %6142 = vmatprep.subr.bf16.mxu0 %v5805
        %6143 = vmatpush1.bf16.msra.mxu0 %v5804
        %6144 = vmatprep.subr.bf16.mxu0 %v5807
        %6145 = vmatpush1.bf16.msra.mxu0 %v5806
        %6146 = vmatprep.subr.bf16.mxu0 %v5809
        %6147 = vmatpush1.bf16.msra.mxu0 %v5808
        %6148 = vmatprep.subr.bf16.mxu0 %v5811
        %6149 = vmatpush1.bf16.msra.mxu0 %v5810
        %6150 = vmatprep.subr.bf16.mxu0 %v5813
        %6151 = vmatpush1.bf16.msra.mxu0 %v5812
        %6152 = vmatprep.subr.bf16.mxu0 %v5815
        %6153 = vmatpush1.bf16.msra.mxu0 %v5814
        %6154 = vmatprep.subr.bf16.mxu0 %v5817
        %6155 = vmatpush1.bf16.msra.mxu0 %v5816
        %6156 = vmatprep.mubr.bf16.mxu0 %v5171
        %6157 = vmatmul.mubr.bf16.gmra.mrb[0].mxu0 %v5170
        %v6158 = vpop.f32.mrb[0].mxu0
        %v6159 = vadd.f32 %v6086, %v6158
        %v6160 = vpop.f32.mrb[0].mxu0
        %v6161 = vadd.f32 %v6088, %v6160
        %v6162 = vpop.f32.mrb[0].mxu0
        %v6163 = vadd.f32 %v6090, %v6162
        %v6164 = vpop.f32.mrb[0].mxu0
        %v6165 = vadd.f32 %v6092, %v6164
        %6166 = vmatprep.mubr.bf16.mxu0 %v5179
        %6167 = vmatmul.mubr.bf16.gmra.mrb[0].mxu0 %v5178
        %v6168 = vpop.f32.mrb[0].mxu0
        %v6169 = vadd.f32 %v6096, %v6168
        %v6170 = vpop.f32.mrb[0].mxu0
        %v6171 = vadd.f32 %v6098, %v6170
        %v6172 = vpop.f32.mrb[0].mxu0
        %v6173 = vadd.f32 %v6100, %v6172
        %v6174 = vpop.f32.mrb[0].mxu0
        %v6175 = vadd.f32 %v6102, %v6174
        %6176 = vmatprep.mubr.bf16.mxu0 %v5187
        %6177 = vmatmul.mubr.bf16.gmra.mrb[0].mxu0 %v5186
        %v6178 = vpop.f32.mrb[0].mxu0
        %v6179 = vadd.f32 %v6106, %v6178
        %v6180 = vpop.f32.mrb[0].mxu0
        %v6181 = vadd.f32 %v6108, %v6180
        %v6182 = vpop.f32.mrb[0].mxu0
        %v6183 = vadd.f32 %v6110, %v6182
        %v6184 = vpop.f32.mrb[0].mxu0
        %v6185 = vadd.f32 %v6112, %v6184
        %6186 = vmatprep.mubr.bf16.mxu0 %v5195
        %6187 = vmatmul.mubr.bf16.gmra.mrb[0].mxu0 %v5194
        %v6188 = vpop.f32.mrb[0].mxu0
        %v6189 = vadd.f32 %v6116, %v6188
        %v6190 = vpop.f32.mrb[0].mxu0
        %v6191 = vadd.f32 %v6118, %v6190
        %v6192 = vpop.f32.mrb[0].mxu0
        %v6193 = vadd.f32 %v6120, %v6192
        %v6194 = vpop.f32.mrb[0].mxu0
        %v6195 = vadd.f32 %v6122, %v6194
        %6196 = vdwg.mxu0
        %6197 = vmatprep.subr.bf16.mxu0 %v5819
        %6198 = vmatpush1.bf16.msra.mxu0 %v5818
        %6199 = vmatprep.subr.bf16.mxu0 %v5821
        %6200 = vmatpush1.bf16.msra.mxu0 %v5820
        %6201 = vmatprep.subr.bf16.mxu0 %v5823
        %6202 = vmatpush1.bf16.msra.mxu0 %v5822
        %6203 = vmatprep.subr.bf16.mxu0 %v5825
        %6204 = vmatpush1.bf16.msra.mxu0 %v5824
        %6205 = vmatprep.subr.bf16.mxu0 %v5827
        %6206 = vmatpush1.bf16.msra.mxu0 %v5826
        %6207 = vmatprep.subr.bf16.mxu0 %v5829
        %6208 = vmatpush1.bf16.msra.mxu0 %v5828
        %6209 = vmatprep.subr.bf16.mxu0 %v5831
        %6210 = vmatpush1.bf16.msra.mxu0 %v5830
        %6211 = vmatprep.subr.bf16.mxu0 %v5833
        %6212 = vmatpush1.bf16.msra.mxu0 %v5832
        %6213 = vmatprep.subr.bf16.mxu0 %v5835
        %6214 = vmatpush1.bf16.msra.mxu0 %v5834
        %6215 = vmatprep.subr.bf16.mxu0 %v5837
        %6216 = vmatpush1.bf16.msra.mxu0 %v5836
        %6217 = vmatprep.subr.bf16.mxu0 %v5839
        %6218 = vmatpush1.bf16.msra.mxu0 %v5838
        %6219 = vmatprep.subr.bf16.mxu0 %v5841
        %6220 = vmatpush1.bf16.msra.mxu0 %v5840
        %6221 = vmatprep.subr.bf16.mxu0 %v5843
        %6222 = vmatpush1.bf16.msra.mxu0 %v5842
        %6223 = vmatprep.subr.bf16.mxu0 %v5845
        %6224 = vmatpush1.bf16.msra.mxu0 %v5844
        %6225 = vmatprep.subr.bf16.mxu0 %v5847
        %6226 = vmatpush1.bf16.msra.mxu0 %v5846
        %6227 = vmatprep.subr.bf16.mxu0 %v5849
        %6228 = vmatpush1.bf16.msra.mxu0 %v5848
        %6229 = vmatprep.mubr.bf16.mxu0 %v5173
        %6230 = vmatmul.mubr.bf16.gmra.mrb[0].mxu0 %v5172
        %v6231 = vpop.f32.mrb[0].mxu0
        %v6232 = vadd.f32 %v6159, %v6231
        %v6233 = vpop.f32.mrb[0].mxu0
        %v6234 = vadd.f32 %v6161, %v6233
        %v6235 = vpop.f32.mrb[0].mxu0
        %v6236 = vadd.f32 %v6163, %v6235
        %v6237 = vpop.f32.mrb[0].mxu0
        %v6238 = vadd.f32 %v6165, %v6237
        %6239 = vmatprep.mubr.bf16.mxu0 %v5181
        %6240 = vmatmul.mubr.bf16.gmra.mrb[0].mxu0 %v5180
        %v6241 = vpop.f32.mrb[0].mxu0
        %v6242 = vadd.f32 %v6169, %v6241
        %v6243 = vpop.f32.mrb[0].mxu0
        %v6244 = vadd.f32 %v6171, %v6243
        %v6245 = vpop.f32.mrb[0].mxu0
        %v6246 = vadd.f32 %v6173, %v6245
        %v6247 = vpop.f32.mrb[0].mxu0
        %v6248 = vadd.f32 %v6175, %v6247
        %6249 = vmatprep.mubr.bf16.mxu0 %v5189
        %6250 = vmatmul.mubr.bf16.gmra.mrb[0].mxu0 %v5188
        %v6251 = vpop.f32.mrb[0].mxu0
        %v6252 = vadd.f32 %v6179, %v6251
        %v6253 = vpop.f32.mrb[0].mxu0
        %v6254 = vadd.f32 %v6181, %v6253
        %v6255 = vpop.f32.mrb[0].mxu0
        %v6256 = vadd.f32 %v6183, %v6255
        %v6257 = vpop.f32.mrb[0].mxu0
        %v6258 = vadd.f32 %v6185, %v6257
        %6259 = vmatprep.mubr.bf16.mxu0 %v5197
        %6260 = vmatmul.mubr.bf16.gmra.mrb[0].mxu0 %v5196
        %v6261 = vpop.f32.mrb[0].mxu0
        %v6262 = vadd.f32 %v6189, %v6261
        %v6263 = vpop.f32.mrb[0].mxu0
        %v6264 = vadd.f32 %v6191, %v6263
        %v6265 = vpop.f32.mrb[0].mxu0
        %v6266 = vadd.f32 %v6193, %v6265
        %v6267 = vpop.f32.mrb[0].mxu0
        %v6268 = vadd.f32 %v6195, %v6267
        %6269 = vdwg.mxu0
        %v6270 = vld [vmem:[%s1069] sm:$0x3]
        %v6272 = vlaneseq
        %v6273 = vshrl.u32 %v6272, 7
        %v6274 = vsub.s32 0, %v6273
        %v6275 = vrot.slane %v6270, %v6274
        %v6276 = vlaneseq
        %v6277 = vshrl.u32 %v6276, 7
        %v6278 = vsub.s32 1, %v6277
        %v6279 = vrot.slane %v6270, %v6278
        %v6282 = vmul.f32 %v6275, %v6232
        %v6283 = vmul.f32 %v6279, %v6234
        %v6284 = vmul.f32 %v6275, %v6236
        %v6285 = vmul.f32 %v6279, %v6238
        %v6286 = vmul.f32 %v6275, %v6242
        %v6287 = vmul.f32 %v6279, %v6244
        %v6288 = vmul.f32 %v6275, %v6246
        %v6289 = vmul.f32 %v6279, %v6248
        %v6290 = vmul.f32 %v6275, %v6252
        %v6291 = vmul.f32 %v6279, %v6254
        %v6292 = vmul.f32 %v6275, %v6256
        %v6293 = vmul.f32 %v6279, %v6258
        %v6294 = vmul.f32 %v6275, %v6262
        %v6295 = vmul.f32 %v6279, %v6264
        %v6296 = vmul.f32 %v6275, %v6266
        %v6297 = vmul.f32 %v6279, %v6268
        %v6298 = vadd.f32 %v3536, %v6282
        %v6299 = vadd.f32 %v3537, %v6283
        %v6300 = vadd.f32 %v3538, %v6284
        %v6301 = vadd.f32 %v3539, %v6285
        %v6302 = vadd.f32 %v3540, %v6286
        %v6303 = vadd.f32 %v3541, %v6287
        %v6304 = vadd.f32 %v3542, %v6288
        %v6305 = vadd.f32 %v3543, %v6289
        %v6306 = vadd.f32 %v3544, %v6290
        %v6307 = vadd.f32 %v3545, %v6291
        %v6308 = vadd.f32 %v3546, %v6292
        %v6309 = vadd.f32 %v3547, %v6293
        %v6310 = vadd.f32 %v3548, %v6294
        %v6311 = vadd.f32 %v3549, %v6295
        %v6312 = vadd.f32 %v3550, %v6296
        %v6313 = vadd.f32 %v3551, %v6297
        %6314 = vst [vmem:[#allocation2] sm:$0xff] %v6298
        %6315 = vst [vmem:[#allocation2 + $0x8] sm:$0xff] %v6299
        %6316 = vst [vmem:[#allocation2 + $0x10] sm:$0xff] %v6300
        %6317 = vst [vmem:[#allocation2 + $0x18] sm:$0xff] %v6301
        %6318 = vst [vmem:[#allocation2 + $0x20] sm:$0xff] %v6302
        %6319 = vst [vmem:[#allocation2 + $0x28] sm:$0xff] %v6303
        %6320 = vst [vmem:[#allocation2 + $0x30] sm:$0xff] %v6304
        %6321 = vst [vmem:[#allocation2 + $0x38] sm:$0xff] %v6305
        %6322 = vst [vmem:[#allocation2 + $0x40] sm:$0xff] %v6306
        %6323 = vst [vmem:[#allocation2 + $0x48] sm:$0xff] %v6307
        %6324 = vst [vmem:[#allocation2 + $0x50] sm:$0xff] %v6308
        %6325 = vst [vmem:[#allocation2 + $0x58] sm:$0xff] %v6309
        %6326 = vst [vmem:[#allocation2 + $0x60] sm:$0xff] %v6310
        %6327 = vst [vmem:[#allocation2 + $0x68] sm:$0xff] %v6311
        %6328 = vst [vmem:[#allocation2 + $0x70] sm:$0xff] %v6312
        %6329 = vst [vmem:[#allocation2 + $0x78] sm:$0xff] %v6313
        %p6330 = scmp.eq.s32.totalorder %s36, 5
        // Predicated region
        $region189: #{forward.1} parent=107 // pred_check
          %p6331 = pneg %p6330
        $region190: #{forward.1} parent=107 // pred_check_branch
          %6333 = sbr.rel (%p6331) target = $region192
        $region191: #{forward.1} parent=107 // pred_region
          %v6334 = vld [vmem:[#allocation21] sm:$0x3]
          %v6335 = vld [vmem:[#allocation22] sm:$0x3]
          %v6336 = vadd.f32 %v6298, %v6299
          %6337 = vadd.xlane.f32.xlu0 %v6336
          %v6338 = vpop.xlane.xlu0 %6337
          %v6339 = vadd.f32 %v6300, %v6301
          %6340 = vadd.xlane.f32.xlu0 %v6339
          %v6341 = vpop.xlane.xlu0 %6340
          %v6342 = vadd.f32 %v6302, %v6303
          %6343 = vadd.xlane.f32.xlu0 %v6342
          %v6344 = vpop.xlane.xlu0 %6343
          %v6345 = vadd.f32 %v6304, %v6305
          %6346 = vadd.xlane.f32.xlu0 %v6345
          %v6347 = vpop.xlane.xlu0 %6346
          %v6348 = vadd.f32 %v6306, %v6307
          %6349 = vadd.xlane.f32.xlu0 %v6348
          %v6350 = vpop.xlane.xlu0 %6349
          %v6351 = vadd.f32 %v6308, %v6309
          %6352 = vadd.xlane.f32.xlu0 %v6351
          %v6353 = vpop.xlane.xlu0 %6352
          %v6354 = vadd.f32 %v6310, %v6311
          %6355 = vadd.xlane.f32.xlu0 %v6354
          %v6356 = vpop.xlane.xlu0 %6355
          %v6357 = vadd.f32 %v6312, %v6313
          %6358 = vadd.xlane.f32.xlu0 %v6357
          %v6359 = vpop.xlane.xlu0 %6358
          %v6360 = vmul.f32 %v6338, %v1614
          %v6361 = vmul.f32 %v6341, %v1614
          %v6362 = vmul.f32 %v6344, %v1614
          %v6363 = vmul.f32 %v6347, %v1614
          %v6364 = vmul.f32 %v6350, %v1614
          %v6365 = vmul.f32 %v6353, %v1614
          %v6366 = vmul.f32 %v6356, %v1614
          %v6367 = vmul.f32 %v6359, %v1614
          %v6368 = vsub.f32 %v6298, %v6360
          %v6369 = vsub.f32 %v6299, %v6360
          %v6370 = vsub.f32 %v6300, %v6361
          %v6371 = vsub.f32 %v6301, %v6361
          %v6372 = vsub.f32 %v6302, %v6362
          %v6373 = vsub.f32 %v6303, %v6362
          %v6374 = vsub.f32 %v6304, %v6363
          %v6375 = vsub.f32 %v6305, %v6363
          %v6376 = vsub.f32 %v6306, %v6364
          %v6377 = vsub.f32 %v6307, %v6364
          %v6378 = vsub.f32 %v6308, %v6365
          %v6379 = vsub.f32 %v6309, %v6365
          %v6380 = vsub.f32 %v6310, %v6366
          %v6381 = vsub.f32 %v6311, %v6366
          %v6382 = vsub.f32 %v6312, %v6367
          %v6383 = vsub.f32 %v6313, %v6367
          %v6384 = vmul.f32 %v6368, %v6368
          %v6385 = vmul.f32 %v6369, %v6369
          %v6386 = vmul.f32 %v6370, %v6370
          %v6387 = vmul.f32 %v6371, %v6371
          %v6388 = vmul.f32 %v6372, %v6372
          %v6389 = vmul.f32 %v6373, %v6373
          %v6390 = vmul.f32 %v6374, %v6374
          %v6391 = vmul.f32 %v6375, %v6375
          %v6392 = vmul.f32 %v6376, %v6376
          %v6393 = vmul.f32 %v6377, %v6377
          %v6394 = vmul.f32 %v6378, %v6378
          %v6395 = vmul.f32 %v6379, %v6379
          %v6396 = vmul.f32 %v6380, %v6380
          %v6397 = vmul.f32 %v6381, %v6381
          %v6398 = vmul.f32 %v6382, %v6382
          %v6399 = vmul.f32 %v6383, %v6383
          %v6400 = vadd.f32 %v6384, %v6385
          %6401 = vadd.xlane.f32.xlu0 %v6400
          %v6402 = vpop.xlane.xlu0 %6401
          %v6403 = vadd.f32 %v6386, %v6387
          %6404 = vadd.xlane.f32.xlu0 %v6403
          %v6405 = vpop.xlane.xlu0 %6404
          %v6406 = vadd.f32 %v6388, %v6389
          %6407 = vadd.xlane.f32.xlu0 %v6406
          %v6408 = vpop.xlane.xlu0 %6407
          %v6409 = vadd.f32 %v6390, %v6391
          %6410 = vadd.xlane.f32.xlu0 %v6409
          %v6411 = vpop.xlane.xlu0 %6410
          %v6412 = vadd.f32 %v6392, %v6393
          %6413 = vadd.xlane.f32.xlu0 %v6412
          %v6414 = vpop.xlane.xlu0 %6413
          %v6415 = vadd.f32 %v6394, %v6395
          %6416 = vadd.xlane.f32.xlu0 %v6415
          %v6417 = vpop.xlane.xlu0 %6416
          %v6418 = vadd.f32 %v6396, %v6397
          %6419 = vadd.xlane.f32.xlu0 %v6418
          %v6420 = vpop.xlane.xlu0 %6419
          %v6421 = vadd.f32 %v6398, %v6399
          %6422 = vadd.xlane.f32.xlu0 %v6421
          %v6423 = vpop.xlane.xlu0 %6422
          %v6424 = vmul.f32 %v6402, %v1614
          %v6425 = vmul.f32 %v6405, %v1614
          %v6426 = vmul.f32 %v6408, %v1614
          %v6427 = vmul.f32 %v6411, %v1614
          %v6428 = vmul.f32 %v6414, %v1614
          %v6429 = vmul.f32 %v6417, %v1614
          %v6430 = vmul.f32 %v6420, %v1614
          %v6431 = vmul.f32 %v6423, %v1614
          %v6432 = vadd.f32 %v6424, 1e-06
          %v6433 = vadd.f32 %v6425, 1e-06
          %v6434 = vadd.f32 %v6426, 1e-06
          %v6435 = vadd.f32 %v6427, 1e-06
          %v6436 = vadd.f32 %v6428, 1e-06
          %v6437 = vadd.f32 %v6429, 1e-06
          %v6438 = vadd.f32 %v6430, 1e-06
          %v6439 = vadd.f32 %v6431, 1e-06
          %v6440 = vrsqrt.pop %v6432
          %v6441 = vrsqrt.pop %v6433
          %v6442 = vrsqrt.pop %v6434
          %v6443 = vrsqrt.pop %v6435
          %v6444 = vrsqrt.pop %v6436
          %v6445 = vrsqrt.pop %v6437
          %v6446 = vrsqrt.pop %v6438
          %v6447 = vrsqrt.pop %v6439
          %v6448 = vmul.f32 %v6368, %v6440
          %v6449 = vmul.f32 %v6369, %v6440
          %v6450 = vmul.f32 %v6370, %v6441
          %v6451 = vmul.f32 %v6371, %v6441
          %v6452 = vmul.f32 %v6372, %v6442
          %v6453 = vmul.f32 %v6373, %v6442
          %v6454 = vmul.f32 %v6374, %v6443
          %v6455 = vmul.f32 %v6375, %v6443
          %v6456 = vmul.f32 %v6376, %v6444
          %v6457 = vmul.f32 %v6377, %v6444
          %v6458 = vmul.f32 %v6378, %v6445
          %v6459 = vmul.f32 %v6379, %v6445
          %v6460 = vmul.f32 %v6380, %v6446
          %v6461 = vmul.f32 %v6381, %v6446
          %v6462 = vmul.f32 %v6382, %v6447
          %v6463 = vmul.f32 %v6383, %v6447
          %v6465 = vlaneseq
          %v6466 = vshrl.u32 %v6465, 7
          %v6467 = vsub.s32 0, %v6466
          %v6468 = vrot.slane %v6334, %v6467
          %v6469 = vlaneseq
          %v6470 = vshrl.u32 %v6469, 7
          %v6471 = vsub.s32 1, %v6470
          %v6472 = vrot.slane %v6334, %v6471
          %v6475 = vmul.f32 %v6448, %v6468
          %v6476 = vmul.f32 %v6449, %v6472
          %v6477 = vmul.f32 %v6450, %v6468
          %v6478 = vmul.f32 %v6451, %v6472
          %v6479 = vmul.f32 %v6452, %v6468
          %v6480 = vmul.f32 %v6453, %v6472
          %v6481 = vmul.f32 %v6454, %v6468
          %v6482 = vmul.f32 %v6455, %v6472
          %v6483 = vmul.f32 %v6456, %v6468
          %v6484 = vmul.f32 %v6457, %v6472
          %v6485 = vmul.f32 %v6458, %v6468
          %v6486 = vmul.f32 %v6459, %v6472
          %v6487 = vmul.f32 %v6460, %v6468
          %v6488 = vmul.f32 %v6461, %v6472
          %v6489 = vmul.f32 %v6462, %v6468
          %v6490 = vmul.f32 %v6463, %v6472
          %v6492 = vlaneseq
          %v6493 = vshrl.u32 %v6492, 7
          %v6494 = vsub.s32 0, %v6493
          %v6495 = vrot.slane %v6335, %v6494
          %v6496 = vlaneseq
          %v6497 = vshrl.u32 %v6496, 7
          %v6498 = vsub.s32 1, %v6497
          %v6499 = vrot.slane %v6335, %v6498
          %v6502 = vadd.f32 %v6475, %v6495
          %v6503 = vadd.f32 %v6476, %v6499
          %v6504 = vadd.f32 %v6477, %v6495
          %v6505 = vadd.f32 %v6478, %v6499
          %v6506 = vadd.f32 %v6479, %v6495
          %v6507 = vadd.f32 %v6480, %v6499
          %v6508 = vadd.f32 %v6481, %v6495
          %v6509 = vadd.f32 %v6482, %v6499
          %v6510 = vadd.f32 %v6483, %v6495
          %v6511 = vadd.f32 %v6484, %v6499
          %v6512 = vadd.f32 %v6485, %v6495
          %v6513 = vadd.f32 %v6486, %v6499
          %v6514 = vadd.f32 %v6487, %v6495
          %v6515 = vadd.f32 %v6488, %v6499
          %v6516 = vadd.f32 %v6489, %v6495
          %v6517 = vadd.f32 %v6490, %v6499
          %6518 = vst [vmem:[%s22] sm:$0xff] %v6502
          %6519 = vst [vmem:[%s22 + $0x8] sm:$0xff] %v6503
          %6520 = vst [vmem:[%s22 + $0x10] sm:$0xff] %v6504
          %6521 = vst [vmem:[%s22 + $0x18] sm:$0xff] %v6505
          %6522 = vst [vmem:[%s22 + $0x20] sm:$0xff] %v6506
          %6523 = vst [vmem:[%s22 + $0x28] sm:$0xff] %v6507
          %6524 = vst [vmem:[%s22 + $0x30] sm:$0xff] %v6508
          %6525 = vst [vmem:[%s22 + $0x38] sm:$0xff] %v6509
          %6526 = vst [vmem:[%s22 + $0x40] sm:$0xff] %v6510
          %6527 = vst [vmem:[%s22 + $0x48] sm:$0xff] %v6511
          %6528 = vst [vmem:[%s22 + $0x50] sm:$0xff] %v6512
          %6529 = vst [vmem:[%s22 + $0x58] sm:$0xff] %v6513
          %6530 = vst [vmem:[%s22 + $0x60] sm:$0xff] %v6514
          %6531 = vst [vmem:[%s22 + $0x68] sm:$0xff] %v6515
          %6532 = vst [vmem:[%s22 + $0x70] sm:$0xff] %v6516
          %6533 = vst [vmem:[%s22 + $0x78] sm:$0xff] %v6517
        $region192: #{forward.1} parent=107 // pred_fallthru
          _
        // Predicated region
        $region193: #{forward.1} parent=107 // pred_check
          %p6534 = pneg %p581
        $region194: #{forward.1} parent=107 // pred_check_branch
          %6536 = sbr.rel (%p6534) target = $region196
        $region195: #{forward.1} parent=107 // pred_region
          _
        $region196: #{forward.1} parent=107 // pred_fallthru
          _
        // Predicated region
        $region197: #{forward.1} parent=107 // pred_check
          %p6537 = pneg %p581
        $region198: #{forward.1} parent=107 // pred_check_branch
          %6539 = sbr.rel (%p6537) target = $region200
        $region199: #{forward.1} parent=107 // pred_region
          _
        $region200: #{forward.1} parent=107 // pred_fallthru
          _
      $region108: #{forward.1} parent=5 // pred_fallthru
        _
      %p6540 = scmp.le.s32.totalorder 2, %s31
      // Predicated region
      $region201: #{forward.1} parent=5 // pred_check
        %p6541 = pneg %p6540
      $region202: #{forward.1} parent=5 // pred_check_branch
        %6543 = sbr.rel (%p6541) target = $region204
      $region203: #{forward.1} parent=5 // pred_region
        %s6544 = ssub.s32 %s31, 2
      $region204: #{forward.1} parent=5 // pred_fallthru
        _
    $region6: #{forward.1} parent=1 // loop_footer
      %s35 = sadd.s32 1, %s31
    $region7: #{forward.1} parent=1 // loop_footer_branch
      %30 = sbr.rel target = $region3
    $region8: #{forward.1} parent=1 // loop_exit
      _
    %6545 = vsyncpa [#allocation4], 1
    %s6546 = scalar_lea.sflag [#allocation4], 1
    %6547 = vsyncpa %s6546, 1
    %6548 = vsyncpa [#allocation6], 1
    %6549 = vsyncpa [#allocation23], 1

</llo_original>
